<compile_context>
chip_gen: v6e
topology: v6e:2x2x1
jax: 0.10.0
libtpu: 0.0.40
codegen_flags: <defaults>
</compile_context>

<pallas_src>
import functools

import jax
import jax.numpy as jnp
from jax import lax
from jax.experimental import pallas as pl
from jax.experimental.pallas import tpu as pltpu


def _round_up(x, m):
    return (x + m - 1) // m * m


def _make_fused_gru_kernel(num_layers, T, Bp, Hp, mm_dtype):
    """Fused multi-layer GRU kernel (single grid point, everything in VMEM).

    Ref layout (all whole-array VMEM blocks, no grid):
      inputs : x (T*Bp, Dp) in mm_dtype,
               then per layer l: wih_l (3, Din_l, Hp), whh_l (3, Hp, Hp) [mm_dtype]
                                 bih_l (3, 1, Hp),     bhh_l (3, 1, Hp)  [f32]
      outputs: out (T, Bp, Hp) f32  -- last-layer hidden state, every timestep
               h_n (L, Bp, Hp) f32  -- final hidden state of every layer
      scratch: gi_r/gi_z/gi_n (T, Bp, Hp) f32 -- hoisted per-gate input proj.
               act (T, Bp, Hp) f32            -- inter-layer activations
    Gate order is PyTorch's r | z | n.
    """

    def kernel(*refs):
        x_ref = refs[0]
        w_refs = refs[1:1 + 4 * num_layers]
        out_ref = refs[1 + 4 * num_layers]
        hn_ref = refs[2 + 4 * num_layers]
        gi_r_scr = refs[3 + 4 * num_layers]
        gi_z_scr = refs[4 + 4 * num_layers]
        gi_n_scr = refs[5 + 4 * num_layers]
        act_scr = refs[6 + 4 * num_layers]

        unroll = True if T <= 64 else 8

        for layer in range(num_layers):
            wih_ref, whh_ref, bih_ref, bhh_ref = w_refs[4 * layer:4 * layer + 4]

            # ---- Phase 1: input projection for ALL timesteps at once (off
            #      the recurrent path). One big MXU matmul per gate.  b_hh of
            #      the r/z gates is folded here (exact); b_hn must stay inside
            #      r * (.) per PyTorch GRU semantics. ----
            if layer == 0:
                act = x_ref[...]                                  # (T*Bp, Dp)
            else:
                act = act_scr[...].reshape(T * Bp, Hp).astype(mm_dtype)

            gi_r = jnp.dot(act, wih_ref[0],
                           preferred_element_type=jnp.float32) + bih_ref[0] + bhh_ref[0]
            gi_z = jnp.dot(act, wih_ref[1],
                           preferred_element_type=jnp.float32) + bih_ref[1] + bhh_ref[1]
            gi_n = jnp.dot(act, wih_ref[2],
                           preferred_element_type=jnp.float32) + bih_ref[2]
            gi_r_scr[...] = gi_r.reshape(T, Bp, Hp)
            gi_z_scr[...] = gi_z.reshape(T, Bp, Hp)
            gi_n_scr[...] = gi_n.reshape(T, Bp, Hp)

            # ---- Phase 2: sequential recurrence over time.  Only the small
            #      (Bp,Hp)x(Hp,Hp) matmuls + gate math remain here. ----
            whh_r = whh_ref[0]                                    # (Hp, Hp)
            whh_z = whh_ref[1]
            whh_n = whh_ref[2]
            bhh_n = bhh_ref[2]                                    # (1, Hp)
            dst = out_ref if layer == num_layers - 1 else act_scr

            def step(t, h):
                h_mm = h.astype(mm_dtype)
                r = jax.nn.sigmoid(
                    gi_r_scr[t] + jnp.dot(h_mm, whh_r,
                                          preferred_element_type=jnp.float32))
                z = jax.nn.sigmoid(
                    gi_z_scr[t] + jnp.dot(h_mm, whh_z,
                                          preferred_element_type=jnp.float32))
                n = jnp.tanh(
                    gi_n_scr[t] + r * (jnp.dot(h_mm, whh_n,
                                               preferred_element_type=jnp.float32)
                                       + bhh_n))
                h_new = (1.0 - z) * n + z * h                     # f32 state
                dst[t] = h_new
                return h_new

            h0 = jnp.zeros((Bp, Hp), jnp.float32)
            h_last = lax.fori_loop(0, T, step, h0, unroll=unroll)
            hn_ref[layer] = h_last

    return kernel


def _prep_layer_weights(w_ih, w_hh, b_ih, b_hh, H, Hp, d_in, dp_in, mm_dtype):
    """PyTorch layout (3H, Din)/(3H, H) rows r|z|n -> gate-major, transposed,
    zero-padded to lane/sublane friendly (Dp, Hp)."""
    wih = jnp.asarray(w_ih, jnp.float32).reshape(3, H, d_in).transpose(0, 2, 1)
    wih = jnp.pad(wih, ((0, 0), (0, dp_in - d_in), (0, Hp - H))).astype(mm_dtype)
    whh = jnp.asarray(w_hh, jnp.float32).reshape(3, H, H).transpose(0, 2, 1)
    whh = jnp.pad(whh, ((0, 0), (0, Hp - H), (0, Hp - H))).astype(mm_dtype)
    bih = jnp.pad(jnp.asarray(b_ih, jnp.float32).reshape(3, 1, H),
                  ((0, 0), (0, 0), (0, Hp - H)))
    bhh = jnp.pad(jnp.asarray(b_hh, jnp.float32).reshape(3, 1, H),
                  ((0, 0), (0, 0), (0, Hp - H)))
    return wih, whh, bih, bhh


@functools.partial(jax.jit, static_argnames=("mxu_dtype",))
def homograph_rnn_forward(x_btd, params, mxu_dtype=jnp.float32):
    """Equivalent of `self.rnn(x)` with base_model='GRU', batch_first=True.

    x_btd: (B, T, d_feat). params: per-layer PyTorch-layout (w_ih, w_hh, b_ih,
    b_hh). Returns (output (B, T, H), h_n (num_layers, B, H)), eval semantics.
    mxu_dtype=jnp.bfloat16 selects the bf16 MXU-input / f32-accumulate fast
    path (v6e/v7x); gate math and the hidden state stay f32.
    """
    B, T, D = x_btd.shape
    H = params[0][1].shape[1]
    L = len(params)
    Bp = _round_up(B, 8)        # sublane alignment
    Hp = _round_up(H, 128)      # lane alignment (unmasked stores)
    Dp = _round_up(D, 128)

    # [B,T,D] -> [T,B,D], zero-pad batch & feature dims, flatten to a
    # lane-friendly 2-D slab for the hoisted input projection.
    x = jnp.transpose(x_btd, (1, 0, 2)).astype(jnp.float32)
    x = jnp.pad(x, ((0, 0), (0, Bp - B), (0, Dp - D)))
    x_flat = x.reshape(T * Bp, Dp).astype(mxu_dtype)

    flat_inputs = [x_flat]
    for layer, (w_ih, w_hh, b_ih, b_hh) in enumerate(params):
        d_in = w_ih.shape[1]
        dp_in = Dp if layer == 0 else Hp
        flat_inputs.extend(
            _prep_layer_weights(w_ih, w_hh, b_ih, b_hh, H, Hp, d_in, dp_in,
                                mxu_dtype))

    kernel = _make_fused_gru_kernel(L, T, Bp, Hp, mxu_dtype)
    out_pad, hn_pad = pl.pallas_call(
        kernel,
        out_shape=(jax.ShapeDtypeStruct((T, Bp, Hp), jnp.float32),
                   jax.ShapeDtypeStruct((L, Bp, Hp), jnp.float32)),
        scratch_shapes=[
            pltpu.VMEM((T, Bp, Hp), jnp.float32),   # gi_r
            pltpu.VMEM((T, Bp, Hp), jnp.float32),   # gi_z
            pltpu.VMEM((T, Bp, Hp), jnp.float32),   # gi_n
            pltpu.VMEM((T, Bp, Hp), jnp.float32),   # inter-layer activations
        ],
    )(*flat_inputs)

    output = jnp.transpose(out_pad, (1, 0, 2))[:B, :, :H]   # (B, T, H)
    h_n = hn_pad[:, :B, :H]                                  # (L, B, H)
    return output, h_n


def init_gru_params(key, d_feat, hidden_size, num_layers):
    """PyTorch nn.GRU init: uniform(-1/sqrt(H), 1/sqrt(H)) for all params."""
    k = 1.0 / jnp.sqrt(jnp.float32(hidden_size))
    params = []
    for layer in range(num_layers):
        in_sz = d_feat if layer == 0 else hidden_size
        key, k1, k2, k3, k4 = jax.random.split(key, 5)
        w_ih = jax.random.uniform(k1, (3 * hidden_size, in_sz), jnp.float32, -k, k)
        w_hh = jax.random.uniform(k2, (3 * hidden_size, hidden_size), jnp.float32, -k, k)
        b_ih = jax.random.uniform(k3, (3 * hidden_size,), jnp.float32, -k, k)
        b_hh = jax.random.uniform(k4, (3 * hidden_size,), jnp.float32, -k, k)
        params.append((w_ih, w_hh, b_ih, b_hh))
    return params


def _reference_gru(x_btd, params):
    """Pure-JAX lax.scan reference (PyTorch GRU eval semantics)."""
    x = jnp.transpose(x_btd, (1, 0, 2)).astype(jnp.float32)  # (T, B, D)
    finals = []
    for (w_ih, w_hh, b_ih, b_hh) in params:
        H = w_hh.shape[1]
        B = x.shape[1]

        def step(h, x_t):
            gi = x_t @ w_ih.T + b_ih
            gh = h @ w_hh.T + b_hh
            r = jax.nn.sigmoid(gi[:, :H] + gh[:, :H])
            z = jax.nn.sigmoid(gi[:, H:2 * H] + gh[:, H:2 * H])
            n = jnp.tanh(gi[:, 2 * H:] + r * gh[:, 2 * H:])
            h_new = (1.0 - z) * n + z * h
            return h_new, h_new

        h0 = jnp.zeros((B, H), jnp.float32)
        h_last, x = lax.scan(step, h0, x)
        finals.append(h_last)
    return jnp.transpose(x, (1, 0, 2)), jnp.stack(finals, axis=0)


if __name__ == "__main__":
    # Small shapes consistent with the module: d_feat features per timestep,
    # hidden_size GRU units, num_layers stacked layers, batch_first input.
    B, T, D, H, L = 8, 8, 16, 32, 2
    key = jax.random.PRNGKey(0)
    kx, kp = jax.random.split(key)
    x = jax.random.normal(kx, (B, T, D), jnp.float32)
    params = init_gru_params(kp, d_feat=D, hidden_size=H, num_layers=L)

    # f32 MXU path: matches the PyTorch-equivalent reference numerics.
    out, h_n = homograph_rnn_forward(x, params)
    out = jax.block_until_ready(out)
    h_n = jax.block_until_ready(h_n)

    ref_out, ref_hn = _reference_gru(x, params)
    assert out.shape == (B, T, H) and h_n.shape == (L, B, H)
    assert jnp.allclose(out, ref_out, atol=1e-5, rtol=1e-5), "output mismatch"
    assert jnp.allclose(h_n, ref_hn, atol=1e-5, rtol=1e-5), "h_n mismatch"

    # bf16 MXU-input fast path (v6e/v7x): sanity check with loose tolerance.
    out_bf, hn_bf = homograph_rnn_forward(x, params, mxu_dtype=jnp.bfloat16)
    out_bf = jax.block_until_ready(out_bf)
    hn_bf = jax.block_until_ready(hn_bf)
    assert jnp.allclose(out_bf, ref_out, atol=1e-1, rtol=1e-1), "bf16 path off"

    print("KERNEL_OK")
</pallas_src>

<mosaic_0001>
module attributes {stable_mosaic.version = 11 : i64} {
  func.func @kernel(%arg0: memref<64x128xf32, #tpu.memory_space<vmem>>, %arg1: memref<3x128x128xf32, #tpu.memory_space<vmem>>, %arg2: memref<3x128x128xf32, #tpu.memory_space<vmem>>, %arg3: memref<3x1x128xf32, #tpu.memory_space<vmem>>, %arg4: memref<3x1x128xf32, #tpu.memory_space<vmem>>, %arg5: memref<3x128x128xf32, #tpu.memory_space<vmem>>, %arg6: memref<3x128x128xf32, #tpu.memory_space<vmem>>, %arg7: memref<3x1x128xf32, #tpu.memory_space<vmem>>, %arg8: memref<3x1x128xf32, #tpu.memory_space<vmem>>, %arg9: memref<8x8x128xf32, #tpu.memory_space<vmem>>, %arg10: memref<2x8x128xf32, #tpu.memory_space<vmem>>, %arg11: memref<8x8x128xf32, #tpu.memory_space<vmem>>, %arg12: memref<8x8x128xf32, #tpu.memory_space<vmem>>, %arg13: memref<8x8x128xf32, #tpu.memory_space<vmem>>, %arg14: memref<8x8x128xf32, #tpu.memory_space<vmem>>) attributes {dimension_semantics = [], scalar_prefetch = 0 : i64, scratch_operands = 4 : i64, tpu.core_type = #tpu.core_type<tc>} {
    %c0 = arith.constant 0 : index
    %c0_0 = arith.constant 0 : index
    %0 = vector.load %arg0[%c0, %c0_0] : memref<64x128xf32, #tpu.memory_space<vmem>>, vector<64x128xf32>
    %c0_1 = arith.constant 0 : index
    %c0_2 = arith.constant 0 : index
    %c0_3 = arith.constant 0 : index
    %1 = vector.load %arg1[%c0_1, %c0_2, %c0_3] : memref<3x128x128xf32, #tpu.memory_space<vmem>>, vector<1x128x128xf32>
    %2 = vector.shape_cast %1 : vector<1x128x128xf32> to vector<128x128xf32>
    %cst = arith.constant dense<0.000000e+00> : vector<64x128xf32>
    %3 = tpu.matmul %0, %2, %cst {dimension_numbers = #tpu.dot_dimension_numbers<[1], [0], [0], [1], [0, 0, 1, 1], [], []>} : vector<64x128xf32>, vector<128x128xf32>, vector<64x128xf32> -> vector<64x128xf32>
    %c0_4 = arith.constant 0 : index
    %c0_5 = arith.constant 0 : index
    %c0_6 = arith.constant 0 : index
    %4 = vector.load %arg3[%c0_4, %c0_5, %c0_6] : memref<3x1x128xf32, #tpu.memory_space<vmem>>, vector<1x1x128xf32>
    %5 = vector.shape_cast %4 : vector<1x1x128xf32> to vector<1x128xf32>
    %6 = vector.broadcast %5 : vector<1x128xf32> to vector<64x128xf32>
    %7 = arith.addf %3, %6 : vector<64x128xf32>
    %c0_7 = arith.constant 0 : index
    %c0_8 = arith.constant 0 : index
    %c0_9 = arith.constant 0 : index
    %8 = vector.load %arg4[%c0_7, %c0_8, %c0_9] : memref<3x1x128xf32, #tpu.memory_space<vmem>>, vector<1x1x128xf32>
    %9 = vector.shape_cast %8 : vector<1x1x128xf32> to vector<1x128xf32>
    %10 = vector.broadcast %9 : vector<1x128xf32> to vector<64x128xf32>
    %11 = arith.addf %7, %10 : vector<64x128xf32>
    %c1 = arith.constant 1 : index
    %c0_10 = arith.constant 0 : index
    %c0_11 = arith.constant 0 : index
    %12 = vector.load %arg1[%c1, %c0_10, %c0_11] : memref<3x128x128xf32, #tpu.memory_space<vmem>>, vector<1x128x128xf32>
    %13 = vector.shape_cast %12 : vector<1x128x128xf32> to vector<128x128xf32>
    %cst_12 = arith.constant dense<0.000000e+00> : vector<64x128xf32>
    %14 = tpu.matmul %0, %13, %cst_12 {dimension_numbers = #tpu.dot_dimension_numbers<[1], [0], [0], [1], [0, 0, 1, 1], [], []>} : vector<64x128xf32>, vector<128x128xf32>, vector<64x128xf32> -> vector<64x128xf32>
    %c1_13 = arith.constant 1 : index
    %c0_14 = arith.constant 0 : index
    %c0_15 = arith.constant 0 : index
    %15 = vector.load %arg3[%c1_13, %c0_14, %c0_15] : memref<3x1x128xf32, #tpu.memory_space<vmem>>, vector<1x1x128xf32>
    %16 = vector.shape_cast %15 : vector<1x1x128xf32> to vector<1x128xf32>
    %17 = vector.broadcast %16 : vector<1x128xf32> to vector<64x128xf32>
    %18 = arith.addf %14, %17 : vector<64x128xf32>
    %c1_16 = arith.constant 1 : index
    %c0_17 = arith.constant 0 : index
    %c0_18 = arith.constant 0 : index
    %19 = vector.load %arg4[%c1_16, %c0_17, %c0_18] : memref<3x1x128xf32, #tpu.memory_space<vmem>>, vector<1x1x128xf32>
    %20 = vector.shape_cast %19 : vector<1x1x128xf32> to vector<1x128xf32>
    %21 = vector.broadcast %20 : vector<1x128xf32> to vector<64x128xf32>
    %22 = arith.addf %18, %21 : vector<64x128xf32>
    %c2 = arith.constant 2 : index
    %c0_19 = arith.constant 0 : index
    %c0_20 = arith.constant 0 : index
    %23 = vector.load %arg1[%c2, %c0_19, %c0_20] : memref<3x128x128xf32, #tpu.memory_space<vmem>>, vector<1x128x128xf32>
    %24 = vector.shape_cast %23 : vector<1x128x128xf32> to vector<128x128xf32>
    %cst_21 = arith.constant dense<0.000000e+00> : vector<64x128xf32>
    %25 = tpu.matmul %0, %24, %cst_21 {dimension_numbers = #tpu.dot_dimension_numbers<[1], [0], [0], [1], [0, 0, 1, 1], [], []>} : vector<64x128xf32>, vector<128x128xf32>, vector<64x128xf32> -> vector<64x128xf32>
    %c2_22 = arith.constant 2 : index
    %c0_23 = arith.constant 0 : index
    %c0_24 = arith.constant 0 : index
    %26 = vector.load %arg3[%c2_22, %c0_23, %c0_24] : memref<3x1x128xf32, #tpu.memory_space<vmem>>, vector<1x1x128xf32>
    %27 = vector.shape_cast %26 : vector<1x1x128xf32> to vector<1x128xf32>
    %28 = vector.broadcast %27 : vector<1x128xf32> to vector<64x128xf32>
    %29 = arith.addf %25, %28 : vector<64x128xf32>
    %30 = vector.shape_cast %11 : vector<64x128xf32> to vector<8x8x128xf32>
    %c0_25 = arith.constant 0 : index
    %c0_26 = arith.constant 0 : index
    %c0_27 = arith.constant 0 : index
    %31 = vector.load %arg11[%c0_25, %c0_26, %c0_27] : memref<8x8x128xf32, #tpu.memory_space<vmem>>, vector<8x8x128xf32>
    tpu.vector_store %arg11[%c0_25, %c0_26, %c0_27], %30 {strides = array<i32>} : memref<8x8x128xf32, #tpu.memory_space<vmem>>, vector<8x8x128xf32>,
    %32 = vector.shape_cast %22 : vector<64x128xf32> to vector<8x8x128xf32>
    %c0_28 = arith.constant 0 : index
    %c0_29 = arith.constant 0 : index
    %c0_30 = arith.constant 0 : index
    %33 = vector.load %arg12[%c0_28, %c0_29, %c0_30] : memref<8x8x128xf32, #tpu.memory_space<vmem>>, vector<8x8x128xf32>
    tpu.vector_store %arg12[%c0_28, %c0_29, %c0_30], %32 {strides = array<i32>} : memref<8x8x128xf32, #tpu.memory_space<vmem>>, vector<8x8x128xf32>,
    %34 = vector.shape_cast %29 : vector<64x128xf32> to vector<8x8x128xf32>
    %c0_31 = arith.constant 0 : index
    %c0_32 = arith.constant 0 : index
    %c0_33 = arith.constant 0 : index
    %35 = vector.load %arg13[%c0_31, %c0_32, %c0_33] : memref<8x8x128xf32, #tpu.memory_space<vmem>>, vector<8x8x128xf32>
    tpu.vector_store %arg13[%c0_31, %c0_32, %c0_33], %34 {strides = array<i32>} : memref<8x8x128xf32, #tpu.memory_space<vmem>>, vector<8x8x128xf32>,
    %c0_34 = arith.constant 0 : index
    %c0_35 = arith.constant 0 : index
    %c0_36 = arith.constant 0 : index
    %36 = vector.load %arg2[%c0_34, %c0_35, %c0_36] : memref<3x128x128xf32, #tpu.memory_space<vmem>>, vector<1x128x128xf32>
    %37 = vector.shape_cast %36 : vector<1x128x128xf32> to vector<128x128xf32>
    %c1_37 = arith.constant 1 : index
    %c0_38 = arith.constant 0 : index
    %c0_39 = arith.constant 0 : index
    %38 = vector.load %arg2[%c1_37, %c0_38, %c0_39] : memref<3x128x128xf32, #tpu.memory_space<vmem>>, vector<1x128x128xf32>
    %39 = vector.shape_cast %38 : vector<1x128x128xf32> to vector<128x128xf32>
    %c2_40 = arith.constant 2 : index
    %c0_41 = arith.constant 0 : index
    %c0_42 = arith.constant 0 : index
    %40 = vector.load %arg2[%c2_40, %c0_41, %c0_42] : memref<3x128x128xf32, #tpu.memory_space<vmem>>, vector<1x128x128xf32>
    %41 = vector.shape_cast %40 : vector<1x128x128xf32> to vector<128x128xf32>
    %c2_43 = arith.constant 2 : index
    %c0_44 = arith.constant 0 : index
    %c0_45 = arith.constant 0 : index
    %42 = vector.load %arg4[%c2_43, %c0_44, %c0_45] : memref<3x1x128xf32, #tpu.memory_space<vmem>>, vector<1x1x128xf32>
    %43 = vector.shape_cast %42 : vector<1x1x128xf32> to vector<1x128xf32>
    %cst_46 = arith.constant 0.000000e+00 : f32
    %44 = vector.broadcast %cst_46 : f32 to vector<8x128xf32>
    %c0_i32 = arith.constant 0 : i32
    %45 = arith.index_cast %c0_i32 : i32 to index
    %c0_47 = arith.constant 0 : index
    %c0_48 = arith.constant 0 : index
    %46 = vector.load %arg11[%45, %c0_47, %c0_48] : memref<8x8x128xf32, #tpu.memory_space<vmem>>, vector<1x8x128xf32>
    %47 = vector.shape_cast %46 : vector<1x8x128xf32> to vector<8x128xf32>
    %cst_49 = arith.constant dense<0.000000e+00> : vector<8x128xf32>
    %48 = tpu.matmul %44, %37, %cst_49 {dimension_numbers = #tpu.dot_dimension_numbers<[1], [0], [0], [1], [0, 0, 1, 1], [], []>} : vector<8x128xf32>, vector<128x128xf32>, vector<8x128xf32> -> vector<8x128xf32>
    %49 = arith.addf %47, %48 : vector<8x128xf32>
    %50 = arith.negf %49 : vector<8x128xf32>
    %51 = math.exp %50 : vector<8x128xf32>
    %cst_50 = arith.constant 1.000000e+00 : f32
    %52 = vector.broadcast %cst_50 : f32 to vector<8x128xf32>
    %53 = arith.addf %52, %51 : vector<8x128xf32>
    %54 = arith.divf %52, %53 : vector<8x128xf32>
    %55 = arith.index_cast %c0_i32 : i32 to index
    %c0_51 = arith.constant 0 : index
    %c0_52 = arith.constant 0 : index
    %56 = vector.load %arg12[%55, %c0_51, %c0_52] : memref<8x8x128xf32, #tpu.memory_space<vmem>>, vector<1x8x128xf32>
    %57 = vector.shape_cast %56 : vector<1x8x128xf32> to vector<8x128xf32>
    %cst_53 = arith.constant dense<0.000000e+00> : vector<8x128xf32>
    %58 = tpu.matmul %44, %39, %cst_53 {dimension_numbers = #tpu.dot_dimension_numbers<[1], [0], [0], [1], [0, 0, 1, 1], [], []>} : vector<8x128xf32>, vector<128x128xf32>, vector<8x128xf32> -> vector<8x128xf32>
    %59 = arith.addf %57, %58 : vector<8x128xf32>
    %60 = arith.negf %59 : vector<8x128xf32>
    %61 = math.exp %60 : vector<8x128xf32>
    %cst_54 = arith.constant 1.000000e+00 : f32
    %62 = vector.broadcast %cst_54 : f32 to vector<8x128xf32>
    %63 = arith.addf %62, %61 : vector<8x128xf32>
    %64 = arith.divf %62, %63 : vector<8x128xf32>
    %65 = arith.index_cast %c0_i32 : i32 to index
    %c0_55 = arith.constant 0 : index
    %c0_56 = arith.constant 0 : index
    %66 = vector.load %arg13[%65, %c0_55, %c0_56] : memref<8x8x128xf32, #tpu.memory_space<vmem>>, vector<1x8x128xf32>
    %67 = vector.shape_cast %66 : vector<1x8x128xf32> to vector<8x128xf32>
    %cst_57 = arith.constant dense<0.000000e+00> : vector<8x128xf32>
    %68 = tpu.matmul %44, %41, %cst_57 {dimension_numbers = #tpu.dot_dimension_numbers<[1], [0], [0], [1], [0, 0, 1, 1], [], []>} : vector<8x128xf32>, vector<128x128xf32>, vector<8x128xf32> -> vector<8x128xf32>
    %69 = vector.broadcast %43 : vector<1x128xf32> to vector<8x128xf32>
    %70 = arith.addf %68, %69 : vector<8x128xf32>
    %71 = arith.mulf %54, %70 : vector<8x128xf32>
    %72 = arith.addf %67, %71 : vector<8x128xf32>
    %73 = math.tanh %72 : vector<8x128xf32>
    %cst_58 = arith.constant 1.000000e+00 : f32
    %74 = vector.broadcast %cst_58 : f32 to vector<8x128xf32>
    %75 = arith.subf %74, %64 : vector<8x128xf32>
    %76 = arith.mulf %75, %73 : vector<8x128xf32>
    %77 = arith.mulf %64, %44 : vector<8x128xf32>
    %78 = arith.addf %76, %77 : vector<8x128xf32>
    %79 = arith.index_cast %c0_i32 : i32 to index
    %c0_59 = arith.constant 0 : index
    %c0_60 = arith.constant 0 : index
    %80 = vector.load %arg14[%79, %c0_59, %c0_60] : memref<8x8x128xf32, #tpu.memory_space<vmem>>, vector<1x8x128xf32>
    %81 = vector.shape_cast %80 : vector<1x8x128xf32> to vector<8x128xf32>
    %82 = vector.shape_cast %78 : vector<8x128xf32> to vector<1x8x128xf32>
    tpu.vector_store %arg14[%79, %c0_59, %c0_60], %82 {strides = array<i32>} : memref<8x8x128xf32, #tpu.memory_space<vmem>>, vector<1x8x128xf32>,
    %c1_i32 = arith.constant 1 : i32
    %83 = arith.index_cast %c1_i32 : i32 to index
    %c0_61 = arith.constant 0 : index
    %c0_62 = arith.constant 0 : index
    %84 = vector.load %arg11[%83, %c0_61, %c0_62] : memref<8x8x128xf32, #tpu.memory_space<vmem>>, vector<1x8x128xf32>
    %85 = vector.shape_cast %84 : vector<1x8x128xf32> to vector<8x128xf32>
    %cst_63 = arith.constant dense<0.000000e+00> : vector<8x128xf32>
    %86 = tpu.matmul %78, %37, %cst_63 {dimension_numbers = #tpu.dot_dimension_numbers<[1], [0], [0], [1], [0, 0, 1, 1], [], []>} : vector<8x128xf32>, vector<128x128xf32>, vector<8x128xf32> -> vector<8x128xf32>
    %87 = arith.addf %85, %86 : vector<8x128xf32>
    %88 = arith.negf %87 : vector<8x128xf32>
    %89 = math.exp %88 : vector<8x128xf32>
    %cst_64 = arith.constant 1.000000e+00 : f32
    %90 = vector.broadcast %cst_64 : f32 to vector<8x128xf32>
    %91 = arith.addf %90, %89 : vector<8x128xf32>
    %92 = arith.divf %90, %91 : vector<8x128xf32>
    %93 = arith.index_cast %c1_i32 : i32 to index
    %c0_65 = arith.constant 0 : index
    %c0_66 = arith.constant 0 : index
    %94 = vector.load %arg12[%93, %c0_65, %c0_66] : memref<8x8x128xf32, #tpu.memory_space<vmem>>, vector<1x8x128xf32>
    %95 = vector.shape_cast %94 : vector<1x8x128xf32> to vector<8x128xf32>
    %cst_67 = arith.constant dense<0.000000e+00> : vector<8x128xf32>
    %96 = tpu.matmul %78, %39, %cst_67 {dimension_numbers = #tpu.dot_dimension_numbers<[1], [0], [0], [1], [0, 0, 1, 1], [], []>} : vector<8x128xf32>, vector<128x128xf32>, vector<8x128xf32> -> vector<8x128xf32>
    %97 = arith.addf %95, %96 : vector<8x128xf32>
    %98 = arith.negf %97 : vector<8x128xf32>
    %99 = math.exp %98 : vector<8x128xf32>
    %cst_68 = arith.constant 1.000000e+00 : f32
    %100 = vector.broadcast %cst_68 : f32 to vector<8x128xf32>
    %101 = arith.addf %100, %99 : vector<8x128xf32>
    %102 = arith.divf %100, %101 : vector<8x128xf32>
    %103 = arith.index_cast %c1_i32 : i32 to index
    %c0_69 = arith.constant 0 : index
    %c0_70 = arith.constant 0 : index
    %104 = vector.load %arg13[%103, %c0_69, %c0_70] : memref<8x8x128xf32, #tpu.memory_space<vmem>>, vector<1x8x128xf32>
    %105 = vector.shape_cast %104 : vector<1x8x128xf32> to vector<8x128xf32>
    %cst_71 = arith.constant dense<0.000000e+00> : vector<8x128xf32>
    %106 = tpu.matmul %78, %41, %cst_71 {dimension_numbers = #tpu.dot_dimension_numbers<[1], [0], [0], [1], [0, 0, 1, 1], [], []>} : vector<8x128xf32>, vector<128x128xf32>, vector<8x128xf32> -> vector<8x128xf32>
    %107 = vector.broadcast %43 : vector<1x128xf32> to vector<8x128xf32>
    %108 = arith.addf %106, %107 : vector<8x128xf32>
    %109 = arith.mulf %92, %108 : vector<8x128xf32>
    %110 = arith.addf %105, %109 : vector<8x128xf32>
    %111 = math.tanh %110 : vector<8x128xf32>
    %cst_72 = arith.constant 1.000000e+00 : f32
    %112 = vector.broadcast %cst_72 : f32 to vector<8x128xf32>
    %113 = arith.subf %112, %102 : vector<8x128xf32>
    %114 = arith.mulf %113, %111 : vector<8x128xf32>
    %115 = arith.mulf %102, %78 : vector<8x128xf32>
    %116 = arith.addf %114, %115 : vector<8x128xf32>
    %117 = arith.index_cast %c1_i32 : i32 to index
    %c0_73 = arith.constant 0 : index
    %c0_74 = arith.constant 0 : index
    %118 = vector.load %arg14[%117, %c0_73, %c0_74] : memref<8x8x128xf32, #tpu.memory_space<vmem>>, vector<1x8x128xf32>
    %119 = vector.shape_cast %118 : vector<1x8x128xf32> to vector<8x128xf32>
    %120 = vector.shape_cast %116 : vector<8x128xf32> to vector<1x8x128xf32>
    tpu.vector_store %arg14[%117, %c0_73, %c0_74], %120 {strides = array<i32>} : memref<8x8x128xf32, #tpu.memory_space<vmem>>, vector<1x8x128xf32>,
    %c2_i32 = arith.constant 2 : i32
    %121 = arith.index_cast %c2_i32 : i32 to index
    %c0_75 = arith.constant 0 : index
    %c0_76 = arith.constant 0 : index
    %122 = vector.load %arg11[%121, %c0_75, %c0_76] : memref<8x8x128xf32, #tpu.memory_space<vmem>>, vector<1x8x128xf32>
    %123 = vector.shape_cast %122 : vector<1x8x128xf32> to vector<8x128xf32>
    %cst_77 = arith.constant dense<0.000000e+00> : vector<8x128xf32>
    %124 = tpu.matmul %116, %37, %cst_77 {dimension_numbers = #tpu.dot_dimension_numbers<[1], [0], [0], [1], [0, 0, 1, 1], [], []>} : vector<8x128xf32>, vector<128x128xf32>, vector<8x128xf32> -> vector<8x128xf32>
    %125 = arith.addf %123, %124 : vector<8x128xf32>
    %126 = arith.negf %125 : vector<8x128xf32>
    %127 = math.exp %126 : vector<8x128xf32>
    %cst_78 = arith.constant 1.000000e+00 : f32
    %128 = vector.broadcast %cst_78 : f32 to vector<8x128xf32>
    %129 = arith.addf %128, %127 : vector<8x128xf32>
    %130 = arith.divf %128, %129 : vector<8x128xf32>
    %131 = arith.index_cast %c2_i32 : i32 to index
    %c0_79 = arith.constant 0 : index
    %c0_80 = arith.constant 0 : index
    %132 = vector.load %arg12[%131, %c0_79, %c0_80] : memref<8x8x128xf32, #tpu.memory_space<vmem>>, vector<1x8x128xf32>
    %133 = vector.shape_cast %132 : vector<1x8x128xf32> to vector<8x128xf32>
    %cst_81 = arith.constant dense<0.000000e+00> : vector<8x128xf32>
    %134 = tpu.matmul %116, %39, %cst_81 {dimension_numbers = #tpu.dot_dimension_numbers<[1], [0], [0], [1], [0, 0, 1, 1], [], []>} : vector<8x128xf32>, vector<128x128xf32>, vector<8x128xf32> -> vector<8x128xf32>
    %135 = arith.addf %133, %134 : vector<8x128xf32>
    %136 = arith.negf %135 : vector<8x128xf32>
    %137 = math.exp %136 : vector<8x128xf32>
    %cst_82 = arith.constant 1.000000e+00 : f32
    %138 = vector.broadcast %cst_82 : f32 to vector<8x128xf32>
    %139 = arith.addf %138, %137 : vector<8x128xf32>
    %140 = arith.divf %138, %139 : vector<8x128xf32>
    %141 = arith.index_cast %c2_i32 : i32 to index
    %c0_83 = arith.constant 0 : index
    %c0_84 = arith.constant 0 : index
    %142 = vector.load %arg13[%141, %c0_83, %c0_84] : memref<8x8x128xf32, #tpu.memory_space<vmem>>, vector<1x8x128xf32>
    %143 = vector.shape_cast %142 : vector<1x8x128xf32> to vector<8x128xf32>
    %cst_85 = arith.constant dense<0.000000e+00> : vector<8x128xf32>
    %144 = tpu.matmul %116, %41, %cst_85 {dimension_numbers = #tpu.dot_dimension_numbers<[1], [0], [0], [1], [0, 0, 1, 1], [], []>} : vector<8x128xf32>, vector<128x128xf32>, vector<8x128xf32> -> vector<8x128xf32>
    %145 = vector.broadcast %43 : vector<1x128xf32> to vector<8x128xf32>
    %146 = arith.addf %144, %145 : vector<8x128xf32>
    %147 = arith.mulf %130, %146 : vector<8x128xf32>
    %148 = arith.addf %143, %147 : vector<8x128xf32>
    %149 = math.tanh %148 : vector<8x128xf32>
    %cst_86 = arith.constant 1.000000e+00 : f32
    %150 = vector.broadcast %cst_86 : f32 to vector<8x128xf32>
    %151 = arith.subf %150, %140 : vector<8x128xf32>
    %152 = arith.mulf %151, %149 : vector<8x128xf32>
    %153 = arith.mulf %140, %116 : vector<8x128xf32>
    %154 = arith.addf %152, %153 : vector<8x128xf32>
    %155 = arith.index_cast %c2_i32 : i32 to index
    %c0_87 = arith.constant 0 : index
    %c0_88 = arith.constant 0 : index
    %156 = vector.load %arg14[%155, %c0_87, %c0_88] : memref<8x8x128xf32, #tpu.memory_space<vmem>>, vector<1x8x128xf32>
    %157 = vector.shape_cast %156 : vector<1x8x128xf32> to vector<8x128xf32>
    %158 = vector.shape_cast %154 : vector<8x128xf32> to vector<1x8x128xf32>
    tpu.vector_store %arg14[%155, %c0_87, %c0_88], %158 {strides = array<i32>} : memref<8x8x128xf32, #tpu.memory_space<vmem>>, vector<1x8x128xf32>,
    %c3_i32 = arith.constant 3 : i32
    %159 = arith.index_cast %c3_i32 : i32 to index
    %c0_89 = arith.constant 0 : index
    %c0_90 = arith.constant 0 : index
    %160 = vector.load %arg11[%159, %c0_89, %c0_90] : memref<8x8x128xf32, #tpu.memory_space<vmem>>, vector<1x8x128xf32>
    %161 = vector.shape_cast %160 : vector<1x8x128xf32> to vector<8x128xf32>
    %cst_91 = arith.constant dense<0.000000e+00> : vector<8x128xf32>
    %162 = tpu.matmul %154, %37, %cst_91 {dimension_numbers = #tpu.dot_dimension_numbers<[1], [0], [0], [1], [0, 0, 1, 1], [], []>} : vector<8x128xf32>, vector<128x128xf32>, vector<8x128xf32> -> vector<8x128xf32>
    %163 = arith.addf %161, %162 : vector<8x128xf32>
    %164 = arith.negf %163 : vector<8x128xf32>
    %165 = math.exp %164 : vector<8x128xf32>
    %cst_92 = arith.constant 1.000000e+00 : f32
    %166 = vector.broadcast %cst_92 : f32 to vector<8x128xf32>
    %167 = arith.addf %166, %165 : vector<8x128xf32>
    %168 = arith.divf %166, %167 : vector<8x128xf32>
    %169 = arith.index_cast %c3_i32 : i32 to index
    %c0_93 = arith.constant 0 : index
    %c0_94 = arith.constant 0 : index
    %170 = vector.load %arg12[%169, %c0_93, %c0_94] : memref<8x8x128xf32, #tpu.memory_space<vmem>>, vector<1x8x128xf32>
    %171 = vector.shape_cast %170 : vector<1x8x128xf32> to vector<8x128xf32>
    %cst_95 = arith.constant dense<0.000000e+00> : vector<8x128xf32>
    %172 = tpu.matmul %154, %39, %cst_95 {dimension_numbers = #tpu.dot_dimension_numbers<[1], [0], [0], [1], [0, 0, 1, 1], [], []>} : vector<8x128xf32>, vector<128x128xf32>, vector<8x128xf32> -> vector<8x128xf32>
    %173 = arith.addf %171, %172 : vector<8x128xf32>
    %174 = arith.negf %173 : vector<8x128xf32>
    %175 = math.exp %174 : vector<8x128xf32>
    %cst_96 = arith.constant 1.000000e+00 : f32
    %176 = vector.broadcast %cst_96 : f32 to vector<8x128xf32>
    %177 = arith.addf %176, %175 : vector<8x128xf32>
    %178 = arith.divf %176, %177 : vector<8x128xf32>
    %179 = arith.index_cast %c3_i32 : i32 to index
    %c0_97 = arith.constant 0 : index
    %c0_98 = arith.constant 0 : index
    %180 = vector.load %arg13[%179, %c0_97, %c0_98] : memref<8x8x128xf32, #tpu.memory_space<vmem>>, vector<1x8x128xf32>
    %181 = vector.shape_cast %180 : vector<1x8x128xf32> to vector<8x128xf32>
    %cst_99 = arith.constant dense<0.000000e+00> : vector<8x128xf32>
    %182 = tpu.matmul %154, %41, %cst_99 {dimension_numbers = #tpu.dot_dimension_numbers<[1], [0], [0], [1], [0, 0, 1, 1], [], []>} : vector<8x128xf32>, vector<128x128xf32>, vector<8x128xf32> -> vector<8x128xf32>
    %183 = vector.broadcast %43 : vector<1x128xf32> to vector<8x128xf32>
    %184 = arith.addf %182, %183 : vector<8x128xf32>
    %185 = arith.mulf %168, %184 : vector<8x128xf32>
    %186 = arith.addf %181, %185 : vector<8x128xf32>
    %187 = math.tanh %186 : vector<8x128xf32>
    %cst_100 = arith.constant 1.000000e+00 : f32
    %188 = vector.broadcast %cst_100 : f32 to vector<8x128xf32>
    %189 = arith.subf %188, %178 : vector<8x128xf32>
    %190 = arith.mulf %189, %187 : vector<8x128xf32>
    %191 = arith.mulf %178, %154 : vector<8x128xf32>
    %192 = arith.addf %190, %191 : vector<8x128xf32>
    %193 = arith.index_cast %c3_i32 : i32 to index
    %c0_101 = arith.constant 0 : index
    %c0_102 = arith.constant 0 : index
    %194 = vector.load %arg14[%193, %c0_101, %c0_102] : memref<8x8x128xf32, #tpu.memory_space<vmem>>, vector<1x8x128xf32>
    %195 = vector.shape_cast %194 : vector<1x8x128xf32> to vector<8x128xf32>
    %196 = vector.shape_cast %192 : vector<8x128xf32> to vector<1x8x128xf32>
    tpu.vector_store %arg14[%193, %c0_101, %c0_102], %196 {strides = array<i32>} : memref<8x8x128xf32, #tpu.memory_space<vmem>>, vector<1x8x128xf32>,
    %c4_i32 = arith.constant 4 : i32
    %197 = arith.index_cast %c4_i32 : i32 to index
    %c0_103 = arith.constant 0 : index
    %c0_104 = arith.constant 0 : index
    %198 = vector.load %arg11[%197, %c0_103, %c0_104] : memref<8x8x128xf32, #tpu.memory_space<vmem>>, vector<1x8x128xf32>
    %199 = vector.shape_cast %198 : vector<1x8x128xf32> to vector<8x128xf32>
    %cst_105 = arith.constant dense<0.000000e+00> : vector<8x128xf32>
    %200 = tpu.matmul %192, %37, %cst_105 {dimension_numbers = #tpu.dot_dimension_numbers<[1], [0], [0], [1], [0, 0, 1, 1], [], []>} : vector<8x128xf32>, vector<128x128xf32>, vector<8x128xf32> -> vector<8x128xf32>
    %201 = arith.addf %199, %200 : vector<8x128xf32>
    %202 = arith.negf %201 : vector<8x128xf32>
    %203 = math.exp %202 : vector<8x128xf32>
    %cst_106 = arith.constant 1.000000e+00 : f32
    %204 = vector.broadcast %cst_106 : f32 to vector<8x128xf32>
    %205 = arith.addf %204, %203 : vector<8x128xf32>
    %206 = arith.divf %204, %205 : vector<8x128xf32>
    %207 = arith.index_cast %c4_i32 : i32 to index
    %c0_107 = arith.constant 0 : index
    %c0_108 = arith.constant 0 : index
    %208 = vector.load %arg12[%207, %c0_107, %c0_108] : memref<8x8x128xf32, #tpu.memory_space<vmem>>, vector<1x8x128xf32>
    %209 = vector.shape_cast %208 : vector<1x8x128xf32> to vector<8x128xf32>
    %cst_109 = arith.constant dense<0.000000e+00> : vector<8x128xf32>
    %210 = tpu.matmul %192, %39, %cst_109 {dimension_numbers = #tpu.dot_dimension_numbers<[1], [0], [0], [1], [0, 0, 1, 1], [], []>} : vector<8x128xf32>, vector<128x128xf32>, vector<8x128xf32> -> vector<8x128xf32>
    %211 = arith.addf %209, %210 : vector<8x128xf32>
    %212 = arith.negf %211 : vector<8x128xf32>
    %213 = math.exp %212 : vector<8x128xf32>
    %cst_110 = arith.constant 1.000000e+00 : f32
    %214 = vector.broadcast %cst_110 : f32 to vector<8x128xf32>
    %215 = arith.addf %214, %213 : vector<8x128xf32>
    %216 = arith.divf %214, %215 : vector<8x128xf32>
    %217 = arith.index_cast %c4_i32 : i32 to index
    %c0_111 = arith.constant 0 : index
    %c0_112 = arith.constant 0 : index
    %218 = vector.load %arg13[%217, %c0_111, %c0_112] : memref<8x8x128xf32, #tpu.memory_space<vmem>>, vector<1x8x128xf32>
    %219 = vector.shape_cast %218 : vector<1x8x128xf32> to vector<8x128xf32>
    %cst_113 = arith.constant dense<0.000000e+00> : vector<8x128xf32>
    %220 = tpu.matmul %192, %41, %cst_113 {dimension_numbers = #tpu.dot_dimension_numbers<[1], [0], [0], [1], [0, 0, 1, 1], [], []>} : vector<8x128xf32>, vector<128x128xf32>, vector<8x128xf32> -> vector<8x128xf32>
    %221 = vector.broadcast %43 : vector<1x128xf32> to vector<8x128xf32>
    %222 = arith.addf %220, %221 : vector<8x128xf32>
    %223 = arith.mulf %206, %222 : vector<8x128xf32>
    %224 = arith.addf %219, %223 : vector<8x128xf32>
    %225 = math.tanh %224 : vector<8x128xf32>
    %cst_114 = arith.constant 1.000000e+00 : f32
    %226 = vector.broadcast %cst_114 : f32 to vector<8x128xf32>
    %227 = arith.subf %226, %216 : vector<8x128xf32>
    %228 = arith.mulf %227, %225 : vector<8x128xf32>
    %229 = arith.mulf %216, %192 : vector<8x128xf32>
    %230 = arith.addf %228, %229 : vector<8x128xf32>
    %231 = arith.index_cast %c4_i32 : i32 to index
    %c0_115 = arith.constant 0 : index
    %c0_116 = arith.constant 0 : index
    %232 = vector.load %arg14[%231, %c0_115, %c0_116] : memref<8x8x128xf32, #tpu.memory_space<vmem>>, vector<1x8x128xf32>
    %233 = vector.shape_cast %232 : vector<1x8x128xf32> to vector<8x128xf32>
    %234 = vector.shape_cast %230 : vector<8x128xf32> to vector<1x8x128xf32>
    tpu.vector_store %arg14[%231, %c0_115, %c0_116], %234 {strides = array<i32>} : memref<8x8x128xf32, #tpu.memory_space<vmem>>, vector<1x8x128xf32>,
    %c5_i32 = arith.constant 5 : i32
    %235 = arith.index_cast %c5_i32 : i32 to index
    %c0_117 = arith.constant 0 : index
    %c0_118 = arith.constant 0 : index
    %236 = vector.load %arg11[%235, %c0_117, %c0_118] : memref<8x8x128xf32, #tpu.memory_space<vmem>>, vector<1x8x128xf32>
    %237 = vector.shape_cast %236 : vector<1x8x128xf32> to vector<8x128xf32>
    %cst_119 = arith.constant dense<0.000000e+00> : vector<8x128xf32>
    %238 = tpu.matmul %230, %37, %cst_119 {dimension_numbers = #tpu.dot_dimension_numbers<[1], [0], [0], [1], [0, 0, 1, 1], [], []>} : vector<8x128xf32>, vector<128x128xf32>, vector<8x128xf32> -> vector<8x128xf32>
    %239 = arith.addf %237, %238 : vector<8x128xf32>
    %240 = arith.negf %239 : vector<8x128xf32>
    %241 = math.exp %240 : vector<8x128xf32>
    %cst_120 = arith.constant 1.000000e+00 : f32
    %242 = vector.broadcast %cst_120 : f32 to vector<8x128xf32>
    %243 = arith.addf %242, %241 : vector<8x128xf32>
    %244 = arith.divf %242, %243 : vector<8x128xf32>
    %245 = arith.index_cast %c5_i32 : i32 to index
    %c0_121 = arith.constant 0 : index
    %c0_122 = arith.constant 0 : index
    %246 = vector.load %arg12[%245, %c0_121, %c0_122] : memref<8x8x128xf32, #tpu.memory_space<vmem>>, vector<1x8x128xf32>
    %247 = vector.shape_cast %246 : vector<1x8x128xf32> to vector<8x128xf32>
    %cst_123 = arith.constant dense<0.000000e+00> : vector<8x128xf32>
    %248 = tpu.matmul %230, %39, %cst_123 {dimension_numbers = #tpu.dot_dimension_numbers<[1], [0], [0], [1], [0, 0, 1, 1], [], []>} : vector<8x128xf32>, vector<128x128xf32>, vector<8x128xf32> -> vector<8x128xf32>
    %249 = arith.addf %247, %248 : vector<8x128xf32>
    %250 = arith.negf %249 : vector<8x128xf32>
    %251 = math.exp %250 : vector<8x128xf32>
    %cst_124 = arith.constant 1.000000e+00 : f32
    %252 = vector.broadcast %cst_124 : f32 to vector<8x128xf32>
    %253 = arith.addf %252, %251 : vector<8x128xf32>
    %254 = arith.divf %252, %253 : vector<8x128xf32>
    %255 = arith.index_cast %c5_i32 : i32 to index
    %c0_125 = arith.constant 0 : index
    %c0_126 = arith.constant 0 : index
    %256 = vector.load %arg13[%255, %c0_125, %c0_126] : memref<8x8x128xf32, #tpu.memory_space<vmem>>, vector<1x8x128xf32>
    %257 = vector.shape_cast %256 : vector<1x8x128xf32> to vector<8x128xf32>
    %cst_127 = arith.constant dense<0.000000e+00> : vector<8x128xf32>
    %258 = tpu.matmul %230, %41, %cst_127 {dimension_numbers = #tpu.dot_dimension_numbers<[1], [0], [0], [1], [0, 0, 1, 1], [], []>} : vector<8x128xf32>, vector<128x128xf32>, vector<8x128xf32> -> vector<8x128xf32>
    %259 = vector.broadcast %43 : vector<1x128xf32> to vector<8x128xf32>
    %260 = arith.addf %258, %259 : vector<8x128xf32>
    %261 = arith.mulf %244, %260 : vector<8x128xf32>
    %262 = arith.addf %257, %261 : vector<8x128xf32>
    %263 = math.tanh %262 : vector<8x128xf32>
    %cst_128 = arith.constant 1.000000e+00 : f32
    %264 = vector.broadcast %cst_128 : f32 to vector<8x128xf32>
    %265 = arith.subf %264, %254 : vector<8x128xf32>
    %266 = arith.mulf %265, %263 : vector<8x128xf32>
    %267 = arith.mulf %254, %230 : vector<8x128xf32>
    %268 = arith.addf %266, %267 : vector<8x128xf32>
    %269 = arith.index_cast %c5_i32 : i32 to index
    %c0_129 = arith.constant 0 : index
    %c0_130 = arith.constant 0 : index
    %270 = vector.load %arg14[%269, %c0_129, %c0_130] : memref<8x8x128xf32, #tpu.memory_space<vmem>>, vector<1x8x128xf32>
    %271 = vector.shape_cast %270 : vector<1x8x128xf32> to vector<8x128xf32>
    %272 = vector.shape_cast %268 : vector<8x128xf32> to vector<1x8x128xf32>
    tpu.vector_store %arg14[%269, %c0_129, %c0_130], %272 {strides = array<i32>} : memref<8x8x128xf32, #tpu.memory_space<vmem>>, vector<1x8x128xf32>,
    %c6_i32 = arith.constant 6 : i32
    %273 = arith.index_cast %c6_i32 : i32 to index
    %c0_131 = arith.constant 0 : index
    %c0_132 = arith.constant 0 : index
    %274 = vector.load %arg11[%273, %c0_131, %c0_132] : memref<8x8x128xf32, #tpu.memory_space<vmem>>, vector<1x8x128xf32>
    %275 = vector.shape_cast %274 : vector<1x8x128xf32> to vector<8x128xf32>
    %cst_133 = arith.constant dense<0.000000e+00> : vector<8x128xf32>
    %276 = tpu.matmul %268, %37, %cst_133 {dimension_numbers = #tpu.dot_dimension_numbers<[1], [0], [0], [1], [0, 0, 1, 1], [], []>} : vector<8x128xf32>, vector<128x128xf32>, vector<8x128xf32> -> vector<8x128xf32>
    %277 = arith.addf %275, %276 : vector<8x128xf32>
    %278 = arith.negf %277 : vector<8x128xf32>
    %279 = math.exp %278 : vector<8x128xf32>
    %cst_134 = arith.constant 1.000000e+00 : f32
    %280 = vector.broadcast %cst_134 : f32 to vector<8x128xf32>
    %281 = arith.addf %280, %279 : vector<8x128xf32>
    %282 = arith.divf %280, %281 : vector<8x128xf32>
    %283 = arith.index_cast %c6_i32 : i32 to index
    %c0_135 = arith.constant 0 : index
    %c0_136 = arith.constant 0 : index
    %284 = vector.load %arg12[%283, %c0_135, %c0_136] : memref<8x8x128xf32, #tpu.memory_space<vmem>>, vector<1x8x128xf32>
    %285 = vector.shape_cast %284 : vector<1x8x128xf32> to vector<8x128xf32>
    %cst_137 = arith.constant dense<0.000000e+00> : vector<8x128xf32>
    %286 = tpu.matmul %268, %39, %cst_137 {dimension_numbers = #tpu.dot_dimension_numbers<[1], [0], [0], [1], [0, 0, 1, 1], [], []>} : vector<8x128xf32>, vector<128x128xf32>, vector<8x128xf32> -> vector<8x128xf32>
    %287 = arith.addf %285, %286 : vector<8x128xf32>
    %288 = arith.negf %287 : vector<8x128xf32>
    %289 = math.exp %288 : vector<8x128xf32>
    %cst_138 = arith.constant 1.000000e+00 : f32
    %290 = vector.broadcast %cst_138 : f32 to vector<8x128xf32>
    %291 = arith.addf %290, %289 : vector<8x128xf32>
    %292 = arith.divf %290, %291 : vector<8x128xf32>
    %293 = arith.index_cast %c6_i32 : i32 to index
    %c0_139 = arith.constant 0 : index
    %c0_140 = arith.constant 0 : index
    %294 = vector.load %arg13[%293, %c0_139, %c0_140] : memref<8x8x128xf32, #tpu.memory_space<vmem>>, vector<1x8x128xf32>
    %295 = vector.shape_cast %294 : vector<1x8x128xf32> to vector<8x128xf32>
    %cst_141 = arith.constant dense<0.000000e+00> : vector<8x128xf32>
    %296 = tpu.matmul %268, %41, %cst_141 {dimension_numbers = #tpu.dot_dimension_numbers<[1], [0], [0], [1], [0, 0, 1, 1], [], []>} : vector<8x128xf32>, vector<128x128xf32>, vector<8x128xf32> -> vector<8x128xf32>
    %297 = vector.broadcast %43 : vector<1x128xf32> to vector<8x128xf32>
    %298 = arith.addf %296, %297 : vector<8x128xf32>
    %299 = arith.mulf %282, %298 : vector<8x128xf32>
    %300 = arith.addf %295, %299 : vector<8x128xf32>
    %301 = math.tanh %300 : vector<8x128xf32>
    %cst_142 = arith.constant 1.000000e+00 : f32
    %302 = vector.broadcast %cst_142 : f32 to vector<8x128xf32>
    %303 = arith.subf %302, %292 : vector<8x128xf32>
    %304 = arith.mulf %303, %301 : vector<8x128xf32>
    %305 = arith.mulf %292, %268 : vector<8x128xf32>
    %306 = arith.addf %304, %305 : vector<8x128xf32>
    %307 = arith.index_cast %c6_i32 : i32 to index
    %c0_143 = arith.constant 0 : index
    %c0_144 = arith.constant 0 : index
    %308 = vector.load %arg14[%307, %c0_143, %c0_144] : memref<8x8x128xf32, #tpu.memory_space<vmem>>, vector<1x8x128xf32>
    %309 = vector.shape_cast %308 : vector<1x8x128xf32> to vector<8x128xf32>
    %310 = vector.shape_cast %306 : vector<8x128xf32> to vector<1x8x128xf32>
    tpu.vector_store %arg14[%307, %c0_143, %c0_144], %310 {strides = array<i32>} : memref<8x8x128xf32, #tpu.memory_space<vmem>>, vector<1x8x128xf32>,
    %c7_i32 = arith.constant 7 : i32
    %311 = arith.index_cast %c7_i32 : i32 to index
    %c0_145 = arith.constant 0 : index
    %c0_146 = arith.constant 0 : index
    %312 = vector.load %arg11[%311, %c0_145, %c0_146] : memref<8x8x128xf32, #tpu.memory_space<vmem>>, vector<1x8x128xf32>
    %313 = vector.shape_cast %312 : vector<1x8x128xf32> to vector<8x128xf32>
    %cst_147 = arith.constant dense<0.000000e+00> : vector<8x128xf32>
    %314 = tpu.matmul %306, %37, %cst_147 {dimension_numbers = #tpu.dot_dimension_numbers<[1], [0], [0], [1], [0, 0, 1, 1], [], []>} : vector<8x128xf32>, vector<128x128xf32>, vector<8x128xf32> -> vector<8x128xf32>
    %315 = arith.addf %313, %314 : vector<8x128xf32>
    %316 = arith.negf %315 : vector<8x128xf32>
    %317 = math.exp %316 : vector<8x128xf32>
    %cst_148 = arith.constant 1.000000e+00 : f32
    %318 = vector.broadcast %cst_148 : f32 to vector<8x128xf32>
    %319 = arith.addf %318, %317 : vector<8x128xf32>
    %320 = arith.divf %318, %319 : vector<8x128xf32>
    %321 = arith.index_cast %c7_i32 : i32 to index
    %c0_149 = arith.constant 0 : index
    %c0_150 = arith.constant 0 : index
    %322 = vector.load %arg12[%321, %c0_149, %c0_150] : memref<8x8x128xf32, #tpu.memory_space<vmem>>, vector<1x8x128xf32>
    %323 = vector.shape_cast %322 : vector<1x8x128xf32> to vector<8x128xf32>
    %cst_151 = arith.constant dense<0.000000e+00> : vector<8x128xf32>
    %324 = tpu.matmul %306, %39, %cst_151 {dimension_numbers = #tpu.dot_dimension_numbers<[1], [0], [0], [1], [0, 0, 1, 1], [], []>} : vector<8x128xf32>, vector<128x128xf32>, vector<8x128xf32> -> vector<8x128xf32>
    %325 = arith.addf %323, %324 : vector<8x128xf32>
    %326 = arith.negf %325 : vector<8x128xf32>
    %327 = math.exp %326 : vector<8x128xf32>
    %cst_152 = arith.constant 1.000000e+00 : f32
    %328 = vector.broadcast %cst_152 : f32 to vector<8x128xf32>
    %329 = arith.addf %328, %327 : vector<8x128xf32>
    %330 = arith.divf %328, %329 : vector<8x128xf32>
    %331 = arith.index_cast %c7_i32 : i32 to index
    %c0_153 = arith.constant 0 : index
    %c0_154 = arith.constant 0 : index
    %332 = vector.load %arg13[%331, %c0_153, %c0_154] : memref<8x8x128xf32, #tpu.memory_space<vmem>>, vector<1x8x128xf32>
    %333 = vector.shape_cast %332 : vector<1x8x128xf32> to vector<8x128xf32>
    %cst_155 = arith.constant dense<0.000000e+00> : vector<8x128xf32>
    %334 = tpu.matmul %306, %41, %cst_155 {dimension_numbers = #tpu.dot_dimension_numbers<[1], [0], [0], [1], [0, 0, 1, 1], [], []>} : vector<8x128xf32>, vector<128x128xf32>, vector<8x128xf32> -> vector<8x128xf32>
    %335 = vector.broadcast %43 : vector<1x128xf32> to vector<8x128xf32>
    %336 = arith.addf %334, %335 : vector<8x128xf32>
    %337 = arith.mulf %320, %336 : vector<8x128xf32>
    %338 = arith.addf %333, %337 : vector<8x128xf32>
    %339 = math.tanh %338 : vector<8x128xf32>
    %cst_156 = arith.constant 1.000000e+00 : f32
    %340 = vector.broadcast %cst_156 : f32 to vector<8x128xf32>
    %341 = arith.subf %340, %330 : vector<8x128xf32>
    %342 = arith.mulf %341, %339 : vector<8x128xf32>
    %343 = arith.mulf %330, %306 : vector<8x128xf32>
    %344 = arith.addf %342, %343 : vector<8x128xf32>
    %345 = arith.index_cast %c7_i32 : i32 to index
    %c0_157 = arith.constant 0 : index
    %c0_158 = arith.constant 0 : index
    %346 = vector.load %arg14[%345, %c0_157, %c0_158] : memref<8x8x128xf32, #tpu.memory_space<vmem>>, vector<1x8x128xf32>
    %347 = vector.shape_cast %346 : vector<1x8x128xf32> to vector<8x128xf32>
    %348 = vector.shape_cast %344 : vector<8x128xf32> to vector<1x8x128xf32>
    tpu.vector_store %arg14[%345, %c0_157, %c0_158], %348 {strides = array<i32>} : memref<8x8x128xf32, #tpu.memory_space<vmem>>, vector<1x8x128xf32>,
    %c8_i32 = arith.constant 8 : i32
    %c0_159 = arith.constant 0 : index
    %c0_160 = arith.constant 0 : index
    %c0_161 = arith.constant 0 : index
    %349 = vector.load %arg10[%c0_159, %c0_160, %c0_161] : memref<2x8x128xf32, #tpu.memory_space<vmem>>, vector<1x8x128xf32>
    %350 = vector.shape_cast %349 : vector<1x8x128xf32> to vector<8x128xf32>
    %351 = vector.shape_cast %344 : vector<8x128xf32> to vector<1x8x128xf32>
    tpu.vector_store %arg10[%c0_159, %c0_160, %c0_161], %351 {strides = array<i32>} : memref<2x8x128xf32, #tpu.memory_space<vmem>>, vector<1x8x128xf32>,
    %c0_162 = arith.constant 0 : index
    %c0_163 = arith.constant 0 : index
    %c0_164 = arith.constant 0 : index
    %352 = vector.load %arg14[%c0_162, %c0_163, %c0_164] : memref<8x8x128xf32, #tpu.memory_space<vmem>>, vector<8x8x128xf32>
    %353 = vector.shape_cast %352 : vector<8x8x128xf32> to vector<64x128xf32>
    %c0_165 = arith.constant 0 : index
    %c0_166 = arith.constant 0 : index
    %c0_167 = arith.constant 0 : index
    %354 = vector.load %arg5[%c0_165, %c0_166, %c0_167] : memref<3x128x128xf32, #tpu.memory_space<vmem>>, vector<1x128x128xf32>
    %355 = vector.shape_cast %354 : vector<1x128x128xf32> to vector<128x128xf32>
    %cst_168 = arith.constant dense<0.000000e+00> : vector<64x128xf32>
    %356 = tpu.matmul %353, %355, %cst_168 {dimension_numbers = #tpu.dot_dimension_numbers<[1], [0], [0], [1], [0, 0, 1, 1], [], []>} : vector<64x128xf32>, vector<128x128xf32>, vector<64x128xf32> -> vector<64x128xf32>
    %c0_169 = arith.constant 0 : index
    %c0_170 = arith.constant 0 : index
    %c0_171 = arith.constant 0 : index
    %357 = vector.load %arg7[%c0_169, %c0_170, %c0_171] : memref<3x1x128xf32, #tpu.memory_space<vmem>>, vector<1x1x128xf32>
    %358 = vector.shape_cast %357 : vector<1x1x128xf32> to vector<1x128xf32>
    %359 = vector.broadcast %358 : vector<1x128xf32> to vector<64x128xf32>
    %360 = arith.addf %356, %359 : vector<64x128xf32>
    %c0_172 = arith.constant 0 : index
    %c0_173 = arith.constant 0 : index
    %c0_174 = arith.constant 0 : index
    %361 = vector.load %arg8[%c0_172, %c0_173, %c0_174] : memref<3x1x128xf32, #tpu.memory_space<vmem>>, vector<1x1x128xf32>
    %362 = vector.shape_cast %361 : vector<1x1x128xf32> to vector<1x128xf32>
    %363 = vector.broadcast %362 : vector<1x128xf32> to vector<64x128xf32>
    %364 = arith.addf %360, %363 : vector<64x128xf32>
    %c1_175 = arith.constant 1 : index
    %c0_176 = arith.constant 0 : index
    %c0_177 = arith.constant 0 : index
    %365 = vector.load %arg5[%c1_175, %c0_176, %c0_177] : memref<3x128x128xf32, #tpu.memory_space<vmem>>, vector<1x128x128xf32>
    %366 = vector.shape_cast %365 : vector<1x128x128xf32> to vector<128x128xf32>
    %cst_178 = arith.constant dense<0.000000e+00> : vector<64x128xf32>
    %367 = tpu.matmul %353, %366, %cst_178 {dimension_numbers = #tpu.dot_dimension_numbers<[1], [0], [0], [1], [0, 0, 1, 1], [], []>} : vector<64x128xf32>, vector<128x128xf32>, vector<64x128xf32> -> vector<64x128xf32>
    %c1_179 = arith.constant 1 : index
    %c0_180 = arith.constant 0 : index
    %c0_181 = arith.constant 0 : index
    %368 = vector.load %arg7[%c1_179, %c0_180, %c0_181] : memref<3x1x128xf32, #tpu.memory_space<vmem>>, vector<1x1x128xf32>
    %369 = vector.shape_cast %368 : vector<1x1x128xf32> to vector<1x128xf32>
    %370 = vector.broadcast %369 : vector<1x128xf32> to vector<64x128xf32>
    %371 = arith.addf %367, %370 : vector<64x128xf32>
    %c1_182 = arith.constant 1 : index
    %c0_183 = arith.constant 0 : index
    %c0_184 = arith.constant 0 : index
    %372 = vector.load %arg8[%c1_182, %c0_183, %c0_184] : memref<3x1x128xf32, #tpu.memory_space<vmem>>, vector<1x1x128xf32>
    %373 = vector.shape_cast %372 : vector<1x1x128xf32> to vector<1x128xf32>
    %374 = vector.broadcast %373 : vector<1x128xf32> to vector<64x128xf32>
    %375 = arith.addf %371, %374 : vector<64x128xf32>
    %c2_185 = arith.constant 2 : index
    %c0_186 = arith.constant 0 : index
    %c0_187 = arith.constant 0 : index
    %376 = vector.load %arg5[%c2_185, %c0_186, %c0_187] : memref<3x128x128xf32, #tpu.memory_space<vmem>>, vector<1x128x128xf32>
    %377 = vector.shape_cast %376 : vector<1x128x128xf32> to vector<128x128xf32>
    %cst_188 = arith.constant dense<0.000000e+00> : vector<64x128xf32>
    %378 = tpu.matmul %353, %377, %cst_188 {dimension_numbers = #tpu.dot_dimension_numbers<[1], [0], [0], [1], [0, 0, 1, 1], [], []>} : vector<64x128xf32>, vector<128x128xf32>, vector<64x128xf32> -> vector<64x128xf32>
    %c2_189 = arith.constant 2 : index
    %c0_190 = arith.constant 0 : index
    %c0_191 = arith.constant 0 : index
    %379 = vector.load %arg7[%c2_189, %c0_190, %c0_191] : memref<3x1x128xf32, #tpu.memory_space<vmem>>, vector<1x1x128xf32>
    %380 = vector.shape_cast %379 : vector<1x1x128xf32> to vector<1x128xf32>
    %381 = vector.broadcast %380 : vector<1x128xf32> to vector<64x128xf32>
    %382 = arith.addf %378, %381 : vector<64x128xf32>
    %383 = vector.shape_cast %364 : vector<64x128xf32> to vector<8x8x128xf32>
    %c0_192 = arith.constant 0 : index
    %c0_193 = arith.constant 0 : index
    %c0_194 = arith.constant 0 : index
    %384 = vector.load %arg11[%c0_192, %c0_193, %c0_194] : memref<8x8x128xf32, #tpu.memory_space<vmem>>, vector<8x8x128xf32>
    tpu.vector_store %arg11[%c0_192, %c0_193, %c0_194], %383 {strides = array<i32>} : memref<8x8x128xf32, #tpu.memory_space<vmem>>, vector<8x8x128xf32>,
    %385 = vector.shape_cast %375 : vector<64x128xf32> to vector<8x8x128xf32>
    %c0_195 = arith.constant 0 : index
    %c0_196 = arith.constant 0 : index
    %c0_197 = arith.constant 0 : index
    %386 = vector.load %arg12[%c0_195, %c0_196, %c0_197] : memref<8x8x128xf32, #tpu.memory_space<vmem>>, vector<8x8x128xf32>
    tpu.vector_store %arg12[%c0_195, %c0_196, %c0_197], %385 {strides = array<i32>} : memref<8x8x128xf32, #tpu.memory_space<vmem>>, vector<8x8x128xf32>,
    %387 = vector.shape_cast %382 : vector<64x128xf32> to vector<8x8x128xf32>
    %c0_198 = arith.constant 0 : index
    %c0_199 = arith.constant 0 : index
    %c0_200 = arith.constant 0 : index
    %388 = vector.load %arg13[%c0_198, %c0_199, %c0_200] : memref<8x8x128xf32, #tpu.memory_space<vmem>>, vector<8x8x128xf32>
    tpu.vector_store %arg13[%c0_198, %c0_199, %c0_200], %387 {strides = array<i32>} : memref<8x8x128xf32, #tpu.memory_space<vmem>>, vector<8x8x128xf32>,
    %c0_201 = arith.constant 0 : index
    %c0_202 = arith.constant 0 : index
    %c0_203 = arith.constant 0 : index
    %389 = vector.load %arg6[%c0_201, %c0_202, %c0_203] : memref<3x128x128xf32, #tpu.memory_space<vmem>>, vector<1x128x128xf32>
    %390 = vector.shape_cast %389 : vector<1x128x128xf32> to vector<128x128xf32>
    %c1_204 = arith.constant 1 : index
    %c0_205 = arith.constant 0 : index
    %c0_206 = arith.constant 0 : index
    %391 = vector.load %arg6[%c1_204, %c0_205, %c0_206] : memref<3x128x128xf32, #tpu.memory_space<vmem>>, vector<1x128x128xf32>
    %392 = vector.shape_cast %391 : vector<1x128x128xf32> to vector<128x128xf32>
    %c2_207 = arith.constant 2 : index
    %c0_208 = arith.constant 0 : index
    %c0_209 = arith.constant 0 : index
    %393 = vector.load %arg6[%c2_207, %c0_208, %c0_209] : memref<3x128x128xf32, #tpu.memory_space<vmem>>, vector<1x128x128xf32>
    %394 = vector.shape_cast %393 : vector<1x128x128xf32> to vector<128x128xf32>
    %c2_210 = arith.constant 2 : index
    %c0_211 = arith.constant 0 : index
    %c0_212 = arith.constant 0 : index
    %395 = vector.load %arg8[%c2_210, %c0_211, %c0_212] : memref<3x1x128xf32, #tpu.memory_space<vmem>>, vector<1x1x128xf32>
    %396 = vector.shape_cast %395 : vector<1x1x128xf32> to vector<1x128xf32>
    %cst_213 = arith.constant 0.000000e+00 : f32
    %397 = vector.broadcast %cst_213 : f32 to vector<8x128xf32>
    %c0_i32_214 = arith.constant 0 : i32
    %398 = arith.index_cast %c0_i32_214 : i32 to index
    %c0_215 = arith.constant 0 : index
    %c0_216 = arith.constant 0 : index
    %399 = vector.load %arg11[%398, %c0_215, %c0_216] : memref<8x8x128xf32, #tpu.memory_space<vmem>>, vector<1x8x128xf32>
    %400 = vector.shape_cast %399 : vector<1x8x128xf32> to vector<8x128xf32>
    %cst_217 = arith.constant dense<0.000000e+00> : vector<8x128xf32>
    %401 = tpu.matmul %397, %390, %cst_217 {dimension_numbers = #tpu.dot_dimension_numbers<[1], [0], [0], [1], [0, 0, 1, 1], [], []>} : vector<8x128xf32>, vector<128x128xf32>, vector<8x128xf32> -> vector<8x128xf32>
    %402 = arith.addf %400, %401 : vector<8x128xf32>
    %403 = arith.negf %402 : vector<8x128xf32>
    %404 = math.exp %403 : vector<8x128xf32>
    %cst_218 = arith.constant 1.000000e+00 : f32
    %405 = vector.broadcast %cst_218 : f32 to vector<8x128xf32>
    %406 = arith.addf %405, %404 : vector<8x128xf32>
    %407 = arith.divf %405, %406 : vector<8x128xf32>
    %408 = arith.index_cast %c0_i32_214 : i32 to index
    %c0_219 = arith.constant 0 : index
    %c0_220 = arith.constant 0 : index
    %409 = vector.load %arg12[%408, %c0_219, %c0_220] : memref<8x8x128xf32, #tpu.memory_space<vmem>>, vector<1x8x128xf32>
    %410 = vector.shape_cast %409 : vector<1x8x128xf32> to vector<8x128xf32>
    %cst_221 = arith.constant dense<0.000000e+00> : vector<8x128xf32>
    %411 = tpu.matmul %397, %392, %cst_221 {dimension_numbers = #tpu.dot_dimension_numbers<[1], [0], [0], [1], [0, 0, 1, 1], [], []>} : vector<8x128xf32>, vector<128x128xf32>, vector<8x128xf32> -> vector<8x128xf32>
    %412 = arith.addf %410, %411 : vector<8x128xf32>
    %413 = arith.negf %412 : vector<8x128xf32>
    %414 = math.exp %413 : vector<8x128xf32>
    %cst_222 = arith.constant 1.000000e+00 : f32
    %415 = vector.broadcast %cst_222 : f32 to vector<8x128xf32>
    %416 = arith.addf %415, %414 : vector<8x128xf32>
    %417 = arith.divf %415, %416 : vector<8x128xf32>
    %418 = arith.index_cast %c0_i32_214 : i32 to index
    %c0_223 = arith.constant 0 : index
    %c0_224 = arith.constant 0 : index
    %419 = vector.load %arg13[%418, %c0_223, %c0_224] : memref<8x8x128xf32, #tpu.memory_space<vmem>>, vector<1x8x128xf32>
    %420 = vector.shape_cast %419 : vector<1x8x128xf32> to vector<8x128xf32>
    %cst_225 = arith.constant dense<0.000000e+00> : vector<8x128xf32>
    %421 = tpu.matmul %397, %394, %cst_225 {dimension_numbers = #tpu.dot_dimension_numbers<[1], [0], [0], [1], [0, 0, 1, 1], [], []>} : vector<8x128xf32>, vector<128x128xf32>, vector<8x128xf32> -> vector<8x128xf32>
    %422 = vector.broadcast %396 : vector<1x128xf32> to vector<8x128xf32>
    %423 = arith.addf %421, %422 : vector<8x128xf32>
    %424 = arith.mulf %407, %423 : vector<8x128xf32>
    %425 = arith.addf %420, %424 : vector<8x128xf32>
    %426 = math.tanh %425 : vector<8x128xf32>
    %cst_226 = arith.constant 1.000000e+00 : f32
    %427 = vector.broadcast %cst_226 : f32 to vector<8x128xf32>
    %428 = arith.subf %427, %417 : vector<8x128xf32>
    %429 = arith.mulf %428, %426 : vector<8x128xf32>
    %430 = arith.mulf %417, %397 : vector<8x128xf32>
    %431 = arith.addf %429, %430 : vector<8x128xf32>
    %432 = arith.index_cast %c0_i32_214 : i32 to index
    %c0_227 = arith.constant 0 : index
    %c0_228 = arith.constant 0 : index
    %433 = vector.load %arg9[%432, %c0_227, %c0_228] : memref<8x8x128xf32, #tpu.memory_space<vmem>>, vector<1x8x128xf32>
    %434 = vector.shape_cast %433 : vector<1x8x128xf32> to vector<8x128xf32>
    %435 = vector.shape_cast %431 : vector<8x128xf32> to vector<1x8x128xf32>
    tpu.vector_store %arg9[%432, %c0_227, %c0_228], %435 {strides = array<i32>} : memref<8x8x128xf32, #tpu.memory_space<vmem>>, vector<1x8x128xf32>,
    %c1_i32_229 = arith.constant 1 : i32
    %436 = arith.index_cast %c1_i32_229 : i32 to index
    %c0_230 = arith.constant 0 : index
    %c0_231 = arith.constant 0 : index
    %437 = vector.load %arg11[%436, %c0_230, %c0_231] : memref<8x8x128xf32, #tpu.memory_space<vmem>>, vector<1x8x128xf32>
    %438 = vector.shape_cast %437 : vector<1x8x128xf32> to vector<8x128xf32>
    %cst_232 = arith.constant dense<0.000000e+00> : vector<8x128xf32>
    %439 = tpu.matmul %431, %390, %cst_232 {dimension_numbers = #tpu.dot_dimension_numbers<[1], [0], [0], [1], [0, 0, 1, 1], [], []>} : vector<8x128xf32>, vector<128x128xf32>, vector<8x128xf32> -> vector<8x128xf32>
    %440 = arith.addf %438, %439 : vector<8x128xf32>
    %441 = arith.negf %440 : vector<8x128xf32>
    %442 = math.exp %441 : vector<8x128xf32>
    %cst_233 = arith.constant 1.000000e+00 : f32
    %443 = vector.broadcast %cst_233 : f32 to vector<8x128xf32>
    %444 = arith.addf %443, %442 : vector<8x128xf32>
    %445 = arith.divf %443, %444 : vector<8x128xf32>
    %446 = arith.index_cast %c1_i32_229 : i32 to index
    %c0_234 = arith.constant 0 : index
    %c0_235 = arith.constant 0 : index
    %447 = vector.load %arg12[%446, %c0_234, %c0_235] : memref<8x8x128xf32, #tpu.memory_space<vmem>>, vector<1x8x128xf32>
    %448 = vector.shape_cast %447 : vector<1x8x128xf32> to vector<8x128xf32>
    %cst_236 = arith.constant dense<0.000000e+00> : vector<8x128xf32>
    %449 = tpu.matmul %431, %392, %cst_236 {dimension_numbers = #tpu.dot_dimension_numbers<[1], [0], [0], [1], [0, 0, 1, 1], [], []>} : vector<8x128xf32>, vector<128x128xf32>, vector<8x128xf32> -> vector<8x128xf32>
    %450 = arith.addf %448, %449 : vector<8x128xf32>
    %451 = arith.negf %450 : vector<8x128xf32>
    %452 = math.exp %451 : vector<8x128xf32>
    %cst_237 = arith.constant 1.000000e+00 : f32
    %453 = vector.broadcast %cst_237 : f32 to vector<8x128xf32>
    %454 = arith.addf %453, %452 : vector<8x128xf32>
    %455 = arith.divf %453, %454 : vector<8x128xf32>
    %456 = arith.index_cast %c1_i32_229 : i32 to index
    %c0_238 = arith.constant 0 : index
    %c0_239 = arith.constant 0 : index
    %457 = vector.load %arg13[%456, %c0_238, %c0_239] : memref<8x8x128xf32, #tpu.memory_space<vmem>>, vector<1x8x128xf32>
    %458 = vector.shape_cast %457 : vector<1x8x128xf32> to vector<8x128xf32>
    %cst_240 = arith.constant dense<0.000000e+00> : vector<8x128xf32>
    %459 = tpu.matmul %431, %394, %cst_240 {dimension_numbers = #tpu.dot_dimension_numbers<[1], [0], [0], [1], [0, 0, 1, 1], [], []>} : vector<8x128xf32>, vector<128x128xf32>, vector<8x128xf32> -> vector<8x128xf32>
    %460 = vector.broadcast %396 : vector<1x128xf32> to vector<8x128xf32>
    %461 = arith.addf %459, %460 : vector<8x128xf32>
    %462 = arith.mulf %445, %461 : vector<8x128xf32>
    %463 = arith.addf %458, %462 : vector<8x128xf32>
    %464 = math.tanh %463 : vector<8x128xf32>
    %cst_241 = arith.constant 1.000000e+00 : f32
    %465 = vector.broadcast %cst_241 : f32 to vector<8x128xf32>
    %466 = arith.subf %465, %455 : vector<8x128xf32>
    %467 = arith.mulf %466, %464 : vector<8x128xf32>
    %468 = arith.mulf %455, %431 : vector<8x128xf32>
    %469 = arith.addf %467, %468 : vector<8x128xf32>
    %470 = arith.index_cast %c1_i32_229 : i32 to index
    %c0_242 = arith.constant 0 : index
    %c0_243 = arith.constant 0 : index
    %471 = vector.load %arg9[%470, %c0_242, %c0_243] : memref<8x8x128xf32, #tpu.memory_space<vmem>>, vector<1x8x128xf32>
    %472 = vector.shape_cast %471 : vector<1x8x128xf32> to vector<8x128xf32>
    %473 = vector.shape_cast %469 : vector<8x128xf32> to vector<1x8x128xf32>
    tpu.vector_store %arg9[%470, %c0_242, %c0_243], %473 {strides = array<i32>} : memref<8x8x128xf32, #tpu.memory_space<vmem>>, vector<1x8x128xf32>,
    %c2_i32_244 = arith.constant 2 : i32
    %474 = arith.index_cast %c2_i32_244 : i32 to index
    %c0_245 = arith.constant 0 : index
    %c0_246 = arith.constant 0 : index
    %475 = vector.load %arg11[%474, %c0_245, %c0_246] : memref<8x8x128xf32, #tpu.memory_space<vmem>>, vector<1x8x128xf32>
    %476 = vector.shape_cast %475 : vector<1x8x128xf32> to vector<8x128xf32>
    %cst_247 = arith.constant dense<0.000000e+00> : vector<8x128xf32>
    %477 = tpu.matmul %469, %390, %cst_247 {dimension_numbers = #tpu.dot_dimension_numbers<[1], [0], [0], [1], [0, 0, 1, 1], [], []>} : vector<8x128xf32>, vector<128x128xf32>, vector<8x128xf32> -> vector<8x128xf32>
    %478 = arith.addf %476, %477 : vector<8x128xf32>
    %479 = arith.negf %478 : vector<8x128xf32>
    %480 = math.exp %479 : vector<8x128xf32>
    %cst_248 = arith.constant 1.000000e+00 : f32
    %481 = vector.broadcast %cst_248 : f32 to vector<8x128xf32>
    %482 = arith.addf %481, %480 : vector<8x128xf32>
    %483 = arith.divf %481, %482 : vector<8x128xf32>
    %484 = arith.index_cast %c2_i32_244 : i32 to index
    %c0_249 = arith.constant 0 : index
    %c0_250 = arith.constant 0 : index
    %485 = vector.load %arg12[%484, %c0_249, %c0_250] : memref<8x8x128xf32, #tpu.memory_space<vmem>>, vector<1x8x128xf32>
    %486 = vector.shape_cast %485 : vector<1x8x128xf32> to vector<8x128xf32>
    %cst_251 = arith.constant dense<0.000000e+00> : vector<8x128xf32>
    %487 = tpu.matmul %469, %392, %cst_251 {dimension_numbers = #tpu.dot_dimension_numbers<[1], [0], [0], [1], [0, 0, 1, 1], [], []>} : vector<8x128xf32>, vector<128x128xf32>, vector<8x128xf32> -> vector<8x128xf32>
    %488 = arith.addf %486, %487 : vector<8x128xf32>
    %489 = arith.negf %488 : vector<8x128xf32>
    %490 = math.exp %489 : vector<8x128xf32>
    %cst_252 = arith.constant 1.000000e+00 : f32
    %491 = vector.broadcast %cst_252 : f32 to vector<8x128xf32>
    %492 = arith.addf %491, %490 : vector<8x128xf32>
    %493 = arith.divf %491, %492 : vector<8x128xf32>
    %494 = arith.index_cast %c2_i32_244 : i32 to index
    %c0_253 = arith.constant 0 : index
    %c0_254 = arith.constant 0 : index
    %495 = vector.load %arg13[%494, %c0_253, %c0_254] : memref<8x8x128xf32, #tpu.memory_space<vmem>>, vector<1x8x128xf32>
    %496 = vector.shape_cast %495 : vector<1x8x128xf32> to vector<8x128xf32>
    %cst_255 = arith.constant dense<0.000000e+00> : vector<8x128xf32>
    %497 = tpu.matmul %469, %394, %cst_255 {dimension_numbers = #tpu.dot_dimension_numbers<[1], [0], [0], [1], [0, 0, 1, 1], [], []>} : vector<8x128xf32>, vector<128x128xf32>, vector<8x128xf32> -> vector<8x128xf32>
    %498 = vector.broadcast %396 : vector<1x128xf32> to vector<8x128xf32>
    %499 = arith.addf %497, %498 : vector<8x128xf32>
    %500 = arith.mulf %483, %499 : vector<8x128xf32>
    %501 = arith.addf %496, %500 : vector<8x128xf32>
    %502 = math.tanh %501 : vector<8x128xf32>
    %cst_256 = arith.constant 1.000000e+00 : f32
    %503 = vector.broadcast %cst_256 : f32 to vector<8x128xf32>
    %504 = arith.subf %503, %493 : vector<8x128xf32>
    %505 = arith.mulf %504, %502 : vector<8x128xf32>
    %506 = arith.mulf %493, %469 : vector<8x128xf32>
    %507 = arith.addf %505, %506 : vector<8x128xf32>
    %508 = arith.index_cast %c2_i32_244 : i32 to index
    %c0_257 = arith.constant 0 : index
    %c0_258 = arith.constant 0 : index
    %509 = vector.load %arg9[%508, %c0_257, %c0_258] : memref<8x8x128xf32, #tpu.memory_space<vmem>>, vector<1x8x128xf32>
    %510 = vector.shape_cast %509 : vector<1x8x128xf32> to vector<8x128xf32>
    %511 = vector.shape_cast %507 : vector<8x128xf32> to vector<1x8x128xf32>
    tpu.vector_store %arg9[%508, %c0_257, %c0_258], %511 {strides = array<i32>} : memref<8x8x128xf32, #tpu.memory_space<vmem>>, vector<1x8x128xf32>,
    %c3_i32_259 = arith.constant 3 : i32
    %512 = arith.index_cast %c3_i32_259 : i32 to index
    %c0_260 = arith.constant 0 : index
    %c0_261 = arith.constant 0 : index
    %513 = vector.load %arg11[%512, %c0_260, %c0_261] : memref<8x8x128xf32, #tpu.memory_space<vmem>>, vector<1x8x128xf32>
    %514 = vector.shape_cast %513 : vector<1x8x128xf32> to vector<8x128xf32>
    %cst_262 = arith.constant dense<0.000000e+00> : vector<8x128xf32>
    %515 = tpu.matmul %507, %390, %cst_262 {dimension_numbers = #tpu.dot_dimension_numbers<[1], [0], [0], [1], [0, 0, 1, 1], [], []>} : vector<8x128xf32>, vector<128x128xf32>, vector<8x128xf32> -> vector<8x128xf32>
    %516 = arith.addf %514, %515 : vector<8x128xf32>
    %517 = arith.negf %516 : vector<8x128xf32>
    %518 = math.exp %517 : vector<8x128xf32>
    %cst_263 = arith.constant 1.000000e+00 : f32
    %519 = vector.broadcast %cst_263 : f32 to vector<8x128xf32>
    %520 = arith.addf %519, %518 : vector<8x128xf32>
    %521 = arith.divf %519, %520 : vector<8x128xf32>
    %522 = arith.index_cast %c3_i32_259 : i32 to index
    %c0_264 = arith.constant 0 : index
    %c0_265 = arith.constant 0 : index
    %523 = vector.load %arg12[%522, %c0_264, %c0_265] : memref<8x8x128xf32, #tpu.memory_space<vmem>>, vector<1x8x128xf32>
    %524 = vector.shape_cast %523 : vector<1x8x128xf32> to vector<8x128xf32>
    %cst_266 = arith.constant dense<0.000000e+00> : vector<8x128xf32>
    %525 = tpu.matmul %507, %392, %cst_266 {dimension_numbers = #tpu.dot_dimension_numbers<[1], [0], [0], [1], [0, 0, 1, 1], [], []>} : vector<8x128xf32>, vector<128x128xf32>, vector<8x128xf32> -> vector<8x128xf32>
    %526 = arith.addf %524, %525 : vector<8x128xf32>
    %527 = arith.negf %526 : vector<8x128xf32>
    %528 = math.exp %527 : vector<8x128xf32>
    %cst_267 = arith.constant 1.000000e+00 : f32
    %529 = vector.broadcast %cst_267 : f32 to vector<8x128xf32>
    %530 = arith.addf %529, %528 : vector<8x128xf32>
    %531 = arith.divf %529, %530 : vector<8x128xf32>
    %532 = arith.index_cast %c3_i32_259 : i32 to index
    %c0_268 = arith.constant 0 : index
    %c0_269 = arith.constant 0 : index
    %533 = vector.load %arg13[%532, %c0_268, %c0_269] : memref<8x8x128xf32, #tpu.memory_space<vmem>>, vector<1x8x128xf32>
    %534 = vector.shape_cast %533 : vector<1x8x128xf32> to vector<8x128xf32>
    %cst_270 = arith.constant dense<0.000000e+00> : vector<8x128xf32>
    %535 = tpu.matmul %507, %394, %cst_270 {dimension_numbers = #tpu.dot_dimension_numbers<[1], [0], [0], [1], [0, 0, 1, 1], [], []>} : vector<8x128xf32>, vector<128x128xf32>, vector<8x128xf32> -> vector<8x128xf32>
    %536 = vector.broadcast %396 : vector<1x128xf32> to vector<8x128xf32>
    %537 = arith.addf %535, %536 : vector<8x128xf32>
    %538 = arith.mulf %521, %537 : vector<8x128xf32>
    %539 = arith.addf %534, %538 : vector<8x128xf32>
    %540 = math.tanh %539 : vector<8x128xf32>
    %cst_271 = arith.constant 1.000000e+00 : f32
    %541 = vector.broadcast %cst_271 : f32 to vector<8x128xf32>
    %542 = arith.subf %541, %531 : vector<8x128xf32>
    %543 = arith.mulf %542, %540 : vector<8x128xf32>
    %544 = arith.mulf %531, %507 : vector<8x128xf32>
    %545 = arith.addf %543, %544 : vector<8x128xf32>
    %546 = arith.index_cast %c3_i32_259 : i32 to index
    %c0_272 = arith.constant 0 : index
    %c0_273 = arith.constant 0 : index
    %547 = vector.load %arg9[%546, %c0_272, %c0_273] : memref<8x8x128xf32, #tpu.memory_space<vmem>>, vector<1x8x128xf32>
    %548 = vector.shape_cast %547 : vector<1x8x128xf32> to vector<8x128xf32>
    %549 = vector.shape_cast %545 : vector<8x128xf32> to vector<1x8x128xf32>
    tpu.vector_store %arg9[%546, %c0_272, %c0_273], %549 {strides = array<i32>} : memref<8x8x128xf32, #tpu.memory_space<vmem>>, vector<1x8x128xf32>,
    %c4_i32_274 = arith.constant 4 : i32
    %550 = arith.index_cast %c4_i32_274 : i32 to index
    %c0_275 = arith.constant 0 : index
    %c0_276 = arith.constant 0 : index
    %551 = vector.load %arg11[%550, %c0_275, %c0_276] : memref<8x8x128xf32, #tpu.memory_space<vmem>>, vector<1x8x128xf32>
    %552 = vector.shape_cast %551 : vector<1x8x128xf32> to vector<8x128xf32>
    %cst_277 = arith.constant dense<0.000000e+00> : vector<8x128xf32>
    %553 = tpu.matmul %545, %390, %cst_277 {dimension_numbers = #tpu.dot_dimension_numbers<[1], [0], [0], [1], [0, 0, 1, 1], [], []>} : vector<8x128xf32>, vector<128x128xf32>, vector<8x128xf32> -> vector<8x128xf32>
    %554 = arith.addf %552, %553 : vector<8x128xf32>
    %555 = arith.negf %554 : vector<8x128xf32>
    %556 = math.exp %555 : vector<8x128xf32>
    %cst_278 = arith.constant 1.000000e+00 : f32
    %557 = vector.broadcast %cst_278 : f32 to vector<8x128xf32>
    %558 = arith.addf %557, %556 : vector<8x128xf32>
    %559 = arith.divf %557, %558 : vector<8x128xf32>
    %560 = arith.index_cast %c4_i32_274 : i32 to index
    %c0_279 = arith.constant 0 : index
    %c0_280 = arith.constant 0 : index
    %561 = vector.load %arg12[%560, %c0_279, %c0_280] : memref<8x8x128xf32, #tpu.memory_space<vmem>>, vector<1x8x128xf32>
    %562 = vector.shape_cast %561 : vector<1x8x128xf32> to vector<8x128xf32>
    %cst_281 = arith.constant dense<0.000000e+00> : vector<8x128xf32>
    %563 = tpu.matmul %545, %392, %cst_281 {dimension_numbers = #tpu.dot_dimension_numbers<[1], [0], [0], [1], [0, 0, 1, 1], [], []>} : vector<8x128xf32>, vector<128x128xf32>, vector<8x128xf32> -> vector<8x128xf32>
    %564 = arith.addf %562, %563 : vector<8x128xf32>
    %565 = arith.negf %564 : vector<8x128xf32>
    %566 = math.exp %565 : vector<8x128xf32>
    %cst_282 = arith.constant 1.000000e+00 : f32
    %567 = vector.broadcast %cst_282 : f32 to vector<8x128xf32>
    %568 = arith.addf %567, %566 : vector<8x128xf32>
    %569 = arith.divf %567, %568 : vector<8x128xf32>
    %570 = arith.index_cast %c4_i32_274 : i32 to index
    %c0_283 = arith.constant 0 : index
    %c0_284 = arith.constant 0 : index
    %571 = vector.load %arg13[%570, %c0_283, %c0_284] : memref<8x8x128xf32, #tpu.memory_space<vmem>>, vector<1x8x128xf32>
    %572 = vector.shape_cast %571 : vector<1x8x128xf32> to vector<8x128xf32>
    %cst_285 = arith.constant dense<0.000000e+00> : vector<8x128xf32>
    %573 = tpu.matmul %545, %394, %cst_285 {dimension_numbers = #tpu.dot_dimension_numbers<[1], [0], [0], [1], [0, 0, 1, 1], [], []>} : vector<8x128xf32>, vector<128x128xf32>, vector<8x128xf32> -> vector<8x128xf32>
    %574 = vector.broadcast %396 : vector<1x128xf32> to vector<8x128xf32>
    %575 = arith.addf %573, %574 : vector<8x128xf32>
    %576 = arith.mulf %559, %575 : vector<8x128xf32>
    %577 = arith.addf %572, %576 : vector<8x128xf32>
    %578 = math.tanh %577 : vector<8x128xf32>
    %cst_286 = arith.constant 1.000000e+00 : f32
    %579 = vector.broadcast %cst_286 : f32 to vector<8x128xf32>
    %580 = arith.subf %579, %569 : vector<8x128xf32>
    %581 = arith.mulf %580, %578 : vector<8x128xf32>
    %582 = arith.mulf %569, %545 : vector<8x128xf32>
    %583 = arith.addf %581, %582 : vector<8x128xf32>
    %584 = arith.index_cast %c4_i32_274 : i32 to index
    %c0_287 = arith.constant 0 : index
    %c0_288 = arith.constant 0 : index
    %585 = vector.load %arg9[%584, %c0_287, %c0_288] : memref<8x8x128xf32, #tpu.memory_space<vmem>>, vector<1x8x128xf32>
    %586 = vector.shape_cast %585 : vector<1x8x128xf32> to vector<8x128xf32>
    %587 = vector.shape_cast %583 : vector<8x128xf32> to vector<1x8x128xf32>
    tpu.vector_store %arg9[%584, %c0_287, %c0_288], %587 {strides = array<i32>} : memref<8x8x128xf32, #tpu.memory_space<vmem>>, vector<1x8x128xf32>,
    %c5_i32_289 = arith.constant 5 : i32
    %588 = arith.index_cast %c5_i32_289 : i32 to index
    %c0_290 = arith.constant 0 : index
    %c0_291 = arith.constant 0 : index
    %589 = vector.load %arg11[%588, %c0_290, %c0_291] : memref<8x8x128xf32, #tpu.memory_space<vmem>>, vector<1x8x128xf32>
    %590 = vector.shape_cast %589 : vector<1x8x128xf32> to vector<8x128xf32>
    %cst_292 = arith.constant dense<0.000000e+00> : vector<8x128xf32>
    %591 = tpu.matmul %583, %390, %cst_292 {dimension_numbers = #tpu.dot_dimension_numbers<[1], [0], [0], [1], [0, 0, 1, 1], [], []>} : vector<8x128xf32>, vector<128x128xf32>, vector<8x128xf32> -> vector<8x128xf32>
    %592 = arith.addf %590, %591 : vector<8x128xf32>
    %593 = arith.negf %592 : vector<8x128xf32>
    %594 = math.exp %593 : vector<8x128xf32>
    %cst_293 = arith.constant 1.000000e+00 : f32
    %595 = vector.broadcast %cst_293 : f32 to vector<8x128xf32>
    %596 = arith.addf %595, %594 : vector<8x128xf32>
    %597 = arith.divf %595, %596 : vector<8x128xf32>
    %598 = arith.index_cast %c5_i32_289 : i32 to index
    %c0_294 = arith.constant 0 : index
    %c0_295 = arith.constant 0 : index
    %599 = vector.load %arg12[%598, %c0_294, %c0_295] : memref<8x8x128xf32, #tpu.memory_space<vmem>>, vector<1x8x128xf32>
    %600 = vector.shape_cast %599 : vector<1x8x128xf32> to vector<8x128xf32>
    %cst_296 = arith.constant dense<0.000000e+00> : vector<8x128xf32>
    %601 = tpu.matmul %583, %392, %cst_296 {dimension_numbers = #tpu.dot_dimension_numbers<[1], [0], [0], [1], [0, 0, 1, 1], [], []>} : vector<8x128xf32>, vector<128x128xf32>, vector<8x128xf32> -> vector<8x128xf32>
    %602 = arith.addf %600, %601 : vector<8x128xf32>
    %603 = arith.negf %602 : vector<8x128xf32>
    %604 = math.exp %603 : vector<8x128xf32>
    %cst_297 = arith.constant 1.000000e+00 : f32
    %605 = vector.broadcast %cst_297 : f32 to vector<8x128xf32>
    %606 = arith.addf %605, %604 : vector<8x128xf32>
    %607 = arith.divf %605, %606 : vector<8x128xf32>
    %608 = arith.index_cast %c5_i32_289 : i32 to index
    %c0_298 = arith.constant 0 : index
    %c0_299 = arith.constant 0 : index
    %609 = vector.load %arg13[%608, %c0_298, %c0_299] : memref<8x8x128xf32, #tpu.memory_space<vmem>>, vector<1x8x128xf32>
    %610 = vector.shape_cast %609 : vector<1x8x128xf32> to vector<8x128xf32>
    %cst_300 = arith.constant dense<0.000000e+00> : vector<8x128xf32>
    %611 = tpu.matmul %583, %394, %cst_300 {dimension_numbers = #tpu.dot_dimension_numbers<[1], [0], [0], [1], [0, 0, 1, 1], [], []>} : vector<8x128xf32>, vector<128x128xf32>, vector<8x128xf32> -> vector<8x128xf32>
    %612 = vector.broadcast %396 : vector<1x128xf32> to vector<8x128xf32>
    %613 = arith.addf %611, %612 : vector<8x128xf32>
    %614 = arith.mulf %597, %613 : vector<8x128xf32>
    %615 = arith.addf %610, %614 : vector<8x128xf32>
    %616 = math.tanh %615 : vector<8x128xf32>
    %cst_301 = arith.constant 1.000000e+00 : f32
    %617 = vector.broadcast %cst_301 : f32 to vector<8x128xf32>
    %618 = arith.subf %617, %607 : vector<8x128xf32>
    %619 = arith.mulf %618, %616 : vector<8x128xf32>
    %620 = arith.mulf %607, %583 : vector<8x128xf32>
    %621 = arith.addf %619, %620 : vector<8x128xf32>
    %622 = arith.index_cast %c5_i32_289 : i32 to index
    %c0_302 = arith.constant 0 : index
    %c0_303 = arith.constant 0 : index
    %623 = vector.load %arg9[%622, %c0_302, %c0_303] : memref<8x8x128xf32, #tpu.memory_space<vmem>>, vector<1x8x128xf32>
    %624 = vector.shape_cast %623 : vector<1x8x128xf32> to vector<8x128xf32>
    %625 = vector.shape_cast %621 : vector<8x128xf32> to vector<1x8x128xf32>
    tpu.vector_store %arg9[%622, %c0_302, %c0_303], %625 {strides = array<i32>} : memref<8x8x128xf32, #tpu.memory_space<vmem>>, vector<1x8x128xf32>,
    %c6_i32_304 = arith.constant 6 : i32
    %626 = arith.index_cast %c6_i32_304 : i32 to index
    %c0_305 = arith.constant 0 : index
    %c0_306 = arith.constant 0 : index
    %627 = vector.load %arg11[%626, %c0_305, %c0_306] : memref<8x8x128xf32, #tpu.memory_space<vmem>>, vector<1x8x128xf32>
    %628 = vector.shape_cast %627 : vector<1x8x128xf32> to vector<8x128xf32>
    %cst_307 = arith.constant dense<0.000000e+00> : vector<8x128xf32>
    %629 = tpu.matmul %621, %390, %cst_307 {dimension_numbers = #tpu.dot_dimension_numbers<[1], [0], [0], [1], [0, 0, 1, 1], [], []>} : vector<8x128xf32>, vector<128x128xf32>, vector<8x128xf32> -> vector<8x128xf32>
    %630 = arith.addf %628, %629 : vector<8x128xf32>
    %631 = arith.negf %630 : vector<8x128xf32>
    %632 = math.exp %631 : vector<8x128xf32>
    %cst_308 = arith.constant 1.000000e+00 : f32
    %633 = vector.broadcast %cst_308 : f32 to vector<8x128xf32>
    %634 = arith.addf %633, %632 : vector<8x128xf32>
    %635 = arith.divf %633, %634 : vector<8x128xf32>
    %636 = arith.index_cast %c6_i32_304 : i32 to index
    %c0_309 = arith.constant 0 : index
    %c0_310 = arith.constant 0 : index
    %637 = vector.load %arg12[%636, %c0_309, %c0_310] : memref<8x8x128xf32, #tpu.memory_space<vmem>>, vector<1x8x128xf32>
    %638 = vector.shape_cast %637 : vector<1x8x128xf32> to vector<8x128xf32>
    %cst_311 = arith.constant dense<0.000000e+00> : vector<8x128xf32>
    %639 = tpu.matmul %621, %392, %cst_311 {dimension_numbers = #tpu.dot_dimension_numbers<[1], [0], [0], [1], [0, 0, 1, 1], [], []>} : vector<8x128xf32>, vector<128x128xf32>, vector<8x128xf32> -> vector<8x128xf32>
    %640 = arith.addf %638, %639 : vector<8x128xf32>
    %641 = arith.negf %640 : vector<8x128xf32>
    %642 = math.exp %641 : vector<8x128xf32>
    %cst_312 = arith.constant 1.000000e+00 : f32
    %643 = vector.broadcast %cst_312 : f32 to vector<8x128xf32>
    %644 = arith.addf %643, %642 : vector<8x128xf32>
    %645 = arith.divf %643, %644 : vector<8x128xf32>
    %646 = arith.index_cast %c6_i32_304 : i32 to index
    %c0_313 = arith.constant 0 : index
    %c0_314 = arith.constant 0 : index
    %647 = vector.load %arg13[%646, %c0_313, %c0_314] : memref<8x8x128xf32, #tpu.memory_space<vmem>>, vector<1x8x128xf32>
    %648 = vector.shape_cast %647 : vector<1x8x128xf32> to vector<8x128xf32>
    %cst_315 = arith.constant dense<0.000000e+00> : vector<8x128xf32>
    %649 = tpu.matmul %621, %394, %cst_315 {dimension_numbers = #tpu.dot_dimension_numbers<[1], [0], [0], [1], [0, 0, 1, 1], [], []>} : vector<8x128xf32>, vector<128x128xf32>, vector<8x128xf32> -> vector<8x128xf32>
    %650 = vector.broadcast %396 : vector<1x128xf32> to vector<8x128xf32>
    %651 = arith.addf %649, %650 : vector<8x128xf32>
    %652 = arith.mulf %635, %651 : vector<8x128xf32>
    %653 = arith.addf %648, %652 : vector<8x128xf32>
    %654 = math.tanh %653 : vector<8x128xf32>
    %cst_316 = arith.constant 1.000000e+00 : f32
    %655 = vector.broadcast %cst_316 : f32 to vector<8x128xf32>
    %656 = arith.subf %655, %645 : vector<8x128xf32>
    %657 = arith.mulf %656, %654 : vector<8x128xf32>
    %658 = arith.mulf %645, %621 : vector<8x128xf32>
    %659 = arith.addf %657, %658 : vector<8x128xf32>
    %660 = arith.index_cast %c6_i32_304 : i32 to index
    %c0_317 = arith.constant 0 : index
    %c0_318 = arith.constant 0 : index
    %661 = vector.load %arg9[%660, %c0_317, %c0_318] : memref<8x8x128xf32, #tpu.memory_space<vmem>>, vector<1x8x128xf32>
    %662 = vector.shape_cast %661 : vector<1x8x128xf32> to vector<8x128xf32>
    %663 = vector.shape_cast %659 : vector<8x128xf32> to vector<1x8x128xf32>
    tpu.vector_store %arg9[%660, %c0_317, %c0_318], %663 {strides = array<i32>} : memref<8x8x128xf32, #tpu.memory_space<vmem>>, vector<1x8x128xf32>,
    %c7_i32_319 = arith.constant 7 : i32
    %664 = arith.index_cast %c7_i32_319 : i32 to index
    %c0_320 = arith.constant 0 : index
    %c0_321 = arith.constant 0 : index
    %665 = vector.load %arg11[%664, %c0_320, %c0_321] : memref<8x8x128xf32, #tpu.memory_space<vmem>>, vector<1x8x128xf32>
    %666 = vector.shape_cast %665 : vector<1x8x128xf32> to vector<8x128xf32>
    %cst_322 = arith.constant dense<0.000000e+00> : vector<8x128xf32>
    %667 = tpu.matmul %659, %390, %cst_322 {dimension_numbers = #tpu.dot_dimension_numbers<[1], [0], [0], [1], [0, 0, 1, 1], [], []>} : vector<8x128xf32>, vector<128x128xf32>, vector<8x128xf32> -> vector<8x128xf32>
    %668 = arith.addf %666, %667 : vector<8x128xf32>
    %669 = arith.negf %668 : vector<8x128xf32>
    %670 = math.exp %669 : vector<8x128xf32>
    %cst_323 = arith.constant 1.000000e+00 : f32
    %671 = vector.broadcast %cst_323 : f32 to vector<8x128xf32>
    %672 = arith.addf %671, %670 : vector<8x128xf32>
    %673 = arith.divf %671, %672 : vector<8x128xf32>
    %674 = arith.index_cast %c7_i32_319 : i32 to index
    %c0_324 = arith.constant 0 : index
    %c0_325 = arith.constant 0 : index
    %675 = vector.load %arg12[%674, %c0_324, %c0_325] : memref<8x8x128xf32, #tpu.memory_space<vmem>>, vector<1x8x128xf32>
    %676 = vector.shape_cast %675 : vector<1x8x128xf32> to vector<8x128xf32>
    %cst_326 = arith.constant dense<0.000000e+00> : vector<8x128xf32>
    %677 = tpu.matmul %659, %392, %cst_326 {dimension_numbers = #tpu.dot_dimension_numbers<[1], [0], [0], [1], [0, 0, 1, 1], [], []>} : vector<8x128xf32>, vector<128x128xf32>, vector<8x128xf32> -> vector<8x128xf32>
    %678 = arith.addf %676, %677 : vector<8x128xf32>
    %679 = arith.negf %678 : vector<8x128xf32>
    %680 = math.exp %679 : vector<8x128xf32>
    %cst_327 = arith.constant 1.000000e+00 : f32
    %681 = vector.broadcast %cst_327 : f32 to vector<8x128xf32>
    %682 = arith.addf %681, %680 : vector<8x128xf32>
    %683 = arith.divf %681, %682 : vector<8x128xf32>
    %684 = arith.index_cast %c7_i32_319 : i32 to index
    %c0_328 = arith.constant 0 : index
    %c0_329 = arith.constant 0 : index
    %685 = vector.load %arg13[%684, %c0_328, %c0_329] : memref<8x8x128xf32, #tpu.memory_space<vmem>>, vector<1x8x128xf32>
    %686 = vector.shape_cast %685 : vector<1x8x128xf32> to vector<8x128xf32>
    %cst_330 = arith.constant dense<0.000000e+00> : vector<8x128xf32>
    %687 = tpu.matmul %659, %394, %cst_330 {dimension_numbers = #tpu.dot_dimension_numbers<[1], [0], [0], [1], [0, 0, 1, 1], [], []>} : vector<8x128xf32>, vector<128x128xf32>, vector<8x128xf32> -> vector<8x128xf32>
    %688 = vector.broadcast %396 : vector<1x128xf32> to vector<8x128xf32>
    %689 = arith.addf %687, %688 : vector<8x128xf32>
    %690 = arith.mulf %673, %689 : vector<8x128xf32>
    %691 = arith.addf %686, %690 : vector<8x128xf32>
    %692 = math.tanh %691 : vector<8x128xf32>
    %cst_331 = arith.constant 1.000000e+00 : f32
    %693 = vector.broadcast %cst_331 : f32 to vector<8x128xf32>
    %694 = arith.subf %693, %683 : vector<8x128xf32>
    %695 = arith.mulf %694, %692 : vector<8x128xf32>
    %696 = arith.mulf %683, %659 : vector<8x128xf32>
    %697 = arith.addf %695, %696 : vector<8x128xf32>
    %698 = arith.index_cast %c7_i32_319 : i32 to index
    %c0_332 = arith.constant 0 : index
    %c0_333 = arith.constant 0 : index
    %699 = vector.load %arg9[%698, %c0_332, %c0_333] : memref<8x8x128xf32, #tpu.memory_space<vmem>>, vector<1x8x128xf32>
    %700 = vector.shape_cast %699 : vector<1x8x128xf32> to vector<8x128xf32>
    %701 = vector.shape_cast %697 : vector<8x128xf32> to vector<1x8x128xf32>
    tpu.vector_store %arg9[%698, %c0_332, %c0_333], %701 {strides = array<i32>} : memref<8x8x128xf32, #tpu.memory_space<vmem>>, vector<1x8x128xf32>,
    %c8_i32_334 = arith.constant 8 : i32
    %c1_335 = arith.constant 1 : index
    %c0_336 = arith.constant 0 : index
    %c0_337 = arith.constant 0 : index
    %702 = vector.load %arg10[%c1_335, %c0_336, %c0_337] : memref<2x8x128xf32, #tpu.memory_space<vmem>>, vector<1x8x128xf32>
    %703 = vector.shape_cast %702 : vector<1x8x128xf32> to vector<8x128xf32>
    %704 = vector.shape_cast %697 : vector<8x128xf32> to vector<1x8x128xf32>
    tpu.vector_store %arg10[%c1_335, %c0_336, %c0_337], %704 {strides = array<i32>} : memref<2x8x128xf32, #tpu.memory_space<vmem>>, vector<1x8x128xf32>,
    return
  }
}

</mosaic_0001>

<llo_original>
// kernel: homograph_rnn_forward.1
$region0: #{homograph_rnn_forward.1}
  #allocation0 [shape = 'u32[]', space=smem, size = 0x4, offset = 0x4, fixed_abs, tag = 'smem constant byte address 0x4 - core index']
  #allocation1 [shape = 'u32[144,128]{1,0:T(1,128)}', space=vmem, size = 0x12000, scoped, tag = 'internal scratch']
  #allocation2 [shape = 'f32[8,8,128]{2,1,0:T(8,128)}', space=vmem, size = 0x8000, scoped, tag = 'scratch operand']
  #allocation3 [shape = 'f32[8,8,128]{2,1,0:T(8,128)}', space=vmem, size = 0x8000, scoped, tag = 'scratch operand']
  #allocation4 [shape = 'f32[8,8,128]{2,1,0:T(8,128)}', space=vmem, size = 0x8000, scoped, tag = 'scratch operand']
  #allocation5 [shape = 'f32[8,8,128]{2,1,0:T(8,128)}', space=vmem, size = 0x8000, scoped, tag = 'scratch operand']
  %s0 = inlined_call_operand.vmem [shape: f32[64,128], index: 0, kind: input, shape index: {}]
  %s1 = inlined_call_operand.vmem [shape: f32[3,128,128], index: 1, kind: input, shape index: {}]
  %s2 = inlined_call_operand.vmem [shape: f32[3,128,128], index: 2, kind: input, shape index: {}]
  %s3 = inlined_call_operand.vmem [shape: f32[3,1,128], index: 3, kind: input, shape index: {}]
  %s4 = inlined_call_operand.vmem [shape: f32[3,1,128], index: 4, kind: input, shape index: {}]
  %s5 = inlined_call_operand.vmem [shape: f32[3,128,128], index: 5, kind: input, shape index: {}]
  %s6 = inlined_call_operand.vmem [shape: f32[3,128,128], index: 6, kind: input, shape index: {}]
  %s7 = inlined_call_operand.vmem [shape: f32[3,1,128], index: 7, kind: input, shape index: {}]
  %s8 = inlined_call_operand.vmem [shape: f32[3,1,128], index: 8, kind: input, shape index: {}]
  %s9 = inlined_call_operand.vmem [shape: f32[8,8,128], index: 9, kind: output, shape index: {0}]
  %s10 = inlined_call_operand.hbm [shape: f32[2,8,128], index: 10, kind: output, shape index: {1}]
  %11 = xla_tuple %s9, %s10
  %s12 = sld [smem:[#allocation0]]
  $region54: #{homograph_rnn_forward.1} parent=0
    _
  %s14 = ssub.s32 1, %s12
  %s15 = scalar_select 0, %s14, %s12
  $region1: #{homograph_rnn_forward.1} parent=0
    #allocation6 [shape = 'u8[8192]{0}', space=vmem, size = 0x2000, scoped, tag = 'output window, operand 1, single buffered']
    #allocation7 [shape = 's32[1]{0}', space=sflag, size = 0x4, scoped, tag = 'scoped memory for homograph_rnn_forward.1']
    %16 = vsyncpa [#allocation7], 0
    // Predicated region
    $region2: #{homograph_rnn_forward.1} parent=1 // pred_check
      _
    $region3: #{homograph_rnn_forward.1} parent=1 // pred_check_branch
      %18 = sbr.rel (0) target = $region5
    $region4: #{homograph_rnn_forward.1} parent=1 // pred_region
      _
    $region5: #{homograph_rnn_forward.1} parent=1 // pred_fallthru
      _
    // Predicated region
    $region6: #{homograph_rnn_forward.1} parent=1 // pred_check
      _
    $region7: #{homograph_rnn_forward.1} parent=1 // pred_check_branch
      %20 = sbr.rel (0) target = $region9
    $region8: #{homograph_rnn_forward.1} parent=1 // pred_region
      _
    $region9: #{homograph_rnn_forward.1} parent=1 // pred_fallthru
      _
    // Predicated region
    $region10: #{homograph_rnn_forward.1} parent=1 // pred_check
      _
    $region11: #{homograph_rnn_forward.1} parent=1 // pred_check_branch
      %22 = sbr.rel (0) target = $region13
    $region12: #{homograph_rnn_forward.1} parent=1 // pred_region
      _
    $region13: #{homograph_rnn_forward.1} parent=1 // pred_fallthru
      _
    // Predicated region
    $region14: #{homograph_rnn_forward.1} parent=1 // pred_check
      _
    $region15: #{homograph_rnn_forward.1} parent=1 // pred_check_branch
      %24 = sbr.rel (0) target = $region17
    $region16: #{homograph_rnn_forward.1} parent=1 // pred_region
      _
    $region17: #{homograph_rnn_forward.1} parent=1 // pred_fallthru
      _
    // Predicated region
    $region18: #{homograph_rnn_forward.1} parent=1 // pred_check
      _
    $region19: #{homograph_rnn_forward.1} parent=1 // pred_check_branch
      %26 = sbr.rel (0) target = $region21
    $region20: #{homograph_rnn_forward.1} parent=1 // pred_region
      _
    $region21: #{homograph_rnn_forward.1} parent=1 // pred_fallthru
      _
    // Predicated region
    $region22: #{homograph_rnn_forward.1} parent=1 // pred_check
      _
    $region23: #{homograph_rnn_forward.1} parent=1 // pred_check_branch
      %28 = sbr.rel (0) target = $region25
    $region24: #{homograph_rnn_forward.1} parent=1 // pred_region
      _
    $region25: #{homograph_rnn_forward.1} parent=1 // pred_fallthru
      _
    // Predicated region
    $region26: #{homograph_rnn_forward.1} parent=1 // pred_check
      _
    $region27: #{homograph_rnn_forward.1} parent=1 // pred_check_branch
      %30 = sbr.rel (0) target = $region29
    $region28: #{homograph_rnn_forward.1} parent=1 // pred_region
      _
    $region29: #{homograph_rnn_forward.1} parent=1 // pred_fallthru
      _
    // Predicated region
    $region30: #{homograph_rnn_forward.1} parent=1 // pred_check
      _
    $region31: #{homograph_rnn_forward.1} parent=1 // pred_check_branch
      %32 = sbr.rel (0) target = $region33
    $region32: #{homograph_rnn_forward.1} parent=1 // pred_region
      _
    $region33: #{homograph_rnn_forward.1} parent=1 // pred_fallthru
      _
    // Predicated region
    $region34: #{homograph_rnn_forward.1} parent=1 // pred_check
      _
    $region35: #{homograph_rnn_forward.1} parent=1 // pred_check_branch
      %34 = sbr.rel (0) target = $region37
    $region36: #{homograph_rnn_forward.1} parent=1 // pred_region
      _
    $region37: #{homograph_rnn_forward.1} parent=1 // pred_fallthru
      _
    %v35 = vld [vmem:[%s0] sm:$0xff]
    %v36 = vld [vmem:[%s0 + $0x8] sm:$0xff]
    %v37 = vld [vmem:[%s0 + $0x10] sm:$0xff]
    %v38 = vld [vmem:[%s0 + $0x18] sm:$0xff]
    %v39 = vld [vmem:[%s0 + $0x20] sm:$0xff]
    %v40 = vld [vmem:[%s0 + $0x28] sm:$0xff]
    %v41 = vld [vmem:[%s0 + $0x30] sm:$0xff]
    %v42 = vld [vmem:[%s0 + $0x38] sm:$0xff]
    %v43 = vld [vmem:[%s1] sm:$0xff]
    %v44 = vld [vmem:[%s1 + $0x8] sm:$0xff]
    %v45 = vld [vmem:[%s1 + $0x10] sm:$0xff]
    %v46 = vld [vmem:[%s1 + $0x18] sm:$0xff]
    %v47 = vld [vmem:[%s1 + $0x20] sm:$0xff]
    %v48 = vld [vmem:[%s1 + $0x28] sm:$0xff]
    %v49 = vld [vmem:[%s1 + $0x30] sm:$0xff]
    %v50 = vld [vmem:[%s1 + $0x38] sm:$0xff]
    %v51 = vld [vmem:[%s1 + $0x40] sm:$0xff]
    %v52 = vld [vmem:[%s1 + $0x48] sm:$0xff]
    %v53 = vld [vmem:[%s1 + $0x50] sm:$0xff]
    %v54 = vld [vmem:[%s1 + $0x58] sm:$0xff]
    %v55 = vld [vmem:[%s1 + $0x60] sm:$0xff]
    %v56 = vld [vmem:[%s1 + $0x68] sm:$0xff]
    %v57 = vld [vmem:[%s1 + $0x70] sm:$0xff]
    %v58 = vld [vmem:[%s1 + $0x78] sm:$0xff]
    %v59 = vld [vmem:[%s3] sm:$0x1]
    %v61 = vlaneseq
    %v62 = vshrl.u32 %v61, 7
    %v63 = vsub.s32 0, %v62
    %v64 = vrot.slane %v59, %v63
    %66 = vmatprep.subr.mxu0 0.0
    %67 = vmatpush1.msra.mxu0 %v58
    %68 = vmatprep.subr.mxu0 0.0
    %69 = vmatpush1.msra.mxu0 %v57
    %70 = vmatprep.subr.mxu0 0.0
    %71 = vmatpush1.msra.mxu0 %v56
    %72 = vmatprep.subr.mxu0 0.0
    %73 = vmatpush1.msra.mxu0 %v55
    %74 = vmatprep.subr.mxu0 0.0
    %75 = vmatpush1.msra.mxu0 %v54
    %76 = vmatprep.subr.mxu0 0.0
    %77 = vmatpush1.msra.mxu0 %v53
    %78 = vmatprep.subr.mxu0 0.0
    %79 = vmatpush1.msra.mxu0 %v52
    %80 = vmatprep.subr.mxu0 0.0
    %81 = vmatpush1.msra.mxu0 %v51
    %82 = vmatprep.subr.mxu0 0.0
    %83 = vmatpush1.msra.mxu0 %v50
    %84 = vmatprep.subr.mxu0 0.0
    %85 = vmatpush1.msra.mxu0 %v49
    %86 = vmatprep.subr.mxu0 0.0
    %87 = vmatpush1.msra.mxu0 %v48
    %88 = vmatprep.subr.mxu0 0.0
    %89 = vmatpush1.msra.mxu0 %v47
    %90 = vmatprep.subr.mxu0 0.0
    %91 = vmatpush1.msra.mxu0 %v46
    %92 = vmatprep.subr.mxu0 0.0
    %93 = vmatpush1.msra.mxu0 %v45
    %94 = vmatprep.subr.mxu0 0.0
    %95 = vmatpush1.msra.mxu0 %v44
    %96 = vmatprep.subr.mxu0 0.0
    %97 = vmatpush1.msra.mxu0 %v43
    %98 = vmatprep.subr.mxu0 0.0
    %99 = vmatpush2.msra.mxu0 0.0
    %100 = vmatprep.subr.mxu0 0.0
    %101 = vmatpush2.msra.mxu0 0.0
    %102 = vmatprep.subr.mxu0 0.0
    %103 = vmatpush2.msra.mxu0 0.0
    %104 = vmatprep.subr.mxu0 0.0
    %105 = vmatpush2.msra.mxu0 0.0
    %106 = vmatprep.subr.mxu0 0.0
    %107 = vmatpush2.msra.mxu0 0.0
    %108 = vmatprep.subr.mxu0 0.0
    %109 = vmatpush2.msra.mxu0 0.0
    %110 = vmatprep.subr.mxu0 0.0
    %111 = vmatpush2.msra.mxu0 0.0
    %112 = vmatprep.subr.mxu0 0.0
    %113 = vmatpush2.msra.mxu0 0.0
    %114 = vmatprep.subr.mxu0 0.0
    %115 = vmatpush2.msra.mxu0 0.0
    %116 = vmatprep.subr.mxu0 0.0
    %117 = vmatpush2.msra.mxu0 0.0
    %118 = vmatprep.subr.mxu0 0.0
    %119 = vmatpush2.msra.mxu0 0.0
    %120 = vmatprep.subr.mxu0 0.0
    %121 = vmatpush2.msra.mxu0 0.0
    %122 = vmatprep.subr.mxu0 0.0
    %123 = vmatpush2.msra.mxu0 0.0
    %124 = vmatprep.subr.mxu0 0.0
    %125 = vmatpush2.msra.mxu0 0.0
    %126 = vmatprep.subr.mxu0 0.0
    %127 = vmatpush2.msra.mxu0 0.0
    %128 = vmatprep.subr.mxu0 0.0
    %129 = vmatpush2.msra.mxu0 0.0
    %130 = vmatprep.mubr.f32.mxu0 0.0
    %131 = vmatmul.mubr.f32.gmra.mxu0 %v35
    %v132 = vpop.f32.mrf.mxu0
    %v133 = vadd.f32 %v64, %v132
    %v134 = vpop.f32.mrf.mxu0
    %135 = vmatprep.mubr.f32.mxu0 0.0
    %136 = vmatmul.mubr.f32.gmra.mxu0 %v36
    %v137 = vpop.f32.mrf.mxu0
    %v138 = vadd.f32 %v64, %v137
    %v139 = vpop.f32.mrf.mxu0
    %140 = vmatprep.mubr.f32.mxu0 0.0
    %141 = vmatmul.mubr.f32.gmra.mxu0 %v37
    %v142 = vpop.f32.mrf.mxu0
    %v143 = vadd.f32 %v64, %v142
    %v144 = vpop.f32.mrf.mxu0
    %145 = vmatprep.mubr.f32.mxu0 0.0
    %146 = vmatmul.mubr.f32.gmra.mxu0 %v38
    %v147 = vpop.f32.mrf.mxu0
    %v148 = vadd.f32 %v64, %v147
    %v149 = vpop.f32.mrf.mxu0
    %150 = vmatprep.mubr.f32.mxu0 0.0
    %151 = vmatmul.mubr.f32.gmra.mxu0 %v39
    %v152 = vpop.f32.mrf.mxu0
    %v153 = vadd.f32 %v64, %v152
    %v154 = vpop.f32.mrf.mxu0
    %155 = vmatprep.mubr.f32.mxu0 0.0
    %156 = vmatmul.mubr.f32.gmra.mxu0 %v40
    %v157 = vpop.f32.mrf.mxu0
    %v158 = vadd.f32 %v64, %v157
    %v159 = vpop.f32.mrf.mxu0
    %160 = vmatprep.mubr.f32.mxu0 0.0
    %161 = vmatmul.mubr.f32.gmra.mxu0 %v41
    %v162 = vpop.f32.mrf.mxu0
    %v163 = vadd.f32 %v64, %v162
    %v164 = vpop.f32.mrf.mxu0
    %165 = vmatprep.mubr.f32.mxu0 0.0
    %166 = vmatmul.mubr.f32.gmra.mxu0 %v42
    %v167 = vpop.f32.mrf.mxu0
    %v168 = vadd.f32 %v64, %v167
    %v169 = vpop.f32.mrf.mxu0
    %170 = vdwg.mxu0
    %v171 = vld [vmem:[%s4] sm:$0x1]
    %v173 = vlaneseq
    %v174 = vshrl.u32 %v173, 7
    %v175 = vsub.s32 0, %v174
    %v176 = vrot.slane %v171, %v175
    %v178 = vadd.f32 %v133, %v176
    %v179 = vadd.f32 %v138, %v176
    %v180 = vadd.f32 %v143, %v176
    %v181 = vadd.f32 %v148, %v176
    %v182 = vadd.f32 %v153, %v176
    %v183 = vadd.f32 %v158, %v176
    %v184 = vadd.f32 %v163, %v176
    %v185 = vadd.f32 %v168, %v176
    %s186 = scalar_lea.vmem %s1, 128
    %v187 = vld [vmem:[%s186] sm:$0xff]
    %v188 = vld [vmem:[%s186 + $0x8] sm:$0xff]
    %v189 = vld [vmem:[%s186 + $0x10] sm:$0xff]
    %v190 = vld [vmem:[%s186 + $0x18] sm:$0xff]
    %v191 = vld [vmem:[%s186 + $0x20] sm:$0xff]
    %v192 = vld [vmem:[%s186 + $0x28] sm:$0xff]
    %v193 = vld [vmem:[%s186 + $0x30] sm:$0xff]
    %v194 = vld [vmem:[%s186 + $0x38] sm:$0xff]
    %v195 = vld [vmem:[%s186 + $0x40] sm:$0xff]
    %v196 = vld [vmem:[%s186 + $0x48] sm:$0xff]
    %v197 = vld [vmem:[%s186 + $0x50] sm:$0xff]
    %v198 = vld [vmem:[%s186 + $0x58] sm:$0xff]
    %v199 = vld [vmem:[%s186 + $0x60] sm:$0xff]
    %v200 = vld [vmem:[%s186 + $0x68] sm:$0xff]
    %v201 = vld [vmem:[%s186 + $0x70] sm:$0xff]
    %v202 = vld [vmem:[%s186 + $0x78] sm:$0xff]
    %s203 = scalar_lea.vmem %s3, 1
    %v204 = vld [vmem:[%s203] sm:$0x1]
    %v206 = vlaneseq
    %v207 = vshrl.u32 %v206, 7
    %v208 = vsub.s32 0, %v207
    %v209 = vrot.slane %v204, %v208
    %211 = vmatprep.subr.mxu0 0.0
    %212 = vmatpush1.msra.mxu0 %v202
    %213 = vmatprep.subr.mxu0 0.0
    %214 = vmatpush1.msra.mxu0 %v201
    %215 = vmatprep.subr.mxu0 0.0
    %216 = vmatpush1.msra.mxu0 %v200
    %217 = vmatprep.subr.mxu0 0.0
    %218 = vmatpush1.msra.mxu0 %v199
    %219 = vmatprep.subr.mxu0 0.0
    %220 = vmatpush1.msra.mxu0 %v198
    %221 = vmatprep.subr.mxu0 0.0
    %222 = vmatpush1.msra.mxu0 %v197
    %223 = vmatprep.subr.mxu0 0.0
    %224 = vmatpush1.msra.mxu0 %v196
    %225 = vmatprep.subr.mxu0 0.0
    %226 = vmatpush1.msra.mxu0 %v195
    %227 = vmatprep.subr.mxu0 0.0
    %228 = vmatpush1.msra.mxu0 %v194
    %229 = vmatprep.subr.mxu0 0.0
    %230 = vmatpush1.msra.mxu0 %v193
    %231 = vmatprep.subr.mxu0 0.0
    %232 = vmatpush1.msra.mxu0 %v192
    %233 = vmatprep.subr.mxu0 0.0
    %234 = vmatpush1.msra.mxu0 %v191
    %235 = vmatprep.subr.mxu0 0.0
    %236 = vmatpush1.msra.mxu0 %v190
    %237 = vmatprep.subr.mxu0 0.0
    %238 = vmatpush1.msra.mxu0 %v189
    %239 = vmatprep.subr.mxu0 0.0
    %240 = vmatpush1.msra.mxu0 %v188
    %241 = vmatprep.subr.mxu0 0.0
    %242 = vmatpush1.msra.mxu0 %v187
    %243 = vmatprep.subr.mxu0 0.0
    %244 = vmatpush2.msra.mxu0 0.0
    %245 = vmatprep.subr.mxu0 0.0
    %246 = vmatpush2.msra.mxu0 0.0
    %247 = vmatprep.subr.mxu0 0.0
    %248 = vmatpush2.msra.mxu0 0.0
    %249 = vmatprep.subr.mxu0 0.0
    %250 = vmatpush2.msra.mxu0 0.0
    %251 = vmatprep.subr.mxu0 0.0
    %252 = vmatpush2.msra.mxu0 0.0
    %253 = vmatprep.subr.mxu0 0.0
    %254 = vmatpush2.msra.mxu0 0.0
    %255 = vmatprep.subr.mxu0 0.0
    %256 = vmatpush2.msra.mxu0 0.0
    %257 = vmatprep.subr.mxu0 0.0
    %258 = vmatpush2.msra.mxu0 0.0
    %259 = vmatprep.subr.mxu0 0.0
    %260 = vmatpush2.msra.mxu0 0.0
    %261 = vmatprep.subr.mxu0 0.0
    %262 = vmatpush2.msra.mxu0 0.0
    %263 = vmatprep.subr.mxu0 0.0
    %264 = vmatpush2.msra.mxu0 0.0
    %265 = vmatprep.subr.mxu0 0.0
    %266 = vmatpush2.msra.mxu0 0.0
    %267 = vmatprep.subr.mxu0 0.0
    %268 = vmatpush2.msra.mxu0 0.0
    %269 = vmatprep.subr.mxu0 0.0
    %270 = vmatpush2.msra.mxu0 0.0
    %271 = vmatprep.subr.mxu0 0.0
    %272 = vmatpush2.msra.mxu0 0.0
    %273 = vmatprep.subr.mxu0 0.0
    %274 = vmatpush2.msra.mxu0 0.0
    %275 = vmatprep.mubr.f32.mxu0 0.0
    %276 = vmatmul.mubr.f32.gmra.mxu0 %v35
    %v277 = vpop.f32.mrf.mxu0
    %v278 = vadd.f32 %v209, %v277
    %v279 = vpop.f32.mrf.mxu0
    %280 = vmatprep.mubr.f32.mxu0 0.0
    %281 = vmatmul.mubr.f32.gmra.mxu0 %v36
    %v282 = vpop.f32.mrf.mxu0
    %v283 = vadd.f32 %v209, %v282
    %v284 = vpop.f32.mrf.mxu0
    %285 = vmatprep.mubr.f32.mxu0 0.0
    %286 = vmatmul.mubr.f32.gmra.mxu0 %v37
    %v287 = vpop.f32.mrf.mxu0
    %v288 = vadd.f32 %v209, %v287
    %v289 = vpop.f32.mrf.mxu0
    %290 = vmatprep.mubr.f32.mxu0 0.0
    %291 = vmatmul.mubr.f32.gmra.mxu0 %v38
    %v292 = vpop.f32.mrf.mxu0
    %v293 = vadd.f32 %v209, %v292
    %v294 = vpop.f32.mrf.mxu0
    %295 = vmatprep.mubr.f32.mxu0 0.0
    %296 = vmatmul.mubr.f32.gmra.mxu0 %v39
    %v297 = vpop.f32.mrf.mxu0
    %v298 = vadd.f32 %v209, %v297
    %v299 = vpop.f32.mrf.mxu0
    %300 = vmatprep.mubr.f32.mxu0 0.0
    %301 = vmatmul.mubr.f32.gmra.mxu0 %v40
    %v302 = vpop.f32.mrf.mxu0
    %v303 = vadd.f32 %v209, %v302
    %v304 = vpop.f32.mrf.mxu0
    %305 = vmatprep.mubr.f32.mxu0 0.0
    %306 = vmatmul.mubr.f32.gmra.mxu0 %v41
    %v307 = vpop.f32.mrf.mxu0
    %v308 = vadd.f32 %v209, %v307
    %v309 = vpop.f32.mrf.mxu0
    %310 = vmatprep.mubr.f32.mxu0 0.0
    %311 = vmatmul.mubr.f32.gmra.mxu0 %v42
    %v312 = vpop.f32.mrf.mxu0
    %v313 = vadd.f32 %v209, %v312
    %v314 = vpop.f32.mrf.mxu0
    %315 = vdwg.mxu0
    %s316 = scalar_lea.vmem %s4, 1
    %v317 = vld [vmem:[%s316] sm:$0x1]
    %v319 = vlaneseq
    %v320 = vshrl.u32 %v319, 7
    %v321 = vsub.s32 0, %v320
    %v322 = vrot.slane %v317, %v321
    %v324 = vadd.f32 %v278, %v322
    %v325 = vadd.f32 %v283, %v322
    %v326 = vadd.f32 %v288, %v322
    %v327 = vadd.f32 %v293, %v322
    %v328 = vadd.f32 %v298, %v322
    %v329 = vadd.f32 %v303, %v322
    %v330 = vadd.f32 %v308, %v322
    %v331 = vadd.f32 %v313, %v322
    %s332 = scalar_lea.vmem %s1, 256
    %v333 = vld [vmem:[%s332] sm:$0xff]
    %v334 = vld [vmem:[%s332 + $0x8] sm:$0xff]
    %v335 = vld [vmem:[%s332 + $0x10] sm:$0xff]
    %v336 = vld [vmem:[%s332 + $0x18] sm:$0xff]
    %v337 = vld [vmem:[%s332 + $0x20] sm:$0xff]
    %v338 = vld [vmem:[%s332 + $0x28] sm:$0xff]
    %v339 = vld [vmem:[%s332 + $0x30] sm:$0xff]
    %v340 = vld [vmem:[%s332 + $0x38] sm:$0xff]
    %v341 = vld [vmem:[%s332 + $0x40] sm:$0xff]
    %v342 = vld [vmem:[%s332 + $0x48] sm:$0xff]
    %v343 = vld [vmem:[%s332 + $0x50] sm:$0xff]
    %v344 = vld [vmem:[%s332 + $0x58] sm:$0xff]
    %v345 = vld [vmem:[%s332 + $0x60] sm:$0xff]
    %v346 = vld [vmem:[%s332 + $0x68] sm:$0xff]
    %v347 = vld [vmem:[%s332 + $0x70] sm:$0xff]
    %v348 = vld [vmem:[%s332 + $0x78] sm:$0xff]
    %s349 = scalar_lea.vmem %s3, 2
    %v350 = vld [vmem:[%s349] sm:$0x1]
    %v352 = vlaneseq
    %v353 = vshrl.u32 %v352, 7
    %v354 = vsub.s32 0, %v353
    %v355 = vrot.slane %v350, %v354
    %357 = vmatprep.subr.mxu0 0.0
    %358 = vmatpush1.msra.mxu0 %v348
    %359 = vmatprep.subr.mxu0 0.0
    %360 = vmatpush1.msra.mxu0 %v347
    %361 = vmatprep.subr.mxu0 0.0
    %362 = vmatpush1.msra.mxu0 %v346
    %363 = vmatprep.subr.mxu0 0.0
    %364 = vmatpush1.msra.mxu0 %v345
    %365 = vmatprep.subr.mxu0 0.0
    %366 = vmatpush1.msra.mxu0 %v344
    %367 = vmatprep.subr.mxu0 0.0
    %368 = vmatpush1.msra.mxu0 %v343
    %369 = vmatprep.subr.mxu0 0.0
    %370 = vmatpush1.msra.mxu0 %v342
    %371 = vmatprep.subr.mxu0 0.0
    %372 = vmatpush1.msra.mxu0 %v341
    %373 = vmatprep.subr.mxu0 0.0
    %374 = vmatpush1.msra.mxu0 %v340
    %375 = vmatprep.subr.mxu0 0.0
    %376 = vmatpush1.msra.mxu0 %v339
    %377 = vmatprep.subr.mxu0 0.0
    %378 = vmatpush1.msra.mxu0 %v338
    %379 = vmatprep.subr.mxu0 0.0
    %380 = vmatpush1.msra.mxu0 %v337
    %381 = vmatprep.subr.mxu0 0.0
    %382 = vmatpush1.msra.mxu0 %v336
    %383 = vmatprep.subr.mxu0 0.0
    %384 = vmatpush1.msra.mxu0 %v335
    %385 = vmatprep.subr.mxu0 0.0
    %386 = vmatpush1.msra.mxu0 %v334
    %387 = vmatprep.subr.mxu0 0.0
    %388 = vmatpush1.msra.mxu0 %v333
    %389 = vmatprep.subr.mxu0 0.0
    %390 = vmatpush2.msra.mxu0 0.0
    %391 = vmatprep.subr.mxu0 0.0
    %392 = vmatpush2.msra.mxu0 0.0
    %393 = vmatprep.subr.mxu0 0.0
    %394 = vmatpush2.msra.mxu0 0.0
    %395 = vmatprep.subr.mxu0 0.0
    %396 = vmatpush2.msra.mxu0 0.0
    %397 = vmatprep.subr.mxu0 0.0
    %398 = vmatpush2.msra.mxu0 0.0
    %399 = vmatprep.subr.mxu0 0.0
    %400 = vmatpush2.msra.mxu0 0.0
    %401 = vmatprep.subr.mxu0 0.0
    %402 = vmatpush2.msra.mxu0 0.0
    %403 = vmatprep.subr.mxu0 0.0
    %404 = vmatpush2.msra.mxu0 0.0
    %405 = vmatprep.subr.mxu0 0.0
    %406 = vmatpush2.msra.mxu0 0.0
    %407 = vmatprep.subr.mxu0 0.0
    %408 = vmatpush2.msra.mxu0 0.0
    %409 = vmatprep.subr.mxu0 0.0
    %410 = vmatpush2.msra.mxu0 0.0
    %411 = vmatprep.subr.mxu0 0.0
    %412 = vmatpush2.msra.mxu0 0.0
    %413 = vmatprep.subr.mxu0 0.0
    %414 = vmatpush2.msra.mxu0 0.0
    %415 = vmatprep.subr.mxu0 0.0
    %416 = vmatpush2.msra.mxu0 0.0
    %417 = vmatprep.subr.mxu0 0.0
    %418 = vmatpush2.msra.mxu0 0.0
    %419 = vmatprep.subr.mxu0 0.0
    %420 = vmatpush2.msra.mxu0 0.0
    %421 = vmatprep.mubr.f32.mxu0 0.0
    %422 = vmatmul.mubr.f32.gmra.mxu0 %v35
    %v423 = vpop.f32.mrf.mxu0
    %v424 = vadd.f32 %v355, %v423
    %v425 = vpop.f32.mrf.mxu0
    %426 = vmatprep.mubr.f32.mxu0 0.0
    %427 = vmatmul.mubr.f32.gmra.mxu0 %v36
    %v428 = vpop.f32.mrf.mxu0
    %v429 = vadd.f32 %v355, %v428
    %v430 = vpop.f32.mrf.mxu0
    %431 = vmatprep.mubr.f32.mxu0 0.0
    %432 = vmatmul.mubr.f32.gmra.mxu0 %v37
    %v433 = vpop.f32.mrf.mxu0
    %v434 = vadd.f32 %v355, %v433
    %v435 = vpop.f32.mrf.mxu0
    %436 = vmatprep.mubr.f32.mxu0 0.0
    %437 = vmatmul.mubr.f32.gmra.mxu0 %v38
    %v438 = vpop.f32.mrf.mxu0
    %v439 = vadd.f32 %v355, %v438
    %v440 = vpop.f32.mrf.mxu0
    %441 = vmatprep.mubr.f32.mxu0 0.0
    %442 = vmatmul.mubr.f32.gmra.mxu0 %v39
    %v443 = vpop.f32.mrf.mxu0
    %v444 = vadd.f32 %v355, %v443
    %v445 = vpop.f32.mrf.mxu0
    %446 = vmatprep.mubr.f32.mxu0 0.0
    %447 = vmatmul.mubr.f32.gmra.mxu0 %v40
    %v448 = vpop.f32.mrf.mxu0
    %v449 = vadd.f32 %v355, %v448
    %v450 = vpop.f32.mrf.mxu0
    %451 = vmatprep.mubr.f32.mxu0 0.0
    %452 = vmatmul.mubr.f32.gmra.mxu0 %v41
    %v453 = vpop.f32.mrf.mxu0
    %v454 = vadd.f32 %v355, %v453
    %v455 = vpop.f32.mrf.mxu0
    %456 = vmatprep.mubr.f32.mxu0 0.0
    %457 = vmatmul.mubr.f32.gmra.mxu0 %v42
    %v458 = vpop.f32.mrf.mxu0
    %v459 = vadd.f32 %v355, %v458
    %v460 = vpop.f32.mrf.mxu0
    %461 = vdwg.mxu0
    %462 = vst [vmem:[#allocation2] sm:$0xff] %v178
    %463 = vst [vmem:[#allocation2 + $0x8] sm:$0xff] %v179
    %464 = vst [vmem:[#allocation2 + $0x10] sm:$0xff] %v180
    %465 = vst [vmem:[#allocation2 + $0x18] sm:$0xff] %v181
    %466 = vst [vmem:[#allocation2 + $0x20] sm:$0xff] %v182
    %467 = vst [vmem:[#allocation2 + $0x28] sm:$0xff] %v183
    %468 = vst [vmem:[#allocation2 + $0x30] sm:$0xff] %v184
    %469 = vst [vmem:[#allocation2 + $0x38] sm:$0xff] %v185
    %470 = vst [vmem:[#allocation3] sm:$0xff] %v324
    %471 = vst [vmem:[#allocation3 + $0x8] sm:$0xff] %v325
    %472 = vst [vmem:[#allocation3 + $0x10] sm:$0xff] %v326
    %473 = vst [vmem:[#allocation3 + $0x18] sm:$0xff] %v327
    %474 = vst [vmem:[#allocation3 + $0x20] sm:$0xff] %v328
    %475 = vst [vmem:[#allocation3 + $0x28] sm:$0xff] %v329
    %476 = vst [vmem:[#allocation3 + $0x30] sm:$0xff] %v330
    %477 = vst [vmem:[#allocation3 + $0x38] sm:$0xff] %v331
    %478 = vst [vmem:[#allocation4] sm:$0xff] %v424
    %479 = vst [vmem:[#allocation4 + $0x8] sm:$0xff] %v429
    %480 = vst [vmem:[#allocation4 + $0x10] sm:$0xff] %v434
    %481 = vst [vmem:[#allocation4 + $0x18] sm:$0xff] %v439
    %482 = vst [vmem:[#allocation4 + $0x20] sm:$0xff] %v444
    %483 = vst [vmem:[#allocation4 + $0x28] sm:$0xff] %v449
    %484 = vst [vmem:[#allocation4 + $0x30] sm:$0xff] %v454
    %485 = vst [vmem:[#allocation4 + $0x38] sm:$0xff] %v459
    %v486 = vld [vmem:[%s2] sm:$0xff]
    %v487 = vld [vmem:[%s2 + $0x8] sm:$0xff]
    %v488 = vld [vmem:[%s2 + $0x10] sm:$0xff]
    %v489 = vld [vmem:[%s2 + $0x18] sm:$0xff]
    %v490 = vld [vmem:[%s2 + $0x20] sm:$0xff]
    %v491 = vld [vmem:[%s2 + $0x28] sm:$0xff]
    %v492 = vld [vmem:[%s2 + $0x30] sm:$0xff]
    %v493 = vld [vmem:[%s2 + $0x38] sm:$0xff]
    %v494 = vld [vmem:[%s2 + $0x40] sm:$0xff]
    %v495 = vld [vmem:[%s2 + $0x48] sm:$0xff]
    %v496 = vld [vmem:[%s2 + $0x50] sm:$0xff]
    %v497 = vld [vmem:[%s2 + $0x58] sm:$0xff]
    %v498 = vld [vmem:[%s2 + $0x60] sm:$0xff]
    %v499 = vld [vmem:[%s2 + $0x68] sm:$0xff]
    %v500 = vld [vmem:[%s2 + $0x70] sm:$0xff]
    %v501 = vld [vmem:[%s2 + $0x78] sm:$0xff]
    %s502 = scalar_lea.vmem %s2, 128
    %v503 = vld [vmem:[%s502] sm:$0xff]
    %v504 = vld [vmem:[%s502 + $0x8] sm:$0xff]
    %v505 = vld [vmem:[%s502 + $0x10] sm:$0xff]
    %v506 = vld [vmem:[%s502 + $0x18] sm:$0xff]
    %v507 = vld [vmem:[%s502 + $0x20] sm:$0xff]
    %v508 = vld [vmem:[%s502 + $0x28] sm:$0xff]
    %v509 = vld [vmem:[%s502 + $0x30] sm:$0xff]
    %v510 = vld [vmem:[%s502 + $0x38] sm:$0xff]
    %v511 = vld [vmem:[%s502 + $0x40] sm:$0xff]
    %v512 = vld [vmem:[%s502 + $0x48] sm:$0xff]
    %v513 = vld [vmem:[%s502 + $0x50] sm:$0xff]
    %v514 = vld [vmem:[%s502 + $0x58] sm:$0xff]
    %v515 = vld [vmem:[%s502 + $0x60] sm:$0xff]
    %v516 = vld [vmem:[%s502 + $0x68] sm:$0xff]
    %v517 = vld [vmem:[%s502 + $0x70] sm:$0xff]
    %v518 = vld [vmem:[%s502 + $0x78] sm:$0xff]
    %s519 = scalar_lea.vmem %s2, 256
    %v520 = vld [vmem:[%s519] sm:$0xff]
    %v521 = vld [vmem:[%s519 + $0x8] sm:$0xff]
    %v522 = vld [vmem:[%s519 + $0x10] sm:$0xff]
    %v523 = vld [vmem:[%s519 + $0x18] sm:$0xff]
    %v524 = vld [vmem:[%s519 + $0x20] sm:$0xff]
    %v525 = vld [vmem:[%s519 + $0x28] sm:$0xff]
    %v526 = vld [vmem:[%s519 + $0x30] sm:$0xff]
    %v527 = vld [vmem:[%s519 + $0x38] sm:$0xff]
    %v528 = vld [vmem:[%s519 + $0x40] sm:$0xff]
    %v529 = vld [vmem:[%s519 + $0x48] sm:$0xff]
    %v530 = vld [vmem:[%s519 + $0x50] sm:$0xff]
    %v531 = vld [vmem:[%s519 + $0x58] sm:$0xff]
    %v532 = vld [vmem:[%s519 + $0x60] sm:$0xff]
    %v533 = vld [vmem:[%s519 + $0x68] sm:$0xff]
    %v534 = vld [vmem:[%s519 + $0x70] sm:$0xff]
    %v535 = vld [vmem:[%s519 + $0x78] sm:$0xff]
    %s536 = scalar_lea.vmem %s4, 2
    %v537 = vld [vmem:[%s536] sm:$0x1]
    %v538 = vld [vmem:[#allocation2] sm:$0xff]
    %539 = vmatprep.subr.mxu0 0.0
    %540 = vmatpush1.msra.mxu0 %v501
    %541 = vmatprep.subr.mxu0 0.0
    %542 = vmatpush1.msra.mxu0 %v500
    %543 = vmatprep.subr.mxu0 0.0
    %544 = vmatpush1.msra.mxu0 %v499
    %545 = vmatprep.subr.mxu0 0.0
    %546 = vmatpush1.msra.mxu0 %v498
    %547 = vmatprep.subr.mxu0 0.0
    %548 = vmatpush1.msra.mxu0 %v497
    %549 = vmatprep.subr.mxu0 0.0
    %550 = vmatpush1.msra.mxu0 %v496
    %551 = vmatprep.subr.mxu0 0.0
    %552 = vmatpush1.msra.mxu0 %v495
    %553 = vmatprep.subr.mxu0 0.0
    %554 = vmatpush1.msra.mxu0 %v494
    %555 = vmatprep.subr.mxu0 0.0
    %556 = vmatpush1.msra.mxu0 %v493
    %557 = vmatprep.subr.mxu0 0.0
    %558 = vmatpush1.msra.mxu0 %v492
    %559 = vmatprep.subr.mxu0 0.0
    %560 = vmatpush1.msra.mxu0 %v491
    %561 = vmatprep.subr.mxu0 0.0
    %562 = vmatpush1.msra.mxu0 %v490
    %563 = vmatprep.subr.mxu0 0.0
    %564 = vmatpush1.msra.mxu0 %v489
    %565 = vmatprep.subr.mxu0 0.0
    %566 = vmatpush1.msra.mxu0 %v488
    %567 = vmatprep.subr.mxu0 0.0
    %568 = vmatpush1.msra.mxu0 %v487
    %569 = vmatprep.subr.mxu0 0.0
    %570 = vmatpush1.msra.mxu0 %v486
    %571 = vmatprep.subr.mxu0 0.0
    %572 = vmatpush2.msra.mxu0 0.0
    %573 = vmatprep.subr.mxu0 0.0
    %574 = vmatpush2.msra.mxu0 0.0
    %575 = vmatprep.subr.mxu0 0.0
    %576 = vmatpush2.msra.mxu0 0.0
    %577 = vmatprep.subr.mxu0 0.0
    %578 = vmatpush2.msra.mxu0 0.0
    %579 = vmatprep.subr.mxu0 0.0
    %580 = vmatpush2.msra.mxu0 0.0
    %581 = vmatprep.subr.mxu0 0.0
    %582 = vmatpush2.msra.mxu0 0.0
    %583 = vmatprep.subr.mxu0 0.0
    %584 = vmatpush2.msra.mxu0 0.0
    %585 = vmatprep.subr.mxu0 0.0
    %586 = vmatpush2.msra.mxu0 0.0
    %587 = vmatprep.subr.mxu0 0.0
    %588 = vmatpush2.msra.mxu0 0.0
    %589 = vmatprep.subr.mxu0 0.0
    %590 = vmatpush2.msra.mxu0 0.0
    %591 = vmatprep.subr.mxu0 0.0
    %592 = vmatpush2.msra.mxu0 0.0
    %593 = vmatprep.subr.mxu0 0.0
    %594 = vmatpush2.msra.mxu0 0.0
    %595 = vmatprep.subr.mxu0 0.0
    %596 = vmatpush2.msra.mxu0 0.0
    %597 = vmatprep.subr.mxu0 0.0
    %598 = vmatpush2.msra.mxu0 0.0
    %599 = vmatprep.subr.mxu0 0.0
    %600 = vmatpush2.msra.mxu0 0.0
    %601 = vmatprep.subr.mxu0 0.0
    %602 = vmatpush2.msra.mxu0 0.0
    %603 = vmatprep.mubr.f32.mxu0 0.0
    %604 = vmatmul.mubr.f32.gmra.mxu0 0.0
    %v605 = vpop.f32.mrf.mxu0
    %v606 = vadd.f32 0.0, %v605
    %v607 = vpop.f32.mrf.mxu0
    %608 = vdwg.mxu0
    %v609 = vadd.f32 %v538, %v606
    %v610 = vxor.u32 %v609, 2147483648
    %v611 = vmul.f32 %v610, 1.442695
    %v612 = vpow.pop %v611
    %v613 = vadd.f32 %v612, 1.0
    %v614 = vrcp.pop %v613
    %v615 = vmul.f32 1.0, %v614
    %v616 = vld [vmem:[#allocation3] sm:$0xff]
    %617 = vmatprep.subr.mxu0 0.0
    %618 = vmatpush1.msra.mxu0 %v518
    %619 = vmatprep.subr.mxu0 0.0
    %620 = vmatpush1.msra.mxu0 %v517
    %621 = vmatprep.subr.mxu0 0.0
    %622 = vmatpush1.msra.mxu0 %v516
    %623 = vmatprep.subr.mxu0 0.0
    %624 = vmatpush1.msra.mxu0 %v515
    %625 = vmatprep.subr.mxu0 0.0
    %626 = vmatpush1.msra.mxu0 %v514
    %627 = vmatprep.subr.mxu0 0.0
    %628 = vmatpush1.msra.mxu0 %v513
    %629 = vmatprep.subr.mxu0 0.0
    %630 = vmatpush1.msra.mxu0 %v512
    %631 = vmatprep.subr.mxu0 0.0
    %632 = vmatpush1.msra.mxu0 %v511
    %633 = vmatprep.subr.mxu0 0.0
    %634 = vmatpush1.msra.mxu0 %v510
    %635 = vmatprep.subr.mxu0 0.0
    %636 = vmatpush1.msra.mxu0 %v509
    %637 = vmatprep.subr.mxu0 0.0
    %638 = vmatpush1.msra.mxu0 %v508
    %639 = vmatprep.subr.mxu0 0.0
    %640 = vmatpush1.msra.mxu0 %v507
    %641 = vmatprep.subr.mxu0 0.0
    %642 = vmatpush1.msra.mxu0 %v506
    %643 = vmatprep.subr.mxu0 0.0
    %644 = vmatpush1.msra.mxu0 %v505
    %645 = vmatprep.subr.mxu0 0.0
    %646 = vmatpush1.msra.mxu0 %v504
    %647 = vmatprep.subr.mxu0 0.0
    %648 = vmatpush1.msra.mxu0 %v503
    %649 = vmatprep.subr.mxu0 0.0
    %650 = vmatpush2.msra.mxu0 0.0
    %651 = vmatprep.subr.mxu0 0.0
    %652 = vmatpush2.msra.mxu0 0.0
    %653 = vmatprep.subr.mxu0 0.0
    %654 = vmatpush2.msra.mxu0 0.0
    %655 = vmatprep.subr.mxu0 0.0
    %656 = vmatpush2.msra.mxu0 0.0
    %657 = vmatprep.subr.mxu0 0.0
    %658 = vmatpush2.msra.mxu0 0.0
    %659 = vmatprep.subr.mxu0 0.0
    %660 = vmatpush2.msra.mxu0 0.0
    %661 = vmatprep.subr.mxu0 0.0
    %662 = vmatpush2.msra.mxu0 0.0
    %663 = vmatprep.subr.mxu0 0.0
    %664 = vmatpush2.msra.mxu0 0.0
    %665 = vmatprep.subr.mxu0 0.0
    %666 = vmatpush2.msra.mxu0 0.0
    %667 = vmatprep.subr.mxu0 0.0
    %668 = vmatpush2.msra.mxu0 0.0
    %669 = vmatprep.subr.mxu0 0.0
    %670 = vmatpush2.msra.mxu0 0.0
    %671 = vmatprep.subr.mxu0 0.0
    %672 = vmatpush2.msra.mxu0 0.0
    %673 = vmatprep.subr.mxu0 0.0
    %674 = vmatpush2.msra.mxu0 0.0
    %675 = vmatprep.subr.mxu0 0.0
    %676 = vmatpush2.msra.mxu0 0.0
    %677 = vmatprep.subr.mxu0 0.0
    %678 = vmatpush2.msra.mxu0 0.0
    %679 = vmatprep.subr.mxu0 0.0
    %680 = vmatpush2.msra.mxu0 0.0
    %681 = vmatprep.mubr.f32.mxu0 0.0
    %682 = vmatmul.mubr.f32.gmra.mxu0 0.0
    %v683 = vpop.f32.mrf.mxu0
    %v684 = vadd.f32 0.0, %v683
    %v685 = vpop.f32.mrf.mxu0
    %686 = vdwg.mxu0
    %v687 = vadd.f32 %v616, %v684
    %v688 = vxor.u32 %v687, 2147483648
    %v689 = vmul.f32 %v688, 1.442695
    %v690 = vpow.pop %v689
    %v691 = vadd.f32 %v690, 1.0
    %v692 = vrcp.pop %v691
    %v693 = vmul.f32 1.0, %v692
    %v694 = vld [vmem:[#allocation4] sm:$0xff]
    %v696 = vlaneseq
    %v697 = vshrl.u32 %v696, 7
    %v698 = vsub.s32 0, %v697
    %v699 = vrot.slane %v537, %v698
    %701 = vmatprep.subr.mxu0 0.0
    %702 = vmatpush1.msra.mxu0 %v535
    %703 = vmatprep.subr.mxu0 0.0
    %704 = vmatpush1.msra.mxu0 %v534
    %705 = vmatprep.subr.mxu0 0.0
    %706 = vmatpush1.msra.mxu0 %v533
    %707 = vmatprep.subr.mxu0 0.0
    %708 = vmatpush1.msra.mxu0 %v532
    %709 = vmatprep.subr.mxu0 0.0
    %710 = vmatpush1.msra.mxu0 %v531
    %711 = vmatprep.subr.mxu0 0.0
    %712 = vmatpush1.msra.mxu0 %v530
    %713 = vmatprep.subr.mxu0 0.0
    %714 = vmatpush1.msra.mxu0 %v529
    %715 = vmatprep.subr.mxu0 0.0
    %716 = vmatpush1.msra.mxu0 %v528
    %717 = vmatprep.subr.mxu0 0.0
    %718 = vmatpush1.msra.mxu0 %v527
    %719 = vmatprep.subr.mxu0 0.0
    %720 = vmatpush1.msra.mxu0 %v526
    %721 = vmatprep.subr.mxu0 0.0
    %722 = vmatpush1.msra.mxu0 %v525
    %723 = vmatprep.subr.mxu0 0.0
    %724 = vmatpush1.msra.mxu0 %v524
    %725 = vmatprep.subr.mxu0 0.0
    %726 = vmatpush1.msra.mxu0 %v523
    %727 = vmatprep.subr.mxu0 0.0
    %728 = vmatpush1.msra.mxu0 %v522
    %729 = vmatprep.subr.mxu0 0.0
    %730 = vmatpush1.msra.mxu0 %v521
    %731 = vmatprep.subr.mxu0 0.0
    %732 = vmatpush1.msra.mxu0 %v520
    %733 = vmatprep.subr.mxu0 0.0
    %734 = vmatpush2.msra.mxu0 0.0
    %735 = vmatprep.subr.mxu0 0.0
    %736 = vmatpush2.msra.mxu0 0.0
    %737 = vmatprep.subr.mxu0 0.0
    %738 = vmatpush2.msra.mxu0 0.0
    %739 = vmatprep.subr.mxu0 0.0
    %740 = vmatpush2.msra.mxu0 0.0
    %741 = vmatprep.subr.mxu0 0.0
    %742 = vmatpush2.msra.mxu0 0.0
    %743 = vmatprep.subr.mxu0 0.0
    %744 = vmatpush2.msra.mxu0 0.0
    %745 = vmatprep.subr.mxu0 0.0
    %746 = vmatpush2.msra.mxu0 0.0
    %747 = vmatprep.subr.mxu0 0.0
    %748 = vmatpush2.msra.mxu0 0.0
    %749 = vmatprep.subr.mxu0 0.0
    %750 = vmatpush2.msra.mxu0 0.0
    %751 = vmatprep.subr.mxu0 0.0
    %752 = vmatpush2.msra.mxu0 0.0
    %753 = vmatprep.subr.mxu0 0.0
    %754 = vmatpush2.msra.mxu0 0.0
    %755 = vmatprep.subr.mxu0 0.0
    %756 = vmatpush2.msra.mxu0 0.0
    %757 = vmatprep.subr.mxu0 0.0
    %758 = vmatpush2.msra.mxu0 0.0
    %759 = vmatprep.subr.mxu0 0.0
    %760 = vmatpush2.msra.mxu0 0.0
    %761 = vmatprep.subr.mxu0 0.0
    %762 = vmatpush2.msra.mxu0 0.0
    %763 = vmatprep.subr.mxu0 0.0
    %764 = vmatpush2.msra.mxu0 0.0
    %765 = vmatprep.mubr.f32.mxu0 0.0
    %766 = vmatmul.mubr.f32.gmra.mxu0 0.0
    %v767 = vpop.f32.mrf.mxu0
    %v768 = vadd.f32 %v699, %v767
    %v769 = vpop.f32.mrf.mxu0
    %770 = vdwg.mxu0
    %v771 = vmul.f32 %v615, %v768
    %v772 = vadd.f32 %v694, %v771
    %v773 = vtanh.pop %v772
    %v774 = vsub.f32 1.0, %v693
    %v775 = vmul.f32 %v774, %v773
    %v776 = vmul.f32 %v693, 0.0
    %v777 = vadd.f32 %v775, %v776
    %778 = vst [vmem:[#allocation5] sm:$0xff] %v777
    %s779 = scalar_lea.vmem [#allocation2], 8
    %v780 = vld [vmem:[%s779] sm:$0xff]
    %781 = vmatprep.subr.mxu0 0.0
    %782 = vmatpush1.msra.mxu0 %v501
    %783 = vmatprep.subr.mxu0 0.0
    %784 = vmatpush1.msra.mxu0 %v500
    %785 = vmatprep.subr.mxu0 0.0
    %786 = vmatpush1.msra.mxu0 %v499
    %787 = vmatprep.subr.mxu0 0.0
    %788 = vmatpush1.msra.mxu0 %v498
    %789 = vmatprep.subr.mxu0 0.0
    %790 = vmatpush1.msra.mxu0 %v497
    %791 = vmatprep.subr.mxu0 0.0
    %792 = vmatpush1.msra.mxu0 %v496
    %793 = vmatprep.subr.mxu0 0.0
    %794 = vmatpush1.msra.mxu0 %v495
    %795 = vmatprep.subr.mxu0 0.0
    %796 = vmatpush1.msra.mxu0 %v494
    %797 = vmatprep.subr.mxu0 0.0
    %798 = vmatpush1.msra.mxu0 %v493
    %799 = vmatprep.subr.mxu0 0.0
    %800 = vmatpush1.msra.mxu0 %v492
    %801 = vmatprep.subr.mxu0 0.0
    %802 = vmatpush1.msra.mxu0 %v491
    %803 = vmatprep.subr.mxu0 0.0
    %804 = vmatpush1.msra.mxu0 %v490
    %805 = vmatprep.subr.mxu0 0.0
    %806 = vmatpush1.msra.mxu0 %v489
    %807 = vmatprep.subr.mxu0 0.0
    %808 = vmatpush1.msra.mxu0 %v488
    %809 = vmatprep.subr.mxu0 0.0
    %810 = vmatpush1.msra.mxu0 %v487
    %811 = vmatprep.subr.mxu0 0.0
    %812 = vmatpush1.msra.mxu0 %v486
    %813 = vmatprep.subr.mxu0 0.0
    %814 = vmatpush2.msra.mxu0 0.0
    %815 = vmatprep.subr.mxu0 0.0
    %816 = vmatpush2.msra.mxu0 0.0
    %817 = vmatprep.subr.mxu0 0.0
    %818 = vmatpush2.msra.mxu0 0.0
    %819 = vmatprep.subr.mxu0 0.0
    %820 = vmatpush2.msra.mxu0 0.0
    %821 = vmatprep.subr.mxu0 0.0
    %822 = vmatpush2.msra.mxu0 0.0
    %823 = vmatprep.subr.mxu0 0.0
    %824 = vmatpush2.msra.mxu0 0.0
    %825 = vmatprep.subr.mxu0 0.0
    %826 = vmatpush2.msra.mxu0 0.0
    %827 = vmatprep.subr.mxu0 0.0
    %828 = vmatpush2.msra.mxu0 0.0
    %829 = vmatprep.subr.mxu0 0.0
    %830 = vmatpush2.msra.mxu0 0.0
    %831 = vmatprep.subr.mxu0 0.0
    %832 = vmatpush2.msra.mxu0 0.0
    %833 = vmatprep.subr.mxu0 0.0
    %834 = vmatpush2.msra.mxu0 0.0
    %835 = vmatprep.subr.mxu0 0.0
    %836 = vmatpush2.msra.mxu0 0.0
    %837 = vmatprep.subr.mxu0 0.0
    %838 = vmatpush2.msra.mxu0 0.0
    %839 = vmatprep.subr.mxu0 0.0
    %840 = vmatpush2.msra.mxu0 0.0
    %841 = vmatprep.subr.mxu0 0.0
    %842 = vmatpush2.msra.mxu0 0.0
    %843 = vmatprep.subr.mxu0 0.0
    %844 = vmatpush2.msra.mxu0 0.0
    %845 = vmatprep.mubr.f32.mxu0 0.0
    %846 = vmatmul.mubr.f32.gmra.mxu0 %v777
    %v847 = vpop.f32.mrf.mxu0
    %v848 = vadd.f32 0.0, %v847
    %v849 = vpop.f32.mrf.mxu0
    %850 = vdwg.mxu0
    %v851 = vadd.f32 %v780, %v848
    %v852 = vxor.u32 %v851, 2147483648
    %v853 = vmul.f32 %v852, 1.442695
    %v854 = vpow.pop %v853
    %v855 = vadd.f32 %v854, 1.0
    %v856 = vrcp.pop %v855
    %v857 = vmul.f32 1.0, %v856
    %s858 = scalar_lea.vmem [#allocation3], 8
    %v859 = vld [vmem:[%s858] sm:$0xff]
    %860 = vmatprep.subr.mxu0 0.0
    %861 = vmatpush1.msra.mxu0 %v518
    %862 = vmatprep.subr.mxu0 0.0
    %863 = vmatpush1.msra.mxu0 %v517
    %864 = vmatprep.subr.mxu0 0.0
    %865 = vmatpush1.msra.mxu0 %v516
    %866 = vmatprep.subr.mxu0 0.0
    %867 = vmatpush1.msra.mxu0 %v515
    %868 = vmatprep.subr.mxu0 0.0
    %869 = vmatpush1.msra.mxu0 %v514
    %870 = vmatprep.subr.mxu0 0.0
    %871 = vmatpush1.msra.mxu0 %v513
    %872 = vmatprep.subr.mxu0 0.0
    %873 = vmatpush1.msra.mxu0 %v512
    %874 = vmatprep.subr.mxu0 0.0
    %875 = vmatpush1.msra.mxu0 %v511
    %876 = vmatprep.subr.mxu0 0.0
    %877 = vmatpush1.msra.mxu0 %v510
    %878 = vmatprep.subr.mxu0 0.0
    %879 = vmatpush1.msra.mxu0 %v509
    %880 = vmatprep.subr.mxu0 0.0
    %881 = vmatpush1.msra.mxu0 %v508
    %882 = vmatprep.subr.mxu0 0.0
    %883 = vmatpush1.msra.mxu0 %v507
    %884 = vmatprep.subr.mxu0 0.0
    %885 = vmatpush1.msra.mxu0 %v506
    %886 = vmatprep.subr.mxu0 0.0
    %887 = vmatpush1.msra.mxu0 %v505
    %888 = vmatprep.subr.mxu0 0.0
    %889 = vmatpush1.msra.mxu0 %v504
    %890 = vmatprep.subr.mxu0 0.0
    %891 = vmatpush1.msra.mxu0 %v503
    %892 = vmatprep.subr.mxu0 0.0
    %893 = vmatpush2.msra.mxu0 0.0
    %894 = vmatprep.subr.mxu0 0.0
    %895 = vmatpush2.msra.mxu0 0.0
    %896 = vmatprep.subr.mxu0 0.0
    %897 = vmatpush2.msra.mxu0 0.0
    %898 = vmatprep.subr.mxu0 0.0
    %899 = vmatpush2.msra.mxu0 0.0
    %900 = vmatprep.subr.mxu0 0.0
    %901 = vmatpush2.msra.mxu0 0.0
    %902 = vmatprep.subr.mxu0 0.0
    %903 = vmatpush2.msra.mxu0 0.0
    %904 = vmatprep.subr.mxu0 0.0
    %905 = vmatpush2.msra.mxu0 0.0
    %906 = vmatprep.subr.mxu0 0.0
    %907 = vmatpush2.msra.mxu0 0.0
    %908 = vmatprep.subr.mxu0 0.0
    %909 = vmatpush2.msra.mxu0 0.0
    %910 = vmatprep.subr.mxu0 0.0
    %911 = vmatpush2.msra.mxu0 0.0
    %912 = vmatprep.subr.mxu0 0.0
    %913 = vmatpush2.msra.mxu0 0.0
    %914 = vmatprep.subr.mxu0 0.0
    %915 = vmatpush2.msra.mxu0 0.0
    %916 = vmatprep.subr.mxu0 0.0
    %917 = vmatpush2.msra.mxu0 0.0
    %918 = vmatprep.subr.mxu0 0.0
    %919 = vmatpush2.msra.mxu0 0.0
    %920 = vmatprep.subr.mxu0 0.0
    %921 = vmatpush2.msra.mxu0 0.0
    %922 = vmatprep.subr.mxu0 0.0
    %923 = vmatpush2.msra.mxu0 0.0
    %924 = vmatprep.mubr.f32.mxu0 0.0
    %925 = vmatmul.mubr.f32.gmra.mxu0 %v777
    %v926 = vpop.f32.mrf.mxu0
    %v927 = vadd.f32 0.0, %v926
    %v928 = vpop.f32.mrf.mxu0
    %929 = vdwg.mxu0
    %v930 = vadd.f32 %v859, %v927
    %v931 = vxor.u32 %v930, 2147483648
    %v932 = vmul.f32 %v931, 1.442695
    %v933 = vpow.pop %v932
    %v934 = vadd.f32 %v933, 1.0
    %v935 = vrcp.pop %v934
    %v936 = vmul.f32 1.0, %v935
    %s937 = scalar_lea.vmem [#allocation4], 8
    %v938 = vld [vmem:[%s937] sm:$0xff]
    %939 = vmatprep.subr.mxu0 0.0
    %940 = vmatpush1.msra.mxu0 %v535
    %941 = vmatprep.subr.mxu0 0.0
    %942 = vmatpush1.msra.mxu0 %v534
    %943 = vmatprep.subr.mxu0 0.0
    %944 = vmatpush1.msra.mxu0 %v533
    %945 = vmatprep.subr.mxu0 0.0
    %946 = vmatpush1.msra.mxu0 %v532
    %947 = vmatprep.subr.mxu0 0.0
    %948 = vmatpush1.msra.mxu0 %v531
    %949 = vmatprep.subr.mxu0 0.0
    %950 = vmatpush1.msra.mxu0 %v530
    %951 = vmatprep.subr.mxu0 0.0
    %952 = vmatpush1.msra.mxu0 %v529
    %953 = vmatprep.subr.mxu0 0.0
    %954 = vmatpush1.msra.mxu0 %v528
    %955 = vmatprep.subr.mxu0 0.0
    %956 = vmatpush1.msra.mxu0 %v527
    %957 = vmatprep.subr.mxu0 0.0
    %958 = vmatpush1.msra.mxu0 %v526
    %959 = vmatprep.subr.mxu0 0.0
    %960 = vmatpush1.msra.mxu0 %v525
    %961 = vmatprep.subr.mxu0 0.0
    %962 = vmatpush1.msra.mxu0 %v524
    %963 = vmatprep.subr.mxu0 0.0
    %964 = vmatpush1.msra.mxu0 %v523
    %965 = vmatprep.subr.mxu0 0.0
    %966 = vmatpush1.msra.mxu0 %v522
    %967 = vmatprep.subr.mxu0 0.0
    %968 = vmatpush1.msra.mxu0 %v521
    %969 = vmatprep.subr.mxu0 0.0
    %970 = vmatpush1.msra.mxu0 %v520
    %971 = vmatprep.subr.mxu0 0.0
    %972 = vmatpush2.msra.mxu0 0.0
    %973 = vmatprep.subr.mxu0 0.0
    %974 = vmatpush2.msra.mxu0 0.0
    %975 = vmatprep.subr.mxu0 0.0
    %976 = vmatpush2.msra.mxu0 0.0
    %977 = vmatprep.subr.mxu0 0.0
    %978 = vmatpush2.msra.mxu0 0.0
    %979 = vmatprep.subr.mxu0 0.0
    %980 = vmatpush2.msra.mxu0 0.0
    %981 = vmatprep.subr.mxu0 0.0
    %982 = vmatpush2.msra.mxu0 0.0
    %983 = vmatprep.subr.mxu0 0.0
    %984 = vmatpush2.msra.mxu0 0.0
    %985 = vmatprep.subr.mxu0 0.0
    %986 = vmatpush2.msra.mxu0 0.0
    %987 = vmatprep.subr.mxu0 0.0
    %988 = vmatpush2.msra.mxu0 0.0
    %989 = vmatprep.subr.mxu0 0.0
    %990 = vmatpush2.msra.mxu0 0.0
    %991 = vmatprep.subr.mxu0 0.0
    %992 = vmatpush2.msra.mxu0 0.0
    %993 = vmatprep.subr.mxu0 0.0
    %994 = vmatpush2.msra.mxu0 0.0
    %995 = vmatprep.subr.mxu0 0.0
    %996 = vmatpush2.msra.mxu0 0.0
    %997 = vmatprep.subr.mxu0 0.0
    %998 = vmatpush2.msra.mxu0 0.0
    %999 = vmatprep.subr.mxu0 0.0
    %1000 = vmatpush2.msra.mxu0 0.0
    %1001 = vmatprep.subr.mxu0 0.0
    %1002 = vmatpush2.msra.mxu0 0.0
    %1003 = vmatprep.mubr.f32.mxu0 0.0
    %1004 = vmatmul.mubr.f32.gmra.mxu0 %v777
    %v1005 = vpop.f32.mrf.mxu0
    %v1006 = vadd.f32 %v699, %v1005
    %v1007 = vpop.f32.mrf.mxu0
    %1008 = vdwg.mxu0
    %v1009 = vmul.f32 %v857, %v1006
    %v1010 = vadd.f32 %v938, %v1009
    %v1011 = vtanh.pop %v1010
    %v1012 = vsub.f32 1.0, %v936
    %v1013 = vmul.f32 %v1012, %v1011
    %v1014 = vmul.f32 %v936, %v777
    %v1015 = vadd.f32 %v1013, %v1014
    %s1016 = scalar_lea.vmem [#allocation5], 8
    %1017 = vst [vmem:[%s1016] sm:$0xff] %v1015
    %s1018 = scalar_lea.vmem [#allocation2], 16
    %v1019 = vld [vmem:[%s1018] sm:$0xff]
    %1020 = vmatprep.subr.mxu0 0.0
    %1021 = vmatpush1.msra.mxu0 %v501
    %1022 = vmatprep.subr.mxu0 0.0
    %1023 = vmatpush1.msra.mxu0 %v500
    %1024 = vmatprep.subr.mxu0 0.0
    %1025 = vmatpush1.msra.mxu0 %v499
    %1026 = vmatprep.subr.mxu0 0.0
    %1027 = vmatpush1.msra.mxu0 %v498
    %1028 = vmatprep.subr.mxu0 0.0
    %1029 = vmatpush1.msra.mxu0 %v497
    %1030 = vmatprep.subr.mxu0 0.0
    %1031 = vmatpush1.msra.mxu0 %v496
    %1032 = vmatprep.subr.mxu0 0.0
    %1033 = vmatpush1.msra.mxu0 %v495
    %1034 = vmatprep.subr.mxu0 0.0
    %1035 = vmatpush1.msra.mxu0 %v494
    %1036 = vmatprep.subr.mxu0 0.0
    %1037 = vmatpush1.msra.mxu0 %v493
    %1038 = vmatprep.subr.mxu0 0.0
    %1039 = vmatpush1.msra.mxu0 %v492
    %1040 = vmatprep.subr.mxu0 0.0
    %1041 = vmatpush1.msra.mxu0 %v491
    %1042 = vmatprep.subr.mxu0 0.0
    %1043 = vmatpush1.msra.mxu0 %v490
    %1044 = vmatprep.subr.mxu0 0.0
    %1045 = vmatpush1.msra.mxu0 %v489
    %1046 = vmatprep.subr.mxu0 0.0
    %1047 = vmatpush1.msra.mxu0 %v488
    %1048 = vmatprep.subr.mxu0 0.0
    %1049 = vmatpush1.msra.mxu0 %v487
    %1050 = vmatprep.subr.mxu0 0.0
    %1051 = vmatpush1.msra.mxu0 %v486
    %1052 = vmatprep.subr.mxu0 0.0
    %1053 = vmatpush2.msra.mxu0 0.0
    %1054 = vmatprep.subr.mxu0 0.0
    %1055 = vmatpush2.msra.mxu0 0.0
    %1056 = vmatprep.subr.mxu0 0.0
    %1057 = vmatpush2.msra.mxu0 0.0
    %1058 = vmatprep.subr.mxu0 0.0
    %1059 = vmatpush2.msra.mxu0 0.0
    %1060 = vmatprep.subr.mxu0 0.0
    %1061 = vmatpush2.msra.mxu0 0.0
    %1062 = vmatprep.subr.mxu0 0.0
    %1063 = vmatpush2.msra.mxu0 0.0
    %1064 = vmatprep.subr.mxu0 0.0
    %1065 = vmatpush2.msra.mxu0 0.0
    %1066 = vmatprep.subr.mxu0 0.0
    %1067 = vmatpush2.msra.mxu0 0.0
    %1068 = vmatprep.subr.mxu0 0.0
    %1069 = vmatpush2.msra.mxu0 0.0
    %1070 = vmatprep.subr.mxu0 0.0
    %1071 = vmatpush2.msra.mxu0 0.0
    %1072 = vmatprep.subr.mxu0 0.0
    %1073 = vmatpush2.msra.mxu0 0.0
    %1074 = vmatprep.subr.mxu0 0.0
    %1075 = vmatpush2.msra.mxu0 0.0
    %1076 = vmatprep.subr.mxu0 0.0
    %1077 = vmatpush2.msra.mxu0 0.0
    %1078 = vmatprep.subr.mxu0 0.0
    %1079 = vmatpush2.msra.mxu0 0.0
    %1080 = vmatprep.subr.mxu0 0.0
    %1081 = vmatpush2.msra.mxu0 0.0
    %1082 = vmatprep.subr.mxu0 0.0
    %1083 = vmatpush2.msra.mxu0 0.0
    %1084 = vmatprep.mubr.f32.mxu0 0.0
    %1085 = vmatmul.mubr.f32.gmra.mxu0 %v1015
    %v1086 = vpop.f32.mrf.mxu0
    %v1087 = vadd.f32 0.0, %v1086
    %v1088 = vpop.f32.mrf.mxu0
    %1089 = vdwg.mxu0
    %v1090 = vadd.f32 %v1019, %v1087
    %v1091 = vxor.u32 %v1090, 2147483648
    %v1092 = vmul.f32 %v1091, 1.442695
    %v1093 = vpow.pop %v1092
    %v1094 = vadd.f32 %v1093, 1.0
    %v1095 = vrcp.pop %v1094
    %v1096 = vmul.f32 1.0, %v1095
    %s1097 = scalar_lea.vmem [#allocation3], 16
    %v1098 = vld [vmem:[%s1097] sm:$0xff]
    %1099 = vmatprep.subr.mxu0 0.0
    %1100 = vmatpush1.msra.mxu0 %v518
    %1101 = vmatprep.subr.mxu0 0.0
    %1102 = vmatpush1.msra.mxu0 %v517
    %1103 = vmatprep.subr.mxu0 0.0
    %1104 = vmatpush1.msra.mxu0 %v516
    %1105 = vmatprep.subr.mxu0 0.0
    %1106 = vmatpush1.msra.mxu0 %v515
    %1107 = vmatprep.subr.mxu0 0.0
    %1108 = vmatpush1.msra.mxu0 %v514
    %1109 = vmatprep.subr.mxu0 0.0
    %1110 = vmatpush1.msra.mxu0 %v513
    %1111 = vmatprep.subr.mxu0 0.0
    %1112 = vmatpush1.msra.mxu0 %v512
    %1113 = vmatprep.subr.mxu0 0.0
    %1114 = vmatpush1.msra.mxu0 %v511
    %1115 = vmatprep.subr.mxu0 0.0
    %1116 = vmatpush1.msra.mxu0 %v510
    %1117 = vmatprep.subr.mxu0 0.0
    %1118 = vmatpush1.msra.mxu0 %v509
    %1119 = vmatprep.subr.mxu0 0.0
    %1120 = vmatpush1.msra.mxu0 %v508
    %1121 = vmatprep.subr.mxu0 0.0
    %1122 = vmatpush1.msra.mxu0 %v507
    %1123 = vmatprep.subr.mxu0 0.0
    %1124 = vmatpush1.msra.mxu0 %v506
    %1125 = vmatprep.subr.mxu0 0.0
    %1126 = vmatpush1.msra.mxu0 %v505
    %1127 = vmatprep.subr.mxu0 0.0
    %1128 = vmatpush1.msra.mxu0 %v504
    %1129 = vmatprep.subr.mxu0 0.0
    %1130 = vmatpush1.msra.mxu0 %v503
    %1131 = vmatprep.subr.mxu0 0.0
    %1132 = vmatpush2.msra.mxu0 0.0
    %1133 = vmatprep.subr.mxu0 0.0
    %1134 = vmatpush2.msra.mxu0 0.0
    %1135 = vmatprep.subr.mxu0 0.0
    %1136 = vmatpush2.msra.mxu0 0.0
    %1137 = vmatprep.subr.mxu0 0.0
    %1138 = vmatpush2.msra.mxu0 0.0
    %1139 = vmatprep.subr.mxu0 0.0
    %1140 = vmatpush2.msra.mxu0 0.0
    %1141 = vmatprep.subr.mxu0 0.0
    %1142 = vmatpush2.msra.mxu0 0.0
    %1143 = vmatprep.subr.mxu0 0.0
    %1144 = vmatpush2.msra.mxu0 0.0
    %1145 = vmatprep.subr.mxu0 0.0
    %1146 = vmatpush2.msra.mxu0 0.0
    %1147 = vmatprep.subr.mxu0 0.0
    %1148 = vmatpush2.msra.mxu0 0.0
    %1149 = vmatprep.subr.mxu0 0.0
    %1150 = vmatpush2.msra.mxu0 0.0
    %1151 = vmatprep.subr.mxu0 0.0
    %1152 = vmatpush2.msra.mxu0 0.0
    %1153 = vmatprep.subr.mxu0 0.0
    %1154 = vmatpush2.msra.mxu0 0.0
    %1155 = vmatprep.subr.mxu0 0.0
    %1156 = vmatpush2.msra.mxu0 0.0
    %1157 = vmatprep.subr.mxu0 0.0
    %1158 = vmatpush2.msra.mxu0 0.0
    %1159 = vmatprep.subr.mxu0 0.0
    %1160 = vmatpush2.msra.mxu0 0.0
    %1161 = vmatprep.subr.mxu0 0.0
    %1162 = vmatpush2.msra.mxu0 0.0
    %1163 = vmatprep.mubr.f32.mxu0 0.0
    %1164 = vmatmul.mubr.f32.gmra.mxu0 %v1015
    %v1165 = vpop.f32.mrf.mxu0
    %v1166 = vadd.f32 0.0, %v1165
    %v1167 = vpop.f32.mrf.mxu0
    %1168 = vdwg.mxu0
    %v1169 = vadd.f32 %v1098, %v1166
    %v1170 = vxor.u32 %v1169, 2147483648
    %v1171 = vmul.f32 %v1170, 1.442695
    %v1172 = vpow.pop %v1171
    %v1173 = vadd.f32 %v1172, 1.0
    %v1174 = vrcp.pop %v1173
    %v1175 = vmul.f32 1.0, %v1174
    %s1176 = scalar_lea.vmem [#allocation4], 16
    %v1177 = vld [vmem:[%s1176] sm:$0xff]
    %1178 = vmatprep.subr.mxu0 0.0
    %1179 = vmatpush1.msra.mxu0 %v535
    %1180 = vmatprep.subr.mxu0 0.0
    %1181 = vmatpush1.msra.mxu0 %v534
    %1182 = vmatprep.subr.mxu0 0.0
    %1183 = vmatpush1.msra.mxu0 %v533
    %1184 = vmatprep.subr.mxu0 0.0
    %1185 = vmatpush1.msra.mxu0 %v532
    %1186 = vmatprep.subr.mxu0 0.0
    %1187 = vmatpush1.msra.mxu0 %v531
    %1188 = vmatprep.subr.mxu0 0.0
    %1189 = vmatpush1.msra.mxu0 %v530
    %1190 = vmatprep.subr.mxu0 0.0
    %1191 = vmatpush1.msra.mxu0 %v529
    %1192 = vmatprep.subr.mxu0 0.0
    %1193 = vmatpush1.msra.mxu0 %v528
    %1194 = vmatprep.subr.mxu0 0.0
    %1195 = vmatpush1.msra.mxu0 %v527
    %1196 = vmatprep.subr.mxu0 0.0
    %1197 = vmatpush1.msra.mxu0 %v526
    %1198 = vmatprep.subr.mxu0 0.0
    %1199 = vmatpush1.msra.mxu0 %v525
    %1200 = vmatprep.subr.mxu0 0.0
    %1201 = vmatpush1.msra.mxu0 %v524
    %1202 = vmatprep.subr.mxu0 0.0
    %1203 = vmatpush1.msra.mxu0 %v523
    %1204 = vmatprep.subr.mxu0 0.0
    %1205 = vmatpush1.msra.mxu0 %v522
    %1206 = vmatprep.subr.mxu0 0.0
    %1207 = vmatpush1.msra.mxu0 %v521
    %1208 = vmatprep.subr.mxu0 0.0
    %1209 = vmatpush1.msra.mxu0 %v520
    %1210 = vmatprep.subr.mxu0 0.0
    %1211 = vmatpush2.msra.mxu0 0.0
    %1212 = vmatprep.subr.mxu0 0.0
    %1213 = vmatpush2.msra.mxu0 0.0
    %1214 = vmatprep.subr.mxu0 0.0
    %1215 = vmatpush2.msra.mxu0 0.0
    %1216 = vmatprep.subr.mxu0 0.0
    %1217 = vmatpush2.msra.mxu0 0.0
    %1218 = vmatprep.subr.mxu0 0.0
    %1219 = vmatpush2.msra.mxu0 0.0
    %1220 = vmatprep.subr.mxu0 0.0
    %1221 = vmatpush2.msra.mxu0 0.0
    %1222 = vmatprep.subr.mxu0 0.0
    %1223 = vmatpush2.msra.mxu0 0.0
    %1224 = vmatprep.subr.mxu0 0.0
    %1225 = vmatpush2.msra.mxu0 0.0
    %1226 = vmatprep.subr.mxu0 0.0
    %1227 = vmatpush2.msra.mxu0 0.0
    %1228 = vmatprep.subr.mxu0 0.0
    %1229 = vmatpush2.msra.mxu0 0.0
    %1230 = vmatprep.subr.mxu0 0.0
    %1231 = vmatpush2.msra.mxu0 0.0
    %1232 = vmatprep.subr.mxu0 0.0
    %1233 = vmatpush2.msra.mxu0 0.0
    %1234 = vmatprep.subr.mxu0 0.0
    %1235 = vmatpush2.msra.mxu0 0.0
    %1236 = vmatprep.subr.mxu0 0.0
    %1237 = vmatpush2.msra.mxu0 0.0
    %1238 = vmatprep.subr.mxu0 0.0
    %1239 = vmatpush2.msra.mxu0 0.0
    %1240 = vmatprep.subr.mxu0 0.0
    %1241 = vmatpush2.msra.mxu0 0.0
    %1242 = vmatprep.mubr.f32.mxu0 0.0
    %1243 = vmatmul.mubr.f32.gmra.mxu0 %v1015
    %v1244 = vpop.f32.mrf.mxu0
    %v1245 = vadd.f32 %v699, %v1244
    %v1246 = vpop.f32.mrf.mxu0
    %1247 = vdwg.mxu0
    %v1248 = vmul.f32 %v1096, %v1245
    %v1249 = vadd.f32 %v1177, %v1248
    %v1250 = vtanh.pop %v1249
    %v1251 = vsub.f32 1.0, %v1175
    %v1252 = vmul.f32 %v1251, %v1250
    %v1253 = vmul.f32 %v1175, %v1015
    %v1254 = vadd.f32 %v1252, %v1253
    %s1255 = scalar_lea.vmem [#allocation5], 16
    %1256 = vst [vmem:[%s1255] sm:$0xff] %v1254
    %s1257 = scalar_lea.vmem [#allocation2], 24
    %v1258 = vld [vmem:[%s1257] sm:$0xff]
    %1259 = vmatprep.subr.mxu0 0.0
    %1260 = vmatpush1.msra.mxu0 %v501
    %1261 = vmatprep.subr.mxu0 0.0
    %1262 = vmatpush1.msra.mxu0 %v500
    %1263 = vmatprep.subr.mxu0 0.0
    %1264 = vmatpush1.msra.mxu0 %v499
    %1265 = vmatprep.subr.mxu0 0.0
    %1266 = vmatpush1.msra.mxu0 %v498
    %1267 = vmatprep.subr.mxu0 0.0
    %1268 = vmatpush1.msra.mxu0 %v497
    %1269 = vmatprep.subr.mxu0 0.0
    %1270 = vmatpush1.msra.mxu0 %v496
    %1271 = vmatprep.subr.mxu0 0.0
    %1272 = vmatpush1.msra.mxu0 %v495
    %1273 = vmatprep.subr.mxu0 0.0
    %1274 = vmatpush1.msra.mxu0 %v494
    %1275 = vmatprep.subr.mxu0 0.0
    %1276 = vmatpush1.msra.mxu0 %v493
    %1277 = vmatprep.subr.mxu0 0.0
    %1278 = vmatpush1.msra.mxu0 %v492
    %1279 = vmatprep.subr.mxu0 0.0
    %1280 = vmatpush1.msra.mxu0 %v491
    %1281 = vmatprep.subr.mxu0 0.0
    %1282 = vmatpush1.msra.mxu0 %v490
    %1283 = vmatprep.subr.mxu0 0.0
    %1284 = vmatpush1.msra.mxu0 %v489
    %1285 = vmatprep.subr.mxu0 0.0
    %1286 = vmatpush1.msra.mxu0 %v488
    %1287 = vmatprep.subr.mxu0 0.0
    %1288 = vmatpush1.msra.mxu0 %v487
    %1289 = vmatprep.subr.mxu0 0.0
    %1290 = vmatpush1.msra.mxu0 %v486
    %1291 = vmatprep.subr.mxu0 0.0
    %1292 = vmatpush2.msra.mxu0 0.0
    %1293 = vmatprep.subr.mxu0 0.0
    %1294 = vmatpush2.msra.mxu0 0.0
    %1295 = vmatprep.subr.mxu0 0.0
    %1296 = vmatpush2.msra.mxu0 0.0
    %1297 = vmatprep.subr.mxu0 0.0
    %1298 = vmatpush2.msra.mxu0 0.0
    %1299 = vmatprep.subr.mxu0 0.0
    %1300 = vmatpush2.msra.mxu0 0.0
    %1301 = vmatprep.subr.mxu0 0.0
    %1302 = vmatpush2.msra.mxu0 0.0
    %1303 = vmatprep.subr.mxu0 0.0
    %1304 = vmatpush2.msra.mxu0 0.0
    %1305 = vmatprep.subr.mxu0 0.0
    %1306 = vmatpush2.msra.mxu0 0.0
    %1307 = vmatprep.subr.mxu0 0.0
    %1308 = vmatpush2.msra.mxu0 0.0
    %1309 = vmatprep.subr.mxu0 0.0
    %1310 = vmatpush2.msra.mxu0 0.0
    %1311 = vmatprep.subr.mxu0 0.0
    %1312 = vmatpush2.msra.mxu0 0.0
    %1313 = vmatprep.subr.mxu0 0.0
    %1314 = vmatpush2.msra.mxu0 0.0
    %1315 = vmatprep.subr.mxu0 0.0
    %1316 = vmatpush2.msra.mxu0 0.0
    %1317 = vmatprep.subr.mxu0 0.0
    %1318 = vmatpush2.msra.mxu0 0.0
    %1319 = vmatprep.subr.mxu0 0.0
    %1320 = vmatpush2.msra.mxu0 0.0
    %1321 = vmatprep.subr.mxu0 0.0
    %1322 = vmatpush2.msra.mxu0 0.0
    %1323 = vmatprep.mubr.f32.mxu0 0.0
    %1324 = vmatmul.mubr.f32.gmra.mxu0 %v1254
    %v1325 = vpop.f32.mrf.mxu0
    %v1326 = vadd.f32 0.0, %v1325
    %v1327 = vpop.f32.mrf.mxu0
    %1328 = vdwg.mxu0
    %v1329 = vadd.f32 %v1258, %v1326
    %v1330 = vxor.u32 %v1329, 2147483648
    %v1331 = vmul.f32 %v1330, 1.442695
    %v1332 = vpow.pop %v1331
    %v1333 = vadd.f32 %v1332, 1.0
    %v1334 = vrcp.pop %v1333
    %v1335 = vmul.f32 1.0, %v1334
    %s1336 = scalar_lea.vmem [#allocation3], 24
    %v1337 = vld [vmem:[%s1336] sm:$0xff]
    %1338 = vmatprep.subr.mxu0 0.0
    %1339 = vmatpush1.msra.mxu0 %v518
    %1340 = vmatprep.subr.mxu0 0.0
    %1341 = vmatpush1.msra.mxu0 %v517
    %1342 = vmatprep.subr.mxu0 0.0
    %1343 = vmatpush1.msra.mxu0 %v516
    %1344 = vmatprep.subr.mxu0 0.0
    %1345 = vmatpush1.msra.mxu0 %v515
    %1346 = vmatprep.subr.mxu0 0.0
    %1347 = vmatpush1.msra.mxu0 %v514
    %1348 = vmatprep.subr.mxu0 0.0
    %1349 = vmatpush1.msra.mxu0 %v513
    %1350 = vmatprep.subr.mxu0 0.0
    %1351 = vmatpush1.msra.mxu0 %v512
    %1352 = vmatprep.subr.mxu0 0.0
    %1353 = vmatpush1.msra.mxu0 %v511
    %1354 = vmatprep.subr.mxu0 0.0
    %1355 = vmatpush1.msra.mxu0 %v510
    %1356 = vmatprep.subr.mxu0 0.0
    %1357 = vmatpush1.msra.mxu0 %v509
    %1358 = vmatprep.subr.mxu0 0.0
    %1359 = vmatpush1.msra.mxu0 %v508
    %1360 = vmatprep.subr.mxu0 0.0
    %1361 = vmatpush1.msra.mxu0 %v507
    %1362 = vmatprep.subr.mxu0 0.0
    %1363 = vmatpush1.msra.mxu0 %v506
    %1364 = vmatprep.subr.mxu0 0.0
    %1365 = vmatpush1.msra.mxu0 %v505
    %1366 = vmatprep.subr.mxu0 0.0
    %1367 = vmatpush1.msra.mxu0 %v504
    %1368 = vmatprep.subr.mxu0 0.0
    %1369 = vmatpush1.msra.mxu0 %v503
    %1370 = vmatprep.subr.mxu0 0.0
    %1371 = vmatpush2.msra.mxu0 0.0
    %1372 = vmatprep.subr.mxu0 0.0
    %1373 = vmatpush2.msra.mxu0 0.0
    %1374 = vmatprep.subr.mxu0 0.0
    %1375 = vmatpush2.msra.mxu0 0.0
    %1376 = vmatprep.subr.mxu0 0.0
    %1377 = vmatpush2.msra.mxu0 0.0
    %1378 = vmatprep.subr.mxu0 0.0
    %1379 = vmatpush2.msra.mxu0 0.0
    %1380 = vmatprep.subr.mxu0 0.0
    %1381 = vmatpush2.msra.mxu0 0.0
    %1382 = vmatprep.subr.mxu0 0.0
    %1383 = vmatpush2.msra.mxu0 0.0
    %1384 = vmatprep.subr.mxu0 0.0
    %1385 = vmatpush2.msra.mxu0 0.0
    %1386 = vmatprep.subr.mxu0 0.0
    %1387 = vmatpush2.msra.mxu0 0.0
    %1388 = vmatprep.subr.mxu0 0.0
    %1389 = vmatpush2.msra.mxu0 0.0
    %1390 = vmatprep.subr.mxu0 0.0
    %1391 = vmatpush2.msra.mxu0 0.0
    %1392 = vmatprep.subr.mxu0 0.0
    %1393 = vmatpush2.msra.mxu0 0.0
    %1394 = vmatprep.subr.mxu0 0.0
    %1395 = vmatpush2.msra.mxu0 0.0
    %1396 = vmatprep.subr.mxu0 0.0
    %1397 = vmatpush2.msra.mxu0 0.0
    %1398 = vmatprep.subr.mxu0 0.0
    %1399 = vmatpush2.msra.mxu0 0.0
    %1400 = vmatprep.subr.mxu0 0.0
    %1401 = vmatpush2.msra.mxu0 0.0
    %1402 = vmatprep.mubr.f32.mxu0 0.0
    %1403 = vmatmul.mubr.f32.gmra.mxu0 %v1254
    %v1404 = vpop.f32.mrf.mxu0
    %v1405 = vadd.f32 0.0, %v1404
    %v1406 = vpop.f32.mrf.mxu0
    %1407 = vdwg.mxu0
    %v1408 = vadd.f32 %v1337, %v1405
    %v1409 = vxor.u32 %v1408, 2147483648
    %v1410 = vmul.f32 %v1409, 1.442695
    %v1411 = vpow.pop %v1410
    %v1412 = vadd.f32 %v1411, 1.0
    %v1413 = vrcp.pop %v1412
    %v1414 = vmul.f32 1.0, %v1413
    %s1415 = scalar_lea.vmem [#allocation4], 24
    %v1416 = vld [vmem:[%s1415] sm:$0xff]
    %1417 = vmatprep.subr.mxu0 0.0
    %1418 = vmatpush1.msra.mxu0 %v535
    %1419 = vmatprep.subr.mxu0 0.0
    %1420 = vmatpush1.msra.mxu0 %v534
    %1421 = vmatprep.subr.mxu0 0.0
    %1422 = vmatpush1.msra.mxu0 %v533
    %1423 = vmatprep.subr.mxu0 0.0
    %1424 = vmatpush1.msra.mxu0 %v532
    %1425 = vmatprep.subr.mxu0 0.0
    %1426 = vmatpush1.msra.mxu0 %v531
    %1427 = vmatprep.subr.mxu0 0.0
    %1428 = vmatpush1.msra.mxu0 %v530
    %1429 = vmatprep.subr.mxu0 0.0
    %1430 = vmatpush1.msra.mxu0 %v529
    %1431 = vmatprep.subr.mxu0 0.0
    %1432 = vmatpush1.msra.mxu0 %v528
    %1433 = vmatprep.subr.mxu0 0.0
    %1434 = vmatpush1.msra.mxu0 %v527
    %1435 = vmatprep.subr.mxu0 0.0
    %1436 = vmatpush1.msra.mxu0 %v526
    %1437 = vmatprep.subr.mxu0 0.0
    %1438 = vmatpush1.msra.mxu0 %v525
    %1439 = vmatprep.subr.mxu0 0.0
    %1440 = vmatpush1.msra.mxu0 %v524
    %1441 = vmatprep.subr.mxu0 0.0
    %1442 = vmatpush1.msra.mxu0 %v523
    %1443 = vmatprep.subr.mxu0 0.0
    %1444 = vmatpush1.msra.mxu0 %v522
    %1445 = vmatprep.subr.mxu0 0.0
    %1446 = vmatpush1.msra.mxu0 %v521
    %1447 = vmatprep.subr.mxu0 0.0
    %1448 = vmatpush1.msra.mxu0 %v520
    %1449 = vmatprep.subr.mxu0 0.0
    %1450 = vmatpush2.msra.mxu0 0.0
    %1451 = vmatprep.subr.mxu0 0.0
    %1452 = vmatpush2.msra.mxu0 0.0
    %1453 = vmatprep.subr.mxu0 0.0
    %1454 = vmatpush2.msra.mxu0 0.0
    %1455 = vmatprep.subr.mxu0 0.0
    %1456 = vmatpush2.msra.mxu0 0.0
    %1457 = vmatprep.subr.mxu0 0.0
    %1458 = vmatpush2.msra.mxu0 0.0
    %1459 = vmatprep.subr.mxu0 0.0
    %1460 = vmatpush2.msra.mxu0 0.0
    %1461 = vmatprep.subr.mxu0 0.0
    %1462 = vmatpush2.msra.mxu0 0.0
    %1463 = vmatprep.subr.mxu0 0.0
    %1464 = vmatpush2.msra.mxu0 0.0
    %1465 = vmatprep.subr.mxu0 0.0
    %1466 = vmatpush2.msra.mxu0 0.0
    %1467 = vmatprep.subr.mxu0 0.0
    %1468 = vmatpush2.msra.mxu0 0.0
    %1469 = vmatprep.subr.mxu0 0.0
    %1470 = vmatpush2.msra.mxu0 0.0
    %1471 = vmatprep.subr.mxu0 0.0
    %1472 = vmatpush2.msra.mxu0 0.0
    %1473 = vmatprep.subr.mxu0 0.0
    %1474 = vmatpush2.msra.mxu0 0.0
    %1475 = vmatprep.subr.mxu0 0.0
    %1476 = vmatpush2.msra.mxu0 0.0
    %1477 = vmatprep.subr.mxu0 0.0
    %1478 = vmatpush2.msra.mxu0 0.0
    %1479 = vmatprep.subr.mxu0 0.0
    %1480 = vmatpush2.msra.mxu0 0.0
    %1481 = vmatprep.mubr.f32.mxu0 0.0
    %1482 = vmatmul.mubr.f32.gmra.mxu0 %v1254
    %v1483 = vpop.f32.mrf.mxu0
    %v1484 = vadd.f32 %v699, %v1483
    %v1485 = vpop.f32.mrf.mxu0
    %1486 = vdwg.mxu0
    %v1487 = vmul.f32 %v1335, %v1484
    %v1488 = vadd.f32 %v1416, %v1487
    %v1489 = vtanh.pop %v1488
    %v1490 = vsub.f32 1.0, %v1414
    %v1491 = vmul.f32 %v1490, %v1489
    %v1492 = vmul.f32 %v1414, %v1254
    %v1493 = vadd.f32 %v1491, %v1492
    %s1494 = scalar_lea.vmem [#allocation5], 24
    %1495 = vst [vmem:[%s1494] sm:$0xff] %v1493
    %s1496 = scalar_lea.vmem [#allocation2], 32
    %v1497 = vld [vmem:[%s1496] sm:$0xff]
    %1498 = vmatprep.subr.mxu0 0.0
    %1499 = vmatpush1.msra.mxu0 %v501
    %1500 = vmatprep.subr.mxu0 0.0
    %1501 = vmatpush1.msra.mxu0 %v500
    %1502 = vmatprep.subr.mxu0 0.0
    %1503 = vmatpush1.msra.mxu0 %v499
    %1504 = vmatprep.subr.mxu0 0.0
    %1505 = vmatpush1.msra.mxu0 %v498
    %1506 = vmatprep.subr.mxu0 0.0
    %1507 = vmatpush1.msra.mxu0 %v497
    %1508 = vmatprep.subr.mxu0 0.0
    %1509 = vmatpush1.msra.mxu0 %v496
    %1510 = vmatprep.subr.mxu0 0.0
    %1511 = vmatpush1.msra.mxu0 %v495
    %1512 = vmatprep.subr.mxu0 0.0
    %1513 = vmatpush1.msra.mxu0 %v494
    %1514 = vmatprep.subr.mxu0 0.0
    %1515 = vmatpush1.msra.mxu0 %v493
    %1516 = vmatprep.subr.mxu0 0.0
    %1517 = vmatpush1.msra.mxu0 %v492
    %1518 = vmatprep.subr.mxu0 0.0
    %1519 = vmatpush1.msra.mxu0 %v491
    %1520 = vmatprep.subr.mxu0 0.0
    %1521 = vmatpush1.msra.mxu0 %v490
    %1522 = vmatprep.subr.mxu0 0.0
    %1523 = vmatpush1.msra.mxu0 %v489
    %1524 = vmatprep.subr.mxu0 0.0
    %1525 = vmatpush1.msra.mxu0 %v488
    %1526 = vmatprep.subr.mxu0 0.0
    %1527 = vmatpush1.msra.mxu0 %v487
    %1528 = vmatprep.subr.mxu0 0.0
    %1529 = vmatpush1.msra.mxu0 %v486
    %1530 = vmatprep.subr.mxu0 0.0
    %1531 = vmatpush2.msra.mxu0 0.0
    %1532 = vmatprep.subr.mxu0 0.0
    %1533 = vmatpush2.msra.mxu0 0.0
    %1534 = vmatprep.subr.mxu0 0.0
    %1535 = vmatpush2.msra.mxu0 0.0
    %1536 = vmatprep.subr.mxu0 0.0
    %1537 = vmatpush2.msra.mxu0 0.0
    %1538 = vmatprep.subr.mxu0 0.0
    %1539 = vmatpush2.msra.mxu0 0.0
    %1540 = vmatprep.subr.mxu0 0.0
    %1541 = vmatpush2.msra.mxu0 0.0
    %1542 = vmatprep.subr.mxu0 0.0
    %1543 = vmatpush2.msra.mxu0 0.0
    %1544 = vmatprep.subr.mxu0 0.0
    %1545 = vmatpush2.msra.mxu0 0.0
    %1546 = vmatprep.subr.mxu0 0.0
    %1547 = vmatpush2.msra.mxu0 0.0
    %1548 = vmatprep.subr.mxu0 0.0
    %1549 = vmatpush2.msra.mxu0 0.0
    %1550 = vmatprep.subr.mxu0 0.0
    %1551 = vmatpush2.msra.mxu0 0.0
    %1552 = vmatprep.subr.mxu0 0.0
    %1553 = vmatpush2.msra.mxu0 0.0
    %1554 = vmatprep.subr.mxu0 0.0
    %1555 = vmatpush2.msra.mxu0 0.0
    %1556 = vmatprep.subr.mxu0 0.0
    %1557 = vmatpush2.msra.mxu0 0.0
    %1558 = vmatprep.subr.mxu0 0.0
    %1559 = vmatpush2.msra.mxu0 0.0
    %1560 = vmatprep.subr.mxu0 0.0
    %1561 = vmatpush2.msra.mxu0 0.0
    %1562 = vmatprep.mubr.f32.mxu0 0.0
    %1563 = vmatmul.mubr.f32.gmra.mxu0 %v1493
    %v1564 = vpop.f32.mrf.mxu0
    %v1565 = vadd.f32 0.0, %v1564
    %v1566 = vpop.f32.mrf.mxu0
    %1567 = vdwg.mxu0
    %v1568 = vadd.f32 %v1497, %v1565
    %v1569 = vxor.u32 %v1568, 2147483648
    %v1570 = vmul.f32 %v1569, 1.442695
    %v1571 = vpow.pop %v1570
    %v1572 = vadd.f32 %v1571, 1.0
    %v1573 = vrcp.pop %v1572
    %v1574 = vmul.f32 1.0, %v1573
    %s1575 = scalar_lea.vmem [#allocation3], 32
    %v1576 = vld [vmem:[%s1575] sm:$0xff]
    %1577 = vmatprep.subr.mxu0 0.0
    %1578 = vmatpush1.msra.mxu0 %v518
    %1579 = vmatprep.subr.mxu0 0.0
    %1580 = vmatpush1.msra.mxu0 %v517
    %1581 = vmatprep.subr.mxu0 0.0
    %1582 = vmatpush1.msra.mxu0 %v516
    %1583 = vmatprep.subr.mxu0 0.0
    %1584 = vmatpush1.msra.mxu0 %v515
    %1585 = vmatprep.subr.mxu0 0.0
    %1586 = vmatpush1.msra.mxu0 %v514
    %1587 = vmatprep.subr.mxu0 0.0
    %1588 = vmatpush1.msra.mxu0 %v513
    %1589 = vmatprep.subr.mxu0 0.0
    %1590 = vmatpush1.msra.mxu0 %v512
    %1591 = vmatprep.subr.mxu0 0.0
    %1592 = vmatpush1.msra.mxu0 %v511
    %1593 = vmatprep.subr.mxu0 0.0
    %1594 = vmatpush1.msra.mxu0 %v510
    %1595 = vmatprep.subr.mxu0 0.0
    %1596 = vmatpush1.msra.mxu0 %v509
    %1597 = vmatprep.subr.mxu0 0.0
    %1598 = vmatpush1.msra.mxu0 %v508
    %1599 = vmatprep.subr.mxu0 0.0
    %1600 = vmatpush1.msra.mxu0 %v507
    %1601 = vmatprep.subr.mxu0 0.0
    %1602 = vmatpush1.msra.mxu0 %v506
    %1603 = vmatprep.subr.mxu0 0.0
    %1604 = vmatpush1.msra.mxu0 %v505
    %1605 = vmatprep.subr.mxu0 0.0
    %1606 = vmatpush1.msra.mxu0 %v504
    %1607 = vmatprep.subr.mxu0 0.0
    %1608 = vmatpush1.msra.mxu0 %v503
    %1609 = vmatprep.subr.mxu0 0.0
    %1610 = vmatpush2.msra.mxu0 0.0
    %1611 = vmatprep.subr.mxu0 0.0
    %1612 = vmatpush2.msra.mxu0 0.0
    %1613 = vmatprep.subr.mxu0 0.0
    %1614 = vmatpush2.msra.mxu0 0.0
    %1615 = vmatprep.subr.mxu0 0.0
    %1616 = vmatpush2.msra.mxu0 0.0
    %1617 = vmatprep.subr.mxu0 0.0
    %1618 = vmatpush2.msra.mxu0 0.0
    %1619 = vmatprep.subr.mxu0 0.0
    %1620 = vmatpush2.msra.mxu0 0.0
    %1621 = vmatprep.subr.mxu0 0.0
    %1622 = vmatpush2.msra.mxu0 0.0
    %1623 = vmatprep.subr.mxu0 0.0
    %1624 = vmatpush2.msra.mxu0 0.0
    %1625 = vmatprep.subr.mxu0 0.0
    %1626 = vmatpush2.msra.mxu0 0.0
    %1627 = vmatprep.subr.mxu0 0.0
    %1628 = vmatpush2.msra.mxu0 0.0
    %1629 = vmatprep.subr.mxu0 0.0
    %1630 = vmatpush2.msra.mxu0 0.0
    %1631 = vmatprep.subr.mxu0 0.0
    %1632 = vmatpush2.msra.mxu0 0.0
    %1633 = vmatprep.subr.mxu0 0.0
    %1634 = vmatpush2.msra.mxu0 0.0
    %1635 = vmatprep.subr.mxu0 0.0
    %1636 = vmatpush2.msra.mxu0 0.0
    %1637 = vmatprep.subr.mxu0 0.0
    %1638 = vmatpush2.msra.mxu0 0.0
    %1639 = vmatprep.subr.mxu0 0.0
    %1640 = vmatpush2.msra.mxu0 0.0
    %1641 = vmatprep.mubr.f32.mxu0 0.0
    %1642 = vmatmul.mubr.f32.gmra.mxu0 %v1493
    %v1643 = vpop.f32.mrf.mxu0
    %v1644 = vadd.f32 0.0, %v1643
    %v1645 = vpop.f32.mrf.mxu0
    %1646 = vdwg.mxu0
    %v1647 = vadd.f32 %v1576, %v1644
    %v1648 = vxor.u32 %v1647, 2147483648
    %v1649 = vmul.f32 %v1648, 1.442695
    %v1650 = vpow.pop %v1649
    %v1651 = vadd.f32 %v1650, 1.0
    %v1652 = vrcp.pop %v1651
    %v1653 = vmul.f32 1.0, %v1652
    %s1654 = scalar_lea.vmem [#allocation4], 32
    %v1655 = vld [vmem:[%s1654] sm:$0xff]
    %1656 = vmatprep.subr.mxu0 0.0
    %1657 = vmatpush1.msra.mxu0 %v535
    %1658 = vmatprep.subr.mxu0 0.0
    %1659 = vmatpush1.msra.mxu0 %v534
    %1660 = vmatprep.subr.mxu0 0.0
    %1661 = vmatpush1.msra.mxu0 %v533
    %1662 = vmatprep.subr.mxu0 0.0
    %1663 = vmatpush1.msra.mxu0 %v532
    %1664 = vmatprep.subr.mxu0 0.0
    %1665 = vmatpush1.msra.mxu0 %v531
    %1666 = vmatprep.subr.mxu0 0.0
    %1667 = vmatpush1.msra.mxu0 %v530
    %1668 = vmatprep.subr.mxu0 0.0
    %1669 = vmatpush1.msra.mxu0 %v529
    %1670 = vmatprep.subr.mxu0 0.0
    %1671 = vmatpush1.msra.mxu0 %v528
    %1672 = vmatprep.subr.mxu0 0.0
    %1673 = vmatpush1.msra.mxu0 %v527
    %1674 = vmatprep.subr.mxu0 0.0
    %1675 = vmatpush1.msra.mxu0 %v526
    %1676 = vmatprep.subr.mxu0 0.0
    %1677 = vmatpush1.msra.mxu0 %v525
    %1678 = vmatprep.subr.mxu0 0.0
    %1679 = vmatpush1.msra.mxu0 %v524
    %1680 = vmatprep.subr.mxu0 0.0
    %1681 = vmatpush1.msra.mxu0 %v523
    %1682 = vmatprep.subr.mxu0 0.0
    %1683 = vmatpush1.msra.mxu0 %v522
    %1684 = vmatprep.subr.mxu0 0.0
    %1685 = vmatpush1.msra.mxu0 %v521
    %1686 = vmatprep.subr.mxu0 0.0
    %1687 = vmatpush1.msra.mxu0 %v520
    %1688 = vmatprep.subr.mxu0 0.0
    %1689 = vmatpush2.msra.mxu0 0.0
    %1690 = vmatprep.subr.mxu0 0.0
    %1691 = vmatpush2.msra.mxu0 0.0
    %1692 = vmatprep.subr.mxu0 0.0
    %1693 = vmatpush2.msra.mxu0 0.0
    %1694 = vmatprep.subr.mxu0 0.0
    %1695 = vmatpush2.msra.mxu0 0.0
    %1696 = vmatprep.subr.mxu0 0.0
    %1697 = vmatpush2.msra.mxu0 0.0
    %1698 = vmatprep.subr.mxu0 0.0
    %1699 = vmatpush2.msra.mxu0 0.0
    %1700 = vmatprep.subr.mxu0 0.0
    %1701 = vmatpush2.msra.mxu0 0.0
    %1702 = vmatprep.subr.mxu0 0.0
    %1703 = vmatpush2.msra.mxu0 0.0
    %1704 = vmatprep.subr.mxu0 0.0
    %1705 = vmatpush2.msra.mxu0 0.0
    %1706 = vmatprep.subr.mxu0 0.0
    %1707 = vmatpush2.msra.mxu0 0.0
    %1708 = vmatprep.subr.mxu0 0.0
    %1709 = vmatpush2.msra.mxu0 0.0
    %1710 = vmatprep.subr.mxu0 0.0
    %1711 = vmatpush2.msra.mxu0 0.0
    %1712 = vmatprep.subr.mxu0 0.0
    %1713 = vmatpush2.msra.mxu0 0.0
    %1714 = vmatprep.subr.mxu0 0.0
    %1715 = vmatpush2.msra.mxu0 0.0
    %1716 = vmatprep.subr.mxu0 0.0
    %1717 = vmatpush2.msra.mxu0 0.0
    %1718 = vmatprep.subr.mxu0 0.0
    %1719 = vmatpush2.msra.mxu0 0.0
    %1720 = vmatprep.mubr.f32.mxu0 0.0
    %1721 = vmatmul.mubr.f32.gmra.mxu0 %v1493
    %v1722 = vpop.f32.mrf.mxu0
    %v1723 = vadd.f32 %v699, %v1722
    %v1724 = vpop.f32.mrf.mxu0
    %1725 = vdwg.mxu0
    %v1726 = vmul.f32 %v1574, %v1723
    %v1727 = vadd.f32 %v1655, %v1726
    %v1728 = vtanh.pop %v1727
    %v1729 = vsub.f32 1.0, %v1653
    %v1730 = vmul.f32 %v1729, %v1728
    %v1731 = vmul.f32 %v1653, %v1493
    %v1732 = vadd.f32 %v1730, %v1731
    %s1733 = scalar_lea.vmem [#allocation5], 32
    %1734 = vst [vmem:[%s1733] sm:$0xff] %v1732
    %s1735 = scalar_lea.vmem [#allocation2], 40
    %v1736 = vld [vmem:[%s1735] sm:$0xff]
    %1737 = vmatprep.subr.mxu0 0.0
    %1738 = vmatpush1.msra.mxu0 %v501
    %1739 = vmatprep.subr.mxu0 0.0
    %1740 = vmatpush1.msra.mxu0 %v500
    %1741 = vmatprep.subr.mxu0 0.0
    %1742 = vmatpush1.msra.mxu0 %v499
    %1743 = vmatprep.subr.mxu0 0.0
    %1744 = vmatpush1.msra.mxu0 %v498
    %1745 = vmatprep.subr.mxu0 0.0
    %1746 = vmatpush1.msra.mxu0 %v497
    %1747 = vmatprep.subr.mxu0 0.0
    %1748 = vmatpush1.msra.mxu0 %v496
    %1749 = vmatprep.subr.mxu0 0.0
    %1750 = vmatpush1.msra.mxu0 %v495
    %1751 = vmatprep.subr.mxu0 0.0
    %1752 = vmatpush1.msra.mxu0 %v494
    %1753 = vmatprep.subr.mxu0 0.0
    %1754 = vmatpush1.msra.mxu0 %v493
    %1755 = vmatprep.subr.mxu0 0.0
    %1756 = vmatpush1.msra.mxu0 %v492
    %1757 = vmatprep.subr.mxu0 0.0
    %1758 = vmatpush1.msra.mxu0 %v491
    %1759 = vmatprep.subr.mxu0 0.0
    %1760 = vmatpush1.msra.mxu0 %v490
    %1761 = vmatprep.subr.mxu0 0.0
    %1762 = vmatpush1.msra.mxu0 %v489
    %1763 = vmatprep.subr.mxu0 0.0
    %1764 = vmatpush1.msra.mxu0 %v488
    %1765 = vmatprep.subr.mxu0 0.0
    %1766 = vmatpush1.msra.mxu0 %v487
    %1767 = vmatprep.subr.mxu0 0.0
    %1768 = vmatpush1.msra.mxu0 %v486
    %1769 = vmatprep.subr.mxu0 0.0
    %1770 = vmatpush2.msra.mxu0 0.0
    %1771 = vmatprep.subr.mxu0 0.0
    %1772 = vmatpush2.msra.mxu0 0.0
    %1773 = vmatprep.subr.mxu0 0.0
    %1774 = vmatpush2.msra.mxu0 0.0
    %1775 = vmatprep.subr.mxu0 0.0
    %1776 = vmatpush2.msra.mxu0 0.0
    %1777 = vmatprep.subr.mxu0 0.0
    %1778 = vmatpush2.msra.mxu0 0.0
    %1779 = vmatprep.subr.mxu0 0.0
    %1780 = vmatpush2.msra.mxu0 0.0
    %1781 = vmatprep.subr.mxu0 0.0
    %1782 = vmatpush2.msra.mxu0 0.0
    %1783 = vmatprep.subr.mxu0 0.0
    %1784 = vmatpush2.msra.mxu0 0.0
    %1785 = vmatprep.subr.mxu0 0.0
    %1786 = vmatpush2.msra.mxu0 0.0
    %1787 = vmatprep.subr.mxu0 0.0
    %1788 = vmatpush2.msra.mxu0 0.0
    %1789 = vmatprep.subr.mxu0 0.0
    %1790 = vmatpush2.msra.mxu0 0.0
    %1791 = vmatprep.subr.mxu0 0.0
    %1792 = vmatpush2.msra.mxu0 0.0
    %1793 = vmatprep.subr.mxu0 0.0
    %1794 = vmatpush2.msra.mxu0 0.0
    %1795 = vmatprep.subr.mxu0 0.0
    %1796 = vmatpush2.msra.mxu0 0.0
    %1797 = vmatprep.subr.mxu0 0.0
    %1798 = vmatpush2.msra.mxu0 0.0
    %1799 = vmatprep.subr.mxu0 0.0
    %1800 = vmatpush2.msra.mxu0 0.0
    %1801 = vmatprep.mubr.f32.mxu0 0.0
    %1802 = vmatmul.mubr.f32.gmra.mxu0 %v1732
    %v1803 = vpop.f32.mrf.mxu0
    %v1804 = vadd.f32 0.0, %v1803
    %v1805 = vpop.f32.mrf.mxu0
    %1806 = vdwg.mxu0
    %v1807 = vadd.f32 %v1736, %v1804
    %v1808 = vxor.u32 %v1807, 2147483648
    %v1809 = vmul.f32 %v1808, 1.442695
    %v1810 = vpow.pop %v1809
    %v1811 = vadd.f32 %v1810, 1.0
    %v1812 = vrcp.pop %v1811
    %v1813 = vmul.f32 1.0, %v1812
    %s1814 = scalar_lea.vmem [#allocation3], 40
    %v1815 = vld [vmem:[%s1814] sm:$0xff]
    %1816 = vmatprep.subr.mxu0 0.0
    %1817 = vmatpush1.msra.mxu0 %v518
    %1818 = vmatprep.subr.mxu0 0.0
    %1819 = vmatpush1.msra.mxu0 %v517
    %1820 = vmatprep.subr.mxu0 0.0
    %1821 = vmatpush1.msra.mxu0 %v516
    %1822 = vmatprep.subr.mxu0 0.0
    %1823 = vmatpush1.msra.mxu0 %v515
    %1824 = vmatprep.subr.mxu0 0.0
    %1825 = vmatpush1.msra.mxu0 %v514
    %1826 = vmatprep.subr.mxu0 0.0
    %1827 = vmatpush1.msra.mxu0 %v513
    %1828 = vmatprep.subr.mxu0 0.0
    %1829 = vmatpush1.msra.mxu0 %v512
    %1830 = vmatprep.subr.mxu0 0.0
    %1831 = vmatpush1.msra.mxu0 %v511
    %1832 = vmatprep.subr.mxu0 0.0
    %1833 = vmatpush1.msra.mxu0 %v510
    %1834 = vmatprep.subr.mxu0 0.0
    %1835 = vmatpush1.msra.mxu0 %v509
    %1836 = vmatprep.subr.mxu0 0.0
    %1837 = vmatpush1.msra.mxu0 %v508
    %1838 = vmatprep.subr.mxu0 0.0
    %1839 = vmatpush1.msra.mxu0 %v507
    %1840 = vmatprep.subr.mxu0 0.0
    %1841 = vmatpush1.msra.mxu0 %v506
    %1842 = vmatprep.subr.mxu0 0.0
    %1843 = vmatpush1.msra.mxu0 %v505
    %1844 = vmatprep.subr.mxu0 0.0
    %1845 = vmatpush1.msra.mxu0 %v504
    %1846 = vmatprep.subr.mxu0 0.0
    %1847 = vmatpush1.msra.mxu0 %v503
    %1848 = vmatprep.subr.mxu0 0.0
    %1849 = vmatpush2.msra.mxu0 0.0
    %1850 = vmatprep.subr.mxu0 0.0
    %1851 = vmatpush2.msra.mxu0 0.0
    %1852 = vmatprep.subr.mxu0 0.0
    %1853 = vmatpush2.msra.mxu0 0.0
    %1854 = vmatprep.subr.mxu0 0.0
    %1855 = vmatpush2.msra.mxu0 0.0
    %1856 = vmatprep.subr.mxu0 0.0
    %1857 = vmatpush2.msra.mxu0 0.0
    %1858 = vmatprep.subr.mxu0 0.0
    %1859 = vmatpush2.msra.mxu0 0.0
    %1860 = vmatprep.subr.mxu0 0.0
    %1861 = vmatpush2.msra.mxu0 0.0
    %1862 = vmatprep.subr.mxu0 0.0
    %1863 = vmatpush2.msra.mxu0 0.0
    %1864 = vmatprep.subr.mxu0 0.0
    %1865 = vmatpush2.msra.mxu0 0.0
    %1866 = vmatprep.subr.mxu0 0.0
    %1867 = vmatpush2.msra.mxu0 0.0
    %1868 = vmatprep.subr.mxu0 0.0
    %1869 = vmatpush2.msra.mxu0 0.0
    %1870 = vmatprep.subr.mxu0 0.0
    %1871 = vmatpush2.msra.mxu0 0.0
    %1872 = vmatprep.subr.mxu0 0.0
    %1873 = vmatpush2.msra.mxu0 0.0
    %1874 = vmatprep.subr.mxu0 0.0
    %1875 = vmatpush2.msra.mxu0 0.0
    %1876 = vmatprep.subr.mxu0 0.0
    %1877 = vmatpush2.msra.mxu0 0.0
    %1878 = vmatprep.subr.mxu0 0.0
    %1879 = vmatpush2.msra.mxu0 0.0
    %1880 = vmatprep.mubr.f32.mxu0 0.0
    %1881 = vmatmul.mubr.f32.gmra.mxu0 %v1732
    %v1882 = vpop.f32.mrf.mxu0
    %v1883 = vadd.f32 0.0, %v1882
    %v1884 = vpop.f32.mrf.mxu0
    %1885 = vdwg.mxu0
    %v1886 = vadd.f32 %v1815, %v1883
    %v1887 = vxor.u32 %v1886, 2147483648
    %v1888 = vmul.f32 %v1887, 1.442695
    %v1889 = vpow.pop %v1888
    %v1890 = vadd.f32 %v1889, 1.0
    %v1891 = vrcp.pop %v1890
    %v1892 = vmul.f32 1.0, %v1891
    %s1893 = scalar_lea.vmem [#allocation4], 40
    %v1894 = vld [vmem:[%s1893] sm:$0xff]
    %1895 = vmatprep.subr.mxu0 0.0
    %1896 = vmatpush1.msra.mxu0 %v535
    %1897 = vmatprep.subr.mxu0 0.0
    %1898 = vmatpush1.msra.mxu0 %v534
    %1899 = vmatprep.subr.mxu0 0.0
    %1900 = vmatpush1.msra.mxu0 %v533
    %1901 = vmatprep.subr.mxu0 0.0
    %1902 = vmatpush1.msra.mxu0 %v532
    %1903 = vmatprep.subr.mxu0 0.0
    %1904 = vmatpush1.msra.mxu0 %v531
    %1905 = vmatprep.subr.mxu0 0.0
    %1906 = vmatpush1.msra.mxu0 %v530
    %1907 = vmatprep.subr.mxu0 0.0
    %1908 = vmatpush1.msra.mxu0 %v529
    %1909 = vmatprep.subr.mxu0 0.0
    %1910 = vmatpush1.msra.mxu0 %v528
    %1911 = vmatprep.subr.mxu0 0.0
    %1912 = vmatpush1.msra.mxu0 %v527
    %1913 = vmatprep.subr.mxu0 0.0
    %1914 = vmatpush1.msra.mxu0 %v526
    %1915 = vmatprep.subr.mxu0 0.0
    %1916 = vmatpush1.msra.mxu0 %v525
    %1917 = vmatprep.subr.mxu0 0.0
    %1918 = vmatpush1.msra.mxu0 %v524
    %1919 = vmatprep.subr.mxu0 0.0
    %1920 = vmatpush1.msra.mxu0 %v523
    %1921 = vmatprep.subr.mxu0 0.0
    %1922 = vmatpush1.msra.mxu0 %v522
    %1923 = vmatprep.subr.mxu0 0.0
    %1924 = vmatpush1.msra.mxu0 %v521
    %1925 = vmatprep.subr.mxu0 0.0
    %1926 = vmatpush1.msra.mxu0 %v520
    %1927 = vmatprep.subr.mxu0 0.0
    %1928 = vmatpush2.msra.mxu0 0.0
    %1929 = vmatprep.subr.mxu0 0.0
    %1930 = vmatpush2.msra.mxu0 0.0
    %1931 = vmatprep.subr.mxu0 0.0
    %1932 = vmatpush2.msra.mxu0 0.0
    %1933 = vmatprep.subr.mxu0 0.0
    %1934 = vmatpush2.msra.mxu0 0.0
    %1935 = vmatprep.subr.mxu0 0.0
    %1936 = vmatpush2.msra.mxu0 0.0
    %1937 = vmatprep.subr.mxu0 0.0
    %1938 = vmatpush2.msra.mxu0 0.0
    %1939 = vmatprep.subr.mxu0 0.0
    %1940 = vmatpush2.msra.mxu0 0.0
    %1941 = vmatprep.subr.mxu0 0.0
    %1942 = vmatpush2.msra.mxu0 0.0
    %1943 = vmatprep.subr.mxu0 0.0
    %1944 = vmatpush2.msra.mxu0 0.0
    %1945 = vmatprep.subr.mxu0 0.0
    %1946 = vmatpush2.msra.mxu0 0.0
    %1947 = vmatprep.subr.mxu0 0.0
    %1948 = vmatpush2.msra.mxu0 0.0
    %1949 = vmatprep.subr.mxu0 0.0
    %1950 = vmatpush2.msra.mxu0 0.0
    %1951 = vmatprep.subr.mxu0 0.0
    %1952 = vmatpush2.msra.mxu0 0.0
    %1953 = vmatprep.subr.mxu0 0.0
    %1954 = vmatpush2.msra.mxu0 0.0
    %1955 = vmatprep.subr.mxu0 0.0
    %1956 = vmatpush2.msra.mxu0 0.0
    %1957 = vmatprep.subr.mxu0 0.0
    %1958 = vmatpush2.msra.mxu0 0.0
    %1959 = vmatprep.mubr.f32.mxu0 0.0
    %1960 = vmatmul.mubr.f32.gmra.mxu0 %v1732
    %v1961 = vpop.f32.mrf.mxu0
    %v1962 = vadd.f32 %v699, %v1961
    %v1963 = vpop.f32.mrf.mxu0
    %1964 = vdwg.mxu0
    %v1965 = vmul.f32 %v1813, %v1962
    %v1966 = vadd.f32 %v1894, %v1965
    %v1967 = vtanh.pop %v1966
    %v1968 = vsub.f32 1.0, %v1892
    %v1969 = vmul.f32 %v1968, %v1967
    %v1970 = vmul.f32 %v1892, %v1732
    %v1971 = vadd.f32 %v1969, %v1970
    %s1972 = scalar_lea.vmem [#allocation5], 40
    %1973 = vst [vmem:[%s1972] sm:$0xff] %v1971
    %s1974 = scalar_lea.vmem [#allocation2], 48
    %v1975 = vld [vmem:[%s1974] sm:$0xff]
    %1976 = vmatprep.subr.mxu0 0.0
    %1977 = vmatpush1.msra.mxu0 %v501
    %1978 = vmatprep.subr.mxu0 0.0
    %1979 = vmatpush1.msra.mxu0 %v500
    %1980 = vmatprep.subr.mxu0 0.0
    %1981 = vmatpush1.msra.mxu0 %v499
    %1982 = vmatprep.subr.mxu0 0.0
    %1983 = vmatpush1.msra.mxu0 %v498
    %1984 = vmatprep.subr.mxu0 0.0
    %1985 = vmatpush1.msra.mxu0 %v497
    %1986 = vmatprep.subr.mxu0 0.0
    %1987 = vmatpush1.msra.mxu0 %v496
    %1988 = vmatprep.subr.mxu0 0.0
    %1989 = vmatpush1.msra.mxu0 %v495
    %1990 = vmatprep.subr.mxu0 0.0
    %1991 = vmatpush1.msra.mxu0 %v494
    %1992 = vmatprep.subr.mxu0 0.0
    %1993 = vmatpush1.msra.mxu0 %v493
    %1994 = vmatprep.subr.mxu0 0.0
    %1995 = vmatpush1.msra.mxu0 %v492
    %1996 = vmatprep.subr.mxu0 0.0
    %1997 = vmatpush1.msra.mxu0 %v491
    %1998 = vmatprep.subr.mxu0 0.0
    %1999 = vmatpush1.msra.mxu0 %v490
    %2000 = vmatprep.subr.mxu0 0.0
    %2001 = vmatpush1.msra.mxu0 %v489
    %2002 = vmatprep.subr.mxu0 0.0
    %2003 = vmatpush1.msra.mxu0 %v488
    %2004 = vmatprep.subr.mxu0 0.0
    %2005 = vmatpush1.msra.mxu0 %v487
    %2006 = vmatprep.subr.mxu0 0.0
    %2007 = vmatpush1.msra.mxu0 %v486
    %2008 = vmatprep.subr.mxu0 0.0
    %2009 = vmatpush2.msra.mxu0 0.0
    %2010 = vmatprep.subr.mxu0 0.0
    %2011 = vmatpush2.msra.mxu0 0.0
    %2012 = vmatprep.subr.mxu0 0.0
    %2013 = vmatpush2.msra.mxu0 0.0
    %2014 = vmatprep.subr.mxu0 0.0
    %2015 = vmatpush2.msra.mxu0 0.0
    %2016 = vmatprep.subr.mxu0 0.0
    %2017 = vmatpush2.msra.mxu0 0.0
    %2018 = vmatprep.subr.mxu0 0.0
    %2019 = vmatpush2.msra.mxu0 0.0
    %2020 = vmatprep.subr.mxu0 0.0
    %2021 = vmatpush2.msra.mxu0 0.0
    %2022 = vmatprep.subr.mxu0 0.0
    %2023 = vmatpush2.msra.mxu0 0.0
    %2024 = vmatprep.subr.mxu0 0.0
    %2025 = vmatpush2.msra.mxu0 0.0
    %2026 = vmatprep.subr.mxu0 0.0
    %2027 = vmatpush2.msra.mxu0 0.0
    %2028 = vmatprep.subr.mxu0 0.0
    %2029 = vmatpush2.msra.mxu0 0.0
    %2030 = vmatprep.subr.mxu0 0.0
    %2031 = vmatpush2.msra.mxu0 0.0
    %2032 = vmatprep.subr.mxu0 0.0
    %2033 = vmatpush2.msra.mxu0 0.0
    %2034 = vmatprep.subr.mxu0 0.0
    %2035 = vmatpush2.msra.mxu0 0.0
    %2036 = vmatprep.subr.mxu0 0.0
    %2037 = vmatpush2.msra.mxu0 0.0
    %2038 = vmatprep.subr.mxu0 0.0
    %2039 = vmatpush2.msra.mxu0 0.0
    %2040 = vmatprep.mubr.f32.mxu0 0.0
    %2041 = vmatmul.mubr.f32.gmra.mxu0 %v1971
    %v2042 = vpop.f32.mrf.mxu0
    %v2043 = vadd.f32 0.0, %v2042
    %v2044 = vpop.f32.mrf.mxu0
    %2045 = vdwg.mxu0
    %v2046 = vadd.f32 %v1975, %v2043
    %v2047 = vxor.u32 %v2046, 2147483648
    %v2048 = vmul.f32 %v2047, 1.442695
    %v2049 = vpow.pop %v2048
    %v2050 = vadd.f32 %v2049, 1.0
    %v2051 = vrcp.pop %v2050
    %v2052 = vmul.f32 1.0, %v2051
    %s2053 = scalar_lea.vmem [#allocation3], 48
    %v2054 = vld [vmem:[%s2053] sm:$0xff]
    %2055 = vmatprep.subr.mxu0 0.0
    %2056 = vmatpush1.msra.mxu0 %v518
    %2057 = vmatprep.subr.mxu0 0.0
    %2058 = vmatpush1.msra.mxu0 %v517
    %2059 = vmatprep.subr.mxu0 0.0
    %2060 = vmatpush1.msra.mxu0 %v516
    %2061 = vmatprep.subr.mxu0 0.0
    %2062 = vmatpush1.msra.mxu0 %v515
    %2063 = vmatprep.subr.mxu0 0.0
    %2064 = vmatpush1.msra.mxu0 %v514
    %2065 = vmatprep.subr.mxu0 0.0
    %2066 = vmatpush1.msra.mxu0 %v513
    %2067 = vmatprep.subr.mxu0 0.0
    %2068 = vmatpush1.msra.mxu0 %v512
    %2069 = vmatprep.subr.mxu0 0.0
    %2070 = vmatpush1.msra.mxu0 %v511
    %2071 = vmatprep.subr.mxu0 0.0
    %2072 = vmatpush1.msra.mxu0 %v510
    %2073 = vmatprep.subr.mxu0 0.0
    %2074 = vmatpush1.msra.mxu0 %v509
    %2075 = vmatprep.subr.mxu0 0.0
    %2076 = vmatpush1.msra.mxu0 %v508
    %2077 = vmatprep.subr.mxu0 0.0
    %2078 = vmatpush1.msra.mxu0 %v507
    %2079 = vmatprep.subr.mxu0 0.0
    %2080 = vmatpush1.msra.mxu0 %v506
    %2081 = vmatprep.subr.mxu0 0.0
    %2082 = vmatpush1.msra.mxu0 %v505
    %2083 = vmatprep.subr.mxu0 0.0
    %2084 = vmatpush1.msra.mxu0 %v504
    %2085 = vmatprep.subr.mxu0 0.0
    %2086 = vmatpush1.msra.mxu0 %v503
    %2087 = vmatprep.subr.mxu0 0.0
    %2088 = vmatpush2.msra.mxu0 0.0
    %2089 = vmatprep.subr.mxu0 0.0
    %2090 = vmatpush2.msra.mxu0 0.0
    %2091 = vmatprep.subr.mxu0 0.0
    %2092 = vmatpush2.msra.mxu0 0.0
    %2093 = vmatprep.subr.mxu0 0.0
    %2094 = vmatpush2.msra.mxu0 0.0
    %2095 = vmatprep.subr.mxu0 0.0
    %2096 = vmatpush2.msra.mxu0 0.0
    %2097 = vmatprep.subr.mxu0 0.0
    %2098 = vmatpush2.msra.mxu0 0.0
    %2099 = vmatprep.subr.mxu0 0.0
    %2100 = vmatpush2.msra.mxu0 0.0
    %2101 = vmatprep.subr.mxu0 0.0
    %2102 = vmatpush2.msra.mxu0 0.0
    %2103 = vmatprep.subr.mxu0 0.0
    %2104 = vmatpush2.msra.mxu0 0.0
    %2105 = vmatprep.subr.mxu0 0.0
    %2106 = vmatpush2.msra.mxu0 0.0
    %2107 = vmatprep.subr.mxu0 0.0
    %2108 = vmatpush2.msra.mxu0 0.0
    %2109 = vmatprep.subr.mxu0 0.0
    %2110 = vmatpush2.msra.mxu0 0.0
    %2111 = vmatprep.subr.mxu0 0.0
    %2112 = vmatpush2.msra.mxu0 0.0
    %2113 = vmatprep.subr.mxu0 0.0
    %2114 = vmatpush2.msra.mxu0 0.0
    %2115 = vmatprep.subr.mxu0 0.0
    %2116 = vmatpush2.msra.mxu0 0.0
    %2117 = vmatprep.subr.mxu0 0.0
    %2118 = vmatpush2.msra.mxu0 0.0
    %2119 = vmatprep.mubr.f32.mxu0 0.0
    %2120 = vmatmul.mubr.f32.gmra.mxu0 %v1971
    %v2121 = vpop.f32.mrf.mxu0
    %v2122 = vadd.f32 0.0, %v2121
    %v2123 = vpop.f32.mrf.mxu0
    %2124 = vdwg.mxu0
    %v2125 = vadd.f32 %v2054, %v2122
    %v2126 = vxor.u32 %v2125, 2147483648
    %v2127 = vmul.f32 %v2126, 1.442695
    %v2128 = vpow.pop %v2127
    %v2129 = vadd.f32 %v2128, 1.0
    %v2130 = vrcp.pop %v2129
    %v2131 = vmul.f32 1.0, %v2130
    %s2132 = scalar_lea.vmem [#allocation4], 48
    %v2133 = vld [vmem:[%s2132] sm:$0xff]
    %2134 = vmatprep.subr.mxu0 0.0
    %2135 = vmatpush1.msra.mxu0 %v535
    %2136 = vmatprep.subr.mxu0 0.0
    %2137 = vmatpush1.msra.mxu0 %v534
    %2138 = vmatprep.subr.mxu0 0.0
    %2139 = vmatpush1.msra.mxu0 %v533
    %2140 = vmatprep.subr.mxu0 0.0
    %2141 = vmatpush1.msra.mxu0 %v532
    %2142 = vmatprep.subr.mxu0 0.0
    %2143 = vmatpush1.msra.mxu0 %v531
    %2144 = vmatprep.subr.mxu0 0.0
    %2145 = vmatpush1.msra.mxu0 %v530
    %2146 = vmatprep.subr.mxu0 0.0
    %2147 = vmatpush1.msra.mxu0 %v529
    %2148 = vmatprep.subr.mxu0 0.0
    %2149 = vmatpush1.msra.mxu0 %v528
    %2150 = vmatprep.subr.mxu0 0.0
    %2151 = vmatpush1.msra.mxu0 %v527
    %2152 = vmatprep.subr.mxu0 0.0
    %2153 = vmatpush1.msra.mxu0 %v526
    %2154 = vmatprep.subr.mxu0 0.0
    %2155 = vmatpush1.msra.mxu0 %v525
    %2156 = vmatprep.subr.mxu0 0.0
    %2157 = vmatpush1.msra.mxu0 %v524
    %2158 = vmatprep.subr.mxu0 0.0
    %2159 = vmatpush1.msra.mxu0 %v523
    %2160 = vmatprep.subr.mxu0 0.0
    %2161 = vmatpush1.msra.mxu0 %v522
    %2162 = vmatprep.subr.mxu0 0.0
    %2163 = vmatpush1.msra.mxu0 %v521
    %2164 = vmatprep.subr.mxu0 0.0
    %2165 = vmatpush1.msra.mxu0 %v520
    %2166 = vmatprep.subr.mxu0 0.0
    %2167 = vmatpush2.msra.mxu0 0.0
    %2168 = vmatprep.subr.mxu0 0.0
    %2169 = vmatpush2.msra.mxu0 0.0
    %2170 = vmatprep.subr.mxu0 0.0
    %2171 = vmatpush2.msra.mxu0 0.0
    %2172 = vmatprep.subr.mxu0 0.0
    %2173 = vmatpush2.msra.mxu0 0.0
    %2174 = vmatprep.subr.mxu0 0.0
    %2175 = vmatpush2.msra.mxu0 0.0
    %2176 = vmatprep.subr.mxu0 0.0
    %2177 = vmatpush2.msra.mxu0 0.0
    %2178 = vmatprep.subr.mxu0 0.0
    %2179 = vmatpush2.msra.mxu0 0.0
    %2180 = vmatprep.subr.mxu0 0.0
    %2181 = vmatpush2.msra.mxu0 0.0
    %2182 = vmatprep.subr.mxu0 0.0
    %2183 = vmatpush2.msra.mxu0 0.0
    %2184 = vmatprep.subr.mxu0 0.0
    %2185 = vmatpush2.msra.mxu0 0.0
    %2186 = vmatprep.subr.mxu0 0.0
    %2187 = vmatpush2.msra.mxu0 0.0
    %2188 = vmatprep.subr.mxu0 0.0
    %2189 = vmatpush2.msra.mxu0 0.0
    %2190 = vmatprep.subr.mxu0 0.0
    %2191 = vmatpush2.msra.mxu0 0.0
    %2192 = vmatprep.subr.mxu0 0.0
    %2193 = vmatpush2.msra.mxu0 0.0
    %2194 = vmatprep.subr.mxu0 0.0
    %2195 = vmatpush2.msra.mxu0 0.0
    %2196 = vmatprep.subr.mxu0 0.0
    %2197 = vmatpush2.msra.mxu0 0.0
    %2198 = vmatprep.mubr.f32.mxu0 0.0
    %2199 = vmatmul.mubr.f32.gmra.mxu0 %v1971
    %v2200 = vpop.f32.mrf.mxu0
    %v2201 = vadd.f32 %v699, %v2200
    %v2202 = vpop.f32.mrf.mxu0
    %2203 = vdwg.mxu0
    %v2204 = vmul.f32 %v2052, %v2201
    %v2205 = vadd.f32 %v2133, %v2204
    %v2206 = vtanh.pop %v2205
    %v2207 = vsub.f32 1.0, %v2131
    %v2208 = vmul.f32 %v2207, %v2206
    %v2209 = vmul.f32 %v2131, %v1971
    %v2210 = vadd.f32 %v2208, %v2209
    %s2211 = scalar_lea.vmem [#allocation5], 48
    %2212 = vst [vmem:[%s2211] sm:$0xff] %v2210
    %s2213 = scalar_lea.vmem [#allocation2], 56
    %v2214 = vld [vmem:[%s2213] sm:$0xff]
    %2215 = vmatprep.subr.mxu0 0.0
    %2216 = vmatpush1.msra.mxu0 %v501
    %2217 = vmatprep.subr.mxu0 0.0
    %2218 = vmatpush1.msra.mxu0 %v500
    %2219 = vmatprep.subr.mxu0 0.0
    %2220 = vmatpush1.msra.mxu0 %v499
    %2221 = vmatprep.subr.mxu0 0.0
    %2222 = vmatpush1.msra.mxu0 %v498
    %2223 = vmatprep.subr.mxu0 0.0
    %2224 = vmatpush1.msra.mxu0 %v497
    %2225 = vmatprep.subr.mxu0 0.0
    %2226 = vmatpush1.msra.mxu0 %v496
    %2227 = vmatprep.subr.mxu0 0.0
    %2228 = vmatpush1.msra.mxu0 %v495
    %2229 = vmatprep.subr.mxu0 0.0
    %2230 = vmatpush1.msra.mxu0 %v494
    %2231 = vmatprep.subr.mxu0 0.0
    %2232 = vmatpush1.msra.mxu0 %v493
    %2233 = vmatprep.subr.mxu0 0.0
    %2234 = vmatpush1.msra.mxu0 %v492
    %2235 = vmatprep.subr.mxu0 0.0
    %2236 = vmatpush1.msra.mxu0 %v491
    %2237 = vmatprep.subr.mxu0 0.0
    %2238 = vmatpush1.msra.mxu0 %v490
    %2239 = vmatprep.subr.mxu0 0.0
    %2240 = vmatpush1.msra.mxu0 %v489
    %2241 = vmatprep.subr.mxu0 0.0
    %2242 = vmatpush1.msra.mxu0 %v488
    %2243 = vmatprep.subr.mxu0 0.0
    %2244 = vmatpush1.msra.mxu0 %v487
    %2245 = vmatprep.subr.mxu0 0.0
    %2246 = vmatpush1.msra.mxu0 %v486
    %2247 = vmatprep.subr.mxu0 0.0
    %2248 = vmatpush2.msra.mxu0 0.0
    %2249 = vmatprep.subr.mxu0 0.0
    %2250 = vmatpush2.msra.mxu0 0.0
    %2251 = vmatprep.subr.mxu0 0.0
    %2252 = vmatpush2.msra.mxu0 0.0
    %2253 = vmatprep.subr.mxu0 0.0
    %2254 = vmatpush2.msra.mxu0 0.0
    %2255 = vmatprep.subr.mxu0 0.0
    %2256 = vmatpush2.msra.mxu0 0.0
    %2257 = vmatprep.subr.mxu0 0.0
    %2258 = vmatpush2.msra.mxu0 0.0
    %2259 = vmatprep.subr.mxu0 0.0
    %2260 = vmatpush2.msra.mxu0 0.0
    %2261 = vmatprep.subr.mxu0 0.0
    %2262 = vmatpush2.msra.mxu0 0.0
    %2263 = vmatprep.subr.mxu0 0.0
    %2264 = vmatpush2.msra.mxu0 0.0
    %2265 = vmatprep.subr.mxu0 0.0
    %2266 = vmatpush2.msra.mxu0 0.0
    %2267 = vmatprep.subr.mxu0 0.0
    %2268 = vmatpush2.msra.mxu0 0.0
    %2269 = vmatprep.subr.mxu0 0.0
    %2270 = vmatpush2.msra.mxu0 0.0
    %2271 = vmatprep.subr.mxu0 0.0
    %2272 = vmatpush2.msra.mxu0 0.0
    %2273 = vmatprep.subr.mxu0 0.0
    %2274 = vmatpush2.msra.mxu0 0.0
    %2275 = vmatprep.subr.mxu0 0.0
    %2276 = vmatpush2.msra.mxu0 0.0
    %2277 = vmatprep.subr.mxu0 0.0
    %2278 = vmatpush2.msra.mxu0 0.0
    %2279 = vmatprep.mubr.f32.mxu0 0.0
    %2280 = vmatmul.mubr.f32.gmra.mxu0 %v2210
    %v2281 = vpop.f32.mrf.mxu0
    %v2282 = vadd.f32 0.0, %v2281
    %v2283 = vpop.f32.mrf.mxu0
    %2284 = vdwg.mxu0
    %v2285 = vadd.f32 %v2214, %v2282
    %v2286 = vxor.u32 %v2285, 2147483648
    %v2287 = vmul.f32 %v2286, 1.442695
    %v2288 = vpow.pop %v2287
    %v2289 = vadd.f32 %v2288, 1.0
    %v2290 = vrcp.pop %v2289
    %v2291 = vmul.f32 1.0, %v2290
    %s2292 = scalar_lea.vmem [#allocation3], 56
    %v2293 = vld [vmem:[%s2292] sm:$0xff]
    %2294 = vmatprep.subr.mxu0 0.0
    %2295 = vmatpush1.msra.mxu0 %v518
    %2296 = vmatprep.subr.mxu0 0.0
    %2297 = vmatpush1.msra.mxu0 %v517
    %2298 = vmatprep.subr.mxu0 0.0
    %2299 = vmatpush1.msra.mxu0 %v516
    %2300 = vmatprep.subr.mxu0 0.0
    %2301 = vmatpush1.msra.mxu0 %v515
    %2302 = vmatprep.subr.mxu0 0.0
    %2303 = vmatpush1.msra.mxu0 %v514
    %2304 = vmatprep.subr.mxu0 0.0
    %2305 = vmatpush1.msra.mxu0 %v513
    %2306 = vmatprep.subr.mxu0 0.0
    %2307 = vmatpush1.msra.mxu0 %v512
    %2308 = vmatprep.subr.mxu0 0.0
    %2309 = vmatpush1.msra.mxu0 %v511
    %2310 = vmatprep.subr.mxu0 0.0
    %2311 = vmatpush1.msra.mxu0 %v510
    %2312 = vmatprep.subr.mxu0 0.0
    %2313 = vmatpush1.msra.mxu0 %v509
    %2314 = vmatprep.subr.mxu0 0.0
    %2315 = vmatpush1.msra.mxu0 %v508
    %2316 = vmatprep.subr.mxu0 0.0
    %2317 = vmatpush1.msra.mxu0 %v507
    %2318 = vmatprep.subr.mxu0 0.0
    %2319 = vmatpush1.msra.mxu0 %v506
    %2320 = vmatprep.subr.mxu0 0.0
    %2321 = vmatpush1.msra.mxu0 %v505
    %2322 = vmatprep.subr.mxu0 0.0
    %2323 = vmatpush1.msra.mxu0 %v504
    %2324 = vmatprep.subr.mxu0 0.0
    %2325 = vmatpush1.msra.mxu0 %v503
    %2326 = vmatprep.subr.mxu0 0.0
    %2327 = vmatpush2.msra.mxu0 0.0
    %2328 = vmatprep.subr.mxu0 0.0
    %2329 = vmatpush2.msra.mxu0 0.0
    %2330 = vmatprep.subr.mxu0 0.0
    %2331 = vmatpush2.msra.mxu0 0.0
    %2332 = vmatprep.subr.mxu0 0.0
    %2333 = vmatpush2.msra.mxu0 0.0
    %2334 = vmatprep.subr.mxu0 0.0
    %2335 = vmatpush2.msra.mxu0 0.0
    %2336 = vmatprep.subr.mxu0 0.0
    %2337 = vmatpush2.msra.mxu0 0.0
    %2338 = vmatprep.subr.mxu0 0.0
    %2339 = vmatpush2.msra.mxu0 0.0
    %2340 = vmatprep.subr.mxu0 0.0
    %2341 = vmatpush2.msra.mxu0 0.0
    %2342 = vmatprep.subr.mxu0 0.0
    %2343 = vmatpush2.msra.mxu0 0.0
    %2344 = vmatprep.subr.mxu0 0.0
    %2345 = vmatpush2.msra.mxu0 0.0
    %2346 = vmatprep.subr.mxu0 0.0
    %2347 = vmatpush2.msra.mxu0 0.0
    %2348 = vmatprep.subr.mxu0 0.0
    %2349 = vmatpush2.msra.mxu0 0.0
    %2350 = vmatprep.subr.mxu0 0.0
    %2351 = vmatpush2.msra.mxu0 0.0
    %2352 = vmatprep.subr.mxu0 0.0
    %2353 = vmatpush2.msra.mxu0 0.0
    %2354 = vmatprep.subr.mxu0 0.0
    %2355 = vmatpush2.msra.mxu0 0.0
    %2356 = vmatprep.subr.mxu0 0.0
    %2357 = vmatpush2.msra.mxu0 0.0
    %2358 = vmatprep.mubr.f32.mxu0 0.0
    %2359 = vmatmul.mubr.f32.gmra.mxu0 %v2210
    %v2360 = vpop.f32.mrf.mxu0
    %v2361 = vadd.f32 0.0, %v2360
    %v2362 = vpop.f32.mrf.mxu0
    %2363 = vdwg.mxu0
    %v2364 = vadd.f32 %v2293, %v2361
    %v2365 = vxor.u32 %v2364, 2147483648
    %v2366 = vmul.f32 %v2365, 1.442695
    %v2367 = vpow.pop %v2366
    %v2368 = vadd.f32 %v2367, 1.0
    %v2369 = vrcp.pop %v2368
    %v2370 = vmul.f32 1.0, %v2369
    %s2371 = scalar_lea.vmem [#allocation4], 56
    %v2372 = vld [vmem:[%s2371] sm:$0xff]
    %2373 = vmatprep.subr.mxu0 0.0
    %2374 = vmatpush1.msra.mxu0 %v535
    %2375 = vmatprep.subr.mxu0 0.0
    %2376 = vmatpush1.msra.mxu0 %v534
    %2377 = vmatprep.subr.mxu0 0.0
    %2378 = vmatpush1.msra.mxu0 %v533
    %2379 = vmatprep.subr.mxu0 0.0
    %2380 = vmatpush1.msra.mxu0 %v532
    %2381 = vmatprep.subr.mxu0 0.0
    %2382 = vmatpush1.msra.mxu0 %v531
    %2383 = vmatprep.subr.mxu0 0.0
    %2384 = vmatpush1.msra.mxu0 %v530
    %2385 = vmatprep.subr.mxu0 0.0
    %2386 = vmatpush1.msra.mxu0 %v529
    %2387 = vmatprep.subr.mxu0 0.0
    %2388 = vmatpush1.msra.mxu0 %v528
    %2389 = vmatprep.subr.mxu0 0.0
    %2390 = vmatpush1.msra.mxu0 %v527
    %2391 = vmatprep.subr.mxu0 0.0
    %2392 = vmatpush1.msra.mxu0 %v526
    %2393 = vmatprep.subr.mxu0 0.0
    %2394 = vmatpush1.msra.mxu0 %v525
    %2395 = vmatprep.subr.mxu0 0.0
    %2396 = vmatpush1.msra.mxu0 %v524
    %2397 = vmatprep.subr.mxu0 0.0
    %2398 = vmatpush1.msra.mxu0 %v523
    %2399 = vmatprep.subr.mxu0 0.0
    %2400 = vmatpush1.msra.mxu0 %v522
    %2401 = vmatprep.subr.mxu0 0.0
    %2402 = vmatpush1.msra.mxu0 %v521
    %2403 = vmatprep.subr.mxu0 0.0
    %2404 = vmatpush1.msra.mxu0 %v520
    %2405 = vmatprep.subr.mxu0 0.0
    %2406 = vmatpush2.msra.mxu0 0.0
    %2407 = vmatprep.subr.mxu0 0.0
    %2408 = vmatpush2.msra.mxu0 0.0
    %2409 = vmatprep.subr.mxu0 0.0
    %2410 = vmatpush2.msra.mxu0 0.0
    %2411 = vmatprep.subr.mxu0 0.0
    %2412 = vmatpush2.msra.mxu0 0.0
    %2413 = vmatprep.subr.mxu0 0.0
    %2414 = vmatpush2.msra.mxu0 0.0
    %2415 = vmatprep.subr.mxu0 0.0
    %2416 = vmatpush2.msra.mxu0 0.0
    %2417 = vmatprep.subr.mxu0 0.0
    %2418 = vmatpush2.msra.mxu0 0.0
    %2419 = vmatprep.subr.mxu0 0.0
    %2420 = vmatpush2.msra.mxu0 0.0
    %2421 = vmatprep.subr.mxu0 0.0
    %2422 = vmatpush2.msra.mxu0 0.0
    %2423 = vmatprep.subr.mxu0 0.0
    %2424 = vmatpush2.msra.mxu0 0.0
    %2425 = vmatprep.subr.mxu0 0.0
    %2426 = vmatpush2.msra.mxu0 0.0
    %2427 = vmatprep.subr.mxu0 0.0
    %2428 = vmatpush2.msra.mxu0 0.0
    %2429 = vmatprep.subr.mxu0 0.0
    %2430 = vmatpush2.msra.mxu0 0.0
    %2431 = vmatprep.subr.mxu0 0.0
    %2432 = vmatpush2.msra.mxu0 0.0
    %2433 = vmatprep.subr.mxu0 0.0
    %2434 = vmatpush2.msra.mxu0 0.0
    %2435 = vmatprep.subr.mxu0 0.0
    %2436 = vmatpush2.msra.mxu0 0.0
    %2437 = vmatprep.mubr.f32.mxu0 0.0
    %2438 = vmatmul.mubr.f32.gmra.mxu0 %v2210
    %v2439 = vpop.f32.mrf.mxu0
    %v2440 = vadd.f32 %v699, %v2439
    %v2441 = vpop.f32.mrf.mxu0
    %2442 = vdwg.mxu0
    %v2443 = vmul.f32 %v2291, %v2440
    %v2444 = vadd.f32 %v2372, %v2443
    %v2445 = vtanh.pop %v2444
    %v2446 = vsub.f32 1.0, %v2370
    %v2447 = vmul.f32 %v2446, %v2445
    %v2448 = vmul.f32 %v2370, %v2210
    %v2449 = vadd.f32 %v2447, %v2448
    %s2450 = scalar_lea.vmem [#allocation5], 56
    %2451 = vst [vmem:[%s2450] sm:$0xff] %v2449
    %2452 = vst [vmem:[#allocation6] sm:$0xff] %v2449
    %v2453 = vld [vmem:[#allocation5] sm:$0xff]
    %v2454 = vld [vmem:[#allocation5 + $0x8] sm:$0xff]
    %v2455 = vld [vmem:[#allocation5 + $0x10] sm:$0xff]
    %v2456 = vld [vmem:[#allocation5 + $0x18] sm:$0xff]
    %v2457 = vld [vmem:[#allocation5 + $0x20] sm:$0xff]
    %v2458 = vld [vmem:[#allocation5 + $0x28] sm:$0xff]
    %v2459 = vld [vmem:[#allocation5 + $0x30] sm:$0xff]
    %v2460 = vld [vmem:[#allocation5 + $0x38] sm:$0xff]
    %v2461 = vld [vmem:[%s5] sm:$0xff]
    %v2462 = vld [vmem:[%s5 + $0x8] sm:$0xff]
    %v2463 = vld [vmem:[%s5 + $0x10] sm:$0xff]
    %v2464 = vld [vmem:[%s5 + $0x18] sm:$0xff]
    %v2465 = vld [vmem:[%s5 + $0x20] sm:$0xff]
    %v2466 = vld [vmem:[%s5 + $0x28] sm:$0xff]
    %v2467 = vld [vmem:[%s5 + $0x30] sm:$0xff]
    %v2468 = vld [vmem:[%s5 + $0x38] sm:$0xff]
    %v2469 = vld [vmem:[%s5 + $0x40] sm:$0xff]
    %v2470 = vld [vmem:[%s5 + $0x48] sm:$0xff]
    %v2471 = vld [vmem:[%s5 + $0x50] sm:$0xff]
    %v2472 = vld [vmem:[%s5 + $0x58] sm:$0xff]
    %v2473 = vld [vmem:[%s5 + $0x60] sm:$0xff]
    %v2474 = vld [vmem:[%s5 + $0x68] sm:$0xff]
    %v2475 = vld [vmem:[%s5 + $0x70] sm:$0xff]
    %v2476 = vld [vmem:[%s5 + $0x78] sm:$0xff]
    %v2477 = vld [vmem:[%s7] sm:$0x1]
    %v2479 = vlaneseq
    %v2480 = vshrl.u32 %v2479, 7
    %v2481 = vsub.s32 0, %v2480
    %v2482 = vrot.slane %v2477, %v2481
    %2484 = vmatprep.subr.mxu0 0.0
    %2485 = vmatpush1.msra.mxu0 %v2476
    %2486 = vmatprep.subr.mxu0 0.0
    %2487 = vmatpush1.msra.mxu0 %v2475
    %2488 = vmatprep.subr.mxu0 0.0
    %2489 = vmatpush1.msra.mxu0 %v2474
    %2490 = vmatprep.subr.mxu0 0.0
    %2491 = vmatpush1.msra.mxu0 %v2473
    %2492 = vmatprep.subr.mxu0 0.0
    %2493 = vmatpush1.msra.mxu0 %v2472
    %2494 = vmatprep.subr.mxu0 0.0
    %2495 = vmatpush1.msra.mxu0 %v2471
    %2496 = vmatprep.subr.mxu0 0.0
    %2497 = vmatpush1.msra.mxu0 %v2470
    %2498 = vmatprep.subr.mxu0 0.0
    %2499 = vmatpush1.msra.mxu0 %v2469
    %2500 = vmatprep.subr.mxu0 0.0
    %2501 = vmatpush1.msra.mxu0 %v2468
    %2502 = vmatprep.subr.mxu0 0.0
    %2503 = vmatpush1.msra.mxu0 %v2467
    %2504 = vmatprep.subr.mxu0 0.0
    %2505 = vmatpush1.msra.mxu0 %v2466
    %2506 = vmatprep.subr.mxu0 0.0
    %2507 = vmatpush1.msra.mxu0 %v2465
    %2508 = vmatprep.subr.mxu0 0.0
    %2509 = vmatpush1.msra.mxu0 %v2464
    %2510 = vmatprep.subr.mxu0 0.0
    %2511 = vmatpush1.msra.mxu0 %v2463
    %2512 = vmatprep.subr.mxu0 0.0
    %2513 = vmatpush1.msra.mxu0 %v2462
    %2514 = vmatprep.subr.mxu0 0.0
    %2515 = vmatpush1.msra.mxu0 %v2461
    %2516 = vmatprep.subr.mxu0 0.0
    %2517 = vmatpush2.msra.mxu0 0.0
    %2518 = vmatprep.subr.mxu0 0.0
    %2519 = vmatpush2.msra.mxu0 0.0
    %2520 = vmatprep.subr.mxu0 0.0
    %2521 = vmatpush2.msra.mxu0 0.0
    %2522 = vmatprep.subr.mxu0 0.0
    %2523 = vmatpush2.msra.mxu0 0.0
    %2524 = vmatprep.subr.mxu0 0.0
    %2525 = vmatpush2.msra.mxu0 0.0
    %2526 = vmatprep.subr.mxu0 0.0
    %2527 = vmatpush2.msra.mxu0 0.0
    %2528 = vmatprep.subr.mxu0 0.0
    %2529 = vmatpush2.msra.mxu0 0.0
    %2530 = vmatprep.subr.mxu0 0.0
    %2531 = vmatpush2.msra.mxu0 0.0
    %2532 = vmatprep.subr.mxu0 0.0
    %2533 = vmatpush2.msra.mxu0 0.0
    %2534 = vmatprep.subr.mxu0 0.0
    %2535 = vmatpush2.msra.mxu0 0.0
    %2536 = vmatprep.subr.mxu0 0.0
    %2537 = vmatpush2.msra.mxu0 0.0
    %2538 = vmatprep.subr.mxu0 0.0
    %2539 = vmatpush2.msra.mxu0 0.0
    %2540 = vmatprep.subr.mxu0 0.0
    %2541 = vmatpush2.msra.mxu0 0.0
    %2542 = vmatprep.subr.mxu0 0.0
    %2543 = vmatpush2.msra.mxu0 0.0
    %2544 = vmatprep.subr.mxu0 0.0
    %2545 = vmatpush2.msra.mxu0 0.0
    %2546 = vmatprep.subr.mxu0 0.0
    %2547 = vmatpush2.msra.mxu0 0.0
    %2548 = vmatprep.mubr.f32.mxu0 0.0
    %2549 = vmatmul.mubr.f32.gmra.mxu0 %v2453
    %v2550 = vpop.f32.mrf.mxu0
    %v2551 = vadd.f32 %v2482, %v2550
    %v2552 = vpop.f32.mrf.mxu0
    %2553 = vmatprep.mubr.f32.mxu0 0.0
    %2554 = vmatmul.mubr.f32.gmra.mxu0 %v2454
    %v2555 = vpop.f32.mrf.mxu0
    %v2556 = vadd.f32 %v2482, %v2555
    %v2557 = vpop.f32.mrf.mxu0
    %2558 = vmatprep.mubr.f32.mxu0 0.0
    %2559 = vmatmul.mubr.f32.gmra.mxu0 %v2455
    %v2560 = vpop.f32.mrf.mxu0
    %v2561 = vadd.f32 %v2482, %v2560
    %v2562 = vpop.f32.mrf.mxu0
    %2563 = vmatprep.mubr.f32.mxu0 0.0
    %2564 = vmatmul.mubr.f32.gmra.mxu0 %v2456
    %v2565 = vpop.f32.mrf.mxu0
    %v2566 = vadd.f32 %v2482, %v2565
    %v2567 = vpop.f32.mrf.mxu0
    %2568 = vmatprep.mubr.f32.mxu0 0.0
    %2569 = vmatmul.mubr.f32.gmra.mxu0 %v2457
    %v2570 = vpop.f32.mrf.mxu0
    %v2571 = vadd.f32 %v2482, %v2570
    %v2572 = vpop.f32.mrf.mxu0
    %2573 = vmatprep.mubr.f32.mxu0 0.0
    %2574 = vmatmul.mubr.f32.gmra.mxu0 %v2458
    %v2575 = vpop.f32.mrf.mxu0
    %v2576 = vadd.f32 %v2482, %v2575
    %v2577 = vpop.f32.mrf.mxu0
    %2578 = vmatprep.mubr.f32.mxu0 0.0
    %2579 = vmatmul.mubr.f32.gmra.mxu0 %v2459
    %v2580 = vpop.f32.mrf.mxu0
    %v2581 = vadd.f32 %v2482, %v2580
    %v2582 = vpop.f32.mrf.mxu0
    %2583 = vmatprep.mubr.f32.mxu0 0.0
    %2584 = vmatmul.mubr.f32.gmra.mxu0 %v2460
    %v2585 = vpop.f32.mrf.mxu0
    %v2586 = vadd.f32 %v2482, %v2585
    %v2587 = vpop.f32.mrf.mxu0
    %2588 = vdwg.mxu0
    %v2589 = vld [vmem:[%s8] sm:$0x1]
    %v2591 = vlaneseq
    %v2592 = vshrl.u32 %v2591, 7
    %v2593 = vsub.s32 0, %v2592
    %v2594 = vrot.slane %v2589, %v2593
    %v2596 = vadd.f32 %v2551, %v2594
    %v2597 = vadd.f32 %v2556, %v2594
    %v2598 = vadd.f32 %v2561, %v2594
    %v2599 = vadd.f32 %v2566, %v2594
    %v2600 = vadd.f32 %v2571, %v2594
    %v2601 = vadd.f32 %v2576, %v2594
    %v2602 = vadd.f32 %v2581, %v2594
    %v2603 = vadd.f32 %v2586, %v2594
    %s2604 = scalar_lea.vmem %s5, 128
    %v2605 = vld [vmem:[%s2604] sm:$0xff]
    %v2606 = vld [vmem:[%s2604 + $0x8] sm:$0xff]
    %v2607 = vld [vmem:[%s2604 + $0x10] sm:$0xff]
    %v2608 = vld [vmem:[%s2604 + $0x18] sm:$0xff]
    %v2609 = vld [vmem:[%s2604 + $0x20] sm:$0xff]
    %v2610 = vld [vmem:[%s2604 + $0x28] sm:$0xff]
    %v2611 = vld [vmem:[%s2604 + $0x30] sm:$0xff]
    %v2612 = vld [vmem:[%s2604 + $0x38] sm:$0xff]
    %v2613 = vld [vmem:[%s2604 + $0x40] sm:$0xff]
    %v2614 = vld [vmem:[%s2604 + $0x48] sm:$0xff]
    %v2615 = vld [vmem:[%s2604 + $0x50] sm:$0xff]
    %v2616 = vld [vmem:[%s2604 + $0x58] sm:$0xff]
    %v2617 = vld [vmem:[%s2604 + $0x60] sm:$0xff]
    %v2618 = vld [vmem:[%s2604 + $0x68] sm:$0xff]
    %v2619 = vld [vmem:[%s2604 + $0x70] sm:$0xff]
    %v2620 = vld [vmem:[%s2604 + $0x78] sm:$0xff]
    %s2621 = scalar_lea.vmem %s7, 1
    %v2622 = vld [vmem:[%s2621] sm:$0x1]
    %v2624 = vlaneseq
    %v2625 = vshrl.u32 %v2624, 7
    %v2626 = vsub.s32 0, %v2625
    %v2627 = vrot.slane %v2622, %v2626
    %2629 = vmatprep.subr.mxu0 0.0
    %2630 = vmatpush1.msra.mxu0 %v2620
    %2631 = vmatprep.subr.mxu0 0.0
    %2632 = vmatpush1.msra.mxu0 %v2619
    %2633 = vmatprep.subr.mxu0 0.0
    %2634 = vmatpush1.msra.mxu0 %v2618
    %2635 = vmatprep.subr.mxu0 0.0
    %2636 = vmatpush1.msra.mxu0 %v2617
    %2637 = vmatprep.subr.mxu0 0.0
    %2638 = vmatpush1.msra.mxu0 %v2616
    %2639 = vmatprep.subr.mxu0 0.0
    %2640 = vmatpush1.msra.mxu0 %v2615
    %2641 = vmatprep.subr.mxu0 0.0
    %2642 = vmatpush1.msra.mxu0 %v2614
    %2643 = vmatprep.subr.mxu0 0.0
    %2644 = vmatpush1.msra.mxu0 %v2613
    %2645 = vmatprep.subr.mxu0 0.0
    %2646 = vmatpush1.msra.mxu0 %v2612
    %2647 = vmatprep.subr.mxu0 0.0
    %2648 = vmatpush1.msra.mxu0 %v2611
    %2649 = vmatprep.subr.mxu0 0.0
    %2650 = vmatpush1.msra.mxu0 %v2610
    %2651 = vmatprep.subr.mxu0 0.0
    %2652 = vmatpush1.msra.mxu0 %v2609
    %2653 = vmatprep.subr.mxu0 0.0
    %2654 = vmatpush1.msra.mxu0 %v2608
    %2655 = vmatprep.subr.mxu0 0.0
    %2656 = vmatpush1.msra.mxu0 %v2607
    %2657 = vmatprep.subr.mxu0 0.0
    %2658 = vmatpush1.msra.mxu0 %v2606
    %2659 = vmatprep.subr.mxu0 0.0
    %2660 = vmatpush1.msra.mxu0 %v2605
    %2661 = vmatprep.subr.mxu0 0.0
    %2662 = vmatpush2.msra.mxu0 0.0
    %2663 = vmatprep.subr.mxu0 0.0
    %2664 = vmatpush2.msra.mxu0 0.0
    %2665 = vmatprep.subr.mxu0 0.0
    %2666 = vmatpush2.msra.mxu0 0.0
    %2667 = vmatprep.subr.mxu0 0.0
    %2668 = vmatpush2.msra.mxu0 0.0
    %2669 = vmatprep.subr.mxu0 0.0
    %2670 = vmatpush2.msra.mxu0 0.0
    %2671 = vmatprep.subr.mxu0 0.0
    %2672 = vmatpush2.msra.mxu0 0.0
    %2673 = vmatprep.subr.mxu0 0.0
    %2674 = vmatpush2.msra.mxu0 0.0
    %2675 = vmatprep.subr.mxu0 0.0
    %2676 = vmatpush2.msra.mxu0 0.0
    %2677 = vmatprep.subr.mxu0 0.0
    %2678 = vmatpush2.msra.mxu0 0.0
    %2679 = vmatprep.subr.mxu0 0.0
    %2680 = vmatpush2.msra.mxu0 0.0
    %2681 = vmatprep.subr.mxu0 0.0
    %2682 = vmatpush2.msra.mxu0 0.0
    %2683 = vmatprep.subr.mxu0 0.0
    %2684 = vmatpush2.msra.mxu0 0.0
    %2685 = vmatprep.subr.mxu0 0.0
    %2686 = vmatpush2.msra.mxu0 0.0
    %2687 = vmatprep.subr.mxu0 0.0
    %2688 = vmatpush2.msra.mxu0 0.0
    %2689 = vmatprep.subr.mxu0 0.0
    %2690 = vmatpush2.msra.mxu0 0.0
    %2691 = vmatprep.subr.mxu0 0.0
    %2692 = vmatpush2.msra.mxu0 0.0
    %2693 = vmatprep.mubr.f32.mxu0 0.0
    %2694 = vmatmul.mubr.f32.gmra.mxu0 %v2453
    %v2695 = vpop.f32.mrf.mxu0
    %v2696 = vadd.f32 %v2627, %v2695
    %v2697 = vpop.f32.mrf.mxu0
    %2698 = vmatprep.mubr.f32.mxu0 0.0
    %2699 = vmatmul.mubr.f32.gmra.mxu0 %v2454
    %v2700 = vpop.f32.mrf.mxu0
    %v2701 = vadd.f32 %v2627, %v2700
    %v2702 = vpop.f32.mrf.mxu0
    %2703 = vmatprep.mubr.f32.mxu0 0.0
    %2704 = vmatmul.mubr.f32.gmra.mxu0 %v2455
    %v2705 = vpop.f32.mrf.mxu0
    %v2706 = vadd.f32 %v2627, %v2705
    %v2707 = vpop.f32.mrf.mxu0
    %2708 = vmatprep.mubr.f32.mxu0 0.0
    %2709 = vmatmul.mubr.f32.gmra.mxu0 %v2456
    %v2710 = vpop.f32.mrf.mxu0
    %v2711 = vadd.f32 %v2627, %v2710
    %v2712 = vpop.f32.mrf.mxu0
    %2713 = vmatprep.mubr.f32.mxu0 0.0
    %2714 = vmatmul.mubr.f32.gmra.mxu0 %v2457
    %v2715 = vpop.f32.mrf.mxu0
    %v2716 = vadd.f32 %v2627, %v2715
    %v2717 = vpop.f32.mrf.mxu0
    %2718 = vmatprep.mubr.f32.mxu0 0.0
    %2719 = vmatmul.mubr.f32.gmra.mxu0 %v2458
    %v2720 = vpop.f32.mrf.mxu0
    %v2721 = vadd.f32 %v2627, %v2720
    %v2722 = vpop.f32.mrf.mxu0
    %2723 = vmatprep.mubr.f32.mxu0 0.0
    %2724 = vmatmul.mubr.f32.gmra.mxu0 %v2459
    %v2725 = vpop.f32.mrf.mxu0
    %v2726 = vadd.f32 %v2627, %v2725
    %v2727 = vpop.f32.mrf.mxu0
    %2728 = vmatprep.mubr.f32.mxu0 0.0
    %2729 = vmatmul.mubr.f32.gmra.mxu0 %v2460
    %v2730 = vpop.f32.mrf.mxu0
    %v2731 = vadd.f32 %v2627, %v2730
    %v2732 = vpop.f32.mrf.mxu0
    %2733 = vdwg.mxu0
    %s2734 = scalar_lea.vmem %s8, 1
    %v2735 = vld [vmem:[%s2734] sm:$0x1]
    %v2737 = vlaneseq
    %v2738 = vshrl.u32 %v2737, 7
    %v2739 = vsub.s32 0, %v2738
    %v2740 = vrot.slane %v2735, %v2739
    %v2742 = vadd.f32 %v2696, %v2740
    %v2743 = vadd.f32 %v2701, %v2740
    %v2744 = vadd.f32 %v2706, %v2740
    %v2745 = vadd.f32 %v2711, %v2740
    %v2746 = vadd.f32 %v2716, %v2740
    %v2747 = vadd.f32 %v2721, %v2740
    %v2748 = vadd.f32 %v2726, %v2740
    %v2749 = vadd.f32 %v2731, %v2740
    %s2750 = scalar_lea.vmem %s5, 256
    %v2751 = vld [vmem:[%s2750] sm:$0xff]
    %v2752 = vld [vmem:[%s2750 + $0x8] sm:$0xff]
    %v2753 = vld [vmem:[%s2750 + $0x10] sm:$0xff]
    %v2754 = vld [vmem:[%s2750 + $0x18] sm:$0xff]
    %v2755 = vld [vmem:[%s2750 + $0x20] sm:$0xff]
    %v2756 = vld [vmem:[%s2750 + $0x28] sm:$0xff]
    %v2757 = vld [vmem:[%s2750 + $0x30] sm:$0xff]
    %v2758 = vld [vmem:[%s2750 + $0x38] sm:$0xff]
    %v2759 = vld [vmem:[%s2750 + $0x40] sm:$0xff]
    %v2760 = vld [vmem:[%s2750 + $0x48] sm:$0xff]
    %v2761 = vld [vmem:[%s2750 + $0x50] sm:$0xff]
    %v2762 = vld [vmem:[%s2750 + $0x58] sm:$0xff]
    %v2763 = vld [vmem:[%s2750 + $0x60] sm:$0xff]
    %v2764 = vld [vmem:[%s2750 + $0x68] sm:$0xff]
    %v2765 = vld [vmem:[%s2750 + $0x70] sm:$0xff]
    %v2766 = vld [vmem:[%s2750 + $0x78] sm:$0xff]
    %s2767 = scalar_lea.vmem %s7, 2
    %v2768 = vld [vmem:[%s2767] sm:$0x1]
    %v2770 = vlaneseq
    %v2771 = vshrl.u32 %v2770, 7
    %v2772 = vsub.s32 0, %v2771
    %v2773 = vrot.slane %v2768, %v2772
    %2775 = vmatprep.subr.mxu0 0.0
    %2776 = vmatpush1.msra.mxu0 %v2766
    %2777 = vmatprep.subr.mxu0 0.0
    %2778 = vmatpush1.msra.mxu0 %v2765
    %2779 = vmatprep.subr.mxu0 0.0
    %2780 = vmatpush1.msra.mxu0 %v2764
    %2781 = vmatprep.subr.mxu0 0.0
    %2782 = vmatpush1.msra.mxu0 %v2763
    %2783 = vmatprep.subr.mxu0 0.0
    %2784 = vmatpush1.msra.mxu0 %v2762
    %2785 = vmatprep.subr.mxu0 0.0
    %2786 = vmatpush1.msra.mxu0 %v2761
    %2787 = vmatprep.subr.mxu0 0.0
    %2788 = vmatpush1.msra.mxu0 %v2760
    %2789 = vmatprep.subr.mxu0 0.0
    %2790 = vmatpush1.msra.mxu0 %v2759
    %2791 = vmatprep.subr.mxu0 0.0
    %2792 = vmatpush1.msra.mxu0 %v2758
    %2793 = vmatprep.subr.mxu0 0.0
    %2794 = vmatpush1.msra.mxu0 %v2757
    %2795 = vmatprep.subr.mxu0 0.0
    %2796 = vmatpush1.msra.mxu0 %v2756
    %2797 = vmatprep.subr.mxu0 0.0
    %2798 = vmatpush1.msra.mxu0 %v2755
    %2799 = vmatprep.subr.mxu0 0.0
    %2800 = vmatpush1.msra.mxu0 %v2754
    %2801 = vmatprep.subr.mxu0 0.0
    %2802 = vmatpush1.msra.mxu0 %v2753
    %2803 = vmatprep.subr.mxu0 0.0
    %2804 = vmatpush1.msra.mxu0 %v2752
    %2805 = vmatprep.subr.mxu0 0.0
    %2806 = vmatpush1.msra.mxu0 %v2751
    %2807 = vmatprep.subr.mxu0 0.0
    %2808 = vmatpush2.msra.mxu0 0.0
    %2809 = vmatprep.subr.mxu0 0.0
    %2810 = vmatpush2.msra.mxu0 0.0
    %2811 = vmatprep.subr.mxu0 0.0
    %2812 = vmatpush2.msra.mxu0 0.0
    %2813 = vmatprep.subr.mxu0 0.0
    %2814 = vmatpush2.msra.mxu0 0.0
    %2815 = vmatprep.subr.mxu0 0.0
    %2816 = vmatpush2.msra.mxu0 0.0
    %2817 = vmatprep.subr.mxu0 0.0
    %2818 = vmatpush2.msra.mxu0 0.0
    %2819 = vmatprep.subr.mxu0 0.0
    %2820 = vmatpush2.msra.mxu0 0.0
    %2821 = vmatprep.subr.mxu0 0.0
    %2822 = vmatpush2.msra.mxu0 0.0
    %2823 = vmatprep.subr.mxu0 0.0
    %2824 = vmatpush2.msra.mxu0 0.0
    %2825 = vmatprep.subr.mxu0 0.0
    %2826 = vmatpush2.msra.mxu0 0.0
    %2827 = vmatprep.subr.mxu0 0.0
    %2828 = vmatpush2.msra.mxu0 0.0
    %2829 = vmatprep.subr.mxu0 0.0
    %2830 = vmatpush2.msra.mxu0 0.0
    %2831 = vmatprep.subr.mxu0 0.0
    %2832 = vmatpush2.msra.mxu0 0.0
    %2833 = vmatprep.subr.mxu0 0.0
    %2834 = vmatpush2.msra.mxu0 0.0
    %2835 = vmatprep.subr.mxu0 0.0
    %2836 = vmatpush2.msra.mxu0 0.0
    %2837 = vmatprep.subr.mxu0 0.0
    %2838 = vmatpush2.msra.mxu0 0.0
    %2839 = vmatprep.mubr.f32.mxu0 0.0
    %2840 = vmatmul.mubr.f32.gmra.mxu0 %v2453
    %v2841 = vpop.f32.mrf.mxu0
    %v2842 = vadd.f32 %v2773, %v2841
    %v2843 = vpop.f32.mrf.mxu0
    %2844 = vmatprep.mubr.f32.mxu0 0.0
    %2845 = vmatmul.mubr.f32.gmra.mxu0 %v2454
    %v2846 = vpop.f32.mrf.mxu0
    %v2847 = vadd.f32 %v2773, %v2846
    %v2848 = vpop.f32.mrf.mxu0
    %2849 = vmatprep.mubr.f32.mxu0 0.0
    %2850 = vmatmul.mubr.f32.gmra.mxu0 %v2455
    %v2851 = vpop.f32.mrf.mxu0
    %v2852 = vadd.f32 %v2773, %v2851
    %v2853 = vpop.f32.mrf.mxu0
    %2854 = vmatprep.mubr.f32.mxu0 0.0
    %2855 = vmatmul.mubr.f32.gmra.mxu0 %v2456
    %v2856 = vpop.f32.mrf.mxu0
    %v2857 = vadd.f32 %v2773, %v2856
    %v2858 = vpop.f32.mrf.mxu0
    %2859 = vmatprep.mubr.f32.mxu0 0.0
    %2860 = vmatmul.mubr.f32.gmra.mxu0 %v2457
    %v2861 = vpop.f32.mrf.mxu0
    %v2862 = vadd.f32 %v2773, %v2861
    %v2863 = vpop.f32.mrf.mxu0
    %2864 = vmatprep.mubr.f32.mxu0 0.0
    %2865 = vmatmul.mubr.f32.gmra.mxu0 %v2458
    %v2866 = vpop.f32.mrf.mxu0
    %v2867 = vadd.f32 %v2773, %v2866
    %v2868 = vpop.f32.mrf.mxu0
    %2869 = vmatprep.mubr.f32.mxu0 0.0
    %2870 = vmatmul.mubr.f32.gmra.mxu0 %v2459
    %v2871 = vpop.f32.mrf.mxu0
    %v2872 = vadd.f32 %v2773, %v2871
    %v2873 = vpop.f32.mrf.mxu0
    %2874 = vmatprep.mubr.f32.mxu0 0.0
    %2875 = vmatmul.mubr.f32.gmra.mxu0 %v2460
    %v2876 = vpop.f32.mrf.mxu0
    %v2877 = vadd.f32 %v2773, %v2876
    %v2878 = vpop.f32.mrf.mxu0
    %2879 = vdwg.mxu0
    %2880 = vst [vmem:[#allocation2] sm:$0xff] %v2596
    %2881 = vst [vmem:[#allocation2 + $0x8] sm:$0xff] %v2597
    %2882 = vst [vmem:[#allocation2 + $0x10] sm:$0xff] %v2598
    %2883 = vst [vmem:[#allocation2 + $0x18] sm:$0xff] %v2599
    %2884 = vst [vmem:[#allocation2 + $0x20] sm:$0xff] %v2600
    %2885 = vst [vmem:[#allocation2 + $0x28] sm:$0xff] %v2601
    %2886 = vst [vmem:[#allocation2 + $0x30] sm:$0xff] %v2602
    %2887 = vst [vmem:[#allocation2 + $0x38] sm:$0xff] %v2603
    %2888 = vst [vmem:[#allocation3] sm:$0xff] %v2742
    %2889 = vst [vmem:[#allocation3 + $0x8] sm:$0xff] %v2743
    %2890 = vst [vmem:[#allocation3 + $0x10] sm:$0xff] %v2744
    %2891 = vst [vmem:[#allocation3 + $0x18] sm:$0xff] %v2745
    %2892 = vst [vmem:[#allocation3 + $0x20] sm:$0xff] %v2746
    %2893 = vst [vmem:[#allocation3 + $0x28] sm:$0xff] %v2747
    %2894 = vst [vmem:[#allocation3 + $0x30] sm:$0xff] %v2748
    %2895 = vst [vmem:[#allocation3 + $0x38] sm:$0xff] %v2749
    %2896 = vst [vmem:[#allocation4] sm:$0xff] %v2842
    %2897 = vst [vmem:[#allocation4 + $0x8] sm:$0xff] %v2847
    %2898 = vst [vmem:[#allocation4 + $0x10] sm:$0xff] %v2852
    %2899 = vst [vmem:[#allocation4 + $0x18] sm:$0xff] %v2857
    %2900 = vst [vmem:[#allocation4 + $0x20] sm:$0xff] %v2862
    %2901 = vst [vmem:[#allocation4 + $0x28] sm:$0xff] %v2867
    %2902 = vst [vmem:[#allocation4 + $0x30] sm:$0xff] %v2872
    %2903 = vst [vmem:[#allocation4 + $0x38] sm:$0xff] %v2877
    %v2904 = vld [vmem:[%s6] sm:$0xff]
    %v2905 = vld [vmem:[%s6 + $0x8] sm:$0xff]
    %v2906 = vld [vmem:[%s6 + $0x10] sm:$0xff]
    %v2907 = vld [vmem:[%s6 + $0x18] sm:$0xff]
    %v2908 = vld [vmem:[%s6 + $0x20] sm:$0xff]
    %v2909 = vld [vmem:[%s6 + $0x28] sm:$0xff]
    %v2910 = vld [vmem:[%s6 + $0x30] sm:$0xff]
    %v2911 = vld [vmem:[%s6 + $0x38] sm:$0xff]
    %v2912 = vld [vmem:[%s6 + $0x40] sm:$0xff]
    %v2913 = vld [vmem:[%s6 + $0x48] sm:$0xff]
    %v2914 = vld [vmem:[%s6 + $0x50] sm:$0xff]
    %v2915 = vld [vmem:[%s6 + $0x58] sm:$0xff]
    %v2916 = vld [vmem:[%s6 + $0x60] sm:$0xff]
    %v2917 = vld [vmem:[%s6 + $0x68] sm:$0xff]
    %v2918 = vld [vmem:[%s6 + $0x70] sm:$0xff]
    %v2919 = vld [vmem:[%s6 + $0x78] sm:$0xff]
    %s2920 = scalar_lea.vmem %s6, 128
    %v2921 = vld [vmem:[%s2920] sm:$0xff]
    %v2922 = vld [vmem:[%s2920 + $0x8] sm:$0xff]
    %v2923 = vld [vmem:[%s2920 + $0x10] sm:$0xff]
    %v2924 = vld [vmem:[%s2920 + $0x18] sm:$0xff]
    %v2925 = vld [vmem:[%s2920 + $0x20] sm:$0xff]
    %v2926 = vld [vmem:[%s2920 + $0x28] sm:$0xff]
    %v2927 = vld [vmem:[%s2920 + $0x30] sm:$0xff]
    %v2928 = vld [vmem:[%s2920 + $0x38] sm:$0xff]
    %v2929 = vld [vmem:[%s2920 + $0x40] sm:$0xff]
    %v2930 = vld [vmem:[%s2920 + $0x48] sm:$0xff]
    %v2931 = vld [vmem:[%s2920 + $0x50] sm:$0xff]
    %v2932 = vld [vmem:[%s2920 + $0x58] sm:$0xff]
    %v2933 = vld [vmem:[%s2920 + $0x60] sm:$0xff]
    %v2934 = vld [vmem:[%s2920 + $0x68] sm:$0xff]
    %v2935 = vld [vmem:[%s2920 + $0x70] sm:$0xff]
    %v2936 = vld [vmem:[%s2920 + $0x78] sm:$0xff]
    %s2937 = scalar_lea.vmem %s6, 256
    %v2938 = vld [vmem:[%s2937] sm:$0xff]
    %v2939 = vld [vmem:[%s2937 + $0x8] sm:$0xff]
    %v2940 = vld [vmem:[%s2937 + $0x10] sm:$0xff]
    %v2941 = vld [vmem:[%s2937 + $0x18] sm:$0xff]
    %v2942 = vld [vmem:[%s2937 + $0x20] sm:$0xff]
    %v2943 = vld [vmem:[%s2937 + $0x28] sm:$0xff]
    %v2944 = vld [vmem:[%s2937 + $0x30] sm:$0xff]
    %v2945 = vld [vmem:[%s2937 + $0x38] sm:$0xff]
    %v2946 = vld [vmem:[%s2937 + $0x40] sm:$0xff]
    %v2947 = vld [vmem:[%s2937 + $0x48] sm:$0xff]
    %v2948 = vld [vmem:[%s2937 + $0x50] sm:$0xff]
    %v2949 = vld [vmem:[%s2937 + $0x58] sm:$0xff]
    %v2950 = vld [vmem:[%s2937 + $0x60] sm:$0xff]
    %v2951 = vld [vmem:[%s2937 + $0x68] sm:$0xff]
    %v2952 = vld [vmem:[%s2937 + $0x70] sm:$0xff]
    %v2953 = vld [vmem:[%s2937 + $0x78] sm:$0xff]
    %s2954 = scalar_lea.vmem %s8, 2
    %v2955 = vld [vmem:[%s2954] sm:$0x1]
    %v2956 = vld [vmem:[#allocation2] sm:$0xff]
    %2957 = vmatprep.subr.mxu0 0.0
    %2958 = vmatpush1.msra.mxu0 %v2919
    %2959 = vmatprep.subr.mxu0 0.0
    %2960 = vmatpush1.msra.mxu0 %v2918
    %2961 = vmatprep.subr.mxu0 0.0
    %2962 = vmatpush1.msra.mxu0 %v2917
    %2963 = vmatprep.subr.mxu0 0.0
    %2964 = vmatpush1.msra.mxu0 %v2916
    %2965 = vmatprep.subr.mxu0 0.0
    %2966 = vmatpush1.msra.mxu0 %v2915
    %2967 = vmatprep.subr.mxu0 0.0
    %2968 = vmatpush1.msra.mxu0 %v2914
    %2969 = vmatprep.subr.mxu0 0.0
    %2970 = vmatpush1.msra.mxu0 %v2913
    %2971 = vmatprep.subr.mxu0 0.0
    %2972 = vmatpush1.msra.mxu0 %v2912
    %2973 = vmatprep.subr.mxu0 0.0
    %2974 = vmatpush1.msra.mxu0 %v2911
    %2975 = vmatprep.subr.mxu0 0.0
    %2976 = vmatpush1.msra.mxu0 %v2910
    %2977 = vmatprep.subr.mxu0 0.0
    %2978 = vmatpush1.msra.mxu0 %v2909
    %2979 = vmatprep.subr.mxu0 0.0
    %2980 = vmatpush1.msra.mxu0 %v2908
    %2981 = vmatprep.subr.mxu0 0.0
    %2982 = vmatpush1.msra.mxu0 %v2907
    %2983 = vmatprep.subr.mxu0 0.0
    %2984 = vmatpush1.msra.mxu0 %v2906
    %2985 = vmatprep.subr.mxu0 0.0
    %2986 = vmatpush1.msra.mxu0 %v2905
    %2987 = vmatprep.subr.mxu0 0.0
    %2988 = vmatpush1.msra.mxu0 %v2904
    %2989 = vmatprep.subr.mxu0 0.0
    %2990 = vmatpush2.msra.mxu0 0.0
    %2991 = vmatprep.subr.mxu0 0.0
    %2992 = vmatpush2.msra.mxu0 0.0
    %2993 = vmatprep.subr.mxu0 0.0
    %2994 = vmatpush2.msra.mxu0 0.0
    %2995 = vmatprep.subr.mxu0 0.0
    %2996 = vmatpush2.msra.mxu0 0.0
    %2997 = vmatprep.subr.mxu0 0.0
    %2998 = vmatpush2.msra.mxu0 0.0
    %2999 = vmatprep.subr.mxu0 0.0
    %3000 = vmatpush2.msra.mxu0 0.0
    %3001 = vmatprep.subr.mxu0 0.0
    %3002 = vmatpush2.msra.mxu0 0.0
    %3003 = vmatprep.subr.mxu0 0.0
    %3004 = vmatpush2.msra.mxu0 0.0
    %3005 = vmatprep.subr.mxu0 0.0
    %3006 = vmatpush2.msra.mxu0 0.0
    %3007 = vmatprep.subr.mxu0 0.0
    %3008 = vmatpush2.msra.mxu0 0.0
    %3009 = vmatprep.subr.mxu0 0.0
    %3010 = vmatpush2.msra.mxu0 0.0
    %3011 = vmatprep.subr.mxu0 0.0
    %3012 = vmatpush2.msra.mxu0 0.0
    %3013 = vmatprep.subr.mxu0 0.0
    %3014 = vmatpush2.msra.mxu0 0.0
    %3015 = vmatprep.subr.mxu0 0.0
    %3016 = vmatpush2.msra.mxu0 0.0
    %3017 = vmatprep.subr.mxu0 0.0
    %3018 = vmatpush2.msra.mxu0 0.0
    %3019 = vmatprep.subr.mxu0 0.0
    %3020 = vmatpush2.msra.mxu0 0.0
    %3021 = vmatprep.mubr.f32.mxu0 0.0
    %3022 = vmatmul.mubr.f32.gmra.mxu0 0.0
    %v3023 = vpop.f32.mrf.mxu0
    %v3024 = vadd.f32 0.0, %v3023
    %v3025 = vpop.f32.mrf.mxu0
    %3026 = vdwg.mxu0
    %v3027 = vadd.f32 %v2956, %v3024
    %v3028 = vxor.u32 %v3027, 2147483648
    %v3029 = vmul.f32 %v3028, 1.442695
    %v3030 = vpow.pop %v3029
    %v3031 = vadd.f32 %v3030, 1.0
    %v3032 = vrcp.pop %v3031
    %v3033 = vmul.f32 1.0, %v3032
    %v3034 = vld [vmem:[#allocation3] sm:$0xff]
    %3035 = vmatprep.subr.mxu0 0.0
    %3036 = vmatpush1.msra.mxu0 %v2936
    %3037 = vmatprep.subr.mxu0 0.0
    %3038 = vmatpush1.msra.mxu0 %v2935
    %3039 = vmatprep.subr.mxu0 0.0
    %3040 = vmatpush1.msra.mxu0 %v2934
    %3041 = vmatprep.subr.mxu0 0.0
    %3042 = vmatpush1.msra.mxu0 %v2933
    %3043 = vmatprep.subr.mxu0 0.0
    %3044 = vmatpush1.msra.mxu0 %v2932
    %3045 = vmatprep.subr.mxu0 0.0
    %3046 = vmatpush1.msra.mxu0 %v2931
    %3047 = vmatprep.subr.mxu0 0.0
    %3048 = vmatpush1.msra.mxu0 %v2930
    %3049 = vmatprep.subr.mxu0 0.0
    %3050 = vmatpush1.msra.mxu0 %v2929
    %3051 = vmatprep.subr.mxu0 0.0
    %3052 = vmatpush1.msra.mxu0 %v2928
    %3053 = vmatprep.subr.mxu0 0.0
    %3054 = vmatpush1.msra.mxu0 %v2927
    %3055 = vmatprep.subr.mxu0 0.0
    %3056 = vmatpush1.msra.mxu0 %v2926
    %3057 = vmatprep.subr.mxu0 0.0
    %3058 = vmatpush1.msra.mxu0 %v2925
    %3059 = vmatprep.subr.mxu0 0.0
    %3060 = vmatpush1.msra.mxu0 %v2924
    %3061 = vmatprep.subr.mxu0 0.0
    %3062 = vmatpush1.msra.mxu0 %v2923
    %3063 = vmatprep.subr.mxu0 0.0
    %3064 = vmatpush1.msra.mxu0 %v2922
    %3065 = vmatprep.subr.mxu0 0.0
    %3066 = vmatpush1.msra.mxu0 %v2921
    %3067 = vmatprep.subr.mxu0 0.0
    %3068 = vmatpush2.msra.mxu0 0.0
    %3069 = vmatprep.subr.mxu0 0.0
    %3070 = vmatpush2.msra.mxu0 0.0
    %3071 = vmatprep.subr.mxu0 0.0
    %3072 = vmatpush2.msra.mxu0 0.0
    %3073 = vmatprep.subr.mxu0 0.0
    %3074 = vmatpush2.msra.mxu0 0.0
    %3075 = vmatprep.subr.mxu0 0.0
    %3076 = vmatpush2.msra.mxu0 0.0
    %3077 = vmatprep.subr.mxu0 0.0
    %3078 = vmatpush2.msra.mxu0 0.0
    %3079 = vmatprep.subr.mxu0 0.0
    %3080 = vmatpush2.msra.mxu0 0.0
    %3081 = vmatprep.subr.mxu0 0.0
    %3082 = vmatpush2.msra.mxu0 0.0
    %3083 = vmatprep.subr.mxu0 0.0
    %3084 = vmatpush2.msra.mxu0 0.0
    %3085 = vmatprep.subr.mxu0 0.0
    %3086 = vmatpush2.msra.mxu0 0.0
    %3087 = vmatprep.subr.mxu0 0.0
    %3088 = vmatpush2.msra.mxu0 0.0
    %3089 = vmatprep.subr.mxu0 0.0
    %3090 = vmatpush2.msra.mxu0 0.0
    %3091 = vmatprep.subr.mxu0 0.0
    %3092 = vmatpush2.msra.mxu0 0.0
    %3093 = vmatprep.subr.mxu0 0.0
    %3094 = vmatpush2.msra.mxu0 0.0
    %3095 = vmatprep.subr.mxu0 0.0
    %3096 = vmatpush2.msra.mxu0 0.0
    %3097 = vmatprep.subr.mxu0 0.0
    %3098 = vmatpush2.msra.mxu0 0.0
    %3099 = vmatprep.mubr.f32.mxu0 0.0
    %3100 = vmatmul.mubr.f32.gmra.mxu0 0.0
    %v3101 = vpop.f32.mrf.mxu0
    %v3102 = vadd.f32 0.0, %v3101
    %v3103 = vpop.f32.mrf.mxu0
    %3104 = vdwg.mxu0
    %v3105 = vadd.f32 %v3034, %v3102
    %v3106 = vxor.u32 %v3105, 2147483648
    %v3107 = vmul.f32 %v3106, 1.442695
    %v3108 = vpow.pop %v3107
    %v3109 = vadd.f32 %v3108, 1.0
    %v3110 = vrcp.pop %v3109
    %v3111 = vmul.f32 1.0, %v3110
    %v3112 = vld [vmem:[#allocation4] sm:$0xff]
    %v3114 = vlaneseq
    %v3115 = vshrl.u32 %v3114, 7
    %v3116 = vsub.s32 0, %v3115
    %v3117 = vrot.slane %v2955, %v3116
    %3119 = vmatprep.subr.mxu0 0.0
    %3120 = vmatpush1.msra.mxu0 %v2953
    %3121 = vmatprep.subr.mxu0 0.0
    %3122 = vmatpush1.msra.mxu0 %v2952
    %3123 = vmatprep.subr.mxu0 0.0
    %3124 = vmatpush1.msra.mxu0 %v2951
    %3125 = vmatprep.subr.mxu0 0.0
    %3126 = vmatpush1.msra.mxu0 %v2950
    %3127 = vmatprep.subr.mxu0 0.0
    %3128 = vmatpush1.msra.mxu0 %v2949
    %3129 = vmatprep.subr.mxu0 0.0
    %3130 = vmatpush1.msra.mxu0 %v2948
    %3131 = vmatprep.subr.mxu0 0.0
    %3132 = vmatpush1.msra.mxu0 %v2947
    %3133 = vmatprep.subr.mxu0 0.0
    %3134 = vmatpush1.msra.mxu0 %v2946
    %3135 = vmatprep.subr.mxu0 0.0
    %3136 = vmatpush1.msra.mxu0 %v2945
    %3137 = vmatprep.subr.mxu0 0.0
    %3138 = vmatpush1.msra.mxu0 %v2944
    %3139 = vmatprep.subr.mxu0 0.0
    %3140 = vmatpush1.msra.mxu0 %v2943
    %3141 = vmatprep.subr.mxu0 0.0
    %3142 = vmatpush1.msra.mxu0 %v2942
    %3143 = vmatprep.subr.mxu0 0.0
    %3144 = vmatpush1.msra.mxu0 %v2941
    %3145 = vmatprep.subr.mxu0 0.0
    %3146 = vmatpush1.msra.mxu0 %v2940
    %3147 = vmatprep.subr.mxu0 0.0
    %3148 = vmatpush1.msra.mxu0 %v2939
    %3149 = vmatprep.subr.mxu0 0.0
    %3150 = vmatpush1.msra.mxu0 %v2938
    %3151 = vmatprep.subr.mxu0 0.0
    %3152 = vmatpush2.msra.mxu0 0.0
    %3153 = vmatprep.subr.mxu0 0.0
    %3154 = vmatpush2.msra.mxu0 0.0
    %3155 = vmatprep.subr.mxu0 0.0
    %3156 = vmatpush2.msra.mxu0 0.0
    %3157 = vmatprep.subr.mxu0 0.0
    %3158 = vmatpush2.msra.mxu0 0.0
    %3159 = vmatprep.subr.mxu0 0.0
    %3160 = vmatpush2.msra.mxu0 0.0
    %3161 = vmatprep.subr.mxu0 0.0
    %3162 = vmatpush2.msra.mxu0 0.0
    %3163 = vmatprep.subr.mxu0 0.0
    %3164 = vmatpush2.msra.mxu0 0.0
    %3165 = vmatprep.subr.mxu0 0.0
    %3166 = vmatpush2.msra.mxu0 0.0
    %3167 = vmatprep.subr.mxu0 0.0
    %3168 = vmatpush2.msra.mxu0 0.0
    %3169 = vmatprep.subr.mxu0 0.0
    %3170 = vmatpush2.msra.mxu0 0.0
    %3171 = vmatprep.subr.mxu0 0.0
    %3172 = vmatpush2.msra.mxu0 0.0
    %3173 = vmatprep.subr.mxu0 0.0
    %3174 = vmatpush2.msra.mxu0 0.0
    %3175 = vmatprep.subr.mxu0 0.0
    %3176 = vmatpush2.msra.mxu0 0.0
    %3177 = vmatprep.subr.mxu0 0.0
    %3178 = vmatpush2.msra.mxu0 0.0
    %3179 = vmatprep.subr.mxu0 0.0
    %3180 = vmatpush2.msra.mxu0 0.0
    %3181 = vmatprep.subr.mxu0 0.0
    %3182 = vmatpush2.msra.mxu0 0.0
    %3183 = vmatprep.mubr.f32.mxu0 0.0
    %3184 = vmatmul.mubr.f32.gmra.mxu0 0.0
    %v3185 = vpop.f32.mrf.mxu0
    %v3186 = vadd.f32 %v3117, %v3185
    %v3187 = vpop.f32.mrf.mxu0
    %3188 = vdwg.mxu0
    %v3189 = vmul.f32 %v3033, %v3186
    %v3190 = vadd.f32 %v3112, %v3189
    %v3191 = vtanh.pop %v3190
    %v3192 = vsub.f32 1.0, %v3111
    %v3193 = vmul.f32 %v3192, %v3191
    %v3194 = vmul.f32 %v3111, 0.0
    %v3195 = vadd.f32 %v3193, %v3194
    %3196 = vst [vmem:[%s9] sm:$0xff] %v3195
    %v3197 = vld [vmem:[%s779] sm:$0xff]
    %3198 = vmatprep.subr.mxu0 0.0
    %3199 = vmatpush1.msra.mxu0 %v2919
    %3200 = vmatprep.subr.mxu0 0.0
    %3201 = vmatpush1.msra.mxu0 %v2918
    %3202 = vmatprep.subr.mxu0 0.0
    %3203 = vmatpush1.msra.mxu0 %v2917
    %3204 = vmatprep.subr.mxu0 0.0
    %3205 = vmatpush1.msra.mxu0 %v2916
    %3206 = vmatprep.subr.mxu0 0.0
    %3207 = vmatpush1.msra.mxu0 %v2915
    %3208 = vmatprep.subr.mxu0 0.0
    %3209 = vmatpush1.msra.mxu0 %v2914
    %3210 = vmatprep.subr.mxu0 0.0
    %3211 = vmatpush1.msra.mxu0 %v2913
    %3212 = vmatprep.subr.mxu0 0.0
    %3213 = vmatpush1.msra.mxu0 %v2912
    %3214 = vmatprep.subr.mxu0 0.0
    %3215 = vmatpush1.msra.mxu0 %v2911
    %3216 = vmatprep.subr.mxu0 0.0
    %3217 = vmatpush1.msra.mxu0 %v2910
    %3218 = vmatprep.subr.mxu0 0.0
    %3219 = vmatpush1.msra.mxu0 %v2909
    %3220 = vmatprep.subr.mxu0 0.0
    %3221 = vmatpush1.msra.mxu0 %v2908
    %3222 = vmatprep.subr.mxu0 0.0
    %3223 = vmatpush1.msra.mxu0 %v2907
    %3224 = vmatprep.subr.mxu0 0.0
    %3225 = vmatpush1.msra.mxu0 %v2906
    %3226 = vmatprep.subr.mxu0 0.0
    %3227 = vmatpush1.msra.mxu0 %v2905
    %3228 = vmatprep.subr.mxu0 0.0
    %3229 = vmatpush1.msra.mxu0 %v2904
    %3230 = vmatprep.subr.mxu0 0.0
    %3231 = vmatpush2.msra.mxu0 0.0
    %3232 = vmatprep.subr.mxu0 0.0
    %3233 = vmatpush2.msra.mxu0 0.0
    %3234 = vmatprep.subr.mxu0 0.0
    %3235 = vmatpush2.msra.mxu0 0.0
    %3236 = vmatprep.subr.mxu0 0.0
    %3237 = vmatpush2.msra.mxu0 0.0
    %3238 = vmatprep.subr.mxu0 0.0
    %3239 = vmatpush2.msra.mxu0 0.0
    %3240 = vmatprep.subr.mxu0 0.0
    %3241 = vmatpush2.msra.mxu0 0.0
    %3242 = vmatprep.subr.mxu0 0.0
    %3243 = vmatpush2.msra.mxu0 0.0
    %3244 = vmatprep.subr.mxu0 0.0
    %3245 = vmatpush2.msra.mxu0 0.0
    %3246 = vmatprep.subr.mxu0 0.0
    %3247 = vmatpush2.msra.mxu0 0.0
    %3248 = vmatprep.subr.mxu0 0.0
    %3249 = vmatpush2.msra.mxu0 0.0
    %3250 = vmatprep.subr.mxu0 0.0
    %3251 = vmatpush2.msra.mxu0 0.0
    %3252 = vmatprep.subr.mxu0 0.0
    %3253 = vmatpush2.msra.mxu0 0.0
    %3254 = vmatprep.subr.mxu0 0.0
    %3255 = vmatpush2.msra.mxu0 0.0
    %3256 = vmatprep.subr.mxu0 0.0
    %3257 = vmatpush2.msra.mxu0 0.0
    %3258 = vmatprep.subr.mxu0 0.0
    %3259 = vmatpush2.msra.mxu0 0.0
    %3260 = vmatprep.subr.mxu0 0.0
    %3261 = vmatpush2.msra.mxu0 0.0
    %3262 = vmatprep.mubr.f32.mxu0 0.0
    %3263 = vmatmul.mubr.f32.gmra.mxu0 %v3195
    %v3264 = vpop.f32.mrf.mxu0
    %v3265 = vadd.f32 0.0, %v3264
    %v3266 = vpop.f32.mrf.mxu0
    %3267 = vdwg.mxu0
    %v3268 = vadd.f32 %v3197, %v3265
    %v3269 = vxor.u32 %v3268, 2147483648
    %v3270 = vmul.f32 %v3269, 1.442695
    %v3271 = vpow.pop %v3270
    %v3272 = vadd.f32 %v3271, 1.0
    %v3273 = vrcp.pop %v3272
    %v3274 = vmul.f32 1.0, %v3273
    %v3275 = vld [vmem:[%s858] sm:$0xff]
    %3276 = vmatprep.subr.mxu0 0.0
    %3277 = vmatpush1.msra.mxu0 %v2936
    %3278 = vmatprep.subr.mxu0 0.0
    %3279 = vmatpush1.msra.mxu0 %v2935
    %3280 = vmatprep.subr.mxu0 0.0
    %3281 = vmatpush1.msra.mxu0 %v2934
    %3282 = vmatprep.subr.mxu0 0.0
    %3283 = vmatpush1.msra.mxu0 %v2933
    %3284 = vmatprep.subr.mxu0 0.0
    %3285 = vmatpush1.msra.mxu0 %v2932
    %3286 = vmatprep.subr.mxu0 0.0
    %3287 = vmatpush1.msra.mxu0 %v2931
    %3288 = vmatprep.subr.mxu0 0.0
    %3289 = vmatpush1.msra.mxu0 %v2930
    %3290 = vmatprep.subr.mxu0 0.0
    %3291 = vmatpush1.msra.mxu0 %v2929
    %3292 = vmatprep.subr.mxu0 0.0
    %3293 = vmatpush1.msra.mxu0 %v2928
    %3294 = vmatprep.subr.mxu0 0.0
    %3295 = vmatpush1.msra.mxu0 %v2927
    %3296 = vmatprep.subr.mxu0 0.0
    %3297 = vmatpush1.msra.mxu0 %v2926
    %3298 = vmatprep.subr.mxu0 0.0
    %3299 = vmatpush1.msra.mxu0 %v2925
    %3300 = vmatprep.subr.mxu0 0.0
    %3301 = vmatpush1.msra.mxu0 %v2924
    %3302 = vmatprep.subr.mxu0 0.0
    %3303 = vmatpush1.msra.mxu0 %v2923
    %3304 = vmatprep.subr.mxu0 0.0
    %3305 = vmatpush1.msra.mxu0 %v2922
    %3306 = vmatprep.subr.mxu0 0.0
    %3307 = vmatpush1.msra.mxu0 %v2921
    %3308 = vmatprep.subr.mxu0 0.0
    %3309 = vmatpush2.msra.mxu0 0.0
    %3310 = vmatprep.subr.mxu0 0.0
    %3311 = vmatpush2.msra.mxu0 0.0
    %3312 = vmatprep.subr.mxu0 0.0
    %3313 = vmatpush2.msra.mxu0 0.0
    %3314 = vmatprep.subr.mxu0 0.0
    %3315 = vmatpush2.msra.mxu0 0.0
    %3316 = vmatprep.subr.mxu0 0.0
    %3317 = vmatpush2.msra.mxu0 0.0
    %3318 = vmatprep.subr.mxu0 0.0
    %3319 = vmatpush2.msra.mxu0 0.0
    %3320 = vmatprep.subr.mxu0 0.0
    %3321 = vmatpush2.msra.mxu0 0.0
    %3322 = vmatprep.subr.mxu0 0.0
    %3323 = vmatpush2.msra.mxu0 0.0
    %3324 = vmatprep.subr.mxu0 0.0
    %3325 = vmatpush2.msra.mxu0 0.0
    %3326 = vmatprep.subr.mxu0 0.0
    %3327 = vmatpush2.msra.mxu0 0.0
    %3328 = vmatprep.subr.mxu0 0.0
    %3329 = vmatpush2.msra.mxu0 0.0
    %3330 = vmatprep.subr.mxu0 0.0
    %3331 = vmatpush2.msra.mxu0 0.0
    %3332 = vmatprep.subr.mxu0 0.0
    %3333 = vmatpush2.msra.mxu0 0.0
    %3334 = vmatprep.subr.mxu0 0.0
    %3335 = vmatpush2.msra.mxu0 0.0
    %3336 = vmatprep.subr.mxu0 0.0
    %3337 = vmatpush2.msra.mxu0 0.0
    %3338 = vmatprep.subr.mxu0 0.0
    %3339 = vmatpush2.msra.mxu0 0.0
    %3340 = vmatprep.mubr.f32.mxu0 0.0
    %3341 = vmatmul.mubr.f32.gmra.mxu0 %v3195
    %v3342 = vpop.f32.mrf.mxu0
    %v3343 = vadd.f32 0.0, %v3342
    %v3344 = vpop.f32.mrf.mxu0
    %3345 = vdwg.mxu0
    %v3346 = vadd.f32 %v3275, %v3343
    %v3347 = vxor.u32 %v3346, 2147483648
    %v3348 = vmul.f32 %v3347, 1.442695
    %v3349 = vpow.pop %v3348
    %v3350 = vadd.f32 %v3349, 1.0
    %v3351 = vrcp.pop %v3350
    %v3352 = vmul.f32 1.0, %v3351
    %v3353 = vld [vmem:[%s937] sm:$0xff]
    %3354 = vmatprep.subr.mxu0 0.0
    %3355 = vmatpush1.msra.mxu0 %v2953
    %3356 = vmatprep.subr.mxu0 0.0
    %3357 = vmatpush1.msra.mxu0 %v2952
    %3358 = vmatprep.subr.mxu0 0.0
    %3359 = vmatpush1.msra.mxu0 %v2951
    %3360 = vmatprep.subr.mxu0 0.0
    %3361 = vmatpush1.msra.mxu0 %v2950
    %3362 = vmatprep.subr.mxu0 0.0
    %3363 = vmatpush1.msra.mxu0 %v2949
    %3364 = vmatprep.subr.mxu0 0.0
    %3365 = vmatpush1.msra.mxu0 %v2948
    %3366 = vmatprep.subr.mxu0 0.0
    %3367 = vmatpush1.msra.mxu0 %v2947
    %3368 = vmatprep.subr.mxu0 0.0
    %3369 = vmatpush1.msra.mxu0 %v2946
    %3370 = vmatprep.subr.mxu0 0.0
    %3371 = vmatpush1.msra.mxu0 %v2945
    %3372 = vmatprep.subr.mxu0 0.0
    %3373 = vmatpush1.msra.mxu0 %v2944
    %3374 = vmatprep.subr.mxu0 0.0
    %3375 = vmatpush1.msra.mxu0 %v2943
    %3376 = vmatprep.subr.mxu0 0.0
    %3377 = vmatpush1.msra.mxu0 %v2942
    %3378 = vmatprep.subr.mxu0 0.0
    %3379 = vmatpush1.msra.mxu0 %v2941
    %3380 = vmatprep.subr.mxu0 0.0
    %3381 = vmatpush1.msra.mxu0 %v2940
    %3382 = vmatprep.subr.mxu0 0.0
    %3383 = vmatpush1.msra.mxu0 %v2939
    %3384 = vmatprep.subr.mxu0 0.0
    %3385 = vmatpush1.msra.mxu0 %v2938
    %3386 = vmatprep.subr.mxu0 0.0
    %3387 = vmatpush2.msra.mxu0 0.0
    %3388 = vmatprep.subr.mxu0 0.0
    %3389 = vmatpush2.msra.mxu0 0.0
    %3390 = vmatprep.subr.mxu0 0.0
    %3391 = vmatpush2.msra.mxu0 0.0
    %3392 = vmatprep.subr.mxu0 0.0
    %3393 = vmatpush2.msra.mxu0 0.0
    %3394 = vmatprep.subr.mxu0 0.0
    %3395 = vmatpush2.msra.mxu0 0.0
    %3396 = vmatprep.subr.mxu0 0.0
    %3397 = vmatpush2.msra.mxu0 0.0
    %3398 = vmatprep.subr.mxu0 0.0
    %3399 = vmatpush2.msra.mxu0 0.0
    %3400 = vmatprep.subr.mxu0 0.0
    %3401 = vmatpush2.msra.mxu0 0.0
    %3402 = vmatprep.subr.mxu0 0.0
    %3403 = vmatpush2.msra.mxu0 0.0
    %3404 = vmatprep.subr.mxu0 0.0
    %3405 = vmatpush2.msra.mxu0 0.0
    %3406 = vmatprep.subr.mxu0 0.0
    %3407 = vmatpush2.msra.mxu0 0.0
    %3408 = vmatprep.subr.mxu0 0.0
    %3409 = vmatpush2.msra.mxu0 0.0
    %3410 = vmatprep.subr.mxu0 0.0
    %3411 = vmatpush2.msra.mxu0 0.0
    %3412 = vmatprep.subr.mxu0 0.0
    %3413 = vmatpush2.msra.mxu0 0.0
    %3414 = vmatprep.subr.mxu0 0.0
    %3415 = vmatpush2.msra.mxu0 0.0
    %3416 = vmatprep.subr.mxu0 0.0
    %3417 = vmatpush2.msra.mxu0 0.0
    %3418 = vmatprep.mubr.f32.mxu0 0.0
    %3419 = vmatmul.mubr.f32.gmra.mxu0 %v3195
    %v3420 = vpop.f32.mrf.mxu0
    %v3421 = vadd.f32 %v3117, %v3420
    %v3422 = vpop.f32.mrf.mxu0
    %3423 = vdwg.mxu0
    %v3424 = vmul.f32 %v3274, %v3421
    %v3425 = vadd.f32 %v3353, %v3424
    %v3426 = vtanh.pop %v3425
    %v3427 = vsub.f32 1.0, %v3352
    %v3428 = vmul.f32 %v3427, %v3426
    %v3429 = vmul.f32 %v3352, %v3195
    %v3430 = vadd.f32 %v3428, %v3429
    %s3431 = scalar_lea.vmem %s9, 8
    %3432 = vst [vmem:[%s3431] sm:$0xff] %v3430
    %v3433 = vld [vmem:[%s1018] sm:$0xff]
    %3434 = vmatprep.subr.mxu0 0.0
    %3435 = vmatpush1.msra.mxu0 %v2919
    %3436 = vmatprep.subr.mxu0 0.0
    %3437 = vmatpush1.msra.mxu0 %v2918
    %3438 = vmatprep.subr.mxu0 0.0
    %3439 = vmatpush1.msra.mxu0 %v2917
    %3440 = vmatprep.subr.mxu0 0.0
    %3441 = vmatpush1.msra.mxu0 %v2916
    %3442 = vmatprep.subr.mxu0 0.0
    %3443 = vmatpush1.msra.mxu0 %v2915
    %3444 = vmatprep.subr.mxu0 0.0
    %3445 = vmatpush1.msra.mxu0 %v2914
    %3446 = vmatprep.subr.mxu0 0.0
    %3447 = vmatpush1.msra.mxu0 %v2913
    %3448 = vmatprep.subr.mxu0 0.0
    %3449 = vmatpush1.msra.mxu0 %v2912
    %3450 = vmatprep.subr.mxu0 0.0
    %3451 = vmatpush1.msra.mxu0 %v2911
    %3452 = vmatprep.subr.mxu0 0.0
    %3453 = vmatpush1.msra.mxu0 %v2910
    %3454 = vmatprep.subr.mxu0 0.0
    %3455 = vmatpush1.msra.mxu0 %v2909
    %3456 = vmatprep.subr.mxu0 0.0
    %3457 = vmatpush1.msra.mxu0 %v2908
    %3458 = vmatprep.subr.mxu0 0.0
    %3459 = vmatpush1.msra.mxu0 %v2907
    %3460 = vmatprep.subr.mxu0 0.0
    %3461 = vmatpush1.msra.mxu0 %v2906
    %3462 = vmatprep.subr.mxu0 0.0
    %3463 = vmatpush1.msra.mxu0 %v2905
    %3464 = vmatprep.subr.mxu0 0.0
    %3465 = vmatpush1.msra.mxu0 %v2904
    %3466 = vmatprep.subr.mxu0 0.0
    %3467 = vmatpush2.msra.mxu0 0.0
    %3468 = vmatprep.subr.mxu0 0.0
    %3469 = vmatpush2.msra.mxu0 0.0
    %3470 = vmatprep.subr.mxu0 0.0
    %3471 = vmatpush2.msra.mxu0 0.0
    %3472 = vmatprep.subr.mxu0 0.0
    %3473 = vmatpush2.msra.mxu0 0.0
    %3474 = vmatprep.subr.mxu0 0.0
    %3475 = vmatpush2.msra.mxu0 0.0
    %3476 = vmatprep.subr.mxu0 0.0
    %3477 = vmatpush2.msra.mxu0 0.0
    %3478 = vmatprep.subr.mxu0 0.0
    %3479 = vmatpush2.msra.mxu0 0.0
    %3480 = vmatprep.subr.mxu0 0.0
    %3481 = vmatpush2.msra.mxu0 0.0
    %3482 = vmatprep.subr.mxu0 0.0
    %3483 = vmatpush2.msra.mxu0 0.0
    %3484 = vmatprep.subr.mxu0 0.0
    %3485 = vmatpush2.msra.mxu0 0.0
    %3486 = vmatprep.subr.mxu0 0.0
    %3487 = vmatpush2.msra.mxu0 0.0
    %3488 = vmatprep.subr.mxu0 0.0
    %3489 = vmatpush2.msra.mxu0 0.0
    %3490 = vmatprep.subr.mxu0 0.0
    %3491 = vmatpush2.msra.mxu0 0.0
    %3492 = vmatprep.subr.mxu0 0.0
    %3493 = vmatpush2.msra.mxu0 0.0
    %3494 = vmatprep.subr.mxu0 0.0
    %3495 = vmatpush2.msra.mxu0 0.0
    %3496 = vmatprep.subr.mxu0 0.0
    %3497 = vmatpush2.msra.mxu0 0.0
    %3498 = vmatprep.mubr.f32.mxu0 0.0
    %3499 = vmatmul.mubr.f32.gmra.mxu0 %v3430
    %v3500 = vpop.f32.mrf.mxu0
    %v3501 = vadd.f32 0.0, %v3500
    %v3502 = vpop.f32.mrf.mxu0
    %3503 = vdwg.mxu0
    %v3504 = vadd.f32 %v3433, %v3501
    %v3505 = vxor.u32 %v3504, 2147483648
    %v3506 = vmul.f32 %v3505, 1.442695
    %v3507 = vpow.pop %v3506
    %v3508 = vadd.f32 %v3507, 1.0
    %v3509 = vrcp.pop %v3508
    %v3510 = vmul.f32 1.0, %v3509
    %v3511 = vld [vmem:[%s1097] sm:$0xff]
    %3512 = vmatprep.subr.mxu0 0.0
    %3513 = vmatpush1.msra.mxu0 %v2936
    %3514 = vmatprep.subr.mxu0 0.0
    %3515 = vmatpush1.msra.mxu0 %v2935
    %3516 = vmatprep.subr.mxu0 0.0
    %3517 = vmatpush1.msra.mxu0 %v2934
    %3518 = vmatprep.subr.mxu0 0.0
    %3519 = vmatpush1.msra.mxu0 %v2933
    %3520 = vmatprep.subr.mxu0 0.0
    %3521 = vmatpush1.msra.mxu0 %v2932
    %3522 = vmatprep.subr.mxu0 0.0
    %3523 = vmatpush1.msra.mxu0 %v2931
    %3524 = vmatprep.subr.mxu0 0.0
    %3525 = vmatpush1.msra.mxu0 %v2930
    %3526 = vmatprep.subr.mxu0 0.0
    %3527 = vmatpush1.msra.mxu0 %v2929
    %3528 = vmatprep.subr.mxu0 0.0
    %3529 = vmatpush1.msra.mxu0 %v2928
    %3530 = vmatprep.subr.mxu0 0.0
    %3531 = vmatpush1.msra.mxu0 %v2927
    %3532 = vmatprep.subr.mxu0 0.0
    %3533 = vmatpush1.msra.mxu0 %v2926
    %3534 = vmatprep.subr.mxu0 0.0
    %3535 = vmatpush1.msra.mxu0 %v2925
    %3536 = vmatprep.subr.mxu0 0.0
    %3537 = vmatpush1.msra.mxu0 %v2924
    %3538 = vmatprep.subr.mxu0 0.0
    %3539 = vmatpush1.msra.mxu0 %v2923
    %3540 = vmatprep.subr.mxu0 0.0
    %3541 = vmatpush1.msra.mxu0 %v2922
    %3542 = vmatprep.subr.mxu0 0.0
    %3543 = vmatpush1.msra.mxu0 %v2921
    %3544 = vmatprep.subr.mxu0 0.0
    %3545 = vmatpush2.msra.mxu0 0.0
    %3546 = vmatprep.subr.mxu0 0.0
    %3547 = vmatpush2.msra.mxu0 0.0
    %3548 = vmatprep.subr.mxu0 0.0
    %3549 = vmatpush2.msra.mxu0 0.0
    %3550 = vmatprep.subr.mxu0 0.0
    %3551 = vmatpush2.msra.mxu0 0.0
    %3552 = vmatprep.subr.mxu0 0.0
    %3553 = vmatpush2.msra.mxu0 0.0
    %3554 = vmatprep.subr.mxu0 0.0
    %3555 = vmatpush2.msra.mxu0 0.0
    %3556 = vmatprep.subr.mxu0 0.0
    %3557 = vmatpush2.msra.mxu0 0.0
    %3558 = vmatprep.subr.mxu0 0.0
    %3559 = vmatpush2.msra.mxu0 0.0
    %3560 = vmatprep.subr.mxu0 0.0
    %3561 = vmatpush2.msra.mxu0 0.0
    %3562 = vmatprep.subr.mxu0 0.0
    %3563 = vmatpush2.msra.mxu0 0.0
    %3564 = vmatprep.subr.mxu0 0.0
    %3565 = vmatpush2.msra.mxu0 0.0
    %3566 = vmatprep.subr.mxu0 0.0
    %3567 = vmatpush2.msra.mxu0 0.0
    %3568 = vmatprep.subr.mxu0 0.0
    %3569 = vmatpush2.msra.mxu0 0.0
    %3570 = vmatprep.subr.mxu0 0.0
    %3571 = vmatpush2.msra.mxu0 0.0
    %3572 = vmatprep.subr.mxu0 0.0
    %3573 = vmatpush2.msra.mxu0 0.0
    %3574 = vmatprep.subr.mxu0 0.0
    %3575 = vmatpush2.msra.mxu0 0.0
    %3576 = vmatprep.mubr.f32.mxu0 0.0
    %3577 = vmatmul.mubr.f32.gmra.mxu0 %v3430
    %v3578 = vpop.f32.mrf.mxu0
    %v3579 = vadd.f32 0.0, %v3578
    %v3580 = vpop.f32.mrf.mxu0
    %3581 = vdwg.mxu0
    %v3582 = vadd.f32 %v3511, %v3579
    %v3583 = vxor.u32 %v3582, 2147483648
    %v3584 = vmul.f32 %v3583, 1.442695
    %v3585 = vpow.pop %v3584
    %v3586 = vadd.f32 %v3585, 1.0
    %v3587 = vrcp.pop %v3586
    %v3588 = vmul.f32 1.0, %v3587
    %v3589 = vld [vmem:[%s1176] sm:$0xff]
    %3590 = vmatprep.subr.mxu0 0.0
    %3591 = vmatpush1.msra.mxu0 %v2953
    %3592 = vmatprep.subr.mxu0 0.0
    %3593 = vmatpush1.msra.mxu0 %v2952
    %3594 = vmatprep.subr.mxu0 0.0
    %3595 = vmatpush1.msra.mxu0 %v2951
    %3596 = vmatprep.subr.mxu0 0.0
    %3597 = vmatpush1.msra.mxu0 %v2950
    %3598 = vmatprep.subr.mxu0 0.0
    %3599 = vmatpush1.msra.mxu0 %v2949
    %3600 = vmatprep.subr.mxu0 0.0
    %3601 = vmatpush1.msra.mxu0 %v2948
    %3602 = vmatprep.subr.mxu0 0.0
    %3603 = vmatpush1.msra.mxu0 %v2947
    %3604 = vmatprep.subr.mxu0 0.0
    %3605 = vmatpush1.msra.mxu0 %v2946
    %3606 = vmatprep.subr.mxu0 0.0
    %3607 = vmatpush1.msra.mxu0 %v2945
    %3608 = vmatprep.subr.mxu0 0.0
    %3609 = vmatpush1.msra.mxu0 %v2944
    %3610 = vmatprep.subr.mxu0 0.0
    %3611 = vmatpush1.msra.mxu0 %v2943
    %3612 = vmatprep.subr.mxu0 0.0
    %3613 = vmatpush1.msra.mxu0 %v2942
    %3614 = vmatprep.subr.mxu0 0.0
    %3615 = vmatpush1.msra.mxu0 %v2941
    %3616 = vmatprep.subr.mxu0 0.0
    %3617 = vmatpush1.msra.mxu0 %v2940
    %3618 = vmatprep.subr.mxu0 0.0
    %3619 = vmatpush1.msra.mxu0 %v2939
    %3620 = vmatprep.subr.mxu0 0.0
    %3621 = vmatpush1.msra.mxu0 %v2938
    %3622 = vmatprep.subr.mxu0 0.0
    %3623 = vmatpush2.msra.mxu0 0.0
    %3624 = vmatprep.subr.mxu0 0.0
    %3625 = vmatpush2.msra.mxu0 0.0
    %3626 = vmatprep.subr.mxu0 0.0
    %3627 = vmatpush2.msra.mxu0 0.0
    %3628 = vmatprep.subr.mxu0 0.0
    %3629 = vmatpush2.msra.mxu0 0.0
    %3630 = vmatprep.subr.mxu0 0.0
    %3631 = vmatpush2.msra.mxu0 0.0
    %3632 = vmatprep.subr.mxu0 0.0
    %3633 = vmatpush2.msra.mxu0 0.0
    %3634 = vmatprep.subr.mxu0 0.0
    %3635 = vmatpush2.msra.mxu0 0.0
    %3636 = vmatprep.subr.mxu0 0.0
    %3637 = vmatpush2.msra.mxu0 0.0
    %3638 = vmatprep.subr.mxu0 0.0
    %3639 = vmatpush2.msra.mxu0 0.0
    %3640 = vmatprep.subr.mxu0 0.0
    %3641 = vmatpush2.msra.mxu0 0.0
    %3642 = vmatprep.subr.mxu0 0.0
    %3643 = vmatpush2.msra.mxu0 0.0
    %3644 = vmatprep.subr.mxu0 0.0
    %3645 = vmatpush2.msra.mxu0 0.0
    %3646 = vmatprep.subr.mxu0 0.0
    %3647 = vmatpush2.msra.mxu0 0.0
    %3648 = vmatprep.subr.mxu0 0.0
    %3649 = vmatpush2.msra.mxu0 0.0
    %3650 = vmatprep.subr.mxu0 0.0
    %3651 = vmatpush2.msra.mxu0 0.0
    %3652 = vmatprep.subr.mxu0 0.0
    %3653 = vmatpush2.msra.mxu0 0.0
    %3654 = vmatprep.mubr.f32.mxu0 0.0
    %3655 = vmatmul.mubr.f32.gmra.mxu0 %v3430
    %v3656 = vpop.f32.mrf.mxu0
    %v3657 = vadd.f32 %v3117, %v3656
    %v3658 = vpop.f32.mrf.mxu0
    %3659 = vdwg.mxu0
    %v3660 = vmul.f32 %v3510, %v3657
    %v3661 = vadd.f32 %v3589, %v3660
    %v3662 = vtanh.pop %v3661
    %v3663 = vsub.f32 1.0, %v3588
    %v3664 = vmul.f32 %v3663, %v3662
    %v3665 = vmul.f32 %v3588, %v3430
    %v3666 = vadd.f32 %v3664, %v3665
    %s3667 = scalar_lea.vmem %s9, 16
    %3668 = vst [vmem:[%s3667] sm:$0xff] %v3666
    %v3669 = vld [vmem:[%s1257] sm:$0xff]
    %3670 = vmatprep.subr.mxu0 0.0
    %3671 = vmatpush1.msra.mxu0 %v2919
    %3672 = vmatprep.subr.mxu0 0.0
    %3673 = vmatpush1.msra.mxu0 %v2918
    %3674 = vmatprep.subr.mxu0 0.0
    %3675 = vmatpush1.msra.mxu0 %v2917
    %3676 = vmatprep.subr.mxu0 0.0
    %3677 = vmatpush1.msra.mxu0 %v2916
    %3678 = vmatprep.subr.mxu0 0.0
    %3679 = vmatpush1.msra.mxu0 %v2915
    %3680 = vmatprep.subr.mxu0 0.0
    %3681 = vmatpush1.msra.mxu0 %v2914
    %3682 = vmatprep.subr.mxu0 0.0
    %3683 = vmatpush1.msra.mxu0 %v2913
    %3684 = vmatprep.subr.mxu0 0.0
    %3685 = vmatpush1.msra.mxu0 %v2912
    %3686 = vmatprep.subr.mxu0 0.0
    %3687 = vmatpush1.msra.mxu0 %v2911
    %3688 = vmatprep.subr.mxu0 0.0
    %3689 = vmatpush1.msra.mxu0 %v2910
    %3690 = vmatprep.subr.mxu0 0.0
    %3691 = vmatpush1.msra.mxu0 %v2909
    %3692 = vmatprep.subr.mxu0 0.0
    %3693 = vmatpush1.msra.mxu0 %v2908
    %3694 = vmatprep.subr.mxu0 0.0
    %3695 = vmatpush1.msra.mxu0 %v2907
    %3696 = vmatprep.subr.mxu0 0.0
    %3697 = vmatpush1.msra.mxu0 %v2906
    %3698 = vmatprep.subr.mxu0 0.0
    %3699 = vmatpush1.msra.mxu0 %v2905
    %3700 = vmatprep.subr.mxu0 0.0
    %3701 = vmatpush1.msra.mxu0 %v2904
    %3702 = vmatprep.subr.mxu0 0.0
    %3703 = vmatpush2.msra.mxu0 0.0
    %3704 = vmatprep.subr.mxu0 0.0
    %3705 = vmatpush2.msra.mxu0 0.0
    %3706 = vmatprep.subr.mxu0 0.0
    %3707 = vmatpush2.msra.mxu0 0.0
    %3708 = vmatprep.subr.mxu0 0.0
    %3709 = vmatpush2.msra.mxu0 0.0
    %3710 = vmatprep.subr.mxu0 0.0
    %3711 = vmatpush2.msra.mxu0 0.0
    %3712 = vmatprep.subr.mxu0 0.0
    %3713 = vmatpush2.msra.mxu0 0.0
    %3714 = vmatprep.subr.mxu0 0.0
    %3715 = vmatpush2.msra.mxu0 0.0
    %3716 = vmatprep.subr.mxu0 0.0
    %3717 = vmatpush2.msra.mxu0 0.0
    %3718 = vmatprep.subr.mxu0 0.0
    %3719 = vmatpush2.msra.mxu0 0.0
    %3720 = vmatprep.subr.mxu0 0.0
    %3721 = vmatpush2.msra.mxu0 0.0
    %3722 = vmatprep.subr.mxu0 0.0
    %3723 = vmatpush2.msra.mxu0 0.0
    %3724 = vmatprep.subr.mxu0 0.0
    %3725 = vmatpush2.msra.mxu0 0.0
    %3726 = vmatprep.subr.mxu0 0.0
    %3727 = vmatpush2.msra.mxu0 0.0
    %3728 = vmatprep.subr.mxu0 0.0
    %3729 = vmatpush2.msra.mxu0 0.0
    %3730 = vmatprep.subr.mxu0 0.0
    %3731 = vmatpush2.msra.mxu0 0.0
    %3732 = vmatprep.subr.mxu0 0.0
    %3733 = vmatpush2.msra.mxu0 0.0
    %3734 = vmatprep.mubr.f32.mxu0 0.0
    %3735 = vmatmul.mubr.f32.gmra.mxu0 %v3666
    %v3736 = vpop.f32.mrf.mxu0
    %v3737 = vadd.f32 0.0, %v3736
    %v3738 = vpop.f32.mrf.mxu0
    %3739 = vdwg.mxu0
    %v3740 = vadd.f32 %v3669, %v3737
    %v3741 = vxor.u32 %v3740, 2147483648
    %v3742 = vmul.f32 %v3741, 1.442695
    %v3743 = vpow.pop %v3742
    %v3744 = vadd.f32 %v3743, 1.0
    %v3745 = vrcp.pop %v3744
    %v3746 = vmul.f32 1.0, %v3745
    %v3747 = vld [vmem:[%s1336] sm:$0xff]
    %3748 = vmatprep.subr.mxu0 0.0
    %3749 = vmatpush1.msra.mxu0 %v2936
    %3750 = vmatprep.subr.mxu0 0.0
    %3751 = vmatpush1.msra.mxu0 %v2935
    %3752 = vmatprep.subr.mxu0 0.0
    %3753 = vmatpush1.msra.mxu0 %v2934
    %3754 = vmatprep.subr.mxu0 0.0
    %3755 = vmatpush1.msra.mxu0 %v2933
    %3756 = vmatprep.subr.mxu0 0.0
    %3757 = vmatpush1.msra.mxu0 %v2932
    %3758 = vmatprep.subr.mxu0 0.0
    %3759 = vmatpush1.msra.mxu0 %v2931
    %3760 = vmatprep.subr.mxu0 0.0
    %3761 = vmatpush1.msra.mxu0 %v2930
    %3762 = vmatprep.subr.mxu0 0.0
    %3763 = vmatpush1.msra.mxu0 %v2929
    %3764 = vmatprep.subr.mxu0 0.0
    %3765 = vmatpush1.msra.mxu0 %v2928
    %3766 = vmatprep.subr.mxu0 0.0
    %3767 = vmatpush1.msra.mxu0 %v2927
    %3768 = vmatprep.subr.mxu0 0.0
    %3769 = vmatpush1.msra.mxu0 %v2926
    %3770 = vmatprep.subr.mxu0 0.0
    %3771 = vmatpush1.msra.mxu0 %v2925
    %3772 = vmatprep.subr.mxu0 0.0
    %3773 = vmatpush1.msra.mxu0 %v2924
    %3774 = vmatprep.subr.mxu0 0.0
    %3775 = vmatpush1.msra.mxu0 %v2923
    %3776 = vmatprep.subr.mxu0 0.0
    %3777 = vmatpush1.msra.mxu0 %v2922
    %3778 = vmatprep.subr.mxu0 0.0
    %3779 = vmatpush1.msra.mxu0 %v2921
    %3780 = vmatprep.subr.mxu0 0.0
    %3781 = vmatpush2.msra.mxu0 0.0
    %3782 = vmatprep.subr.mxu0 0.0
    %3783 = vmatpush2.msra.mxu0 0.0
    %3784 = vmatprep.subr.mxu0 0.0
    %3785 = vmatpush2.msra.mxu0 0.0
    %3786 = vmatprep.subr.mxu0 0.0
    %3787 = vmatpush2.msra.mxu0 0.0
    %3788 = vmatprep.subr.mxu0 0.0
    %3789 = vmatpush2.msra.mxu0 0.0
    %3790 = vmatprep.subr.mxu0 0.0
    %3791 = vmatpush2.msra.mxu0 0.0
    %3792 = vmatprep.subr.mxu0 0.0
    %3793 = vmatpush2.msra.mxu0 0.0
    %3794 = vmatprep.subr.mxu0 0.0
    %3795 = vmatpush2.msra.mxu0 0.0
    %3796 = vmatprep.subr.mxu0 0.0
    %3797 = vmatpush2.msra.mxu0 0.0
    %3798 = vmatprep.subr.mxu0 0.0
    %3799 = vmatpush2.msra.mxu0 0.0
    %3800 = vmatprep.subr.mxu0 0.0
    %3801 = vmatpush2.msra.mxu0 0.0
    %3802 = vmatprep.subr.mxu0 0.0
    %3803 = vmatpush2.msra.mxu0 0.0
    %3804 = vmatprep.subr.mxu0 0.0
    %3805 = vmatpush2.msra.mxu0 0.0
    %3806 = vmatprep.subr.mxu0 0.0
    %3807 = vmatpush2.msra.mxu0 0.0
    %3808 = vmatprep.subr.mxu0 0.0
    %3809 = vmatpush2.msra.mxu0 0.0
    %3810 = vmatprep.subr.mxu0 0.0
    %3811 = vmatpush2.msra.mxu0 0.0
    %3812 = vmatprep.mubr.f32.mxu0 0.0
    %3813 = vmatmul.mubr.f32.gmra.mxu0 %v3666
    %v3814 = vpop.f32.mrf.mxu0
    %v3815 = vadd.f32 0.0, %v3814
    %v3816 = vpop.f32.mrf.mxu0
    %3817 = vdwg.mxu0
    %v3818 = vadd.f32 %v3747, %v3815
    %v3819 = vxor.u32 %v3818, 2147483648
    %v3820 = vmul.f32 %v3819, 1.442695
    %v3821 = vpow.pop %v3820
    %v3822 = vadd.f32 %v3821, 1.0
    %v3823 = vrcp.pop %v3822
    %v3824 = vmul.f32 1.0, %v3823
    %v3825 = vld [vmem:[%s1415] sm:$0xff]
    %3826 = vmatprep.subr.mxu0 0.0
    %3827 = vmatpush1.msra.mxu0 %v2953
    %3828 = vmatprep.subr.mxu0 0.0
    %3829 = vmatpush1.msra.mxu0 %v2952
    %3830 = vmatprep.subr.mxu0 0.0
    %3831 = vmatpush1.msra.mxu0 %v2951
    %3832 = vmatprep.subr.mxu0 0.0
    %3833 = vmatpush1.msra.mxu0 %v2950
    %3834 = vmatprep.subr.mxu0 0.0
    %3835 = vmatpush1.msra.mxu0 %v2949
    %3836 = vmatprep.subr.mxu0 0.0
    %3837 = vmatpush1.msra.mxu0 %v2948
    %3838 = vmatprep.subr.mxu0 0.0
    %3839 = vmatpush1.msra.mxu0 %v2947
    %3840 = vmatprep.subr.mxu0 0.0
    %3841 = vmatpush1.msra.mxu0 %v2946
    %3842 = vmatprep.subr.mxu0 0.0
    %3843 = vmatpush1.msra.mxu0 %v2945
    %3844 = vmatprep.subr.mxu0 0.0
    %3845 = vmatpush1.msra.mxu0 %v2944
    %3846 = vmatprep.subr.mxu0 0.0
    %3847 = vmatpush1.msra.mxu0 %v2943
    %3848 = vmatprep.subr.mxu0 0.0
    %3849 = vmatpush1.msra.mxu0 %v2942
    %3850 = vmatprep.subr.mxu0 0.0
    %3851 = vmatpush1.msra.mxu0 %v2941
    %3852 = vmatprep.subr.mxu0 0.0
    %3853 = vmatpush1.msra.mxu0 %v2940
    %3854 = vmatprep.subr.mxu0 0.0
    %3855 = vmatpush1.msra.mxu0 %v2939
    %3856 = vmatprep.subr.mxu0 0.0
    %3857 = vmatpush1.msra.mxu0 %v2938
    %3858 = vmatprep.subr.mxu0 0.0
    %3859 = vmatpush2.msra.mxu0 0.0
    %3860 = vmatprep.subr.mxu0 0.0
    %3861 = vmatpush2.msra.mxu0 0.0
    %3862 = vmatprep.subr.mxu0 0.0
    %3863 = vmatpush2.msra.mxu0 0.0
    %3864 = vmatprep.subr.mxu0 0.0
    %3865 = vmatpush2.msra.mxu0 0.0
    %3866 = vmatprep.subr.mxu0 0.0
    %3867 = vmatpush2.msra.mxu0 0.0
    %3868 = vmatprep.subr.mxu0 0.0
    %3869 = vmatpush2.msra.mxu0 0.0
    %3870 = vmatprep.subr.mxu0 0.0
    %3871 = vmatpush2.msra.mxu0 0.0
    %3872 = vmatprep.subr.mxu0 0.0
    %3873 = vmatpush2.msra.mxu0 0.0
    %3874 = vmatprep.subr.mxu0 0.0
    %3875 = vmatpush2.msra.mxu0 0.0
    %3876 = vmatprep.subr.mxu0 0.0
    %3877 = vmatpush2.msra.mxu0 0.0
    %3878 = vmatprep.subr.mxu0 0.0
    %3879 = vmatpush2.msra.mxu0 0.0
    %3880 = vmatprep.subr.mxu0 0.0
    %3881 = vmatpush2.msra.mxu0 0.0
    %3882 = vmatprep.subr.mxu0 0.0
    %3883 = vmatpush2.msra.mxu0 0.0
    %3884 = vmatprep.subr.mxu0 0.0
    %3885 = vmatpush2.msra.mxu0 0.0
    %3886 = vmatprep.subr.mxu0 0.0
    %3887 = vmatpush2.msra.mxu0 0.0
    %3888 = vmatprep.subr.mxu0 0.0
    %3889 = vmatpush2.msra.mxu0 0.0
    %3890 = vmatprep.mubr.f32.mxu0 0.0
    %3891 = vmatmul.mubr.f32.gmra.mxu0 %v3666
    %v3892 = vpop.f32.mrf.mxu0
    %v3893 = vadd.f32 %v3117, %v3892
    %v3894 = vpop.f32.mrf.mxu0
    %3895 = vdwg.mxu0
    %v3896 = vmul.f32 %v3746, %v3893
    %v3897 = vadd.f32 %v3825, %v3896
    %v3898 = vtanh.pop %v3897
    %v3899 = vsub.f32 1.0, %v3824
    %v3900 = vmul.f32 %v3899, %v3898
    %v3901 = vmul.f32 %v3824, %v3666
    %v3902 = vadd.f32 %v3900, %v3901
    %s3903 = scalar_lea.vmem %s9, 24
    %3904 = vst [vmem:[%s3903] sm:$0xff] %v3902
    %v3905 = vld [vmem:[%s1496] sm:$0xff]
    %3906 = vmatprep.subr.mxu0 0.0
    %3907 = vmatpush1.msra.mxu0 %v2919
    %3908 = vmatprep.subr.mxu0 0.0
    %3909 = vmatpush1.msra.mxu0 %v2918
    %3910 = vmatprep.subr.mxu0 0.0
    %3911 = vmatpush1.msra.mxu0 %v2917
    %3912 = vmatprep.subr.mxu0 0.0
    %3913 = vmatpush1.msra.mxu0 %v2916
    %3914 = vmatprep.subr.mxu0 0.0
    %3915 = vmatpush1.msra.mxu0 %v2915
    %3916 = vmatprep.subr.mxu0 0.0
    %3917 = vmatpush1.msra.mxu0 %v2914
    %3918 = vmatprep.subr.mxu0 0.0
    %3919 = vmatpush1.msra.mxu0 %v2913
    %3920 = vmatprep.subr.mxu0 0.0
    %3921 = vmatpush1.msra.mxu0 %v2912
    %3922 = vmatprep.subr.mxu0 0.0
    %3923 = vmatpush1.msra.mxu0 %v2911
    %3924 = vmatprep.subr.mxu0 0.0
    %3925 = vmatpush1.msra.mxu0 %v2910
    %3926 = vmatprep.subr.mxu0 0.0
    %3927 = vmatpush1.msra.mxu0 %v2909
    %3928 = vmatprep.subr.mxu0 0.0
    %3929 = vmatpush1.msra.mxu0 %v2908
    %3930 = vmatprep.subr.mxu0 0.0
    %3931 = vmatpush1.msra.mxu0 %v2907
    %3932 = vmatprep.subr.mxu0 0.0
    %3933 = vmatpush1.msra.mxu0 %v2906
    %3934 = vmatprep.subr.mxu0 0.0
    %3935 = vmatpush1.msra.mxu0 %v2905
    %3936 = vmatprep.subr.mxu0 0.0
    %3937 = vmatpush1.msra.mxu0 %v2904
    %3938 = vmatprep.subr.mxu0 0.0
    %3939 = vmatpush2.msra.mxu0 0.0
    %3940 = vmatprep.subr.mxu0 0.0
    %3941 = vmatpush2.msra.mxu0 0.0
    %3942 = vmatprep.subr.mxu0 0.0
    %3943 = vmatpush2.msra.mxu0 0.0
    %3944 = vmatprep.subr.mxu0 0.0
    %3945 = vmatpush2.msra.mxu0 0.0
    %3946 = vmatprep.subr.mxu0 0.0
    %3947 = vmatpush2.msra.mxu0 0.0
    %3948 = vmatprep.subr.mxu0 0.0
    %3949 = vmatpush2.msra.mxu0 0.0
    %3950 = vmatprep.subr.mxu0 0.0
    %3951 = vmatpush2.msra.mxu0 0.0
    %3952 = vmatprep.subr.mxu0 0.0
    %3953 = vmatpush2.msra.mxu0 0.0
    %3954 = vmatprep.subr.mxu0 0.0
    %3955 = vmatpush2.msra.mxu0 0.0
    %3956 = vmatprep.subr.mxu0 0.0
    %3957 = vmatpush2.msra.mxu0 0.0
    %3958 = vmatprep.subr.mxu0 0.0
    %3959 = vmatpush2.msra.mxu0 0.0
    %3960 = vmatprep.subr.mxu0 0.0
    %3961 = vmatpush2.msra.mxu0 0.0
    %3962 = vmatprep.subr.mxu0 0.0
    %3963 = vmatpush2.msra.mxu0 0.0
    %3964 = vmatprep.subr.mxu0 0.0
    %3965 = vmatpush2.msra.mxu0 0.0
    %3966 = vmatprep.subr.mxu0 0.0
    %3967 = vmatpush2.msra.mxu0 0.0
    %3968 = vmatprep.subr.mxu0 0.0
    %3969 = vmatpush2.msra.mxu0 0.0
    %3970 = vmatprep.mubr.f32.mxu0 0.0
    %3971 = vmatmul.mubr.f32.gmra.mxu0 %v3902
    %v3972 = vpop.f32.mrf.mxu0
    %v3973 = vadd.f32 0.0, %v3972
    %v3974 = vpop.f32.mrf.mxu0
    %3975 = vdwg.mxu0
    %v3976 = vadd.f32 %v3905, %v3973
    %v3977 = vxor.u32 %v3976, 2147483648
    %v3978 = vmul.f32 %v3977, 1.442695
    %v3979 = vpow.pop %v3978
    %v3980 = vadd.f32 %v3979, 1.0
    %v3981 = vrcp.pop %v3980
    %v3982 = vmul.f32 1.0, %v3981
    %v3983 = vld [vmem:[%s1575] sm:$0xff]
    %3984 = vmatprep.subr.mxu0 0.0
    %3985 = vmatpush1.msra.mxu0 %v2936
    %3986 = vmatprep.subr.mxu0 0.0
    %3987 = vmatpush1.msra.mxu0 %v2935
    %3988 = vmatprep.subr.mxu0 0.0
    %3989 = vmatpush1.msra.mxu0 %v2934
    %3990 = vmatprep.subr.mxu0 0.0
    %3991 = vmatpush1.msra.mxu0 %v2933
    %3992 = vmatprep.subr.mxu0 0.0
    %3993 = vmatpush1.msra.mxu0 %v2932
    %3994 = vmatprep.subr.mxu0 0.0
    %3995 = vmatpush1.msra.mxu0 %v2931
    %3996 = vmatprep.subr.mxu0 0.0
    %3997 = vmatpush1.msra.mxu0 %v2930
    %3998 = vmatprep.subr.mxu0 0.0
    %3999 = vmatpush1.msra.mxu0 %v2929
    %4000 = vmatprep.subr.mxu0 0.0
    %4001 = vmatpush1.msra.mxu0 %v2928
    %4002 = vmatprep.subr.mxu0 0.0
    %4003 = vmatpush1.msra.mxu0 %v2927
    %4004 = vmatprep.subr.mxu0 0.0
    %4005 = vmatpush1.msra.mxu0 %v2926
    %4006 = vmatprep.subr.mxu0 0.0
    %4007 = vmatpush1.msra.mxu0 %v2925
    %4008 = vmatprep.subr.mxu0 0.0
    %4009 = vmatpush1.msra.mxu0 %v2924
    %4010 = vmatprep.subr.mxu0 0.0
    %4011 = vmatpush1.msra.mxu0 %v2923
    %4012 = vmatprep.subr.mxu0 0.0
    %4013 = vmatpush1.msra.mxu0 %v2922
    %4014 = vmatprep.subr.mxu0 0.0
    %4015 = vmatpush1.msra.mxu0 %v2921
    %4016 = vmatprep.subr.mxu0 0.0
    %4017 = vmatpush2.msra.mxu0 0.0
    %4018 = vmatprep.subr.mxu0 0.0
    %4019 = vmatpush2.msra.mxu0 0.0
    %4020 = vmatprep.subr.mxu0 0.0
    %4021 = vmatpush2.msra.mxu0 0.0
    %4022 = vmatprep.subr.mxu0 0.0
    %4023 = vmatpush2.msra.mxu0 0.0
    %4024 = vmatprep.subr.mxu0 0.0
    %4025 = vmatpush2.msra.mxu0 0.0
    %4026 = vmatprep.subr.mxu0 0.0
    %4027 = vmatpush2.msra.mxu0 0.0
    %4028 = vmatprep.subr.mxu0 0.0
    %4029 = vmatpush2.msra.mxu0 0.0
    %4030 = vmatprep.subr.mxu0 0.0
    %4031 = vmatpush2.msra.mxu0 0.0
    %4032 = vmatprep.subr.mxu0 0.0
    %4033 = vmatpush2.msra.mxu0 0.0
    %4034 = vmatprep.subr.mxu0 0.0
    %4035 = vmatpush2.msra.mxu0 0.0
    %4036 = vmatprep.subr.mxu0 0.0
    %4037 = vmatpush2.msra.mxu0 0.0
    %4038 = vmatprep.subr.mxu0 0.0
    %4039 = vmatpush2.msra.mxu0 0.0
    %4040 = vmatprep.subr.mxu0 0.0
    %4041 = vmatpush2.msra.mxu0 0.0
    %4042 = vmatprep.subr.mxu0 0.0
    %4043 = vmatpush2.msra.mxu0 0.0
    %4044 = vmatprep.subr.mxu0 0.0
    %4045 = vmatpush2.msra.mxu0 0.0
    %4046 = vmatprep.subr.mxu0 0.0
    %4047 = vmatpush2.msra.mxu0 0.0
    %4048 = vmatprep.mubr.f32.mxu0 0.0
    %4049 = vmatmul.mubr.f32.gmra.mxu0 %v3902
    %v4050 = vpop.f32.mrf.mxu0
    %v4051 = vadd.f32 0.0, %v4050
    %v4052 = vpop.f32.mrf.mxu0
    %4053 = vdwg.mxu0
    %v4054 = vadd.f32 %v3983, %v4051
    %v4055 = vxor.u32 %v4054, 2147483648
    %v4056 = vmul.f32 %v4055, 1.442695
    %v4057 = vpow.pop %v4056
    %v4058 = vadd.f32 %v4057, 1.0
    %v4059 = vrcp.pop %v4058
    %v4060 = vmul.f32 1.0, %v4059
    %v4061 = vld [vmem:[%s1654] sm:$0xff]
    %4062 = vmatprep.subr.mxu0 0.0
    %4063 = vmatpush1.msra.mxu0 %v2953
    %4064 = vmatprep.subr.mxu0 0.0
    %4065 = vmatpush1.msra.mxu0 %v2952
    %4066 = vmatprep.subr.mxu0 0.0
    %4067 = vmatpush1.msra.mxu0 %v2951
    %4068 = vmatprep.subr.mxu0 0.0
    %4069 = vmatpush1.msra.mxu0 %v2950
    %4070 = vmatprep.subr.mxu0 0.0
    %4071 = vmatpush1.msra.mxu0 %v2949
    %4072 = vmatprep.subr.mxu0 0.0
    %4073 = vmatpush1.msra.mxu0 %v2948
    %4074 = vmatprep.subr.mxu0 0.0
    %4075 = vmatpush1.msra.mxu0 %v2947
    %4076 = vmatprep.subr.mxu0 0.0
    %4077 = vmatpush1.msra.mxu0 %v2946
    %4078 = vmatprep.subr.mxu0 0.0
    %4079 = vmatpush1.msra.mxu0 %v2945
    %4080 = vmatprep.subr.mxu0 0.0
    %4081 = vmatpush1.msra.mxu0 %v2944
    %4082 = vmatprep.subr.mxu0 0.0
    %4083 = vmatpush1.msra.mxu0 %v2943
    %4084 = vmatprep.subr.mxu0 0.0
    %4085 = vmatpush1.msra.mxu0 %v2942
    %4086 = vmatprep.subr.mxu0 0.0
    %4087 = vmatpush1.msra.mxu0 %v2941
    %4088 = vmatprep.subr.mxu0 0.0
    %4089 = vmatpush1.msra.mxu0 %v2940
    %4090 = vmatprep.subr.mxu0 0.0
    %4091 = vmatpush1.msra.mxu0 %v2939
    %4092 = vmatprep.subr.mxu0 0.0
    %4093 = vmatpush1.msra.mxu0 %v2938
    %4094 = vmatprep.subr.mxu0 0.0
    %4095 = vmatpush2.msra.mxu0 0.0
    %4096 = vmatprep.subr.mxu0 0.0
    %4097 = vmatpush2.msra.mxu0 0.0
    %4098 = vmatprep.subr.mxu0 0.0
    %4099 = vmatpush2.msra.mxu0 0.0
    %4100 = vmatprep.subr.mxu0 0.0
    %4101 = vmatpush2.msra.mxu0 0.0
    %4102 = vmatprep.subr.mxu0 0.0
    %4103 = vmatpush2.msra.mxu0 0.0
    %4104 = vmatprep.subr.mxu0 0.0
    %4105 = vmatpush2.msra.mxu0 0.0
    %4106 = vmatprep.subr.mxu0 0.0
    %4107 = vmatpush2.msra.mxu0 0.0
    %4108 = vmatprep.subr.mxu0 0.0
    %4109 = vmatpush2.msra.mxu0 0.0
    %4110 = vmatprep.subr.mxu0 0.0
    %4111 = vmatpush2.msra.mxu0 0.0
    %4112 = vmatprep.subr.mxu0 0.0
    %4113 = vmatpush2.msra.mxu0 0.0
    %4114 = vmatprep.subr.mxu0 0.0
    %4115 = vmatpush2.msra.mxu0 0.0
    %4116 = vmatprep.subr.mxu0 0.0
    %4117 = vmatpush2.msra.mxu0 0.0
    %4118 = vmatprep.subr.mxu0 0.0
    %4119 = vmatpush2.msra.mxu0 0.0
    %4120 = vmatprep.subr.mxu0 0.0
    %4121 = vmatpush2.msra.mxu0 0.0
    %4122 = vmatprep.subr.mxu0 0.0
    %4123 = vmatpush2.msra.mxu0 0.0
    %4124 = vmatprep.subr.mxu0 0.0
    %4125 = vmatpush2.msra.mxu0 0.0
    %4126 = vmatprep.mubr.f32.mxu0 0.0
    %4127 = vmatmul.mubr.f32.gmra.mxu0 %v3902
    %v4128 = vpop.f32.mrf.mxu0
    %v4129 = vadd.f32 %v3117, %v4128
    %v4130 = vpop.f32.mrf.mxu0
    %4131 = vdwg.mxu0
    %v4132 = vmul.f32 %v3982, %v4129
    %v4133 = vadd.f32 %v4061, %v4132
    %v4134 = vtanh.pop %v4133
    %v4135 = vsub.f32 1.0, %v4060
    %v4136 = vmul.f32 %v4135, %v4134
    %v4137 = vmul.f32 %v4060, %v3902
    %v4138 = vadd.f32 %v4136, %v4137
    %s4139 = scalar_lea.vmem %s9, 32
    %4140 = vst [vmem:[%s4139] sm:$0xff] %v4138
    %v4141 = vld [vmem:[%s1735] sm:$0xff]
    %4142 = vmatprep.subr.mxu0 0.0
    %4143 = vmatpush1.msra.mxu0 %v2919
    %4144 = vmatprep.subr.mxu0 0.0
    %4145 = vmatpush1.msra.mxu0 %v2918
    %4146 = vmatprep.subr.mxu0 0.0
    %4147 = vmatpush1.msra.mxu0 %v2917
    %4148 = vmatprep.subr.mxu0 0.0
    %4149 = vmatpush1.msra.mxu0 %v2916
    %4150 = vmatprep.subr.mxu0 0.0
    %4151 = vmatpush1.msra.mxu0 %v2915
    %4152 = vmatprep.subr.mxu0 0.0
    %4153 = vmatpush1.msra.mxu0 %v2914
    %4154 = vmatprep.subr.mxu0 0.0
    %4155 = vmatpush1.msra.mxu0 %v2913
    %4156 = vmatprep.subr.mxu0 0.0
    %4157 = vmatpush1.msra.mxu0 %v2912
    %4158 = vmatprep.subr.mxu0 0.0
    %4159 = vmatpush1.msra.mxu0 %v2911
    %4160 = vmatprep.subr.mxu0 0.0
    %4161 = vmatpush1.msra.mxu0 %v2910
    %4162 = vmatprep.subr.mxu0 0.0
    %4163 = vmatpush1.msra.mxu0 %v2909
    %4164 = vmatprep.subr.mxu0 0.0
    %4165 = vmatpush1.msra.mxu0 %v2908
    %4166 = vmatprep.subr.mxu0 0.0
    %4167 = vmatpush1.msra.mxu0 %v2907
    %4168 = vmatprep.subr.mxu0 0.0
    %4169 = vmatpush1.msra.mxu0 %v2906
    %4170 = vmatprep.subr.mxu0 0.0
    %4171 = vmatpush1.msra.mxu0 %v2905
    %4172 = vmatprep.subr.mxu0 0.0
    %4173 = vmatpush1.msra.mxu0 %v2904
    %4174 = vmatprep.subr.mxu0 0.0
    %4175 = vmatpush2.msra.mxu0 0.0
    %4176 = vmatprep.subr.mxu0 0.0
    %4177 = vmatpush2.msra.mxu0 0.0
    %4178 = vmatprep.subr.mxu0 0.0
    %4179 = vmatpush2.msra.mxu0 0.0
    %4180 = vmatprep.subr.mxu0 0.0
    %4181 = vmatpush2.msra.mxu0 0.0
    %4182 = vmatprep.subr.mxu0 0.0
    %4183 = vmatpush2.msra.mxu0 0.0
    %4184 = vmatprep.subr.mxu0 0.0
    %4185 = vmatpush2.msra.mxu0 0.0
    %4186 = vmatprep.subr.mxu0 0.0
    %4187 = vmatpush2.msra.mxu0 0.0
    %4188 = vmatprep.subr.mxu0 0.0
    %4189 = vmatpush2.msra.mxu0 0.0
    %4190 = vmatprep.subr.mxu0 0.0
    %4191 = vmatpush2.msra.mxu0 0.0
    %4192 = vmatprep.subr.mxu0 0.0
    %4193 = vmatpush2.msra.mxu0 0.0
    %4194 = vmatprep.subr.mxu0 0.0
    %4195 = vmatpush2.msra.mxu0 0.0
    %4196 = vmatprep.subr.mxu0 0.0
    %4197 = vmatpush2.msra.mxu0 0.0
    %4198 = vmatprep.subr.mxu0 0.0
    %4199 = vmatpush2.msra.mxu0 0.0
    %4200 = vmatprep.subr.mxu0 0.0
    %4201 = vmatpush2.msra.mxu0 0.0
    %4202 = vmatprep.subr.mxu0 0.0
    %4203 = vmatpush2.msra.mxu0 0.0
    %4204 = vmatprep.subr.mxu0 0.0
    %4205 = vmatpush2.msra.mxu0 0.0
    %4206 = vmatprep.mubr.f32.mxu0 0.0
    %4207 = vmatmul.mubr.f32.gmra.mxu0 %v4138
    %v4208 = vpop.f32.mrf.mxu0
    %v4209 = vadd.f32 0.0, %v4208
    %v4210 = vpop.f32.mrf.mxu0
    %4211 = vdwg.mxu0
    %v4212 = vadd.f32 %v4141, %v4209
    %v4213 = vxor.u32 %v4212, 2147483648
    %v4214 = vmul.f32 %v4213, 1.442695
    %v4215 = vpow.pop %v4214
    %v4216 = vadd.f32 %v4215, 1.0
    %v4217 = vrcp.pop %v4216
    %v4218 = vmul.f32 1.0, %v4217
    %v4219 = vld [vmem:[%s1814] sm:$0xff]
    %4220 = vmatprep.subr.mxu0 0.0
    %4221 = vmatpush1.msra.mxu0 %v2936
    %4222 = vmatprep.subr.mxu0 0.0
    %4223 = vmatpush1.msra.mxu0 %v2935
    %4224 = vmatprep.subr.mxu0 0.0
    %4225 = vmatpush1.msra.mxu0 %v2934
    %4226 = vmatprep.subr.mxu0 0.0
    %4227 = vmatpush1.msra.mxu0 %v2933
    %4228 = vmatprep.subr.mxu0 0.0
    %4229 = vmatpush1.msra.mxu0 %v2932
    %4230 = vmatprep.subr.mxu0 0.0
    %4231 = vmatpush1.msra.mxu0 %v2931
    %4232 = vmatprep.subr.mxu0 0.0
    %4233 = vmatpush1.msra.mxu0 %v2930
    %4234 = vmatprep.subr.mxu0 0.0
    %4235 = vmatpush1.msra.mxu0 %v2929
    %4236 = vmatprep.subr.mxu0 0.0
    %4237 = vmatpush1.msra.mxu0 %v2928
    %4238 = vmatprep.subr.mxu0 0.0
    %4239 = vmatpush1.msra.mxu0 %v2927
    %4240 = vmatprep.subr.mxu0 0.0
    %4241 = vmatpush1.msra.mxu0 %v2926
    %4242 = vmatprep.subr.mxu0 0.0
    %4243 = vmatpush1.msra.mxu0 %v2925
    %4244 = vmatprep.subr.mxu0 0.0
    %4245 = vmatpush1.msra.mxu0 %v2924
    %4246 = vmatprep.subr.mxu0 0.0
    %4247 = vmatpush1.msra.mxu0 %v2923
    %4248 = vmatprep.subr.mxu0 0.0
    %4249 = vmatpush1.msra.mxu0 %v2922
    %4250 = vmatprep.subr.mxu0 0.0
    %4251 = vmatpush1.msra.mxu0 %v2921
    %4252 = vmatprep.subr.mxu0 0.0
    %4253 = vmatpush2.msra.mxu0 0.0
    %4254 = vmatprep.subr.mxu0 0.0
    %4255 = vmatpush2.msra.mxu0 0.0
    %4256 = vmatprep.subr.mxu0 0.0
    %4257 = vmatpush2.msra.mxu0 0.0
    %4258 = vmatprep.subr.mxu0 0.0
    %4259 = vmatpush2.msra.mxu0 0.0
    %4260 = vmatprep.subr.mxu0 0.0
    %4261 = vmatpush2.msra.mxu0 0.0
    %4262 = vmatprep.subr.mxu0 0.0
    %4263 = vmatpush2.msra.mxu0 0.0
    %4264 = vmatprep.subr.mxu0 0.0
    %4265 = vmatpush2.msra.mxu0 0.0
    %4266 = vmatprep.subr.mxu0 0.0
    %4267 = vmatpush2.msra.mxu0 0.0
    %4268 = vmatprep.subr.mxu0 0.0
    %4269 = vmatpush2.msra.mxu0 0.0
    %4270 = vmatprep.subr.mxu0 0.0
    %4271 = vmatpush2.msra.mxu0 0.0
    %4272 = vmatprep.subr.mxu0 0.0
    %4273 = vmatpush2.msra.mxu0 0.0
    %4274 = vmatprep.subr.mxu0 0.0
    %4275 = vmatpush2.msra.mxu0 0.0
    %4276 = vmatprep.subr.mxu0 0.0
    %4277 = vmatpush2.msra.mxu0 0.0
    %4278 = vmatprep.subr.mxu0 0.0
    %4279 = vmatpush2.msra.mxu0 0.0
    %4280 = vmatprep.subr.mxu0 0.0
    %4281 = vmatpush2.msra.mxu0 0.0
    %4282 = vmatprep.subr.mxu0 0.0
    %4283 = vmatpush2.msra.mxu0 0.0
    %4284 = vmatprep.mubr.f32.mxu0 0.0
    %4285 = vmatmul.mubr.f32.gmra.mxu0 %v4138
    %v4286 = vpop.f32.mrf.mxu0
    %v4287 = vadd.f32 0.0, %v4286
    %v4288 = vpop.f32.mrf.mxu0
    %4289 = vdwg.mxu0
    %v4290 = vadd.f32 %v4219, %v4287
    %v4291 = vxor.u32 %v4290, 2147483648
    %v4292 = vmul.f32 %v4291, 1.442695
    %v4293 = vpow.pop %v4292
    %v4294 = vadd.f32 %v4293, 1.0
    %v4295 = vrcp.pop %v4294
    %v4296 = vmul.f32 1.0, %v4295
    %v4297 = vld [vmem:[%s1893] sm:$0xff]
    %4298 = vmatprep.subr.mxu0 0.0
    %4299 = vmatpush1.msra.mxu0 %v2953
    %4300 = vmatprep.subr.mxu0 0.0
    %4301 = vmatpush1.msra.mxu0 %v2952
    %4302 = vmatprep.subr.mxu0 0.0
    %4303 = vmatpush1.msra.mxu0 %v2951
    %4304 = vmatprep.subr.mxu0 0.0
    %4305 = vmatpush1.msra.mxu0 %v2950
    %4306 = vmatprep.subr.mxu0 0.0
    %4307 = vmatpush1.msra.mxu0 %v2949
    %4308 = vmatprep.subr.mxu0 0.0
    %4309 = vmatpush1.msra.mxu0 %v2948
    %4310 = vmatprep.subr.mxu0 0.0
    %4311 = vmatpush1.msra.mxu0 %v2947
    %4312 = vmatprep.subr.mxu0 0.0
    %4313 = vmatpush1.msra.mxu0 %v2946
    %4314 = vmatprep.subr.mxu0 0.0
    %4315 = vmatpush1.msra.mxu0 %v2945
    %4316 = vmatprep.subr.mxu0 0.0
    %4317 = vmatpush1.msra.mxu0 %v2944
    %4318 = vmatprep.subr.mxu0 0.0
    %4319 = vmatpush1.msra.mxu0 %v2943
    %4320 = vmatprep.subr.mxu0 0.0
    %4321 = vmatpush1.msra.mxu0 %v2942
    %4322 = vmatprep.subr.mxu0 0.0
    %4323 = vmatpush1.msra.mxu0 %v2941
    %4324 = vmatprep.subr.mxu0 0.0
    %4325 = vmatpush1.msra.mxu0 %v2940
    %4326 = vmatprep.subr.mxu0 0.0
    %4327 = vmatpush1.msra.mxu0 %v2939
    %4328 = vmatprep.subr.mxu0 0.0
    %4329 = vmatpush1.msra.mxu0 %v2938
    %4330 = vmatprep.subr.mxu0 0.0
    %4331 = vmatpush2.msra.mxu0 0.0
    %4332 = vmatprep.subr.mxu0 0.0
    %4333 = vmatpush2.msra.mxu0 0.0
    %4334 = vmatprep.subr.mxu0 0.0
    %4335 = vmatpush2.msra.mxu0 0.0
    %4336 = vmatprep.subr.mxu0 0.0
    %4337 = vmatpush2.msra.mxu0 0.0
    %4338 = vmatprep.subr.mxu0 0.0
    %4339 = vmatpush2.msra.mxu0 0.0
    %4340 = vmatprep.subr.mxu0 0.0
    %4341 = vmatpush2.msra.mxu0 0.0
    %4342 = vmatprep.subr.mxu0 0.0
    %4343 = vmatpush2.msra.mxu0 0.0
    %4344 = vmatprep.subr.mxu0 0.0
    %4345 = vmatpush2.msra.mxu0 0.0
    %4346 = vmatprep.subr.mxu0 0.0
    %4347 = vmatpush2.msra.mxu0 0.0
    %4348 = vmatprep.subr.mxu0 0.0
    %4349 = vmatpush2.msra.mxu0 0.0
    %4350 = vmatprep.subr.mxu0 0.0
    %4351 = vmatpush2.msra.mxu0 0.0
    %4352 = vmatprep.subr.mxu0 0.0
    %4353 = vmatpush2.msra.mxu0 0.0
    %4354 = vmatprep.subr.mxu0 0.0
    %4355 = vmatpush2.msra.mxu0 0.0
    %4356 = vmatprep.subr.mxu0 0.0
    %4357 = vmatpush2.msra.mxu0 0.0
    %4358 = vmatprep.subr.mxu0 0.0
    %4359 = vmatpush2.msra.mxu0 0.0
    %4360 = vmatprep.subr.mxu0 0.0
    %4361 = vmatpush2.msra.mxu0 0.0
    %4362 = vmatprep.mubr.f32.mxu0 0.0
    %4363 = vmatmul.mubr.f32.gmra.mxu0 %v4138
    %v4364 = vpop.f32.mrf.mxu0
    %v4365 = vadd.f32 %v3117, %v4364
    %v4366 = vpop.f32.mrf.mxu0
    %4367 = vdwg.mxu0
    %v4368 = vmul.f32 %v4218, %v4365
    %v4369 = vadd.f32 %v4297, %v4368
    %v4370 = vtanh.pop %v4369
    %v4371 = vsub.f32 1.0, %v4296
    %v4372 = vmul.f32 %v4371, %v4370
    %v4373 = vmul.f32 %v4296, %v4138
    %v4374 = vadd.f32 %v4372, %v4373
    %s4375 = scalar_lea.vmem %s9, 40
    %4376 = vst [vmem:[%s4375] sm:$0xff] %v4374
    %v4377 = vld [vmem:[%s1974] sm:$0xff]
    %4378 = vmatprep.subr.mxu0 0.0
    %4379 = vmatpush1.msra.mxu0 %v2919
    %4380 = vmatprep.subr.mxu0 0.0
    %4381 = vmatpush1.msra.mxu0 %v2918
    %4382 = vmatprep.subr.mxu0 0.0
    %4383 = vmatpush1.msra.mxu0 %v2917
    %4384 = vmatprep.subr.mxu0 0.0
    %4385 = vmatpush1.msra.mxu0 %v2916
    %4386 = vmatprep.subr.mxu0 0.0
    %4387 = vmatpush1.msra.mxu0 %v2915
    %4388 = vmatprep.subr.mxu0 0.0
    %4389 = vmatpush1.msra.mxu0 %v2914
    %4390 = vmatprep.subr.mxu0 0.0
    %4391 = vmatpush1.msra.mxu0 %v2913
    %4392 = vmatprep.subr.mxu0 0.0
    %4393 = vmatpush1.msra.mxu0 %v2912
    %4394 = vmatprep.subr.mxu0 0.0
    %4395 = vmatpush1.msra.mxu0 %v2911
    %4396 = vmatprep.subr.mxu0 0.0
    %4397 = vmatpush1.msra.mxu0 %v2910
    %4398 = vmatprep.subr.mxu0 0.0
    %4399 = vmatpush1.msra.mxu0 %v2909
    %4400 = vmatprep.subr.mxu0 0.0
    %4401 = vmatpush1.msra.mxu0 %v2908
    %4402 = vmatprep.subr.mxu0 0.0
    %4403 = vmatpush1.msra.mxu0 %v2907
    %4404 = vmatprep.subr.mxu0 0.0
    %4405 = vmatpush1.msra.mxu0 %v2906
    %4406 = vmatprep.subr.mxu0 0.0
    %4407 = vmatpush1.msra.mxu0 %v2905
    %4408 = vmatprep.subr.mxu0 0.0
    %4409 = vmatpush1.msra.mxu0 %v2904
    %4410 = vmatprep.subr.mxu0 0.0
    %4411 = vmatpush2.msra.mxu0 0.0
    %4412 = vmatprep.subr.mxu0 0.0
    %4413 = vmatpush2.msra.mxu0 0.0
    %4414 = vmatprep.subr.mxu0 0.0
    %4415 = vmatpush2.msra.mxu0 0.0
    %4416 = vmatprep.subr.mxu0 0.0
    %4417 = vmatpush2.msra.mxu0 0.0
    %4418 = vmatprep.subr.mxu0 0.0
    %4419 = vmatpush2.msra.mxu0 0.0
    %4420 = vmatprep.subr.mxu0 0.0
    %4421 = vmatpush2.msra.mxu0 0.0
    %4422 = vmatprep.subr.mxu0 0.0
    %4423 = vmatpush2.msra.mxu0 0.0
    %4424 = vmatprep.subr.mxu0 0.0
    %4425 = vmatpush2.msra.mxu0 0.0
    %4426 = vmatprep.subr.mxu0 0.0
    %4427 = vmatpush2.msra.mxu0 0.0
    %4428 = vmatprep.subr.mxu0 0.0
    %4429 = vmatpush2.msra.mxu0 0.0
    %4430 = vmatprep.subr.mxu0 0.0
    %4431 = vmatpush2.msra.mxu0 0.0
    %4432 = vmatprep.subr.mxu0 0.0
    %4433 = vmatpush2.msra.mxu0 0.0
    %4434 = vmatprep.subr.mxu0 0.0
    %4435 = vmatpush2.msra.mxu0 0.0
    %4436 = vmatprep.subr.mxu0 0.0
    %4437 = vmatpush2.msra.mxu0 0.0
    %4438 = vmatprep.subr.mxu0 0.0
    %4439 = vmatpush2.msra.mxu0 0.0
    %4440 = vmatprep.subr.mxu0 0.0
    %4441 = vmatpush2.msra.mxu0 0.0
    %4442 = vmatprep.mubr.f32.mxu0 0.0
    %4443 = vmatmul.mubr.f32.gmra.mxu0 %v4374
    %v4444 = vpop.f32.mrf.mxu0
    %v4445 = vadd.f32 0.0, %v4444
    %v4446 = vpop.f32.mrf.mxu0
    %4447 = vdwg.mxu0
    %v4448 = vadd.f32 %v4377, %v4445
    %v4449 = vxor.u32 %v4448, 2147483648
    %v4450 = vmul.f32 %v4449, 1.442695
    %v4451 = vpow.pop %v4450
    %v4452 = vadd.f32 %v4451, 1.0
    %v4453 = vrcp.pop %v4452
    %v4454 = vmul.f32 1.0, %v4453
    %v4455 = vld [vmem:[%s2053] sm:$0xff]
    %4456 = vmatprep.subr.mxu0 0.0
    %4457 = vmatpush1.msra.mxu0 %v2936
    %4458 = vmatprep.subr.mxu0 0.0
    %4459 = vmatpush1.msra.mxu0 %v2935
    %4460 = vmatprep.subr.mxu0 0.0
    %4461 = vmatpush1.msra.mxu0 %v2934
    %4462 = vmatprep.subr.mxu0 0.0
    %4463 = vmatpush1.msra.mxu0 %v2933
    %4464 = vmatprep.subr.mxu0 0.0
    %4465 = vmatpush1.msra.mxu0 %v2932
    %4466 = vmatprep.subr.mxu0 0.0
    %4467 = vmatpush1.msra.mxu0 %v2931
    %4468 = vmatprep.subr.mxu0 0.0
    %4469 = vmatpush1.msra.mxu0 %v2930
    %4470 = vmatprep.subr.mxu0 0.0
    %4471 = vmatpush1.msra.mxu0 %v2929
    %4472 = vmatprep.subr.mxu0 0.0
    %4473 = vmatpush1.msra.mxu0 %v2928
    %4474 = vmatprep.subr.mxu0 0.0
    %4475 = vmatpush1.msra.mxu0 %v2927
    %4476 = vmatprep.subr.mxu0 0.0
    %4477 = vmatpush1.msra.mxu0 %v2926
    %4478 = vmatprep.subr.mxu0 0.0
    %4479 = vmatpush1.msra.mxu0 %v2925
    %4480 = vmatprep.subr.mxu0 0.0
    %4481 = vmatpush1.msra.mxu0 %v2924
    %4482 = vmatprep.subr.mxu0 0.0
    %4483 = vmatpush1.msra.mxu0 %v2923
    %4484 = vmatprep.subr.mxu0 0.0
    %4485 = vmatpush1.msra.mxu0 %v2922
    %4486 = vmatprep.subr.mxu0 0.0
    %4487 = vmatpush1.msra.mxu0 %v2921
    %4488 = vmatprep.subr.mxu0 0.0
    %4489 = vmatpush2.msra.mxu0 0.0
    %4490 = vmatprep.subr.mxu0 0.0
    %4491 = vmatpush2.msra.mxu0 0.0
    %4492 = vmatprep.subr.mxu0 0.0
    %4493 = vmatpush2.msra.mxu0 0.0
    %4494 = vmatprep.subr.mxu0 0.0
    %4495 = vmatpush2.msra.mxu0 0.0
    %4496 = vmatprep.subr.mxu0 0.0
    %4497 = vmatpush2.msra.mxu0 0.0
    %4498 = vmatprep.subr.mxu0 0.0
    %4499 = vmatpush2.msra.mxu0 0.0
    %4500 = vmatprep.subr.mxu0 0.0
    %4501 = vmatpush2.msra.mxu0 0.0
    %4502 = vmatprep.subr.mxu0 0.0
    %4503 = vmatpush2.msra.mxu0 0.0
    %4504 = vmatprep.subr.mxu0 0.0
    %4505 = vmatpush2.msra.mxu0 0.0
    %4506 = vmatprep.subr.mxu0 0.0
    %4507 = vmatpush2.msra.mxu0 0.0
    %4508 = vmatprep.subr.mxu0 0.0
    %4509 = vmatpush2.msra.mxu0 0.0
    %4510 = vmatprep.subr.mxu0 0.0
    %4511 = vmatpush2.msra.mxu0 0.0
    %4512 = vmatprep.subr.mxu0 0.0
    %4513 = vmatpush2.msra.mxu0 0.0
    %4514 = vmatprep.subr.mxu0 0.0
    %4515 = vmatpush2.msra.mxu0 0.0
    %4516 = vmatprep.subr.mxu0 0.0
    %4517 = vmatpush2.msra.mxu0 0.0
    %4518 = vmatprep.subr.mxu0 0.0
    %4519 = vmatpush2.msra.mxu0 0.0
    %4520 = vmatprep.mubr.f32.mxu0 0.0
    %4521 = vmatmul.mubr.f32.gmra.mxu0 %v4374
    %v4522 = vpop.f32.mrf.mxu0
    %v4523 = vadd.f32 0.0, %v4522
    %v4524 = vpop.f32.mrf.mxu0
    %4525 = vdwg.mxu0
    %v4526 = vadd.f32 %v4455, %v4523
    %v4527 = vxor.u32 %v4526, 2147483648
    %v4528 = vmul.f32 %v4527, 1.442695
    %v4529 = vpow.pop %v4528
    %v4530 = vadd.f32 %v4529, 1.0
    %v4531 = vrcp.pop %v4530
    %v4532 = vmul.f32 1.0, %v4531
    %v4533 = vld [vmem:[%s2132] sm:$0xff]
    %4534 = vmatprep.subr.mxu0 0.0
    %4535 = vmatpush1.msra.mxu0 %v2953
    %4536 = vmatprep.subr.mxu0 0.0
    %4537 = vmatpush1.msra.mxu0 %v2952
    %4538 = vmatprep.subr.mxu0 0.0
    %4539 = vmatpush1.msra.mxu0 %v2951
    %4540 = vmatprep.subr.mxu0 0.0
    %4541 = vmatpush1.msra.mxu0 %v2950
    %4542 = vmatprep.subr.mxu0 0.0
    %4543 = vmatpush1.msra.mxu0 %v2949
    %4544 = vmatprep.subr.mxu0 0.0
    %4545 = vmatpush1.msra.mxu0 %v2948
    %4546 = vmatprep.subr.mxu0 0.0
    %4547 = vmatpush1.msra.mxu0 %v2947
    %4548 = vmatprep.subr.mxu0 0.0
    %4549 = vmatpush1.msra.mxu0 %v2946
    %4550 = vmatprep.subr.mxu0 0.0
    %4551 = vmatpush1.msra.mxu0 %v2945
    %4552 = vmatprep.subr.mxu0 0.0
    %4553 = vmatpush1.msra.mxu0 %v2944
    %4554 = vmatprep.subr.mxu0 0.0
    %4555 = vmatpush1.msra.mxu0 %v2943
    %4556 = vmatprep.subr.mxu0 0.0
    %4557 = vmatpush1.msra.mxu0 %v2942
    %4558 = vmatprep.subr.mxu0 0.0
    %4559 = vmatpush1.msra.mxu0 %v2941
    %4560 = vmatprep.subr.mxu0 0.0
    %4561 = vmatpush1.msra.mxu0 %v2940
    %4562 = vmatprep.subr.mxu0 0.0
    %4563 = vmatpush1.msra.mxu0 %v2939
    %4564 = vmatprep.subr.mxu0 0.0
    %4565 = vmatpush1.msra.mxu0 %v2938
    %4566 = vmatprep.subr.mxu0 0.0
    %4567 = vmatpush2.msra.mxu0 0.0
    %4568 = vmatprep.subr.mxu0 0.0
    %4569 = vmatpush2.msra.mxu0 0.0
    %4570 = vmatprep.subr.mxu0 0.0
    %4571 = vmatpush2.msra.mxu0 0.0
    %4572 = vmatprep.subr.mxu0 0.0
    %4573 = vmatpush2.msra.mxu0 0.0
    %4574 = vmatprep.subr.mxu0 0.0
    %4575 = vmatpush2.msra.mxu0 0.0
    %4576 = vmatprep.subr.mxu0 0.0
    %4577 = vmatpush2.msra.mxu0 0.0
    %4578 = vmatprep.subr.mxu0 0.0
    %4579 = vmatpush2.msra.mxu0 0.0
    %4580 = vmatprep.subr.mxu0 0.0
    %4581 = vmatpush2.msra.mxu0 0.0
    %4582 = vmatprep.subr.mxu0 0.0
    %4583 = vmatpush2.msra.mxu0 0.0
    %4584 = vmatprep.subr.mxu0 0.0
    %4585 = vmatpush2.msra.mxu0 0.0
    %4586 = vmatprep.subr.mxu0 0.0
    %4587 = vmatpush2.msra.mxu0 0.0
    %4588 = vmatprep.subr.mxu0 0.0
    %4589 = vmatpush2.msra.mxu0 0.0
    %4590 = vmatprep.subr.mxu0 0.0
    %4591 = vmatpush2.msra.mxu0 0.0
    %4592 = vmatprep.subr.mxu0 0.0
    %4593 = vmatpush2.msra.mxu0 0.0
    %4594 = vmatprep.subr.mxu0 0.0
    %4595 = vmatpush2.msra.mxu0 0.0
    %4596 = vmatprep.subr.mxu0 0.0
    %4597 = vmatpush2.msra.mxu0 0.0
    %4598 = vmatprep.mubr.f32.mxu0 0.0
    %4599 = vmatmul.mubr.f32.gmra.mxu0 %v4374
    %v4600 = vpop.f32.mrf.mxu0
    %v4601 = vadd.f32 %v3117, %v4600
    %v4602 = vpop.f32.mrf.mxu0
    %4603 = vdwg.mxu0
    %v4604 = vmul.f32 %v4454, %v4601
    %v4605 = vadd.f32 %v4533, %v4604
    %v4606 = vtanh.pop %v4605
    %v4607 = vsub.f32 1.0, %v4532
    %v4608 = vmul.f32 %v4607, %v4606
    %v4609 = vmul.f32 %v4532, %v4374
    %v4610 = vadd.f32 %v4608, %v4609
    %s4611 = scalar_lea.vmem %s9, 48
    %4612 = vst [vmem:[%s4611] sm:$0xff] %v4610
    %v4613 = vld [vmem:[%s2213] sm:$0xff]
    %4614 = vmatprep.subr.mxu0 0.0
    %4615 = vmatpush1.msra.mxu0 %v2919
    %4616 = vmatprep.subr.mxu0 0.0
    %4617 = vmatpush1.msra.mxu0 %v2918
    %4618 = vmatprep.subr.mxu0 0.0
    %4619 = vmatpush1.msra.mxu0 %v2917
    %4620 = vmatprep.subr.mxu0 0.0
    %4621 = vmatpush1.msra.mxu0 %v2916
    %4622 = vmatprep.subr.mxu0 0.0
    %4623 = vmatpush1.msra.mxu0 %v2915
    %4624 = vmatprep.subr.mxu0 0.0
    %4625 = vmatpush1.msra.mxu0 %v2914
    %4626 = vmatprep.subr.mxu0 0.0
    %4627 = vmatpush1.msra.mxu0 %v2913
    %4628 = vmatprep.subr.mxu0 0.0
    %4629 = vmatpush1.msra.mxu0 %v2912
    %4630 = vmatprep.subr.mxu0 0.0
    %4631 = vmatpush1.msra.mxu0 %v2911
    %4632 = vmatprep.subr.mxu0 0.0
    %4633 = vmatpush1.msra.mxu0 %v2910
    %4634 = vmatprep.subr.mxu0 0.0
    %4635 = vmatpush1.msra.mxu0 %v2909
    %4636 = vmatprep.subr.mxu0 0.0
    %4637 = vmatpush1.msra.mxu0 %v2908
    %4638 = vmatprep.subr.mxu0 0.0
    %4639 = vmatpush1.msra.mxu0 %v2907
    %4640 = vmatprep.subr.mxu0 0.0
    %4641 = vmatpush1.msra.mxu0 %v2906
    %4642 = vmatprep.subr.mxu0 0.0
    %4643 = vmatpush1.msra.mxu0 %v2905
    %4644 = vmatprep.subr.mxu0 0.0
    %4645 = vmatpush1.msra.mxu0 %v2904
    %4646 = vmatprep.subr.mxu0 0.0
    %4647 = vmatpush2.msra.mxu0 0.0
    %4648 = vmatprep.subr.mxu0 0.0
    %4649 = vmatpush2.msra.mxu0 0.0
    %4650 = vmatprep.subr.mxu0 0.0
    %4651 = vmatpush2.msra.mxu0 0.0
    %4652 = vmatprep.subr.mxu0 0.0
    %4653 = vmatpush2.msra.mxu0 0.0
    %4654 = vmatprep.subr.mxu0 0.0
    %4655 = vmatpush2.msra.mxu0 0.0
    %4656 = vmatprep.subr.mxu0 0.0
    %4657 = vmatpush2.msra.mxu0 0.0
    %4658 = vmatprep.subr.mxu0 0.0
    %4659 = vmatpush2.msra.mxu0 0.0
    %4660 = vmatprep.subr.mxu0 0.0
    %4661 = vmatpush2.msra.mxu0 0.0
    %4662 = vmatprep.subr.mxu0 0.0
    %4663 = vmatpush2.msra.mxu0 0.0
    %4664 = vmatprep.subr.mxu0 0.0
    %4665 = vmatpush2.msra.mxu0 0.0
    %4666 = vmatprep.subr.mxu0 0.0
    %4667 = vmatpush2.msra.mxu0 0.0
    %4668 = vmatprep.subr.mxu0 0.0
    %4669 = vmatpush2.msra.mxu0 0.0
    %4670 = vmatprep.subr.mxu0 0.0
    %4671 = vmatpush2.msra.mxu0 0.0
    %4672 = vmatprep.subr.mxu0 0.0
    %4673 = vmatpush2.msra.mxu0 0.0
    %4674 = vmatprep.subr.mxu0 0.0
    %4675 = vmatpush2.msra.mxu0 0.0
    %4676 = vmatprep.subr.mxu0 0.0
    %4677 = vmatpush2.msra.mxu0 0.0
    %4678 = vmatprep.mubr.f32.mxu0 0.0
    %4679 = vmatmul.mubr.f32.gmra.mxu0 %v4610
    %v4680 = vpop.f32.mrf.mxu0
    %v4681 = vadd.f32 0.0, %v4680
    %v4682 = vpop.f32.mrf.mxu0
    %4683 = vdwg.mxu0
    %v4684 = vadd.f32 %v4613, %v4681
    %v4685 = vxor.u32 %v4684, 2147483648
    %v4686 = vmul.f32 %v4685, 1.442695
    %v4687 = vpow.pop %v4686
    %v4688 = vadd.f32 %v4687, 1.0
    %v4689 = vrcp.pop %v4688
    %v4690 = vmul.f32 1.0, %v4689
    %v4691 = vld [vmem:[%s2292] sm:$0xff]
    %4692 = vmatprep.subr.mxu0 0.0
    %4693 = vmatpush1.msra.mxu0 %v2936
    %4694 = vmatprep.subr.mxu0 0.0
    %4695 = vmatpush1.msra.mxu0 %v2935
    %4696 = vmatprep.subr.mxu0 0.0
    %4697 = vmatpush1.msra.mxu0 %v2934
    %4698 = vmatprep.subr.mxu0 0.0
    %4699 = vmatpush1.msra.mxu0 %v2933
    %4700 = vmatprep.subr.mxu0 0.0
    %4701 = vmatpush1.msra.mxu0 %v2932
    %4702 = vmatprep.subr.mxu0 0.0
    %4703 = vmatpush1.msra.mxu0 %v2931
    %4704 = vmatprep.subr.mxu0 0.0
    %4705 = vmatpush1.msra.mxu0 %v2930
    %4706 = vmatprep.subr.mxu0 0.0
    %4707 = vmatpush1.msra.mxu0 %v2929
    %4708 = vmatprep.subr.mxu0 0.0
    %4709 = vmatpush1.msra.mxu0 %v2928
    %4710 = vmatprep.subr.mxu0 0.0
    %4711 = vmatpush1.msra.mxu0 %v2927
    %4712 = vmatprep.subr.mxu0 0.0
    %4713 = vmatpush1.msra.mxu0 %v2926
    %4714 = vmatprep.subr.mxu0 0.0
    %4715 = vmatpush1.msra.mxu0 %v2925
    %4716 = vmatprep.subr.mxu0 0.0
    %4717 = vmatpush1.msra.mxu0 %v2924
    %4718 = vmatprep.subr.mxu0 0.0
    %4719 = vmatpush1.msra.mxu0 %v2923
    %4720 = vmatprep.subr.mxu0 0.0
    %4721 = vmatpush1.msra.mxu0 %v2922
    %4722 = vmatprep.subr.mxu0 0.0
    %4723 = vmatpush1.msra.mxu0 %v2921
    %4724 = vmatprep.subr.mxu0 0.0
    %4725 = vmatpush2.msra.mxu0 0.0
    %4726 = vmatprep.subr.mxu0 0.0
    %4727 = vmatpush2.msra.mxu0 0.0
    %4728 = vmatprep.subr.mxu0 0.0
    %4729 = vmatpush2.msra.mxu0 0.0
    %4730 = vmatprep.subr.mxu0 0.0
    %4731 = vmatpush2.msra.mxu0 0.0
    %4732 = vmatprep.subr.mxu0 0.0
    %4733 = vmatpush2.msra.mxu0 0.0
    %4734 = vmatprep.subr.mxu0 0.0
    %4735 = vmatpush2.msra.mxu0 0.0
    %4736 = vmatprep.subr.mxu0 0.0
    %4737 = vmatpush2.msra.mxu0 0.0
    %4738 = vmatprep.subr.mxu0 0.0
    %4739 = vmatpush2.msra.mxu0 0.0
    %4740 = vmatprep.subr.mxu0 0.0
    %4741 = vmatpush2.msra.mxu0 0.0
    %4742 = vmatprep.subr.mxu0 0.0
    %4743 = vmatpush2.msra.mxu0 0.0
    %4744 = vmatprep.subr.mxu0 0.0
    %4745 = vmatpush2.msra.mxu0 0.0
    %4746 = vmatprep.subr.mxu0 0.0
    %4747 = vmatpush2.msra.mxu0 0.0
    %4748 = vmatprep.subr.mxu0 0.0
    %4749 = vmatpush2.msra.mxu0 0.0
    %4750 = vmatprep.subr.mxu0 0.0
    %4751 = vmatpush2.msra.mxu0 0.0
    %4752 = vmatprep.subr.mxu0 0.0
    %4753 = vmatpush2.msra.mxu0 0.0
    %4754 = vmatprep.subr.mxu0 0.0
    %4755 = vmatpush2.msra.mxu0 0.0
    %4756 = vmatprep.mubr.f32.mxu0 0.0
    %4757 = vmatmul.mubr.f32.gmra.mxu0 %v4610
    %v4758 = vpop.f32.mrf.mxu0
    %v4759 = vadd.f32 0.0, %v4758
    %v4760 = vpop.f32.mrf.mxu0
    %4761 = vdwg.mxu0
    %v4762 = vadd.f32 %v4691, %v4759
    %v4763 = vxor.u32 %v4762, 2147483648
    %v4764 = vmul.f32 %v4763, 1.442695
    %v4765 = vpow.pop %v4764
    %v4766 = vadd.f32 %v4765, 1.0
    %v4767 = vrcp.pop %v4766
    %v4768 = vmul.f32 1.0, %v4767
    %v4769 = vld [vmem:[%s2371] sm:$0xff]
    %4770 = vmatprep.subr.mxu0 0.0
    %4771 = vmatpush1.msra.mxu0 %v2953
    %4772 = vmatprep.subr.mxu0 0.0
    %4773 = vmatpush1.msra.mxu0 %v2952
    %4774 = vmatprep.subr.mxu0 0.0
    %4775 = vmatpush1.msra.mxu0 %v2951
    %4776 = vmatprep.subr.mxu0 0.0
    %4777 = vmatpush1.msra.mxu0 %v2950
    %4778 = vmatprep.subr.mxu0 0.0
    %4779 = vmatpush1.msra.mxu0 %v2949
    %4780 = vmatprep.subr.mxu0 0.0
    %4781 = vmatpush1.msra.mxu0 %v2948
    %4782 = vmatprep.subr.mxu0 0.0
    %4783 = vmatpush1.msra.mxu0 %v2947
    %4784 = vmatprep.subr.mxu0 0.0
    %4785 = vmatpush1.msra.mxu0 %v2946
    %4786 = vmatprep.subr.mxu0 0.0
    %4787 = vmatpush1.msra.mxu0 %v2945
    %4788 = vmatprep.subr.mxu0 0.0
    %4789 = vmatpush1.msra.mxu0 %v2944
    %4790 = vmatprep.subr.mxu0 0.0
    %4791 = vmatpush1.msra.mxu0 %v2943
    %4792 = vmatprep.subr.mxu0 0.0
    %4793 = vmatpush1.msra.mxu0 %v2942
    %4794 = vmatprep.subr.mxu0 0.0
    %4795 = vmatpush1.msra.mxu0 %v2941
    %4796 = vmatprep.subr.mxu0 0.0
    %4797 = vmatpush1.msra.mxu0 %v2940
    %4798 = vmatprep.subr.mxu0 0.0
    %4799 = vmatpush1.msra.mxu0 %v2939
    %4800 = vmatprep.subr.mxu0 0.0
    %4801 = vmatpush1.msra.mxu0 %v2938
    %4802 = vmatprep.subr.mxu0 0.0
    %4803 = vmatpush2.msra.mxu0 0.0
    %4804 = vmatprep.subr.mxu0 0.0
    %4805 = vmatpush2.msra.mxu0 0.0
    %4806 = vmatprep.subr.mxu0 0.0
    %4807 = vmatpush2.msra.mxu0 0.0
    %4808 = vmatprep.subr.mxu0 0.0
    %4809 = vmatpush2.msra.mxu0 0.0
    %4810 = vmatprep.subr.mxu0 0.0
    %4811 = vmatpush2.msra.mxu0 0.0
    %4812 = vmatprep.subr.mxu0 0.0
    %4813 = vmatpush2.msra.mxu0 0.0
    %4814 = vmatprep.subr.mxu0 0.0
    %4815 = vmatpush2.msra.mxu0 0.0
    %4816 = vmatprep.subr.mxu0 0.0
    %4817 = vmatpush2.msra.mxu0 0.0
    %4818 = vmatprep.subr.mxu0 0.0
    %4819 = vmatpush2.msra.mxu0 0.0
    %4820 = vmatprep.subr.mxu0 0.0
    %4821 = vmatpush2.msra.mxu0 0.0
    %4822 = vmatprep.subr.mxu0 0.0
    %4823 = vmatpush2.msra.mxu0 0.0
    %4824 = vmatprep.subr.mxu0 0.0
    %4825 = vmatpush2.msra.mxu0 0.0
    %4826 = vmatprep.subr.mxu0 0.0
    %4827 = vmatpush2.msra.mxu0 0.0
    %4828 = vmatprep.subr.mxu0 0.0
    %4829 = vmatpush2.msra.mxu0 0.0
    %4830 = vmatprep.subr.mxu0 0.0
    %4831 = vmatpush2.msra.mxu0 0.0
    %4832 = vmatprep.subr.mxu0 0.0
    %4833 = vmatpush2.msra.mxu0 0.0
    %4834 = vmatprep.mubr.f32.mxu0 0.0
    %4835 = vmatmul.mubr.f32.gmra.mxu0 %v4610
    %v4836 = vpop.f32.mrf.mxu0
    %v4837 = vadd.f32 %v3117, %v4836
    %v4838 = vpop.f32.mrf.mxu0
    %4839 = vdwg.mxu0
    %v4840 = vmul.f32 %v4690, %v4837
    %v4841 = vadd.f32 %v4769, %v4840
    %v4842 = vtanh.pop %v4841
    %v4843 = vsub.f32 1.0, %v4768
    %v4844 = vmul.f32 %v4843, %v4842
    %v4845 = vmul.f32 %v4768, %v4610
    %v4846 = vadd.f32 %v4844, %v4845
    %s4847 = scalar_lea.vmem %s9, 56
    %4848 = vst [vmem:[%s4847] sm:$0xff] %v4846
    %s4849 = scalar_lea.vmem [#allocation6], 8
    %4850 = vst [vmem:[%s4849] sm:$0xff] %v4846
    // Predicated region
    $region38: #{homograph_rnn_forward.1} parent=1 // pred_check
      _
    $region39: #{homograph_rnn_forward.1} parent=1 // pred_check_branch
      %4852 = sbr.rel (0) target = $region41
    $region40: #{homograph_rnn_forward.1} parent=1 // pred_region
      _
    $region41: #{homograph_rnn_forward.1} parent=1 // pred_fallthru
      _
    // Predicated region
    $region42: #{homograph_rnn_forward.1} parent=1 // pred_check
      _
    $region43: #{homograph_rnn_forward.1} parent=1 // pred_check_branch
      %4854 = sbr.rel (0) target = $region45
    $region44: #{homograph_rnn_forward.1} parent=1 // pred_region
      %s4856 = ssub.s32 256, 256
      %4857 = vsyncadd [#allocation7], %s4856
      %s4858 = sshll.u32 [#allocation6], 4
      %s4859 = int_to_ptr.vmem [resolvable:$true] %s4858
      %4864 = dma.vmem_to_hbm [thread:$0]  %s4859, 256, %s10, [#allocation7], 128, 128, 8
    $region45: #{homograph_rnn_forward.1} parent=1 // pred_fallthru
      _
    // Predicated region
    $region46: #{homograph_rnn_forward.1} parent=1 // pred_check
      _
    $region47: #{homograph_rnn_forward.1} parent=1 // pred_check_branch
      %4866 = sbr.rel (0) target = $region49
    $region48: #{homograph_rnn_forward.1} parent=1 // pred_region
      _
    $region49: #{homograph_rnn_forward.1} parent=1 // pred_fallthru
      _
    // Predicated region
    $region50: #{homograph_rnn_forward.1} parent=1 // pred_check
      _
    $region51: #{homograph_rnn_forward.1} parent=1 // pred_check_branch
      %4868 = sbr.rel (0) target = $region53
    $region52: #{homograph_rnn_forward.1} parent=1 // pred_region
      %4869 = dma.done [#allocation7], 256
    $region53: #{homograph_rnn_forward.1} parent=1 // pred_fallthru
      _
    %4870 = vsyncpa [#allocation7], 1

</llo_original>
